<compile_context>
chip_gen: v7x
topology: tpu7x:2x2x1
jax: 0.10.0
libtpu: 0.0.40
codegen_flags: <defaults>
</compile_context>

<pallas_src>
import functools

import jax
import jax.numpy as jnp
from jax.experimental import pallas as pl
from jax.experimental.pallas import tpu as pltpu

MAX_TM = 256  # M tile (rows = N*H*W pixels); every matmul in this model has M <= 128


# ----------------------------------------------------------------------------
# Pallas kernel: fused matmul + bias (+ residual) + activation
# ----------------------------------------------------------------------------
def _matmul_kernel(*refs, act, has_residual):
    if has_residual:
        a_ref, w_ref, b_ref, r_ref, o_ref = refs
    else:
        a_ref, w_ref, b_ref, o_ref = refs
        r_ref = None
    acc = jnp.dot(a_ref[...], w_ref[...], preferred_element_type=jnp.float32)
    acc = acc + b_ref[...]
    if r_ref is not None:
        acc = acc + r_ref[...]
    if act == "relu":
        acc = jnp.maximum(acc, 0.0)
    elif act == "sigmoid":
        acc = pl.reciprocal(1.0 + jnp.exp(-acc), approx=True)
    o_ref[...] = acc.astype(o_ref.dtype)


def matmul_bias_act(a, w, b, act="none", residual=None):
    """act(a @ w + b [+ residual]); a:(M,K) -> bf16, w:(K,N) bf16, b:(N,) f32."""
    M, K = a.shape
    Kw, N = w.shape
    assert K == Kw
    a = a.astype(jnp.bfloat16)
    w = w.astype(jnp.bfloat16)
    b2 = b.reshape(1, N).astype(jnp.float32)

    bm = M if M <= MAX_TM else MAX_TM            # block = full M when it fits
    grid_m = pl.cdiv(M, bm)

    in_specs = [
        pl.BlockSpec((bm, K), lambda i: (i, 0)),
        pl.BlockSpec((K, N), lambda i: (0, 0)),
        pl.BlockSpec((1, N), lambda i: (0, 0)),
    ]
    operands = [a, w, b2]
    has_res = residual is not None
    if has_res:
        in_specs.append(pl.BlockSpec((bm, N), lambda i: (i, 0)))
        operands.append(residual.astype(jnp.float32))

    bytes_accessed = 2 * M * K + 2 * K * N + 4 * N + 4 * M * N
    if has_res:
        bytes_accessed += 4 * M * N

    out = pl.pallas_call(
        functools.partial(_matmul_kernel, act=act, has_residual=has_res),
        out_shape=jax.ShapeDtypeStruct((M, N), jnp.float32),
        grid_spec=pltpu.PrefetchScalarGridSpec(
            num_scalar_prefetch=0,
            grid=(grid_m,),
            in_specs=in_specs,
            out_specs=pl.BlockSpec((bm, N), lambda i: (i, 0)),
        ),
        compiler_params=pltpu.CompilerParams(
            dimension_semantics=("parallel",)),
        cost_estimate=pl.CostEstimate(
            flops=2 * M * K * N,
            transcendentals=(M * N if act == "sigmoid" else 0),
            bytes_accessed=bytes_accessed),
    )(*operands)
    return out


# ----------------------------------------------------------------------------
# Conv wrappers (bf16 im2col glue in JAX, compute in the Pallas kernel)
# ----------------------------------------------------------------------------
def _im2col(x, kh, kw, stride, pad):
    """x: (N,H,W,C) -> bf16 patches (N*Ho*Wo, kh*kw*C) and output dims."""
    x = x.astype(jnp.bfloat16)
    N, H, W, C = x.shape
    if kh == 1 and kw == 1 and pad == 0:
        if stride != 1:
            x = x[:, ::stride, ::stride, :]
        Ho, Wo = x.shape[1], x.shape[2]
        return x.reshape(N * Ho * Wo, C), (N, Ho, Wo)
    xp = jnp.pad(x, ((0, 0), (pad, pad), (pad, pad), (0, 0)))
    Ho = (H + 2 * pad - kh) // stride + 1
    Wo = (W + 2 * pad - kw) // stride + 1
    cols = []
    for i in range(kh):
        for j in range(kw):
            cols.append(xp[:, i:i + (Ho - 1) * stride + 1:stride,
                           j:j + (Wo - 1) * stride + 1:stride, :])
    patches = jnp.concatenate(cols, axis=-1)
    return patches.reshape(N * Ho * Wo, kh * kw * C), (N, Ho, Wo)


def conv_mm(x, cp, stride, pad, act="none", residual=None):
    a, (N, Ho, Wo) = _im2col(x, cp["kh"], cp["kw"], stride, pad)
    out = matmul_bias_act(a, cp["wm"], cp["b"], act=act, residual=residual)
    return out.reshape(N, Ho, Wo, out.shape[-1])


def maxpool2d(x, k=3, stride=2, padding=1):
    N, H, W, C = x.shape
    neg = jnp.finfo(x.dtype).min
    xp = jnp.pad(x, ((0, 0), (padding, padding), (padding, padding), (0, 0)),
                 constant_values=neg)
    Ho = (H + 2 * padding - k) // stride + 1
    Wo = (W + 2 * padding - k) // stride + 1
    out = jnp.full((N, Ho, Wo, C), neg, x.dtype)
    for kh in range(k):
        for kw in range(k):
            out = jnp.maximum(out, xp[:, kh:kh + (Ho - 1) * stride + 1:stride,
                                      kw:kw + (Wo - 1) * stride + 1:stride, :])
    return out


def upsample_bilinear(x, scale=4):
    """PyTorch F.interpolate(mode='bilinear', align_corners=False)."""
    def along_axis(x, axis):
        n = x.shape[axis]
        out = n * scale
        src = (jnp.arange(out, dtype=jnp.float32) + 0.5) / scale - 0.5
        src = jnp.clip(src, 0.0, n - 1.0)
        i0 = jnp.floor(src).astype(jnp.int32)
        i1 = jnp.minimum(i0 + 1, n - 1)
        w1 = src - i0.astype(jnp.float32)
        w0 = 1.0 - w1
        shape = [1] * x.ndim
        shape[axis] = out
        x0 = jnp.take(x, i0, axis=axis)
        x1 = jnp.take(x, i1, axis=axis)
        return x0 * w0.reshape(shape) + x1 * w1.reshape(shape)
    x = along_axis(x, 1)
    x = along_axis(x, 2)
    return x


# ----------------------------------------------------------------------------
# Deterministic synthetic parameters (eval-mode BN folded, matrices pre-built)
# ----------------------------------------------------------------------------
class ParamGen:
    def __init__(self, key):
        self.key = key

    def _next(self):
        self.key, sub = jax.random.split(self.key)
        return sub

    def normal(self, shape, std=0.1):
        return std * jax.random.normal(self._next(), shape, jnp.float32)

    def conv(self, cin, cout, k, bias=True):
        w = self.normal((k, k, cin, cout), std=0.15)               # HWIO
        b = self.normal((cout,), std=0.05) if bias else jnp.zeros((cout,), jnp.float32)
        return {"w": w, "b": b}

    def convT(self, cin, cout, k):
        return {"w": self.normal((cin, cout, k, k), std=0.15),     # PyTorch IOHW
                "b": self.normal((cout,), std=0.05)}

    def bn(self, c, eps=1e-5):
        gamma = 1.0 + self.normal((c,), 0.05)
        beta = self.normal((c,), 0.05)
        mean = self.normal((c,), 0.05)
        var = 1.0 + jnp.abs(self.normal((c,), 0.05))
        s = gamma / jnp.sqrt(var + eps)
        b = beta - mean * s
        return {"s": s, "b": b}


def fold_conv_bn(conv, bn):
    w = conv["w"] * bn["s"][None, None, None, :]
    b = conv["b"] * bn["s"] + bn["b"]
    return w, b


def prep_conv(w_hwio, b):
    KH, KW, Cin, Cout = w_hwio.shape
    return {"wm": w_hwio.reshape(KH * KW * Cin, Cout).astype(jnp.bfloat16),
            "b": b.astype(jnp.float32), "kh": KH, "kw": KW}


def prep_deconv(w_iohw, b):
    """ConvTranspose2d(4x4, stride=2, pad=1) as a 3x3 conv with 4 phase outputs."""
    Cin, Cout, KH, KW = w_iohw.shape
    wp = jnp.zeros((3, 3, Cin, 4 * Cout), jnp.float32)
    for di in range(2):
        for dj in range(2):
            p = di * 2 + dj
            for th in range(3):
                kh = di + 3 - 2 * th
                if not (0 <= kh < KH):
                    continue
                for tw in range(3):
                    kw = dj + 3 - 2 * tw
                    if not (0 <= kw < KW):
                        continue
                    wp = wp.at[th, tw, :, p * Cout:(p + 1) * Cout].set(
                        w_iohw[:, :, kh, kw])
    return {"wm": wp.reshape(9 * Cin, 4 * Cout).astype(jnp.bfloat16),
            "b": jnp.tile(b, 4).astype(jnp.float32),
            "kh": 3, "kw": 3, "cout": Cout}


def make_fuse_params(pg, c):
    bc = c // 4

    def cb(cin, cout, k):
        w, b = fold_conv_bn(pg.conv(cin, cout, k), pg.bn(cout))
        return prep_conv(w, b)

    return {"fh": cb(c, c, 1),
            "td1": cb(c, bc, 1),
            "td2": cb(bc, c, 1),
            "bu1": cb(c, bc, 1),
            "sa": prep_conv(pg.conv(2, 1, 3, bias=False)["w"],
                            jnp.zeros((1,), jnp.float32)),
            "post": cb(c, c, 3)}


def build_params(key):
    pg = ParamGen(key)
    ch = [8, 16, 32, 64]
    layers = [3, 3, 3]

    def conv_bn(cin, cout, k):
        return fold_conv_bn(pg.conv(cin, cout, k, bias=False), pg.bn(cout))

    def prep_conv_bn(cin, cout, k):
        w, b = conv_bn(cin, cout, k)
        return prep_conv(w, b)

    def make_block(cin, cout, stride):
        w1, b1 = conv_bn(cin, cout, 3)
        w2, b2 = conv_bn(cout, cout, 3)
        blk = {"stride": stride, "cout": cout, "conv2": prep_conv(w2, b2)}
        if stride != 1 or cin != cout:
            wd, bd = fold_conv_bn(pg.conv(cin, cout, 1, bias=False), pg.bn(cout))
            # embed the 1x1 downsample at the centre tap of a 3x3 kernel and
            # concat along Cout so conv1 + downsample share one matmul.
            wd3 = jnp.zeros((3, 3, cin, cout), jnp.float32).at[1, 1].set(wd[0, 0])
            blk["conv1ds"] = prep_conv(jnp.concatenate([w1, wd3], axis=-1),
                                       jnp.concatenate([b1, bd]))
        else:
            blk["conv1"] = prep_conv(w1, b1)
        return blk

    def make_layer(cin, cout, n, stride):
        blocks = [make_block(cin, cout, stride)]
        for _ in range(1, n):
            blocks.append(make_block(cout, cout, 1))
        return blocks

    P = {}
    P["stem"] = {"bn0": pg.bn(1),
                 "conv1": prep_conv_bn(1, ch[0], 3),
                 "conv2": prep_conv_bn(ch[0], ch[0], 3),
                 "conv3": prep_conv_bn(ch[0], ch[0] * 2, 3)}
    P["layer1"] = make_layer(ch[1], ch[1], layers[0], 1)
    P["layer2"] = make_layer(ch[1], ch[2], layers[1], 2)
    P["layer3"] = make_layer(ch[2], ch[3], layers[2], 2)
    dc2 = pg.convT(ch[3], ch[2], 4)
    P["deconv2"] = prep_deconv(dc2["w"], dc2["b"])
    P["uplayer2"] = make_layer(ch[2], ch[2], layers[1], 1)
    P["fuse2"] = make_fuse_params(pg, ch[2])
    c21 = pg.conv(64, 32, 3)
    P["conv2_1"] = prep_conv(c21["w"], c21["b"])
    c11 = pg.conv(32, 16, 3)
    P["conv1_1"] = prep_conv(c11["w"], c11["b"])
    dc1 = pg.convT(ch[2], ch[1], 4)
    P["deconv1"] = prep_deconv(dc1["w"], dc1["b"])
    P["uplayer1"] = make_layer(ch[1], ch[1], layers[0], 1)
    P["fuse1"] = make_fuse_params(pg, ch[1])
    P["head1"] = prep_conv_bn(ch[1], ch[1] // 4, 3)
    h2 = pg.conv(ch[1] // 4, 1, 1)
    P["head2"] = prep_conv(h2["w"], h2["b"])
    return P


# ----------------------------------------------------------------------------
# Model building blocks
# ----------------------------------------------------------------------------
def basic_block(x, p):
    cout, s = p["cout"], p["stride"]
    if "conv1ds" in p:                                   # conv1 + downsample fused
        both = conv_mm(x, p["conv1ds"], stride=s, pad=1, act="none")
        h = jnp.maximum(both[..., :cout], 0.0)
        ident = both[..., cout:]
    else:
        h = conv_mm(x, p["conv1"], stride=s, pad=1, act="relu")
        ident = x
    Nb, Ho, Wo, _ = h.shape
    res = ident.reshape(Nb * Ho * Wo, cout).astype(jnp.float32)
    # conv2 + BN + residual add + ReLU all in one kernel epilogue
    return conv_mm(h, p["conv2"], stride=1, pad=1, act="relu", residual=res)


def run_layer(x, blocks):
    for p in blocks:
        x = basic_block(x, p)
    return x


def stem_forward(x, p):
    x = x * p["bn0"]["s"] + p["bn0"]["b"]                # BatchNorm2d on input (eval)
    x = conv_mm(x, p["conv1"], 2, 1, "relu")
    x = conv_mm(x, p["conv2"], 1, 1, "relu")
    x = conv_mm(x, p["conv3"], 1, 1, "relu")
    return maxpool2d(x, 3, 2, 1)


def deconv_subpixel(x, dp):
    Nb, H, W, _ = x.shape
    Cout = dp["cout"]
    out = conv_mm(x, dp, stride=1, pad=1, act="none")    # (Nb, H, W, 4*Cout)
    out = out.reshape(Nb, H, W, 2, 2, Cout)
    out = jnp.transpose(out, (0, 1, 3, 2, 4, 5)).reshape(Nb, 2 * H, 2 * W, Cout)
    return out


def fuse_forward(xh, xl, p):
    # AsymBiChaFuseReduce
    xh = conv_mm(xh, p["fh"], 1, 0, "relu")
    g = jnp.mean(xh, axis=(1, 2), keepdims=True)                      # (Nb,1,1,C)
    t = conv_mm(g, p["td1"], 1, 0, "relu")
    topdown_wei = conv_mm(t, p["td2"], 1, 0, "sigmoid")               # (Nb,1,1,C)
    bu = conv_mm(xl * topdown_wei, p["bu1"], 1, 0, "relu")
    sa_in = jnp.concatenate([jnp.mean(bu, axis=-1, keepdims=True),
                             jnp.max(bu, axis=-1, keepdims=True)], axis=-1)
    bottomup_wei = conv_mm(sa_in, p["sa"], 1, 1, "sigmoid")           # (Nb,H,W,1)
    xs1 = 2.0 * xl * topdown_wei
    xs2 = 2.0 * xh * bottomup_wei
    # shared `post` conv: stack along M and run once
    stacked = jnp.concatenate([xs1, xs2], axis=0)
    post = conv_mm(stacked, p["post"], 1, 1, "relu")
    Nb = xh.shape[0]
    return post[:Nb], post[Nb:]


def askc_resunet_forward(x_nchw, P):
    x = jnp.transpose(x_nchw, (0, 2, 3, 1))              # NCHW -> NHWC
    x = stem_forward(x, P["stem"])
    c1 = run_layer(x, P["layer1"])
    c2 = run_layer(c1, P["layer2"])
    c3 = run_layer(c2, P["layer3"])

    deconvc2 = deconv_subpixel(c3, P["deconv2"])
    out1, out2 = fuse_forward(deconvc2, c2, P["fuse2"])
    fusec2 = jnp.concatenate([out1, out2], axis=-1)
    fusec2 = conv_mm(fusec2, P["conv2_1"], 1, 1, "none")
    upc2 = run_layer(fusec2, P["uplayer2"])

    deconvc1 = deconv_subpixel(upc2, P["deconv1"])
    out1, out2 = fuse_forward(deconvc1, c1, P["fuse1"])
    fusec1 = jnp.concatenate([out1, out2], axis=-1)
    fusec1 = conv_mm(fusec1, P["conv1_1"], 1, 1, "none")
    upc1 = run_layer(fusec1, P["uplayer1"])

    # _FCNHead (Dropout(0.1) is identity in eval mode)
    pred = conv_mm(upc1, P["head1"], 1, 1, "relu")
    pred = conv_mm(pred, P["head2"], 1, 0, "none")

    out = upsample_bilinear(pred, 4)
    out = jax.nn.sigmoid(out)
    return jnp.transpose(out, (0, 3, 1, 2))              # back to NCHW


if __name__ == "__main__":
    key = jax.random.PRNGKey(0)
    kx, kp = jax.random.split(key)
    x = jax.random.normal(kx, (2, 1, 16, 16), jnp.float32)  # NCHW, like PyTorch
    P = build_params(kp)

    fwd = jax.jit(lambda inp: askc_resunet_forward(inp, P))
    y = fwd(x)
    jax.block_until_ready(y)
    assert y.shape == (2, 1, 16, 16), y.shape
    assert bool(jnp.all(jnp.isfinite(y)))
    print("KERNEL_OK")
</pallas_src>

<mosaic_0001>
module attributes {stable_mosaic.version = 11 : i64} {
  func.func @_matmul_kernel(%arg0: i32, %arg1: memref<128x9xbf16, #tpu.memory_space<vmem>>, %arg2: memref<9x8xbf16, #tpu.memory_space<vmem>>, %arg3: memref<1x8xf32, #tpu.memory_space<vmem>>, %arg4: memref<128x8xf32, #tpu.memory_space<vmem>>) attributes {dimension_semantics = [#tpu.dimension_semantics<parallel>], iteration_bounds = array<i64: 1>, scalar_prefetch = 0 : i64, scratch_operands = 0 : i64, tpu.core_type = #tpu.core_type<tc>, window_params = [{transform_indices = @transform_0, window_bounds = array<i64: 128, 9>}, {pipeline_mode = #tpu.pipeline_mode<synchronous>, transform_indices = @transform_1, window_bounds = array<i64: 9, 8>}, {pipeline_mode = #tpu.pipeline_mode<synchronous>, transform_indices = @transform_2, window_bounds = array<i64: 1, 8>}, {transform_indices = @transform_3, window_bounds = array<i64: 128, 8>}]} {
    %c0 = arith.constant 0 : index
    %c0_0 = arith.constant 0 : index
    %0 = vector.load %arg1[%c0, %c0_0] : memref<128x9xbf16, #tpu.memory_space<vmem>>, vector<128x9xbf16>
    %c0_1 = arith.constant 0 : index
    %c0_2 = arith.constant 0 : index
    %1 = vector.load %arg2[%c0_1, %c0_2] : memref<9x8xbf16, #tpu.memory_space<vmem>>, vector<9x8xbf16>
    %cst = arith.constant dense<0.000000e+00> : vector<128x8xf32>
    %2 = tpu.matmul %0, %1, %cst {dimension_numbers = #tpu.dot_dimension_numbers<[1], [0], [0], [1], [0, 0, 1, 1], [], []>} : vector<128x9xbf16>, vector<9x8xbf16>, vector<128x8xf32> -> vector<128x8xf32>
    %c0_3 = arith.constant 0 : index
    %c0_4 = arith.constant 0 : index
    %3 = vector.load %arg3[%c0_3, %c0_4] : memref<1x8xf32, #tpu.memory_space<vmem>>, vector<1x8xf32>
    %4 = vector.broadcast %3 : vector<1x8xf32> to vector<128x8xf32>
    %5 = arith.addf %2, %4 : vector<128x8xf32>
    %cst_5 = arith.constant 0.000000e+00 : f32
    %6 = vector.broadcast %cst_5 : f32 to vector<128x8xf32>
    %7 = arith.maximumf %5, %6 : vector<128x8xf32>
    %c0_6 = arith.constant 0 : index
    %c0_7 = arith.constant 0 : index
    %8 = vector.load %arg4[%c0_6, %c0_7] : memref<128x8xf32, #tpu.memory_space<vmem>>, vector<128x8xf32>
    tpu.vector_store %arg4[%c0_6, %c0_7], %7 {strides = array<i32>} : memref<128x8xf32, #tpu.memory_space<vmem>>, vector<128x8xf32>,
    return
  }
  func.func @transform_0(%arg0: i32) -> (i32, i32) {
    %c0_i32 = arith.constant 0 : i32
    %c0_i32_0 = arith.constant 0 : i32
    return %arg0, %c0_i32 : i32, i32
  }
  func.func @transform_1(%arg0: i32) -> (i32, i32) {
    %c0_i32 = arith.constant 0 : i32
    %c0_i32_0 = arith.constant 0 : i32
    %c0_i32_1 = arith.constant 0 : i32
    return %c0_i32, %c0_i32_0 : i32, i32
  }
  func.func @transform_2(%arg0: i32) -> (i32, i32) {
    %c0_i32 = arith.constant 0 : i32
    %c0_i32_0 = arith.constant 0 : i32
    %c0_i32_1 = arith.constant 0 : i32
    return %c0_i32, %c0_i32_0 : i32, i32
  }
  func.func @transform_3(%arg0: i32) -> (i32, i32) {
    %c0_i32 = arith.constant 0 : i32
    %c0_i32_0 = arith.constant 0 : i32
    return %arg0, %c0_i32 : i32, i32
  }
}

module attributes {stable_mosaic.version = 11 : i64} {
  func.func @_matmul_kernel(%arg0: i32, %arg1: memref<128x72xbf16, #tpu.memory_space<vmem>>, %arg2: memref<72x8xbf16, #tpu.memory_space<vmem>>, %arg3: memref<1x8xf32, #tpu.memory_space<vmem>>, %arg4: memref<128x8xf32, #tpu.memory_space<vmem>>) attributes {dimension_semantics = [#tpu.dimension_semantics<parallel>], iteration_bounds = array<i64: 1>, scalar_prefetch = 0 : i64, scratch_operands = 0 : i64, tpu.core_type = #tpu.core_type<tc>, window_params = [{transform_indices = @transform_0, window_bounds = array<i64: 128, 72>}, {pipeline_mode = #tpu.pipeline_mode<synchronous>, transform_indices = @transform_1, window_bounds = array<i64: 72, 8>}, {pipeline_mode = #tpu.pipeline_mode<synchronous>, transform_indices = @transform_2, window_bounds = array<i64: 1, 8>}, {transform_indices = @transform_3, window_bounds = array<i64: 128, 8>}]} {
    %c0 = arith.constant 0 : index
    %c0_0 = arith.constant 0 : index
    %0 = vector.load %arg1[%c0, %c0_0] : memref<128x72xbf16, #tpu.memory_space<vmem>>, vector<128x72xbf16>
    %c0_1 = arith.constant 0 : index
    %c0_2 = arith.constant 0 : index
    %1 = vector.load %arg2[%c0_1, %c0_2] : memref<72x8xbf16, #tpu.memory_space<vmem>>, vector<72x8xbf16>
    %cst = arith.constant dense<0.000000e+00> : vector<128x8xf32>
    %2 = tpu.matmul %0, %1, %cst {dimension_numbers = #tpu.dot_dimension_numbers<[1], [0], [0], [1], [0, 0, 1, 1], [], []>} : vector<128x72xbf16>, vector<72x8xbf16>, vector<128x8xf32> -> vector<128x8xf32>
    %c0_3 = arith.constant 0 : index
    %c0_4 = arith.constant 0 : index
    %3 = vector.load %arg3[%c0_3, %c0_4] : memref<1x8xf32, #tpu.memory_space<vmem>>, vector<1x8xf32>
    %4 = vector.broadcast %3 : vector<1x8xf32> to vector<128x8xf32>
    %5 = arith.addf %2, %4 : vector<128x8xf32>
    %cst_5 = arith.constant 0.000000e+00 : f32
    %6 = vector.broadcast %cst_5 : f32 to vector<128x8xf32>
    %7 = arith.maximumf %5, %6 : vector<128x8xf32>
    %c0_6 = arith.constant 0 : index
    %c0_7 = arith.constant 0 : index
    %8 = vector.load %arg4[%c0_6, %c0_7] : memref<128x8xf32, #tpu.memory_space<vmem>>, vector<128x8xf32>
    tpu.vector_store %arg4[%c0_6, %c0_7], %7 {strides = array<i32>} : memref<128x8xf32, #tpu.memory_space<vmem>>, vector<128x8xf32>,
    return
  }
  func.func @transform_0(%arg0: i32) -> (i32, i32) {
    %c0_i32 = arith.constant 0 : i32
    %c0_i32_0 = arith.constant 0 : i32
    return %arg0, %c0_i32 : i32, i32
  }
  func.func @transform_1(%arg0: i32) -> (i32, i32) {
    %c0_i32 = arith.constant 0 : i32
    %c0_i32_0 = arith.constant 0 : i32
    %c0_i32_1 = arith.constant 0 : i32
    return %c0_i32, %c0_i32_0 : i32, i32
  }
  func.func @transform_2(%arg0: i32) -> (i32, i32) {
    %c0_i32 = arith.constant 0 : i32
    %c0_i32_0 = arith.constant 0 : i32
    %c0_i32_1 = arith.constant 0 : i32
    return %c0_i32, %c0_i32_0 : i32, i32
  }
  func.func @transform_3(%arg0: i32) -> (i32, i32) {
    %c0_i32 = arith.constant 0 : i32
    %c0_i32_0 = arith.constant 0 : i32
    return %arg0, %c0_i32 : i32, i32
  }
}

module attributes {stable_mosaic.version = 11 : i64} {
  func.func @_matmul_kernel(%arg0: i32, %arg1: memref<128x72xbf16, #tpu.memory_space<vmem>>, %arg2: memref<72x16xbf16, #tpu.memory_space<vmem>>, %arg3: memref<1x16xf32, #tpu.memory_space<vmem>>, %arg4: memref<128x16xf32, #tpu.memory_space<vmem>>) attributes {dimension_semantics = [#tpu.dimension_semantics<parallel>], iteration_bounds = array<i64: 1>, scalar_prefetch = 0 : i64, scratch_operands = 0 : i64, tpu.core_type = #tpu.core_type<tc>, window_params = [{transform_indices = @transform_0, window_bounds = array<i64: 128, 72>}, {pipeline_mode = #tpu.pipeline_mode<synchronous>, transform_indices = @transform_1, window_bounds = array<i64: 72, 16>}, {pipeline_mode = #tpu.pipeline_mode<synchronous>, transform_indices = @transform_2, window_bounds = array<i64: 1, 16>}, {transform_indices = @transform_3, window_bounds = array<i64: 128, 16>}]} {
    %c0 = arith.constant 0 : index
    %c0_0 = arith.constant 0 : index
    %0 = vector.load %arg1[%c0, %c0_0] : memref<128x72xbf16, #tpu.memory_space<vmem>>, vector<128x72xbf16>
    %c0_1 = arith.constant 0 : index
    %c0_2 = arith.constant 0 : index
    %1 = vector.load %arg2[%c0_1, %c0_2] : memref<72x16xbf16, #tpu.memory_space<vmem>>, vector<72x16xbf16>
    %cst = arith.constant dense<0.000000e+00> : vector<128x16xf32>
    %2 = tpu.matmul %0, %1, %cst {dimension_numbers = #tpu.dot_dimension_numbers<[1], [0], [0], [1], [0, 0, 1, 1], [], []>} : vector<128x72xbf16>, vector<72x16xbf16>, vector<128x16xf32> -> vector<128x16xf32>
    %c0_3 = arith.constant 0 : index
    %c0_4 = arith.constant 0 : index
    %3 = vector.load %arg3[%c0_3, %c0_4] : memref<1x16xf32, #tpu.memory_space<vmem>>, vector<1x16xf32>
    %4 = vector.broadcast %3 : vector<1x16xf32> to vector<128x16xf32>
    %5 = arith.addf %2, %4 : vector<128x16xf32>
    %cst_5 = arith.constant 0.000000e+00 : f32
    %6 = vector.broadcast %cst_5 : f32 to vector<128x16xf32>
    %7 = arith.maximumf %5, %6 : vector<128x16xf32>
    %c0_6 = arith.constant 0 : index
    %c0_7 = arith.constant 0 : index
    %8 = vector.load %arg4[%c0_6, %c0_7] : memref<128x16xf32, #tpu.memory_space<vmem>>, vector<128x16xf32>
    tpu.vector_store %arg4[%c0_6, %c0_7], %7 {strides = array<i32>} : memref<128x16xf32, #tpu.memory_space<vmem>>, vector<128x16xf32>,
    return
  }
  func.func @transform_0(%arg0: i32) -> (i32, i32) {
    %c0_i32 = arith.constant 0 : i32
    %c0_i32_0 = arith.constant 0 : i32
    return %arg0, %c0_i32 : i32, i32
  }
  func.func @transform_1(%arg0: i32) -> (i32, i32) {
    %c0_i32 = arith.constant 0 : i32
    %c0_i32_0 = arith.constant 0 : i32
    %c0_i32_1 = arith.constant 0 : i32
    return %c0_i32, %c0_i32_0 : i32, i32
  }
  func.func @transform_2(%arg0: i32) -> (i32, i32) {
    %c0_i32 = arith.constant 0 : i32
    %c0_i32_0 = arith.constant 0 : i32
    %c0_i32_1 = arith.constant 0 : i32
    return %c0_i32, %c0_i32_0 : i32, i32
  }
  func.func @transform_3(%arg0: i32) -> (i32, i32) {
    %c0_i32 = arith.constant 0 : i32
    %c0_i32_0 = arith.constant 0 : i32
    return %arg0, %c0_i32 : i32, i32
  }
}

module attributes {stable_mosaic.version = 11 : i64} {
  func.func @_matmul_kernel(%arg0: i32, %arg1: memref<32x144xbf16, #tpu.memory_space<vmem>>, %arg2: memref<144x16xbf16, #tpu.memory_space<vmem>>, %arg3: memref<1x16xf32, #tpu.memory_space<vmem>>, %arg4: memref<32x16xf32, #tpu.memory_space<vmem>>) attributes {dimension_semantics = [#tpu.dimension_semantics<parallel>], iteration_bounds = array<i64: 1>, scalar_prefetch = 0 : i64, scratch_operands = 0 : i64, tpu.core_type = #tpu.core_type<tc>, window_params = [{transform_indices = @transform_0, window_bounds = array<i64: 32, 144>}, {pipeline_mode = #tpu.pipeline_mode<synchronous>, transform_indices = @transform_1, window_bounds = array<i64: 144, 16>}, {pipeline_mode = #tpu.pipeline_mode<synchronous>, transform_indices = @transform_2, window_bounds = array<i64: 1, 16>}, {transform_indices = @transform_3, window_bounds = array<i64: 32, 16>}]} {
    %c0 = arith.constant 0 : index
    %c0_0 = arith.constant 0 : index
    %0 = vector.load %arg1[%c0, %c0_0] : memref<32x144xbf16, #tpu.memory_space<vmem>>, vector<32x144xbf16>
    %c0_1 = arith.constant 0 : index
    %c0_2 = arith.constant 0 : index
    %1 = vector.load %arg2[%c0_1, %c0_2] : memref<144x16xbf16, #tpu.memory_space<vmem>>, vector<144x16xbf16>
    %cst = arith.constant dense<0.000000e+00> : vector<32x16xf32>
    %2 = tpu.matmul %0, %1, %cst {dimension_numbers = #tpu.dot_dimension_numbers<[1], [0], [0], [1], [0, 0, 1, 1], [], []>} : vector<32x144xbf16>, vector<144x16xbf16>, vector<32x16xf32> -> vector<32x16xf32>
    %c0_3 = arith.constant 0 : index
    %c0_4 = arith.constant 0 : index
    %3 = vector.load %arg3[%c0_3, %c0_4] : memref<1x16xf32, #tpu.memory_space<vmem>>, vector<1x16xf32>
    %4 = vector.broadcast %3 : vector<1x16xf32> to vector<32x16xf32>
    %5 = arith.addf %2, %4 : vector<32x16xf32>
    %cst_5 = arith.constant 0.000000e+00 : f32
    %6 = vector.broadcast %cst_5 : f32 to vector<32x16xf32>
    %7 = arith.maximumf %5, %6 : vector<32x16xf32>
    %c0_6 = arith.constant 0 : index
    %c0_7 = arith.constant 0 : index
    %8 = vector.load %arg4[%c0_6, %c0_7] : memref<32x16xf32, #tpu.memory_space<vmem>>, vector<32x16xf32>
    tpu.vector_store %arg4[%c0_6, %c0_7], %7 {strides = array<i32>} : memref<32x16xf32, #tpu.memory_space<vmem>>, vector<32x16xf32>,
    return
  }
  func.func @transform_0(%arg0: i32) -> (i32, i32) {
    %c0_i32 = arith.constant 0 : i32
    %c0_i32_0 = arith.constant 0 : i32
    return %arg0, %c0_i32 : i32, i32
  }
  func.func @transform_1(%arg0: i32) -> (i32, i32) {
    %c0_i32 = arith.constant 0 : i32
    %c0_i32_0 = arith.constant 0 : i32
    %c0_i32_1 = arith.constant 0 : i32
    return %c0_i32, %c0_i32_0 : i32, i32
  }
  func.func @transform_2(%arg0: i32) -> (i32, i32) {
    %c0_i32 = arith.constant 0 : i32
    %c0_i32_0 = arith.constant 0 : i32
    %c0_i32_1 = arith.constant 0 : i32
    return %c0_i32, %c0_i32_0 : i32, i32
  }
  func.func @transform_3(%arg0: i32) -> (i32, i32) {
    %c0_i32 = arith.constant 0 : i32
    %c0_i32_0 = arith.constant 0 : i32
    return %arg0, %c0_i32 : i32, i32
  }
}

module attributes {stable_mosaic.version = 11 : i64} {
  func.func @_matmul_kernel(%arg0: i32, %arg1: memref<32x144xbf16, #tpu.memory_space<vmem>>, %arg2: memref<144x16xbf16, #tpu.memory_space<vmem>>, %arg3: memref<1x16xf32, #tpu.memory_space<vmem>>, %arg4: memref<32x16xf32, #tpu.memory_space<vmem>>, %arg5: memref<32x16xf32, #tpu.memory_space<vmem>>) attributes {dimension_semantics = [#tpu.dimension_semantics<parallel>], iteration_bounds = array<i64: 1>, scalar_prefetch = 0 : i64, scratch_operands = 0 : i64, tpu.core_type = #tpu.core_type<tc>, window_params = [{transform_indices = @transform_0, window_bounds = array<i64: 32, 144>}, {pipeline_mode = #tpu.pipeline_mode<synchronous>, transform_indices = @transform_1, window_bounds = array<i64: 144, 16>}, {pipeline_mode = #tpu.pipeline_mode<synchronous>, transform_indices = @transform_2, window_bounds = array<i64: 1, 16>}, {transform_indices = @transform_3, window_bounds = array<i64: 32, 16>}, {transform_indices = @transform_4, window_bounds = array<i64: 32, 16>}]} {
    %c0 = arith.constant 0 : index
    %c0_0 = arith.constant 0 : index
    %0 = vector.load %arg1[%c0, %c0_0] : memref<32x144xbf16, #tpu.memory_space<vmem>>, vector<32x144xbf16>
    %c0_1 = arith.constant 0 : index
    %c0_2 = arith.constant 0 : index
    %1 = vector.load %arg2[%c0_1, %c0_2] : memref<144x16xbf16, #tpu.memory_space<vmem>>, vector<144x16xbf16>
    %cst = arith.constant dense<0.000000e+00> : vector<32x16xf32>
    %2 = tpu.matmul %0, %1, %cst {dimension_numbers = #tpu.dot_dimension_numbers<[1], [0], [0], [1], [0, 0, 1, 1], [], []>} : vector<32x144xbf16>, vector<144x16xbf16>, vector<32x16xf32> -> vector<32x16xf32>
    %c0_3 = arith.constant 0 : index
    %c0_4 = arith.constant 0 : index
    %3 = vector.load %arg3[%c0_3, %c0_4] : memref<1x16xf32, #tpu.memory_space<vmem>>, vector<1x16xf32>
    %4 = vector.broadcast %3 : vector<1x16xf32> to vector<32x16xf32>
    %5 = arith.addf %2, %4 : vector<32x16xf32>
    %c0_5 = arith.constant 0 : index
    %c0_6 = arith.constant 0 : index
    %6 = vector.load %arg4[%c0_5, %c0_6] : memref<32x16xf32, #tpu.memory_space<vmem>>, vector<32x16xf32>
    %7 = arith.addf %5, %6 : vector<32x16xf32>
    %cst_7 = arith.constant 0.000000e+00 : f32
    %8 = vector.broadcast %cst_7 : f32 to vector<32x16xf32>
    %9 = arith.maximumf %7, %8 : vector<32x16xf32>
    %c0_8 = arith.constant 0 : index
    %c0_9 = arith.constant 0 : index
    %10 = vector.load %arg5[%c0_8, %c0_9] : memref<32x16xf32, #tpu.memory_space<vmem>>, vector<32x16xf32>
    tpu.vector_store %arg5[%c0_8, %c0_9], %9 {strides = array<i32>} : memref<32x16xf32, #tpu.memory_space<vmem>>, vector<32x16xf32>,
    return
  }
  func.func @transform_0(%arg0: i32) -> (i32, i32) {
    %c0_i32 = arith.constant 0 : i32
    %c0_i32_0 = arith.constant 0 : i32
    return %arg0, %c0_i32 : i32, i32
  }
  func.func @transform_1(%arg0: i32) -> (i32, i32) {
    %c0_i32 = arith.constant 0 : i32
    %c0_i32_0 = arith.constant 0 : i32
    %c0_i32_1 = arith.constant 0 : i32
    return %c0_i32, %c0_i32_0 : i32, i32
  }
  func.func @transform_2(%arg0: i32) -> (i32, i32) {
    %c0_i32 = arith.constant 0 : i32
    %c0_i32_0 = arith.constant 0 : i32
    %c0_i32_1 = arith.constant 0 : i32
    return %c0_i32, %c0_i32_0 : i32, i32
  }
  func.func @transform_3(%arg0: i32) -> (i32, i32) {
    %c0_i32 = arith.constant 0 : i32
    %c0_i32_0 = arith.constant 0 : i32
    return %arg0, %c0_i32 : i32, i32
  }
  func.func @transform_4(%arg0: i32) -> (i32, i32) {
    %c0_i32 = arith.constant 0 : i32
    %c0_i32_0 = arith.constant 0 : i32
    return %arg0, %c0_i32 : i32, i32
  }
}

module attributes {stable_mosaic.version = 11 : i64} {
  func.func @_matmul_kernel(%arg0: i32, %arg1: memref<8x144xbf16, #tpu.memory_space<vmem>>, %arg2: memref<144x64xbf16, #tpu.memory_space<vmem>>, %arg3: memref<1x64xf32, #tpu.memory_space<vmem>>, %arg4: memref<8x64xf32, #tpu.memory_space<vmem>>) attributes {dimension_semantics = [#tpu.dimension_semantics<parallel>], iteration_bounds = array<i64: 1>, scalar_prefetch = 0 : i64, scratch_operands = 0 : i64, tpu.core_type = #tpu.core_type<tc>, window_params = [{transform_indices = @transform_0, window_bounds = array<i64: 8, 144>}, {pipeline_mode = #tpu.pipeline_mode<synchronous>, transform_indices = @transform_1, window_bounds = array<i64: 144, 64>}, {pipeline_mode = #tpu.pipeline_mode<synchronous>, transform_indices = @transform_2, window_bounds = array<i64: 1, 64>}, {transform_indices = @transform_3, window_bounds = array<i64: 8, 64>}]} {
    %c0 = arith.constant 0 : index
    %c0_0 = arith.constant 0 : index
    %0 = vector.load %arg1[%c0, %c0_0] : memref<8x144xbf16, #tpu.memory_space<vmem>>, vector<8x144xbf16>
    %c0_1 = arith.constant 0 : index
    %c0_2 = arith.constant 0 : index
    %1 = vector.load %arg2[%c0_1, %c0_2] : memref<144x64xbf16, #tpu.memory_space<vmem>>, vector<144x64xbf16>
    %cst = arith.constant dense<0.000000e+00> : vector<8x64xf32>
    %2 = tpu.matmul %0, %1, %cst {dimension_numbers = #tpu.dot_dimension_numbers<[1], [0], [0], [1], [0, 0, 1, 1], [], []>} : vector<8x144xbf16>, vector<144x64xbf16>, vector<8x64xf32> -> vector<8x64xf32>
    %c0_3 = arith.constant 0 : index
    %c0_4 = arith.constant 0 : index
    %3 = vector.load %arg3[%c0_3, %c0_4] : memref<1x64xf32, #tpu.memory_space<vmem>>, vector<1x64xf32>
    %4 = vector.broadcast %3 : vector<1x64xf32> to vector<8x64xf32>
    %5 = arith.addf %2, %4 : vector<8x64xf32>
    %c0_5 = arith.constant 0 : index
    %c0_6 = arith.constant 0 : index
    %6 = vector.load %arg4[%c0_5, %c0_6] : memref<8x64xf32, #tpu.memory_space<vmem>>, vector<8x64xf32>
    tpu.vector_store %arg4[%c0_5, %c0_6], %5 {strides = array<i32>} : memref<8x64xf32, #tpu.memory_space<vmem>>, vector<8x64xf32>,
    return
  }
  func.func @transform_0(%arg0: i32) -> (i32, i32) {
    %c0_i32 = arith.constant 0 : i32
    %c0_i32_0 = arith.constant 0 : i32
    return %arg0, %c0_i32 : i32, i32
  }
  func.func @transform_1(%arg0: i32) -> (i32, i32) {
    %c0_i32 = arith.constant 0 : i32
    %c0_i32_0 = arith.constant 0 : i32
    %c0_i32_1 = arith.constant 0 : i32
    return %c0_i32, %c0_i32_0 : i32, i32
  }
  func.func @transform_2(%arg0: i32) -> (i32, i32) {
    %c0_i32 = arith.constant 0 : i32
    %c0_i32_0 = arith.constant 0 : i32
    %c0_i32_1 = arith.constant 0 : i32
    return %c0_i32, %c0_i32_0 : i32, i32
  }
  func.func @transform_3(%arg0: i32) -> (i32, i32) {
    %c0_i32 = arith.constant 0 : i32
    %c0_i32_0 = arith.constant 0 : i32
    return %arg0, %c0_i32 : i32, i32
  }
}

module attributes {stable_mosaic.version = 11 : i64} {
  func.func @_matmul_kernel(%arg0: i32, %arg1: memref<8x288xbf16, #tpu.memory_space<vmem>>, %arg2: memref<288x32xbf16, #tpu.memory_space<vmem>>, %arg3: memref<1x32xf32, #tpu.memory_space<vmem>>, %arg4: memref<8x32xf32, #tpu.memory_space<vmem>>) attributes {dimension_semantics = [#tpu.dimension_semantics<parallel>], iteration_bounds = array<i64: 1>, scalar_prefetch = 0 : i64, scratch_operands = 0 : i64, tpu.core_type = #tpu.core_type<tc>, window_params = [{transform_indices = @transform_0, window_bounds = array<i64: 8, 288>}, {pipeline_mode = #tpu.pipeline_mode<synchronous>, transform_indices = @transform_1, window_bounds = array<i64: 288, 32>}, {pipeline_mode = #tpu.pipeline_mode<synchronous>, transform_indices = @transform_2, window_bounds = array<i64: 1, 32>}, {transform_indices = @transform_3, window_bounds = array<i64: 8, 32>}]} {
    %c0 = arith.constant 0 : index
    %c0_0 = arith.constant 0 : index
    %0 = vector.load %arg1[%c0, %c0_0] : memref<8x288xbf16, #tpu.memory_space<vmem>>, vector<8x288xbf16>
    %c0_1 = arith.constant 0 : index
    %c0_2 = arith.constant 0 : index
    %1 = vector.load %arg2[%c0_1, %c0_2] : memref<288x32xbf16, #tpu.memory_space<vmem>>, vector<288x32xbf16>
    %cst = arith.constant dense<0.000000e+00> : vector<8x32xf32>
    %2 = tpu.matmul %0, %1, %cst {dimension_numbers = #tpu.dot_dimension_numbers<[1], [0], [0], [1], [0, 0, 1, 1], [], []>} : vector<8x288xbf16>, vector<288x32xbf16>, vector<8x32xf32> -> vector<8x32xf32>
    %c0_3 = arith.constant 0 : index
    %c0_4 = arith.constant 0 : index
    %3 = vector.load %arg3[%c0_3, %c0_4] : memref<1x32xf32, #tpu.memory_space<vmem>>, vector<1x32xf32>
    %4 = vector.broadcast %3 : vector<1x32xf32> to vector<8x32xf32>
    %5 = arith.addf %2, %4 : vector<8x32xf32>
    %cst_5 = arith.constant 0.000000e+00 : f32
    %6 = vector.broadcast %cst_5 : f32 to vector<8x32xf32>
    %7 = arith.maximumf %5, %6 : vector<8x32xf32>
    %c0_6 = arith.constant 0 : index
    %c0_7 = arith.constant 0 : index
    %8 = vector.load %arg4[%c0_6, %c0_7] : memref<8x32xf32, #tpu.memory_space<vmem>>, vector<8x32xf32>
    tpu.vector_store %arg4[%c0_6, %c0_7], %7 {strides = array<i32>} : memref<8x32xf32, #tpu.memory_space<vmem>>, vector<8x32xf32>,
    return
  }
  func.func @transform_0(%arg0: i32) -> (i32, i32) {
    %c0_i32 = arith.constant 0 : i32
    %c0_i32_0 = arith.constant 0 : i32
    return %arg0, %c0_i32 : i32, i32
  }
  func.func @transform_1(%arg0: i32) -> (i32, i32) {
    %c0_i32 = arith.constant 0 : i32
    %c0_i32_0 = arith.constant 0 : i32
    %c0_i32_1 = arith.constant 0 : i32
    return %c0_i32, %c0_i32_0 : i32, i32
  }
  func.func @transform_2(%arg0: i32) -> (i32, i32) {
    %c0_i32 = arith.constant 0 : i32
    %c0_i32_0 = arith.constant 0 : i32
    %c0_i32_1 = arith.constant 0 : i32
    return %c0_i32, %c0_i32_0 : i32, i32
  }
  func.func @transform_3(%arg0: i32) -> (i32, i32) {
    %c0_i32 = arith.constant 0 : i32
    %c0_i32_0 = arith.constant 0 : i32
    return %arg0, %c0_i32 : i32, i32
  }
}

module attributes {stable_mosaic.version = 11 : i64} {
  func.func @_matmul_kernel(%arg0: i32, %arg1: memref<8x288xbf16, #tpu.memory_space<vmem>>, %arg2: memref<288x32xbf16, #tpu.memory_space<vmem>>, %arg3: memref<1x32xf32, #tpu.memory_space<vmem>>, %arg4: memref<8x32xf32, #tpu.memory_space<vmem>>, %arg5: memref<8x32xf32, #tpu.memory_space<vmem>>) attributes {dimension_semantics = [#tpu.dimension_semantics<parallel>], iteration_bounds = array<i64: 1>, scalar_prefetch = 0 : i64, scratch_operands = 0 : i64, tpu.core_type = #tpu.core_type<tc>, window_params = [{transform_indices = @transform_0, window_bounds = array<i64: 8, 288>}, {pipeline_mode = #tpu.pipeline_mode<synchronous>, transform_indices = @transform_1, window_bounds = array<i64: 288, 32>}, {pipeline_mode = #tpu.pipeline_mode<synchronous>, transform_indices = @transform_2, window_bounds = array<i64: 1, 32>}, {transform_indices = @transform_3, window_bounds = array<i64: 8, 32>}, {transform_indices = @transform_4, window_bounds = array<i64: 8, 32>}]} {
    %c0 = arith.constant 0 : index
    %c0_0 = arith.constant 0 : index
    %0 = vector.load %arg1[%c0, %c0_0] : memref<8x288xbf16, #tpu.memory_space<vmem>>, vector<8x288xbf16>
    %c0_1 = arith.constant 0 : index
    %c0_2 = arith.constant 0 : index
    %1 = vector.load %arg2[%c0_1, %c0_2] : memref<288x32xbf16, #tpu.memory_space<vmem>>, vector<288x32xbf16>
    %cst = arith.constant dense<0.000000e+00> : vector<8x32xf32>
    %2 = tpu.matmul %0, %1, %cst {dimension_numbers = #tpu.dot_dimension_numbers<[1], [0], [0], [1], [0, 0, 1, 1], [], []>} : vector<8x288xbf16>, vector<288x32xbf16>, vector<8x32xf32> -> vector<8x32xf32>
    %c0_3 = arith.constant 0 : index
    %c0_4 = arith.constant 0 : index
    %3 = vector.load %arg3[%c0_3, %c0_4] : memref<1x32xf32, #tpu.memory_space<vmem>>, vector<1x32xf32>
    %4 = vector.broadcast %3 : vector<1x32xf32> to vector<8x32xf32>
    %5 = arith.addf %2, %4 : vector<8x32xf32>
    %c0_5 = arith.constant 0 : index
    %c0_6 = arith.constant 0 : index
    %6 = vector.load %arg4[%c0_5, %c0_6] : memref<8x32xf32, #tpu.memory_space<vmem>>, vector<8x32xf32>
    %7 = arith.addf %5, %6 : vector<8x32xf32>
    %cst_7 = arith.constant 0.000000e+00 : f32
    %8 = vector.broadcast %cst_7 : f32 to vector<8x32xf32>
    %9 = arith.maximumf %7, %8 : vector<8x32xf32>
    %c0_8 = arith.constant 0 : index
    %c0_9 = arith.constant 0 : index
    %10 = vector.load %arg5[%c0_8, %c0_9] : memref<8x32xf32, #tpu.memory_space<vmem>>, vector<8x32xf32>
    tpu.vector_store %arg5[%c0_8, %c0_9], %9 {strides = array<i32>} : memref<8x32xf32, #tpu.memory_space<vmem>>, vector<8x32xf32>,
    return
  }
  func.func @transform_0(%arg0: i32) -> (i32, i32) {
    %c0_i32 = arith.constant 0 : i32
    %c0_i32_0 = arith.constant 0 : i32
    return %arg0, %c0_i32 : i32, i32
  }
  func.func @transform_1(%arg0: i32) -> (i32, i32) {
    %c0_i32 = arith.constant 0 : i32
    %c0_i32_0 = arith.constant 0 : i32
    %c0_i32_1 = arith.constant 0 : i32
    return %c0_i32, %c0_i32_0 : i32, i32
  }
  func.func @transform_2(%arg0: i32) -> (i32, i32) {
    %c0_i32 = arith.constant 0 : i32
    %c0_i32_0 = arith.constant 0 : i32
    %c0_i32_1 = arith.constant 0 : i32
    return %c0_i32, %c0_i32_0 : i32, i32
  }
  func.func @transform_3(%arg0: i32) -> (i32, i32) {
    %c0_i32 = arith.constant 0 : i32
    %c0_i32_0 = arith.constant 0 : i32
    return %arg0, %c0_i32 : i32, i32
  }
  func.func @transform_4(%arg0: i32) -> (i32, i32) {
    %c0_i32 = arith.constant 0 : i32
    %c0_i32_0 = arith.constant 0 : i32
    return %arg0, %c0_i32 : i32, i32
  }
}

module attributes {stable_mosaic.version = 11 : i64} {
  func.func @_matmul_kernel(%arg0: i32, %arg1: memref<2x288xbf16, #tpu.memory_space<vmem>>, %arg2: memref<288x128xbf16, #tpu.memory_space<vmem>>, %arg3: memref<1x128xf32, #tpu.memory_space<vmem>>, %arg4: memref<2x128xf32, #tpu.memory_space<vmem>>) attributes {dimension_semantics = [#tpu.dimension_semantics<parallel>], iteration_bounds = array<i64: 1>, scalar_prefetch = 0 : i64, scratch_operands = 0 : i64, tpu.core_type = #tpu.core_type<tc>, window_params = [{transform_indices = @transform_0, window_bounds = array<i64: 2, 288>}, {pipeline_mode = #tpu.pipeline_mode<synchronous>, transform_indices = @transform_1, window_bounds = array<i64: 288, 128>}, {pipeline_mode = #tpu.pipeline_mode<synchronous>, transform_indices = @transform_2, window_bounds = array<i64: 1, 128>}, {transform_indices = @transform_3, window_bounds = array<i64: 2, 128>}]} {
    %c0 = arith.constant 0 : index
    %c0_0 = arith.constant 0 : index
    %0 = vector.load %arg1[%c0, %c0_0] : memref<2x288xbf16, #tpu.memory_space<vmem>>, vector<2x288xbf16>
    %c0_1 = arith.constant 0 : index
    %c0_2 = arith.constant 0 : index
    %1 = vector.load %arg2[%c0_1, %c0_2] : memref<288x128xbf16, #tpu.memory_space<vmem>>, vector<288x128xbf16>
    %cst = arith.constant dense<0.000000e+00> : vector<2x128xf32>
    %2 = tpu.matmul %0, %1, %cst {dimension_numbers = #tpu.dot_dimension_numbers<[1], [0], [0], [1], [0, 0, 1, 1], [], []>} : vector<2x288xbf16>, vector<288x128xbf16>, vector<2x128xf32> -> vector<2x128xf32>
    %c0_3 = arith.constant 0 : index
    %c0_4 = arith.constant 0 : index
    %3 = vector.load %arg3[%c0_3, %c0_4] : memref<1x128xf32, #tpu.memory_space<vmem>>, vector<1x128xf32>
    %4 = vector.broadcast %3 : vector<1x128xf32> to vector<2x128xf32>
    %5 = arith.addf %2, %4 : vector<2x128xf32>
    %c0_5 = arith.constant 0 : index
    %c0_6 = arith.constant 0 : index
    %6 = vector.load %arg4[%c0_5, %c0_6] : memref<2x128xf32, #tpu.memory_space<vmem>>, vector<2x128xf32>
    tpu.vector_store %arg4[%c0_5, %c0_6], %5 {strides = array<i32>} : memref<2x128xf32, #tpu.memory_space<vmem>>, vector<2x128xf32>,
    return
  }
  func.func @transform_0(%arg0: i32) -> (i32, i32) {
    %c0_i32 = arith.constant 0 : i32
    %c0_i32_0 = arith.constant 0 : i32
    return %arg0, %c0_i32 : i32, i32
  }
  func.func @transform_1(%arg0: i32) -> (i32, i32) {
    %c0_i32 = arith.constant 0 : i32
    %c0_i32_0 = arith.constant 0 : i32
    %c0_i32_1 = arith.constant 0 : i32
    return %c0_i32, %c0_i32_0 : i32, i32
  }
  func.func @transform_2(%arg0: i32) -> (i32, i32) {
    %c0_i32 = arith.constant 0 : i32
    %c0_i32_0 = arith.constant 0 : i32
    %c0_i32_1 = arith.constant 0 : i32
    return %c0_i32, %c0_i32_0 : i32, i32
  }
  func.func @transform_3(%arg0: i32) -> (i32, i32) {
    %c0_i32 = arith.constant 0 : i32
    %c0_i32_0 = arith.constant 0 : i32
    return %arg0, %c0_i32 : i32, i32
  }
}

module attributes {stable_mosaic.version = 11 : i64} {
  func.func @_matmul_kernel(%arg0: i32, %arg1: memref<2x576xbf16, #tpu.memory_space<vmem>>, %arg2: memref<576x64xbf16, #tpu.memory_space<vmem>>, %arg3: memref<1x64xf32, #tpu.memory_space<vmem>>, %arg4: memref<2x64xf32, #tpu.memory_space<vmem>>, %arg5: memref<2x64xf32, #tpu.memory_space<vmem>>) attributes {dimension_semantics = [#tpu.dimension_semantics<parallel>], iteration_bounds = array<i64: 1>, scalar_prefetch = 0 : i64, scratch_operands = 0 : i64, tpu.core_type = #tpu.core_type<tc>, window_params = [{transform_indices = @transform_0, window_bounds = array<i64: 2, 576>}, {pipeline_mode = #tpu.pipeline_mode<synchronous>, transform_indices = @transform_1, window_bounds = array<i64: 576, 64>}, {pipeline_mode = #tpu.pipeline_mode<synchronous>, transform_indices = @transform_2, window_bounds = array<i64: 1, 64>}, {transform_indices = @transform_3, window_bounds = array<i64: 2, 64>}, {transform_indices = @transform_4, window_bounds = array<i64: 2, 64>}]} {
    %c0 = arith.constant 0 : index
    %c0_0 = arith.constant 0 : index
    %0 = vector.load %arg1[%c0, %c0_0] : memref<2x576xbf16, #tpu.memory_space<vmem>>, vector<2x576xbf16>
    %c0_1 = arith.constant 0 : index
    %c0_2 = arith.constant 0 : index
    %1 = vector.load %arg2[%c0_1, %c0_2] : memref<576x64xbf16, #tpu.memory_space<vmem>>, vector<576x64xbf16>
    %cst = arith.constant dense<0.000000e+00> : vector<2x64xf32>
    %2 = tpu.matmul %0, %1, %cst {dimension_numbers = #tpu.dot_dimension_numbers<[1], [0], [0], [1], [0, 0, 1, 1], [], []>} : vector<2x576xbf16>, vector<576x64xbf16>, vector<2x64xf32> -> vector<2x64xf32>
    %c0_3 = arith.constant 0 : index
    %c0_4 = arith.constant 0 : index
    %3 = vector.load %arg3[%c0_3, %c0_4] : memref<1x64xf32, #tpu.memory_space<vmem>>, vector<1x64xf32>
    %4 = vector.broadcast %3 : vector<1x64xf32> to vector<2x64xf32>
    %5 = arith.addf %2, %4 : vector<2x64xf32>
    %c0_5 = arith.constant 0 : index
    %c0_6 = arith.constant 0 : index
    %6 = vector.load %arg4[%c0_5, %c0_6] : memref<2x64xf32, #tpu.memory_space<vmem>>, vector<2x64xf32>
    %7 = arith.addf %5, %6 : vector<2x64xf32>
    %cst_7 = arith.constant 0.000000e+00 : f32
    %8 = vector.broadcast %cst_7 : f32 to vector<2x64xf32>
    %9 = arith.maximumf %7, %8 : vector<2x64xf32>
    %c0_8 = arith.constant 0 : index
    %c0_9 = arith.constant 0 : index
    %10 = vector.load %arg5[%c0_8, %c0_9] : memref<2x64xf32, #tpu.memory_space<vmem>>, vector<2x64xf32>
    tpu.vector_store %arg5[%c0_8, %c0_9], %9 {strides = array<i32>} : memref<2x64xf32, #tpu.memory_space<vmem>>, vector<2x64xf32>,
    return
  }
  func.func @transform_0(%arg0: i32) -> (i32, i32) {
    %c0_i32 = arith.constant 0 : i32
    %c0_i32_0 = arith.constant 0 : i32
    return %arg0, %c0_i32 : i32, i32
  }
  func.func @transform_1(%arg0: i32) -> (i32, i32) {
    %c0_i32 = arith.constant 0 : i32
    %c0_i32_0 = arith.constant 0 : i32
    %c0_i32_1 = arith.constant 0 : i32
    return %c0_i32, %c0_i32_0 : i32, i32
  }
  func.func @transform_2(%arg0: i32) -> (i32, i32) {
    %c0_i32 = arith.constant 0 : i32
    %c0_i32_0 = arith.constant 0 : i32
    %c0_i32_1 = arith.constant 0 : i32
    return %c0_i32, %c0_i32_0 : i32, i32
  }
  func.func @transform_3(%arg0: i32) -> (i32, i32) {
    %c0_i32 = arith.constant 0 : i32
    %c0_i32_0 = arith.constant 0 : i32
    return %arg0, %c0_i32 : i32, i32
  }
  func.func @transform_4(%arg0: i32) -> (i32, i32) {
    %c0_i32 = arith.constant 0 : i32
    %c0_i32_0 = arith.constant 0 : i32
    return %arg0, %c0_i32 : i32, i32
  }
}

module attributes {stable_mosaic.version = 11 : i64} {
  func.func @_matmul_kernel(%arg0: i32, %arg1: memref<2x576xbf16, #tpu.memory_space<vmem>>, %arg2: memref<576x64xbf16, #tpu.memory_space<vmem>>, %arg3: memref<1x64xf32, #tpu.memory_space<vmem>>, %arg4: memref<2x64xf32, #tpu.memory_space<vmem>>) attributes {dimension_semantics = [#tpu.dimension_semantics<parallel>], iteration_bounds = array<i64: 1>, scalar_prefetch = 0 : i64, scratch_operands = 0 : i64, tpu.core_type = #tpu.core_type<tc>, window_params = [{transform_indices = @transform_0, window_bounds = array<i64: 2, 576>}, {pipeline_mode = #tpu.pipeline_mode<synchronous>, transform_indices = @transform_1, window_bounds = array<i64: 576, 64>}, {pipeline_mode = #tpu.pipeline_mode<synchronous>, transform_indices = @transform_2, window_bounds = array<i64: 1, 64>}, {transform_indices = @transform_3, window_bounds = array<i64: 2, 64>}]} {
    %c0 = arith.constant 0 : index
    %c0_0 = arith.constant 0 : index
    %0 = vector.load %arg1[%c0, %c0_0] : memref<2x576xbf16, #tpu.memory_space<vmem>>, vector<2x576xbf16>
    %c0_1 = arith.constant 0 : index
    %c0_2 = arith.constant 0 : index
    %1 = vector.load %arg2[%c0_1, %c0_2] : memref<576x64xbf16, #tpu.memory_space<vmem>>, vector<576x64xbf16>
    %cst = arith.constant dense<0.000000e+00> : vector<2x64xf32>
    %2 = tpu.matmul %0, %1, %cst {dimension_numbers = #tpu.dot_dimension_numbers<[1], [0], [0], [1], [0, 0, 1, 1], [], []>} : vector<2x576xbf16>, vector<576x64xbf16>, vector<2x64xf32> -> vector<2x64xf32>
    %c0_3 = arith.constant 0 : index
    %c0_4 = arith.constant 0 : index
    %3 = vector.load %arg3[%c0_3, %c0_4] : memref<1x64xf32, #tpu.memory_space<vmem>>, vector<1x64xf32>
    %4 = vector.broadcast %3 : vector<1x64xf32> to vector<2x64xf32>
    %5 = arith.addf %2, %4 : vector<2x64xf32>
    %cst_5 = arith.constant 0.000000e+00 : f32
    %6 = vector.broadcast %cst_5 : f32 to vector<2x64xf32>
    %7 = arith.maximumf %5, %6 : vector<2x64xf32>
    %c0_6 = arith.constant 0 : index
    %c0_7 = arith.constant 0 : index
    %8 = vector.load %arg4[%c0_6, %c0_7] : memref<2x64xf32, #tpu.memory_space<vmem>>, vector<2x64xf32>
    tpu.vector_store %arg4[%c0_6, %c0_7], %7 {strides = array<i32>} : memref<2x64xf32, #tpu.memory_space<vmem>>, vector<2x64xf32>,
    return
  }
  func.func @transform_0(%arg0: i32) -> (i32, i32) {
    %c0_i32 = arith.constant 0 : i32
    %c0_i32_0 = arith.constant 0 : i32
    return %arg0, %c0_i32 : i32, i32
  }
  func.func @transform_1(%arg0: i32) -> (i32, i32) {
    %c0_i32 = arith.constant 0 : i32
    %c0_i32_0 = arith.constant 0 : i32
    %c0_i32_1 = arith.constant 0 : i32
    return %c0_i32, %c0_i32_0 : i32, i32
  }
  func.func @transform_2(%arg0: i32) -> (i32, i32) {
    %c0_i32 = arith.constant 0 : i32
    %c0_i32_0 = arith.constant 0 : i32
    %c0_i32_1 = arith.constant 0 : i32
    return %c0_i32, %c0_i32_0 : i32, i32
  }
  func.func @transform_3(%arg0: i32) -> (i32, i32) {
    %c0_i32 = arith.constant 0 : i32
    %c0_i32_0 = arith.constant 0 : i32
    return %arg0, %c0_i32 : i32, i32
  }
}

module attributes {stable_mosaic.version = 11 : i64} {
  func.func @_matmul_kernel(%arg0: i32, %arg1: memref<2x576xbf16, #tpu.memory_space<vmem>>, %arg2: memref<576x128xbf16, #tpu.memory_space<vmem>>, %arg3: memref<1x128xf32, #tpu.memory_space<vmem>>, %arg4: memref<2x128xf32, #tpu.memory_space<vmem>>) attributes {dimension_semantics = [#tpu.dimension_semantics<parallel>], iteration_bounds = array<i64: 1>, scalar_prefetch = 0 : i64, scratch_operands = 0 : i64, tpu.core_type = #tpu.core_type<tc>, window_params = [{transform_indices = @transform_0, window_bounds = array<i64: 2, 576>}, {pipeline_mode = #tpu.pipeline_mode<synchronous>, transform_indices = @transform_1, window_bounds = array<i64: 576, 128>}, {pipeline_mode = #tpu.pipeline_mode<synchronous>, transform_indices = @transform_2, window_bounds = array<i64: 1, 128>}, {transform_indices = @transform_3, window_bounds = array<i64: 2, 128>}]} {
    %c0 = arith.constant 0 : index
    %c0_0 = arith.constant 0 : index
    %0 = vector.load %arg1[%c0, %c0_0] : memref<2x576xbf16, #tpu.memory_space<vmem>>, vector<2x576xbf16>
    %c0_1 = arith.constant 0 : index
    %c0_2 = arith.constant 0 : index
    %1 = vector.load %arg2[%c0_1, %c0_2] : memref<576x128xbf16, #tpu.memory_space<vmem>>, vector<576x128xbf16>
    %cst = arith.constant dense<0.000000e+00> : vector<2x128xf32>
    %2 = tpu.matmul %0, %1, %cst {dimension_numbers = #tpu.dot_dimension_numbers<[1], [0], [0], [1], [0, 0, 1, 1], [], []>} : vector<2x576xbf16>, vector<576x128xbf16>, vector<2x128xf32> -> vector<2x128xf32>
    %c0_3 = arith.constant 0 : index
    %c0_4 = arith.constant 0 : index
    %3 = vector.load %arg3[%c0_3, %c0_4] : memref<1x128xf32, #tpu.memory_space<vmem>>, vector<1x128xf32>
    %4 = vector.broadcast %3 : vector<1x128xf32> to vector<2x128xf32>
    %5 = arith.addf %2, %4 : vector<2x128xf32>
    %c0_5 = arith.constant 0 : index
    %c0_6 = arith.constant 0 : index
    %6 = vector.load %arg4[%c0_5, %c0_6] : memref<2x128xf32, #tpu.memory_space<vmem>>, vector<2x128xf32>
    tpu.vector_store %arg4[%c0_5, %c0_6], %5 {strides = array<i32>} : memref<2x128xf32, #tpu.memory_space<vmem>>, vector<2x128xf32>,
    return
  }
  func.func @transform_0(%arg0: i32) -> (i32, i32) {
    %c0_i32 = arith.constant 0 : i32
    %c0_i32_0 = arith.constant 0 : i32
    return %arg0, %c0_i32 : i32, i32
  }
  func.func @transform_1(%arg0: i32) -> (i32, i32) {
    %c0_i32 = arith.constant 0 : i32
    %c0_i32_0 = arith.constant 0 : i32
    %c0_i32_1 = arith.constant 0 : i32
    return %c0_i32, %c0_i32_0 : i32, i32
  }
  func.func @transform_2(%arg0: i32) -> (i32, i32) {
    %c0_i32 = arith.constant 0 : i32
    %c0_i32_0 = arith.constant 0 : i32
    %c0_i32_1 = arith.constant 0 : i32
    return %c0_i32, %c0_i32_0 : i32, i32
  }
  func.func @transform_3(%arg0: i32) -> (i32, i32) {
    %c0_i32 = arith.constant 0 : i32
    %c0_i32_0 = arith.constant 0 : i32
    return %arg0, %c0_i32 : i32, i32
  }
}

module attributes {stable_mosaic.version = 11 : i64} {
  func.func @_matmul_kernel(%arg0: i32, %arg1: memref<8x32xbf16, #tpu.memory_space<vmem>>, %arg2: memref<32x32xbf16, #tpu.memory_space<vmem>>, %arg3: memref<1x32xf32, #tpu.memory_space<vmem>>, %arg4: memref<8x32xf32, #tpu.memory_space<vmem>>) attributes {dimension_semantics = [#tpu.dimension_semantics<parallel>], iteration_bounds = array<i64: 1>, scalar_prefetch = 0 : i64, scratch_operands = 0 : i64, tpu.core_type = #tpu.core_type<tc>, window_params = [{transform_indices = @transform_0, window_bounds = array<i64: 8, 32>}, {pipeline_mode = #tpu.pipeline_mode<synchronous>, transform_indices = @transform_1, window_bounds = array<i64: 32, 32>}, {pipeline_mode = #tpu.pipeline_mode<synchronous>, transform_indices = @transform_2, window_bounds = array<i64: 1, 32>}, {transform_indices = @transform_3, window_bounds = array<i64: 8, 32>}]} {
    %c0 = arith.constant 0 : index
    %c0_0 = arith.constant 0 : index
    %0 = vector.load %arg1[%c0, %c0_0] : memref<8x32xbf16, #tpu.memory_space<vmem>>, vector<8x32xbf16>
    %c0_1 = arith.constant 0 : index
    %c0_2 = arith.constant 0 : index
    %1 = vector.load %arg2[%c0_1, %c0_2] : memref<32x32xbf16, #tpu.memory_space<vmem>>, vector<32x32xbf16>
    %cst = arith.constant dense<0.000000e+00> : vector<8x32xf32>
    %2 = tpu.matmul %0, %1, %cst {dimension_numbers = #tpu.dot_dimension_numbers<[1], [0], [0], [1], [0, 0, 1, 1], [], []>} : vector<8x32xbf16>, vector<32x32xbf16>, vector<8x32xf32> -> vector<8x32xf32>
    %c0_3 = arith.constant 0 : index
    %c0_4 = arith.constant 0 : index
    %3 = vector.load %arg3[%c0_3, %c0_4] : memref<1x32xf32, #tpu.memory_space<vmem>>, vector<1x32xf32>
    %4 = vector.broadcast %3 : vector<1x32xf32> to vector<8x32xf32>
    %5 = arith.addf %2, %4 : vector<8x32xf32>
    %cst_5 = arith.constant 0.000000e+00 : f32
    %6 = vector.broadcast %cst_5 : f32 to vector<8x32xf32>
    %7 = arith.maximumf %5, %6 : vector<8x32xf32>
    %c0_6 = arith.constant 0 : index
    %c0_7 = arith.constant 0 : index
    %8 = vector.load %arg4[%c0_6, %c0_7] : memref<8x32xf32, #tpu.memory_space<vmem>>, vector<8x32xf32>
    tpu.vector_store %arg4[%c0_6, %c0_7], %7 {strides = array<i32>} : memref<8x32xf32, #tpu.memory_space<vmem>>, vector<8x32xf32>,
    return
  }
  func.func @transform_0(%arg0: i32) -> (i32, i32) {
    %c0_i32 = arith.constant 0 : i32
    %c0_i32_0 = arith.constant 0 : i32
    return %arg0, %c0_i32 : i32, i32
  }
  func.func @transform_1(%arg0: i32) -> (i32, i32) {
    %c0_i32 = arith.constant 0 : i32
    %c0_i32_0 = arith.constant 0 : i32
    %c0_i32_1 = arith.constant 0 : i32
    return %c0_i32, %c0_i32_0 : i32, i32
  }
  func.func @transform_2(%arg0: i32) -> (i32, i32) {
    %c0_i32 = arith.constant 0 : i32
    %c0_i32_0 = arith.constant 0 : i32
    %c0_i32_1 = arith.constant 0 : i32
    return %c0_i32, %c0_i32_0 : i32, i32
  }
  func.func @transform_3(%arg0: i32) -> (i32, i32) {
    %c0_i32 = arith.constant 0 : i32
    %c0_i32_0 = arith.constant 0 : i32
    return %arg0, %c0_i32 : i32, i32
  }
}

module attributes {stable_mosaic.version = 11 : i64} {
  func.func @_matmul_kernel(%arg0: i32, %arg1: memref<2x32xbf16, #tpu.memory_space<vmem>>, %arg2: memref<32x8xbf16, #tpu.memory_space<vmem>>, %arg3: memref<1x8xf32, #tpu.memory_space<vmem>>, %arg4: memref<2x8xf32, #tpu.memory_space<vmem>>) attributes {dimension_semantics = [#tpu.dimension_semantics<parallel>], iteration_bounds = array<i64: 1>, scalar_prefetch = 0 : i64, scratch_operands = 0 : i64, tpu.core_type = #tpu.core_type<tc>, window_params = [{transform_indices = @transform_0, window_bounds = array<i64: 2, 32>}, {pipeline_mode = #tpu.pipeline_mode<synchronous>, transform_indices = @transform_1, window_bounds = array<i64: 32, 8>}, {pipeline_mode = #tpu.pipeline_mode<synchronous>, transform_indices = @transform_2, window_bounds = array<i64: 1, 8>}, {transform_indices = @transform_3, window_bounds = array<i64: 2, 8>}]} {
    %c0 = arith.constant 0 : index
    %c0_0 = arith.constant 0 : index
    %0 = vector.load %arg1[%c0, %c0_0] : memref<2x32xbf16, #tpu.memory_space<vmem>>, vector<2x32xbf16>
    %c0_1 = arith.constant 0 : index
    %c0_2 = arith.constant 0 : index
    %1 = vector.load %arg2[%c0_1, %c0_2] : memref<32x8xbf16, #tpu.memory_space<vmem>>, vector<32x8xbf16>
    %cst = arith.constant dense<0.000000e+00> : vector<2x8xf32>
    %2 = tpu.matmul %0, %1, %cst {dimension_numbers = #tpu.dot_dimension_numbers<[1], [0], [0], [1], [0, 0, 1, 1], [], []>} : vector<2x32xbf16>, vector<32x8xbf16>, vector<2x8xf32> -> vector<2x8xf32>
    %c0_3 = arith.constant 0 : index
    %c0_4 = arith.constant 0 : index
    %3 = vector.load %arg3[%c0_3, %c0_4] : memref<1x8xf32, #tpu.memory_space<vmem>>, vector<1x8xf32>
    %4 = vector.broadcast %3 : vector<1x8xf32> to vector<2x8xf32>
    %5 = arith.addf %2, %4 : vector<2x8xf32>
    %cst_5 = arith.constant 0.000000e+00 : f32
    %6 = vector.broadcast %cst_5 : f32 to vector<2x8xf32>
    %7 = arith.maximumf %5, %6 : vector<2x8xf32>
    %c0_6 = arith.constant 0 : index
    %c0_7 = arith.constant 0 : index
    %8 = vector.load %arg4[%c0_6, %c0_7] : memref<2x8xf32, #tpu.memory_space<vmem>>, vector<2x8xf32>
    tpu.vector_store %arg4[%c0_6, %c0_7], %7 {strides = array<i32>} : memref<2x8xf32, #tpu.memory_space<vmem>>, vector<2x8xf32>,
    return
  }
  func.func @transform_0(%arg0: i32) -> (i32, i32) {
    %c0_i32 = arith.constant 0 : i32
    %c0_i32_0 = arith.constant 0 : i32
    return %arg0, %c0_i32 : i32, i32
  }
  func.func @transform_1(%arg0: i32) -> (i32, i32) {
    %c0_i32 = arith.constant 0 : i32
    %c0_i32_0 = arith.constant 0 : i32
    %c0_i32_1 = arith.constant 0 : i32
    return %c0_i32, %c0_i32_0 : i32, i32
  }
  func.func @transform_2(%arg0: i32) -> (i32, i32) {
    %c0_i32 = arith.constant 0 : i32
    %c0_i32_0 = arith.constant 0 : i32
    %c0_i32_1 = arith.constant 0 : i32
    return %c0_i32, %c0_i32_0 : i32, i32
  }
  func.func @transform_3(%arg0: i32) -> (i32, i32) {
    %c0_i32 = arith.constant 0 : i32
    %c0_i32_0 = arith.constant 0 : i32
    return %arg0, %c0_i32 : i32, i32
  }
}

module attributes {stable_mosaic.version = 11 : i64} {
  func.func @_matmul_kernel(%arg0: i32, %arg1: memref<2x8xbf16, #tpu.memory_space<vmem>>, %arg2: memref<8x32xbf16, #tpu.memory_space<vmem>>, %arg3: memref<1x32xf32, #tpu.memory_space<vmem>>, %arg4: memref<2x32xf32, #tpu.memory_space<vmem>>) attributes {dimension_semantics = [#tpu.dimension_semantics<parallel>], iteration_bounds = array<i64: 1>, scalar_prefetch = 0 : i64, scratch_operands = 0 : i64, tpu.core_type = #tpu.core_type<tc>, window_params = [{transform_indices = @transform_0, window_bounds = array<i64: 2, 8>}, {pipeline_mode = #tpu.pipeline_mode<synchronous>, transform_indices = @transform_1, window_bounds = array<i64: 8, 32>}, {pipeline_mode = #tpu.pipeline_mode<synchronous>, transform_indices = @transform_2, window_bounds = array<i64: 1, 32>}, {transform_indices = @transform_3, window_bounds = array<i64: 2, 32>}]} {
    %c0 = arith.constant 0 : index
    %c0_0 = arith.constant 0 : index
    %0 = vector.load %arg1[%c0, %c0_0] : memref<2x8xbf16, #tpu.memory_space<vmem>>, vector<2x8xbf16>
    %c0_1 = arith.constant 0 : index
    %c0_2 = arith.constant 0 : index
    %1 = vector.load %arg2[%c0_1, %c0_2] : memref<8x32xbf16, #tpu.memory_space<vmem>>, vector<8x32xbf16>
    %cst = arith.constant dense<0.000000e+00> : vector<2x32xf32>
    %2 = tpu.matmul %0, %1, %cst {dimension_numbers = #tpu.dot_dimension_numbers<[1], [0], [0], [1], [0, 0, 1, 1], [], []>} : vector<2x8xbf16>, vector<8x32xbf16>, vector<2x32xf32> -> vector<2x32xf32>
    %c0_3 = arith.constant 0 : index
    %c0_4 = arith.constant 0 : index
    %3 = vector.load %arg3[%c0_3, %c0_4] : memref<1x32xf32, #tpu.memory_space<vmem>>, vector<1x32xf32>
    %4 = vector.broadcast %3 : vector<1x32xf32> to vector<2x32xf32>
    %5 = arith.addf %2, %4 : vector<2x32xf32>
    %cst_5 = arith.constant 0.000000e+00 : f32
    %6 = vector.broadcast %cst_5 : f32 to vector<2x32xf32>
    %7 = arith.subf %6, %5 : vector<2x32xf32>
    %8 = math.exp %7 : vector<2x32xf32>
    %cst_6 = arith.constant 1.000000e+00 : f32
    %9 = vector.broadcast %cst_6 : f32 to vector<2x32xf32>
    %10 = arith.addf %9, %8 : vector<2x32xf32>
    %11 = tpu.reciprocal %10 {approx = true} : vector<2x32xf32> -> vector<2x32xf32>
    %c0_7 = arith.constant 0 : index
    %c0_8 = arith.constant 0 : index
    %12 = vector.load %arg4[%c0_7, %c0_8] : memref<2x32xf32, #tpu.memory_space<vmem>>, vector<2x32xf32>
    tpu.vector_store %arg4[%c0_7, %c0_8], %11 {strides = array<i32>} : memref<2x32xf32, #tpu.memory_space<vmem>>, vector<2x32xf32>,
    return
  }
  func.func @transform_0(%arg0: i32) -> (i32, i32) {
    %c0_i32 = arith.constant 0 : i32
    %c0_i32_0 = arith.constant 0 : i32
    return %arg0, %c0_i32 : i32, i32
  }
  func.func @transform_1(%arg0: i32) -> (i32, i32) {
    %c0_i32 = arith.constant 0 : i32
    %c0_i32_0 = arith.constant 0 : i32
    %c0_i32_1 = arith.constant 0 : i32
    return %c0_i32, %c0_i32_0 : i32, i32
  }
  func.func @transform_2(%arg0: i32) -> (i32, i32) {
    %c0_i32 = arith.constant 0 : i32
    %c0_i32_0 = arith.constant 0 : i32
    %c0_i32_1 = arith.constant 0 : i32
    return %c0_i32, %c0_i32_0 : i32, i32
  }
  func.func @transform_3(%arg0: i32) -> (i32, i32) {
    %c0_i32 = arith.constant 0 : i32
    %c0_i32_0 = arith.constant 0 : i32
    return %arg0, %c0_i32 : i32, i32
  }
}

module attributes {stable_mosaic.version = 11 : i64} {
  func.func @_matmul_kernel(%arg0: i32, %arg1: memref<8x32xbf16, #tpu.memory_space<vmem>>, %arg2: memref<32x8xbf16, #tpu.memory_space<vmem>>, %arg3: memref<1x8xf32, #tpu.memory_space<vmem>>, %arg4: memref<8x8xf32, #tpu.memory_space<vmem>>) attributes {dimension_semantics = [#tpu.dimension_semantics<parallel>], iteration_bounds = array<i64: 1>, scalar_prefetch = 0 : i64, scratch_operands = 0 : i64, tpu.core_type = #tpu.core_type<tc>, window_params = [{transform_indices = @transform_0, window_bounds = array<i64: 8, 32>}, {pipeline_mode = #tpu.pipeline_mode<synchronous>, transform_indices = @transform_1, window_bounds = array<i64: 32, 8>}, {pipeline_mode = #tpu.pipeline_mode<synchronous>, transform_indices = @transform_2, window_bounds = array<i64: 1, 8>}, {transform_indices = @transform_3, window_bounds = array<i64: 8, 8>}]} {
    %c0 = arith.constant 0 : index
    %c0_0 = arith.constant 0 : index
    %0 = vector.load %arg1[%c0, %c0_0] : memref<8x32xbf16, #tpu.memory_space<vmem>>, vector<8x32xbf16>
    %c0_1 = arith.constant 0 : index
    %c0_2 = arith.constant 0 : index
    %1 = vector.load %arg2[%c0_1, %c0_2] : memref<32x8xbf16, #tpu.memory_space<vmem>>, vector<32x8xbf16>
    %cst = arith.constant dense<0.000000e+00> : vector<8x8xf32>
    %2 = tpu.matmul %0, %1, %cst {dimension_numbers = #tpu.dot_dimension_numbers<[1], [0], [0], [1], [0, 0, 1, 1], [], []>} : vector<8x32xbf16>, vector<32x8xbf16>, vector<8x8xf32> -> vector<8x8xf32>
    %c0_3 = arith.constant 0 : index
    %c0_4 = arith.constant 0 : index
    %3 = vector.load %arg3[%c0_3, %c0_4] : memref<1x8xf32, #tpu.memory_space<vmem>>, vector<1x8xf32>
    %4 = vector.broadcast %3 : vector<1x8xf32> to vector<8x8xf32>
    %5 = arith.addf %2, %4 : vector<8x8xf32>
    %cst_5 = arith.constant 0.000000e+00 : f32
    %6 = vector.broadcast %cst_5 : f32 to vector<8x8xf32>
    %7 = arith.maximumf %5, %6 : vector<8x8xf32>
    %c0_6 = arith.constant 0 : index
    %c0_7 = arith.constant 0 : index
    %8 = vector.load %arg4[%c0_6, %c0_7] : memref<8x8xf32, #tpu.memory_space<vmem>>, vector<8x8xf32>
    tpu.vector_store %arg4[%c0_6, %c0_7], %7 {strides = array<i32>} : memref<8x8xf32, #tpu.memory_space<vmem>>, vector<8x8xf32>,
    return
  }
  func.func @transform_0(%arg0: i32) -> (i32, i32) {
    %c0_i32 = arith.constant 0 : i32
    %c0_i32_0 = arith.constant 0 : i32
    return %arg0, %c0_i32 : i32, i32
  }
  func.func @transform_1(%arg0: i32) -> (i32, i32) {
    %c0_i32 = arith.constant 0 : i32
    %c0_i32_0 = arith.constant 0 : i32
    %c0_i32_1 = arith.constant 0 : i32
    return %c0_i32, %c0_i32_0 : i32, i32
  }
  func.func @transform_2(%arg0: i32) -> (i32, i32) {
    %c0_i32 = arith.constant 0 : i32
    %c0_i32_0 = arith.constant 0 : i32
    %c0_i32_1 = arith.constant 0 : i32
    return %c0_i32, %c0_i32_0 : i32, i32
  }
  func.func @transform_3(%arg0: i32) -> (i32, i32) {
    %c0_i32 = arith.constant 0 : i32
    %c0_i32_0 = arith.constant 0 : i32
    return %arg0, %c0_i32 : i32, i32
  }
}

module attributes {stable_mosaic.version = 11 : i64} {
  func.func @_matmul_kernel(%arg0: i32, %arg1: memref<8x18xbf16, #tpu.memory_space<vmem>>, %arg2: memref<18x1xbf16, #tpu.memory_space<vmem>>, %arg3: memref<1x1xf32, #tpu.memory_space<vmem>>, %arg4: memref<8x1xf32, #tpu.memory_space<vmem>>) attributes {dimension_semantics = [#tpu.dimension_semantics<parallel>], iteration_bounds = array<i64: 1>, scalar_prefetch = 0 : i64, scratch_operands = 0 : i64, tpu.core_type = #tpu.core_type<tc>, window_params = [{transform_indices = @transform_0, window_bounds = array<i64: 8, 18>}, {pipeline_mode = #tpu.pipeline_mode<synchronous>, transform_indices = @transform_1, window_bounds = array<i64: 18, 1>}, {pipeline_mode = #tpu.pipeline_mode<synchronous>, transform_indices = @transform_2, window_bounds = array<i64: 1, 1>}, {transform_indices = @transform_3, window_bounds = array<i64: 8, 1>}]} {
    %c0 = arith.constant 0 : index
    %c0_0 = arith.constant 0 : index
    %0 = vector.load %arg1[%c0, %c0_0] : memref<8x18xbf16, #tpu.memory_space<vmem>>, vector<8x18xbf16>
    %c0_1 = arith.constant 0 : index
    %c0_2 = arith.constant 0 : index
    %1 = vector.load %arg2[%c0_1, %c0_2] : memref<18x1xbf16, #tpu.memory_space<vmem>>, vector<18x1xbf16>
    %cst = arith.constant dense<0.000000e+00> : vector<8x1xf32>
    %2 = tpu.matmul %0, %1, %cst {dimension_numbers = #tpu.dot_dimension_numbers<[1], [0], [0], [1], [0, 0, 1, 1], [], []>} : vector<8x18xbf16>, vector<18x1xbf16>, vector<8x1xf32> -> vector<8x1xf32>
    %c0_3 = arith.constant 0 : index
    %c0_4 = arith.constant 0 : index
    %3 = vector.load %arg3[%c0_3, %c0_4] : memref<1x1xf32, #tpu.memory_space<vmem>>, vector<1x1xf32>
    %4 = vector.broadcast %3 : vector<1x1xf32> to vector<8x1xf32>
    %5 = arith.addf %2, %4 : vector<8x1xf32>
    %cst_5 = arith.constant 0.000000e+00 : f32
    %6 = vector.broadcast %cst_5 : f32 to vector<8x1xf32>
    %7 = arith.subf %6, %5 : vector<8x1xf32>
    %8 = math.exp %7 : vector<8x1xf32>
    %cst_6 = arith.constant 1.000000e+00 : f32
    %9 = vector.broadcast %cst_6 : f32 to vector<8x1xf32>
    %10 = arith.addf %9, %8 : vector<8x1xf32>
    %11 = tpu.reciprocal %10 {approx = true} : vector<8x1xf32> -> vector<8x1xf32>
    %c0_7 = arith.constant 0 : index
    %c0_8 = arith.constant 0 : index
    %12 = vector.load %arg4[%c0_7, %c0_8] : memref<8x1xf32, #tpu.memory_space<vmem>>, vector<8x1xf32>
    tpu.vector_store %arg4[%c0_7, %c0_8], %11 {strides = array<i32>} : memref<8x1xf32, #tpu.memory_space<vmem>>, vector<8x1xf32>,
    return
  }
  func.func @transform_0(%arg0: i32) -> (i32, i32) {
    %c0_i32 = arith.constant 0 : i32
    %c0_i32_0 = arith.constant 0 : i32
    return %arg0, %c0_i32 : i32, i32
  }
  func.func @transform_1(%arg0: i32) -> (i32, i32) {
    %c0_i32 = arith.constant 0 : i32
    %c0_i32_0 = arith.constant 0 : i32
    %c0_i32_1 = arith.constant 0 : i32
    return %c0_i32, %c0_i32_0 : i32, i32
  }
  func.func @transform_2(%arg0: i32) -> (i32, i32) {
    %c0_i32 = arith.constant 0 : i32
    %c0_i32_0 = arith.constant 0 : i32
    %c0_i32_1 = arith.constant 0 : i32
    return %c0_i32, %c0_i32_0 : i32, i32
  }
  func.func @transform_3(%arg0: i32) -> (i32, i32) {
    %c0_i32 = arith.constant 0 : i32
    %c0_i32_0 = arith.constant 0 : i32
    return %arg0, %c0_i32 : i32, i32
  }
}

module attributes {stable_mosaic.version = 11 : i64} {
  func.func @_matmul_kernel(%arg0: i32, %arg1: memref<16x288xbf16, #tpu.memory_space<vmem>>, %arg2: memref<288x32xbf16, #tpu.memory_space<vmem>>, %arg3: memref<1x32xf32, #tpu.memory_space<vmem>>, %arg4: memref<16x32xf32, #tpu.memory_space<vmem>>) attributes {dimension_semantics = [#tpu.dimension_semantics<parallel>], iteration_bounds = array<i64: 1>, scalar_prefetch = 0 : i64, scratch_operands = 0 : i64, tpu.core_type = #tpu.core_type<tc>, window_params = [{transform_indices = @transform_0, window_bounds = array<i64: 16, 288>}, {pipeline_mode = #tpu.pipeline_mode<synchronous>, transform_indices = @transform_1, window_bounds = array<i64: 288, 32>}, {pipeline_mode = #tpu.pipeline_mode<synchronous>, transform_indices = @transform_2, window_bounds = array<i64: 1, 32>}, {transform_indices = @transform_3, window_bounds = array<i64: 16, 32>}]} {
    %c0 = arith.constant 0 : index
    %c0_0 = arith.constant 0 : index
    %0 = vector.load %arg1[%c0, %c0_0] : memref<16x288xbf16, #tpu.memory_space<vmem>>, vector<16x288xbf16>
    %c0_1 = arith.constant 0 : index
    %c0_2 = arith.constant 0 : index
    %1 = vector.load %arg2[%c0_1, %c0_2] : memref<288x32xbf16, #tpu.memory_space<vmem>>, vector<288x32xbf16>
    %cst = arith.constant dense<0.000000e+00> : vector<16x32xf32>
    %2 = tpu.matmul %0, %1, %cst {dimension_numbers = #tpu.dot_dimension_numbers<[1], [0], [0], [1], [0, 0, 1, 1], [], []>} : vector<16x288xbf16>, vector<288x32xbf16>, vector<16x32xf32> -> vector<16x32xf32>
    %c0_3 = arith.constant 0 : index
    %c0_4 = arith.constant 0 : index
    %3 = vector.load %arg3[%c0_3, %c0_4] : memref<1x32xf32, #tpu.memory_space<vmem>>, vector<1x32xf32>
    %4 = vector.broadcast %3 : vector<1x32xf32> to vector<16x32xf32>
    %5 = arith.addf %2, %4 : vector<16x32xf32>
    %cst_5 = arith.constant 0.000000e+00 : f32
    %6 = vector.broadcast %cst_5 : f32 to vector<16x32xf32>
    %7 = arith.maximumf %5, %6 : vector<16x32xf32>
    %c0_6 = arith.constant 0 : index
    %c0_7 = arith.constant 0 : index
    %8 = vector.load %arg4[%c0_6, %c0_7] : memref<16x32xf32, #tpu.memory_space<vmem>>, vector<16x32xf32>
    tpu.vector_store %arg4[%c0_6, %c0_7], %7 {strides = array<i32>} : memref<16x32xf32, #tpu.memory_space<vmem>>, vector<16x32xf32>,
    return
  }
  func.func @transform_0(%arg0: i32) -> (i32, i32) {
    %c0_i32 = arith.constant 0 : i32
    %c0_i32_0 = arith.constant 0 : i32
    return %arg0, %c0_i32 : i32, i32
  }
  func.func @transform_1(%arg0: i32) -> (i32, i32) {
    %c0_i32 = arith.constant 0 : i32
    %c0_i32_0 = arith.constant 0 : i32
    %c0_i32_1 = arith.constant 0 : i32
    return %c0_i32, %c0_i32_0 : i32, i32
  }
  func.func @transform_2(%arg0: i32) -> (i32, i32) {
    %c0_i32 = arith.constant 0 : i32
    %c0_i32_0 = arith.constant 0 : i32
    %c0_i32_1 = arith.constant 0 : i32
    return %c0_i32, %c0_i32_0 : i32, i32
  }
  func.func @transform_3(%arg0: i32) -> (i32, i32) {
    %c0_i32 = arith.constant 0 : i32
    %c0_i32_0 = arith.constant 0 : i32
    return %arg0, %c0_i32 : i32, i32
  }
}

module attributes {stable_mosaic.version = 11 : i64} {
  func.func @_matmul_kernel(%arg0: i32, %arg1: memref<8x288xbf16, #tpu.memory_space<vmem>>, %arg2: memref<288x64xbf16, #tpu.memory_space<vmem>>, %arg3: memref<1x64xf32, #tpu.memory_space<vmem>>, %arg4: memref<8x64xf32, #tpu.memory_space<vmem>>) attributes {dimension_semantics = [#tpu.dimension_semantics<parallel>], iteration_bounds = array<i64: 1>, scalar_prefetch = 0 : i64, scratch_operands = 0 : i64, tpu.core_type = #tpu.core_type<tc>, window_params = [{transform_indices = @transform_0, window_bounds = array<i64: 8, 288>}, {pipeline_mode = #tpu.pipeline_mode<synchronous>, transform_indices = @transform_1, window_bounds = array<i64: 288, 64>}, {pipeline_mode = #tpu.pipeline_mode<synchronous>, transform_indices = @transform_2, window_bounds = array<i64: 1, 64>}, {transform_indices = @transform_3, window_bounds = array<i64: 8, 64>}]} {
    %c0 = arith.constant 0 : index
    %c0_0 = arith.constant 0 : index
    %0 = vector.load %arg1[%c0, %c0_0] : memref<8x288xbf16, #tpu.memory_space<vmem>>, vector<8x288xbf16>
    %c0_1 = arith.constant 0 : index
    %c0_2 = arith.constant 0 : index
    %1 = vector.load %arg2[%c0_1, %c0_2] : memref<288x64xbf16, #tpu.memory_space<vmem>>, vector<288x64xbf16>
    %cst = arith.constant dense<0.000000e+00> : vector<8x64xf32>
    %2 = tpu.matmul %0, %1, %cst {dimension_numbers = #tpu.dot_dimension_numbers<[1], [0], [0], [1], [0, 0, 1, 1], [], []>} : vector<8x288xbf16>, vector<288x64xbf16>, vector<8x64xf32> -> vector<8x64xf32>
    %c0_3 = arith.constant 0 : index
    %c0_4 = arith.constant 0 : index
    %3 = vector.load %arg3[%c0_3, %c0_4] : memref<1x64xf32, #tpu.memory_space<vmem>>, vector<1x64xf32>
    %4 = vector.broadcast %3 : vector<1x64xf32> to vector<8x64xf32>
    %5 = arith.addf %2, %4 : vector<8x64xf32>
    %c0_5 = arith.constant 0 : index
    %c0_6 = arith.constant 0 : index
    %6 = vector.load %arg4[%c0_5, %c0_6] : memref<8x64xf32, #tpu.memory_space<vmem>>, vector<8x64xf32>
    tpu.vector_store %arg4[%c0_5, %c0_6], %5 {strides = array<i32>} : memref<8x64xf32, #tpu.memory_space<vmem>>, vector<8x64xf32>,
    return
  }
  func.func @transform_0(%arg0: i32) -> (i32, i32) {
    %c0_i32 = arith.constant 0 : i32
    %c0_i32_0 = arith.constant 0 : i32
    return %arg0, %c0_i32 : i32, i32
  }
  func.func @transform_1(%arg0: i32) -> (i32, i32) {
    %c0_i32 = arith.constant 0 : i32
    %c0_i32_0 = arith.constant 0 : i32
    %c0_i32_1 = arith.constant 0 : i32
    return %c0_i32, %c0_i32_0 : i32, i32
  }
  func.func @transform_2(%arg0: i32) -> (i32, i32) {
    %c0_i32 = arith.constant 0 : i32
    %c0_i32_0 = arith.constant 0 : i32
    %c0_i32_1 = arith.constant 0 : i32
    return %c0_i32, %c0_i32_0 : i32, i32
  }
  func.func @transform_3(%arg0: i32) -> (i32, i32) {
    %c0_i32 = arith.constant 0 : i32
    %c0_i32_0 = arith.constant 0 : i32
    return %arg0, %c0_i32 : i32, i32
  }
}

module attributes {stable_mosaic.version = 11 : i64} {
  func.func @_matmul_kernel(%arg0: i32, %arg1: memref<8x576xbf16, #tpu.memory_space<vmem>>, %arg2: memref<576x32xbf16, #tpu.memory_space<vmem>>, %arg3: memref<1x32xf32, #tpu.memory_space<vmem>>, %arg4: memref<8x32xf32, #tpu.memory_space<vmem>>) attributes {dimension_semantics = [#tpu.dimension_semantics<parallel>], iteration_bounds = array<i64: 1>, scalar_prefetch = 0 : i64, scratch_operands = 0 : i64, tpu.core_type = #tpu.core_type<tc>, window_params = [{transform_indices = @transform_0, window_bounds = array<i64: 8, 576>}, {pipeline_mode = #tpu.pipeline_mode<synchronous>, transform_indices = @transform_1, window_bounds = array<i64: 576, 32>}, {pipeline_mode = #tpu.pipeline_mode<synchronous>, transform_indices = @transform_2, window_bounds = array<i64: 1, 32>}, {transform_indices = @transform_3, window_bounds = array<i64: 8, 32>}]} {
    %c0 = arith.constant 0 : index
    %c0_0 = arith.constant 0 : index
    %0 = vector.load %arg1[%c0, %c0_0] : memref<8x576xbf16, #tpu.memory_space<vmem>>, vector<8x576xbf16>
    %c0_1 = arith.constant 0 : index
    %c0_2 = arith.constant 0 : index
    %1 = vector.load %arg2[%c0_1, %c0_2] : memref<576x32xbf16, #tpu.memory_space<vmem>>, vector<576x32xbf16>
    %cst = arith.constant dense<0.000000e+00> : vector<8x32xf32>
    %2 = tpu.matmul %0, %1, %cst {dimension_numbers = #tpu.dot_dimension_numbers<[1], [0], [0], [1], [0, 0, 1, 1], [], []>} : vector<8x576xbf16>, vector<576x32xbf16>, vector<8x32xf32> -> vector<8x32xf32>
    %c0_3 = arith.constant 0 : index
    %c0_4 = arith.constant 0 : index
    %3 = vector.load %arg3[%c0_3, %c0_4] : memref<1x32xf32, #tpu.memory_space<vmem>>, vector<1x32xf32>
    %4 = vector.broadcast %3 : vector<1x32xf32> to vector<8x32xf32>
    %5 = arith.addf %2, %4 : vector<8x32xf32>
    %c0_5 = arith.constant 0 : index
    %c0_6 = arith.constant 0 : index
    %6 = vector.load %arg4[%c0_5, %c0_6] : memref<8x32xf32, #tpu.memory_space<vmem>>, vector<8x32xf32>
    tpu.vector_store %arg4[%c0_5, %c0_6], %5 {strides = array<i32>} : memref<8x32xf32, #tpu.memory_space<vmem>>, vector<8x32xf32>,
    return
  }
  func.func @transform_0(%arg0: i32) -> (i32, i32) {
    %c0_i32 = arith.constant 0 : i32
    %c0_i32_0 = arith.constant 0 : i32
    return %arg0, %c0_i32 : i32, i32
  }
  func.func @transform_1(%arg0: i32) -> (i32, i32) {
    %c0_i32 = arith.constant 0 : i32
    %c0_i32_0 = arith.constant 0 : i32
    %c0_i32_1 = arith.constant 0 : i32
    return %c0_i32, %c0_i32_0 : i32, i32
  }
  func.func @transform_2(%arg0: i32) -> (i32, i32) {
    %c0_i32 = arith.constant 0 : i32
    %c0_i32_0 = arith.constant 0 : i32
    %c0_i32_1 = arith.constant 0 : i32
    return %c0_i32, %c0_i32_0 : i32, i32
  }
  func.func @transform_3(%arg0: i32) -> (i32, i32) {
    %c0_i32 = arith.constant 0 : i32
    %c0_i32_0 = arith.constant 0 : i32
    return %arg0, %c0_i32 : i32, i32
  }
}

module attributes {stable_mosaic.version = 11 : i64} {
  func.func @_matmul_kernel(%arg0: i32, %arg1: memref<32x16xbf16, #tpu.memory_space<vmem>>, %arg2: memref<16x16xbf16, #tpu.memory_space<vmem>>, %arg3: memref<1x16xf32, #tpu.memory_space<vmem>>, %arg4: memref<32x16xf32, #tpu.memory_space<vmem>>) attributes {dimension_semantics = [#tpu.dimension_semantics<parallel>], iteration_bounds = array<i64: 1>, scalar_prefetch = 0 : i64, scratch_operands = 0 : i64, tpu.core_type = #tpu.core_type<tc>, window_params = [{transform_indices = @transform_0, window_bounds = array<i64: 32, 16>}, {pipeline_mode = #tpu.pipeline_mode<synchronous>, transform_indices = @transform_1, window_bounds = array<i64: 16, 16>}, {pipeline_mode = #tpu.pipeline_mode<synchronous>, transform_indices = @transform_2, window_bounds = array<i64: 1, 16>}, {transform_indices = @transform_3, window_bounds = array<i64: 32, 16>}]} {
    %c0 = arith.constant 0 : index
    %c0_0 = arith.constant 0 : index
    %0 = vector.load %arg1[%c0, %c0_0] : memref<32x16xbf16, #tpu.memory_space<vmem>>, vector<32x16xbf16>
    %c0_1 = arith.constant 0 : index
    %c0_2 = arith.constant 0 : index
    %1 = vector.load %arg2[%c0_1, %c0_2] : memref<16x16xbf16, #tpu.memory_space<vmem>>, vector<16x16xbf16>
    %cst = arith.constant dense<0.000000e+00> : vector<32x16xf32>
    %2 = tpu.matmul %0, %1, %cst {dimension_numbers = #tpu.dot_dimension_numbers<[1], [0], [0], [1], [0, 0, 1, 1], [], []>} : vector<32x16xbf16>, vector<16x16xbf16>, vector<32x16xf32> -> vector<32x16xf32>
    %c0_3 = arith.constant 0 : index
    %c0_4 = arith.constant 0 : index
    %3 = vector.load %arg3[%c0_3, %c0_4] : memref<1x16xf32, #tpu.memory_space<vmem>>, vector<1x16xf32>
    %4 = vector.broadcast %3 : vector<1x16xf32> to vector<32x16xf32>
    %5 = arith.addf %2, %4 : vector<32x16xf32>
    %cst_5 = arith.constant 0.000000e+00 : f32
    %6 = vector.broadcast %cst_5 : f32 to vector<32x16xf32>
    %7 = arith.maximumf %5, %6 : vector<32x16xf32>
    %c0_6 = arith.constant 0 : index
    %c0_7 = arith.constant 0 : index
    %8 = vector.load %arg4[%c0_6, %c0_7] : memref<32x16xf32, #tpu.memory_space<vmem>>, vector<32x16xf32>
    tpu.vector_store %arg4[%c0_6, %c0_7], %7 {strides = array<i32>} : memref<32x16xf32, #tpu.memory_space<vmem>>, vector<32x16xf32>,
    return
  }
  func.func @transform_0(%arg0: i32) -> (i32, i32) {
    %c0_i32 = arith.constant 0 : i32
    %c0_i32_0 = arith.constant 0 : i32
    return %arg0, %c0_i32 : i32, i32
  }
  func.func @transform_1(%arg0: i32) -> (i32, i32) {
    %c0_i32 = arith.constant 0 : i32
    %c0_i32_0 = arith.constant 0 : i32
    %c0_i32_1 = arith.constant 0 : i32
    return %c0_i32, %c0_i32_0 : i32, i32
  }
  func.func @transform_2(%arg0: i32) -> (i32, i32) {
    %c0_i32 = arith.constant 0 : i32
    %c0_i32_0 = arith.constant 0 : i32
    %c0_i32_1 = arith.constant 0 : i32
    return %c0_i32, %c0_i32_0 : i32, i32
  }
  func.func @transform_3(%arg0: i32) -> (i32, i32) {
    %c0_i32 = arith.constant 0 : i32
    %c0_i32_0 = arith.constant 0 : i32
    return %arg0, %c0_i32 : i32, i32
  }
}

module attributes {stable_mosaic.version = 11 : i64} {
  func.func @_matmul_kernel(%arg0: i32, %arg1: memref<2x16xbf16, #tpu.memory_space<vmem>>, %arg2: memref<16x4xbf16, #tpu.memory_space<vmem>>, %arg3: memref<1x4xf32, #tpu.memory_space<vmem>>, %arg4: memref<2x4xf32, #tpu.memory_space<vmem>>) attributes {dimension_semantics = [#tpu.dimension_semantics<parallel>], iteration_bounds = array<i64: 1>, scalar_prefetch = 0 : i64, scratch_operands = 0 : i64, tpu.core_type = #tpu.core_type<tc>, window_params = [{transform_indices = @transform_0, window_bounds = array<i64: 2, 16>}, {pipeline_mode = #tpu.pipeline_mode<synchronous>, transform_indices = @transform_1, window_bounds = array<i64: 16, 4>}, {pipeline_mode = #tpu.pipeline_mode<synchronous>, transform_indices = @transform_2, window_bounds = array<i64: 1, 4>}, {transform_indices = @transform_3, window_bounds = array<i64: 2, 4>}]} {
    %c0 = arith.constant 0 : index
    %c0_0 = arith.constant 0 : index
    %0 = vector.load %arg1[%c0, %c0_0] : memref<2x16xbf16, #tpu.memory_space<vmem>>, vector<2x16xbf16>
    %c0_1 = arith.constant 0 : index
    %c0_2 = arith.constant 0 : index
    %1 = vector.load %arg2[%c0_1, %c0_2] : memref<16x4xbf16, #tpu.memory_space<vmem>>, vector<16x4xbf16>
    %cst = arith.constant dense<0.000000e+00> : vector<2x4xf32>
    %2 = tpu.matmul %0, %1, %cst {dimension_numbers = #tpu.dot_dimension_numbers<[1], [0], [0], [1], [0, 0, 1, 1], [], []>} : vector<2x16xbf16>, vector<16x4xbf16>, vector<2x4xf32> -> vector<2x4xf32>
    %c0_3 = arith.constant 0 : index
    %c0_4 = arith.constant 0 : index
    %3 = vector.load %arg3[%c0_3, %c0_4] : memref<1x4xf32, #tpu.memory_space<vmem>>, vector<1x4xf32>
    %4 = vector.broadcast %3 : vector<1x4xf32> to vector<2x4xf32>
    %5 = arith.addf %2, %4 : vector<2x4xf32>
    %cst_5 = arith.constant 0.000000e+00 : f32
    %6 = vector.broadcast %cst_5 : f32 to vector<2x4xf32>
    %7 = arith.maximumf %5, %6 : vector<2x4xf32>
    %c0_6 = arith.constant 0 : index
    %c0_7 = arith.constant 0 : index
    %8 = vector.load %arg4[%c0_6, %c0_7] : memref<2x4xf32, #tpu.memory_space<vmem>>, vector<2x4xf32>
    tpu.vector_store %arg4[%c0_6, %c0_7], %7 {strides = array<i32>} : memref<2x4xf32, #tpu.memory_space<vmem>>, vector<2x4xf32>,
    return
  }
  func.func @transform_0(%arg0: i32) -> (i32, i32) {
    %c0_i32 = arith.constant 0 : i32
    %c0_i32_0 = arith.constant 0 : i32
    return %arg0, %c0_i32 : i32, i32
  }
  func.func @transform_1(%arg0: i32) -> (i32, i32) {
    %c0_i32 = arith.constant 0 : i32
    %c0_i32_0 = arith.constant 0 : i32
    %c0_i32_1 = arith.constant 0 : i32
    return %c0_i32, %c0_i32_0 : i32, i32
  }
  func.func @transform_2(%arg0: i32) -> (i32, i32) {
    %c0_i32 = arith.constant 0 : i32
    %c0_i32_0 = arith.constant 0 : i32
    %c0_i32_1 = arith.constant 0 : i32
    return %c0_i32, %c0_i32_0 : i32, i32
  }
  func.func @transform_3(%arg0: i32) -> (i32, i32) {
    %c0_i32 = arith.constant 0 : i32
    %c0_i32_0 = arith.constant 0 : i32
    return %arg0, %c0_i32 : i32, i32
  }
}

module attributes {stable_mosaic.version = 11 : i64} {
  func.func @_matmul_kernel(%arg0: i32, %arg1: memref<2x4xbf16, #tpu.memory_space<vmem>>, %arg2: memref<4x16xbf16, #tpu.memory_space<vmem>>, %arg3: memref<1x16xf32, #tpu.memory_space<vmem>>, %arg4: memref<2x16xf32, #tpu.memory_space<vmem>>) attributes {dimension_semantics = [#tpu.dimension_semantics<parallel>], iteration_bounds = array<i64: 1>, scalar_prefetch = 0 : i64, scratch_operands = 0 : i64, tpu.core_type = #tpu.core_type<tc>, window_params = [{transform_indices = @transform_0, window_bounds = array<i64: 2, 4>}, {pipeline_mode = #tpu.pipeline_mode<synchronous>, transform_indices = @transform_1, window_bounds = array<i64: 4, 16>}, {pipeline_mode = #tpu.pipeline_mode<synchronous>, transform_indices = @transform_2, window_bounds = array<i64: 1, 16>}, {transform_indices = @transform_3, window_bounds = array<i64: 2, 16>}]} {
    %c0 = arith.constant 0 : index
    %c0_0 = arith.constant 0 : index
    %0 = vector.load %arg1[%c0, %c0_0] : memref<2x4xbf16, #tpu.memory_space<vmem>>, vector<2x4xbf16>
    %c0_1 = arith.constant 0 : index
    %c0_2 = arith.constant 0 : index
    %1 = vector.load %arg2[%c0_1, %c0_2] : memref<4x16xbf16, #tpu.memory_space<vmem>>, vector<4x16xbf16>
    %cst = arith.constant dense<0.000000e+00> : vector<2x16xf32>
    %2 = tpu.matmul %0, %1, %cst {dimension_numbers = #tpu.dot_dimension_numbers<[1], [0], [0], [1], [0, 0, 1, 1], [], []>} : vector<2x4xbf16>, vector<4x16xbf16>, vector<2x16xf32> -> vector<2x16xf32>
    %c0_3 = arith.constant 0 : index
    %c0_4 = arith.constant 0 : index
    %3 = vector.load %arg3[%c0_3, %c0_4] : memref<1x16xf32, #tpu.memory_space<vmem>>, vector<1x16xf32>
    %4 = vector.broadcast %3 : vector<1x16xf32> to vector<2x16xf32>
    %5 = arith.addf %2, %4 : vector<2x16xf32>
    %cst_5 = arith.constant 0.000000e+00 : f32
    %6 = vector.broadcast %cst_5 : f32 to vector<2x16xf32>
    %7 = arith.subf %6, %5 : vector<2x16xf32>
    %8 = math.exp %7 : vector<2x16xf32>
    %cst_6 = arith.constant 1.000000e+00 : f32
    %9 = vector.broadcast %cst_6 : f32 to vector<2x16xf32>
    %10 = arith.addf %9, %8 : vector<2x16xf32>
    %11 = tpu.reciprocal %10 {approx = true} : vector<2x16xf32> -> vector<2x16xf32>
    %c0_7 = arith.constant 0 : index
    %c0_8 = arith.constant 0 : index
    %12 = vector.load %arg4[%c0_7, %c0_8] : memref<2x16xf32, #tpu.memory_space<vmem>>, vector<2x16xf32>
    tpu.vector_store %arg4[%c0_7, %c0_8], %11 {strides = array<i32>} : memref<2x16xf32, #tpu.memory_space<vmem>>, vector<2x16xf32>,
    return
  }
  func.func @transform_0(%arg0: i32) -> (i32, i32) {
    %c0_i32 = arith.constant 0 : i32
    %c0_i32_0 = arith.constant 0 : i32
    return %arg0, %c0_i32 : i32, i32
  }
  func.func @transform_1(%arg0: i32) -> (i32, i32) {
    %c0_i32 = arith.constant 0 : i32
    %c0_i32_0 = arith.constant 0 : i32
    %c0_i32_1 = arith.constant 0 : i32
    return %c0_i32, %c0_i32_0 : i32, i32
  }
  func.func @transform_2(%arg0: i32) -> (i32, i32) {
    %c0_i32 = arith.constant 0 : i32
    %c0_i32_0 = arith.constant 0 : i32
    %c0_i32_1 = arith.constant 0 : i32
    return %c0_i32, %c0_i32_0 : i32, i32
  }
  func.func @transform_3(%arg0: i32) -> (i32, i32) {
    %c0_i32 = arith.constant 0 : i32
    %c0_i32_0 = arith.constant 0 : i32
    return %arg0, %c0_i32 : i32, i32
  }
}

module attributes {stable_mosaic.version = 11 : i64} {
  func.func @_matmul_kernel(%arg0: i32, %arg1: memref<32x16xbf16, #tpu.memory_space<vmem>>, %arg2: memref<16x4xbf16, #tpu.memory_space<vmem>>, %arg3: memref<1x4xf32, #tpu.memory_space<vmem>>, %arg4: memref<32x4xf32, #tpu.memory_space<vmem>>) attributes {dimension_semantics = [#tpu.dimension_semantics<parallel>], iteration_bounds = array<i64: 1>, scalar_prefetch = 0 : i64, scratch_operands = 0 : i64, tpu.core_type = #tpu.core_type<tc>, window_params = [{transform_indices = @transform_0, window_bounds = array<i64: 32, 16>}, {pipeline_mode = #tpu.pipeline_mode<synchronous>, transform_indices = @transform_1, window_bounds = array<i64: 16, 4>}, {pipeline_mode = #tpu.pipeline_mode<synchronous>, transform_indices = @transform_2, window_bounds = array<i64: 1, 4>}, {transform_indices = @transform_3, window_bounds = array<i64: 32, 4>}]} {
    %c0 = arith.constant 0 : index
    %c0_0 = arith.constant 0 : index
    %0 = vector.load %arg1[%c0, %c0_0] : memref<32x16xbf16, #tpu.memory_space<vmem>>, vector<32x16xbf16>
    %c0_1 = arith.constant 0 : index
    %c0_2 = arith.constant 0 : index
    %1 = vector.load %arg2[%c0_1, %c0_2] : memref<16x4xbf16, #tpu.memory_space<vmem>>, vector<16x4xbf16>
    %cst = arith.constant dense<0.000000e+00> : vector<32x4xf32>
    %2 = tpu.matmul %0, %1, %cst {dimension_numbers = #tpu.dot_dimension_numbers<[1], [0], [0], [1], [0, 0, 1, 1], [], []>} : vector<32x16xbf16>, vector<16x4xbf16>, vector<32x4xf32> -> vector<32x4xf32>
    %c0_3 = arith.constant 0 : index
    %c0_4 = arith.constant 0 : index
    %3 = vector.load %arg3[%c0_3, %c0_4] : memref<1x4xf32, #tpu.memory_space<vmem>>, vector<1x4xf32>
    %4 = vector.broadcast %3 : vector<1x4xf32> to vector<32x4xf32>
    %5 = arith.addf %2, %4 : vector<32x4xf32>
    %cst_5 = arith.constant 0.000000e+00 : f32
    %6 = vector.broadcast %cst_5 : f32 to vector<32x4xf32>
    %7 = arith.maximumf %5, %6 : vector<32x4xf32>
    %c0_6 = arith.constant 0 : index
    %c0_7 = arith.constant 0 : index
    %8 = vector.load %arg4[%c0_6, %c0_7] : memref<32x4xf32, #tpu.memory_space<vmem>>, vector<32x4xf32>
    tpu.vector_store %arg4[%c0_6, %c0_7], %7 {strides = array<i32>} : memref<32x4xf32, #tpu.memory_space<vmem>>, vector<32x4xf32>,
    return
  }
  func.func @transform_0(%arg0: i32) -> (i32, i32) {
    %c0_i32 = arith.constant 0 : i32
    %c0_i32_0 = arith.constant 0 : i32
    return %arg0, %c0_i32 : i32, i32
  }
  func.func @transform_1(%arg0: i32) -> (i32, i32) {
    %c0_i32 = arith.constant 0 : i32
    %c0_i32_0 = arith.constant 0 : i32
    %c0_i32_1 = arith.constant 0 : i32
    return %c0_i32, %c0_i32_0 : i32, i32
  }
  func.func @transform_2(%arg0: i32) -> (i32, i32) {
    %c0_i32 = arith.constant 0 : i32
    %c0_i32_0 = arith.constant 0 : i32
    %c0_i32_1 = arith.constant 0 : i32
    return %c0_i32, %c0_i32_0 : i32, i32
  }
  func.func @transform_3(%arg0: i32) -> (i32, i32) {
    %c0_i32 = arith.constant 0 : i32
    %c0_i32_0 = arith.constant 0 : i32
    return %arg0, %c0_i32 : i32, i32
  }
}

module attributes {stable_mosaic.version = 11 : i64} {
  func.func @_matmul_kernel(%arg0: i32, %arg1: memref<32x18xbf16, #tpu.memory_space<vmem>>, %arg2: memref<18x1xbf16, #tpu.memory_space<vmem>>, %arg3: memref<1x1xf32, #tpu.memory_space<vmem>>, %arg4: memref<32x1xf32, #tpu.memory_space<vmem>>) attributes {dimension_semantics = [#tpu.dimension_semantics<parallel>], iteration_bounds = array<i64: 1>, scalar_prefetch = 0 : i64, scratch_operands = 0 : i64, tpu.core_type = #tpu.core_type<tc>, window_params = [{transform_indices = @transform_0, window_bounds = array<i64: 32, 18>}, {pipeline_mode = #tpu.pipeline_mode<synchronous>, transform_indices = @transform_1, window_bounds = array<i64: 18, 1>}, {pipeline_mode = #tpu.pipeline_mode<synchronous>, transform_indices = @transform_2, window_bounds = array<i64: 1, 1>}, {transform_indices = @transform_3, window_bounds = array<i64: 32, 1>}]} {
    %c0 = arith.constant 0 : index
    %c0_0 = arith.constant 0 : index
    %0 = vector.load %arg1[%c0, %c0_0] : memref<32x18xbf16, #tpu.memory_space<vmem>>, vector<32x18xbf16>
    %c0_1 = arith.constant 0 : index
    %c0_2 = arith.constant 0 : index
    %1 = vector.load %arg2[%c0_1, %c0_2] : memref<18x1xbf16, #tpu.memory_space<vmem>>, vector<18x1xbf16>
    %cst = arith.constant dense<0.000000e+00> : vector<32x1xf32>
    %2 = tpu.matmul %0, %1, %cst {dimension_numbers = #tpu.dot_dimension_numbers<[1], [0], [0], [1], [0, 0, 1, 1], [], []>} : vector<32x18xbf16>, vector<18x1xbf16>, vector<32x1xf32> -> vector<32x1xf32>
    %c0_3 = arith.constant 0 : index
    %c0_4 = arith.constant 0 : index
    %3 = vector.load %arg3[%c0_3, %c0_4] : memref<1x1xf32, #tpu.memory_space<vmem>>, vector<1x1xf32>
    %4 = vector.broadcast %3 : vector<1x1xf32> to vector<32x1xf32>
    %5 = arith.addf %2, %4 : vector<32x1xf32>
    %cst_5 = arith.constant 0.000000e+00 : f32
    %6 = vector.broadcast %cst_5 : f32 to vector<32x1xf32>
    %7 = arith.subf %6, %5 : vector<32x1xf32>
    %8 = math.exp %7 : vector<32x1xf32>
    %cst_6 = arith.constant 1.000000e+00 : f32
    %9 = vector.broadcast %cst_6 : f32 to vector<32x1xf32>
    %10 = arith.addf %9, %8 : vector<32x1xf32>
    %11 = tpu.reciprocal %10 {approx = true} : vector<32x1xf32> -> vector<32x1xf32>
    %c0_7 = arith.constant 0 : index
    %c0_8 = arith.constant 0 : index
    %12 = vector.load %arg4[%c0_7, %c0_8] : memref<32x1xf32, #tpu.memory_space<vmem>>, vector<32x1xf32>
    tpu.vector_store %arg4[%c0_7, %c0_8], %11 {strides = array<i32>} : memref<32x1xf32, #tpu.memory_space<vmem>>, vector<32x1xf32>,
    return
  }
  func.func @transform_0(%arg0: i32) -> (i32, i32) {
    %c0_i32 = arith.constant 0 : i32
    %c0_i32_0 = arith.constant 0 : i32
    return %arg0, %c0_i32 : i32, i32
  }
  func.func @transform_1(%arg0: i32) -> (i32, i32) {
    %c0_i32 = arith.constant 0 : i32
    %c0_i32_0 = arith.constant 0 : i32
    %c0_i32_1 = arith.constant 0 : i32
    return %c0_i32, %c0_i32_0 : i32, i32
  }
  func.func @transform_2(%arg0: i32) -> (i32, i32) {
    %c0_i32 = arith.constant 0 : i32
    %c0_i32_0 = arith.constant 0 : i32
    %c0_i32_1 = arith.constant 0 : i32
    return %c0_i32, %c0_i32_0 : i32, i32
  }
  func.func @transform_3(%arg0: i32) -> (i32, i32) {
    %c0_i32 = arith.constant 0 : i32
    %c0_i32_0 = arith.constant 0 : i32
    return %arg0, %c0_i32 : i32, i32
  }
}

module attributes {stable_mosaic.version = 11 : i64} {
  func.func @_matmul_kernel(%arg0: i32, %arg1: memref<64x144xbf16, #tpu.memory_space<vmem>>, %arg2: memref<144x16xbf16, #tpu.memory_space<vmem>>, %arg3: memref<1x16xf32, #tpu.memory_space<vmem>>, %arg4: memref<64x16xf32, #tpu.memory_space<vmem>>) attributes {dimension_semantics = [#tpu.dimension_semantics<parallel>], iteration_bounds = array<i64: 1>, scalar_prefetch = 0 : i64, scratch_operands = 0 : i64, tpu.core_type = #tpu.core_type<tc>, window_params = [{transform_indices = @transform_0, window_bounds = array<i64: 64, 144>}, {pipeline_mode = #tpu.pipeline_mode<synchronous>, transform_indices = @transform_1, window_bounds = array<i64: 144, 16>}, {pipeline_mode = #tpu.pipeline_mode<synchronous>, transform_indices = @transform_2, window_bounds = array<i64: 1, 16>}, {transform_indices = @transform_3, window_bounds = array<i64: 64, 16>}]} {
    %c0 = arith.constant 0 : index
    %c0_0 = arith.constant 0 : index
    %0 = vector.load %arg1[%c0, %c0_0] : memref<64x144xbf16, #tpu.memory_space<vmem>>, vector<64x144xbf16>
    %c0_1 = arith.constant 0 : index
    %c0_2 = arith.constant 0 : index
    %1 = vector.load %arg2[%c0_1, %c0_2] : memref<144x16xbf16, #tpu.memory_space<vmem>>, vector<144x16xbf16>
    %cst = arith.constant dense<0.000000e+00> : vector<64x16xf32>
    %2 = tpu.matmul %0, %1, %cst {dimension_numbers = #tpu.dot_dimension_numbers<[1], [0], [0], [1], [0, 0, 1, 1], [], []>} : vector<64x144xbf16>, vector<144x16xbf16>, vector<64x16xf32> -> vector<64x16xf32>
    %c0_3 = arith.constant 0 : index
    %c0_4 = arith.constant 0 : index
    %3 = vector.load %arg3[%c0_3, %c0_4] : memref<1x16xf32, #tpu.memory_space<vmem>>, vector<1x16xf32>
    %4 = vector.broadcast %3 : vector<1x16xf32> to vector<64x16xf32>
    %5 = arith.addf %2, %4 : vector<64x16xf32>
    %cst_5 = arith.constant 0.000000e+00 : f32
    %6 = vector.broadcast %cst_5 : f32 to vector<64x16xf32>
    %7 = arith.maximumf %5, %6 : vector<64x16xf32>
    %c0_6 = arith.constant 0 : index
    %c0_7 = arith.constant 0 : index
    %8 = vector.load %arg4[%c0_6, %c0_7] : memref<64x16xf32, #tpu.memory_space<vmem>>, vector<64x16xf32>
    tpu.vector_store %arg4[%c0_6, %c0_7], %7 {strides = array<i32>} : memref<64x16xf32, #tpu.memory_space<vmem>>, vector<64x16xf32>,
    return
  }
  func.func @transform_0(%arg0: i32) -> (i32, i32) {
    %c0_i32 = arith.constant 0 : i32
    %c0_i32_0 = arith.constant 0 : i32
    return %arg0, %c0_i32 : i32, i32
  }
  func.func @transform_1(%arg0: i32) -> (i32, i32) {
    %c0_i32 = arith.constant 0 : i32
    %c0_i32_0 = arith.constant 0 : i32
    %c0_i32_1 = arith.constant 0 : i32
    return %c0_i32, %c0_i32_0 : i32, i32
  }
  func.func @transform_2(%arg0: i32) -> (i32, i32) {
    %c0_i32 = arith.constant 0 : i32
    %c0_i32_0 = arith.constant 0 : i32
    %c0_i32_1 = arith.constant 0 : i32
    return %c0_i32, %c0_i32_0 : i32, i32
  }
  func.func @transform_3(%arg0: i32) -> (i32, i32) {
    %c0_i32 = arith.constant 0 : i32
    %c0_i32_0 = arith.constant 0 : i32
    return %arg0, %c0_i32 : i32, i32
  }
}

module attributes {stable_mosaic.version = 11 : i64} {
  func.func @_matmul_kernel(%arg0: i32, %arg1: memref<32x288xbf16, #tpu.memory_space<vmem>>, %arg2: memref<288x16xbf16, #tpu.memory_space<vmem>>, %arg3: memref<1x16xf32, #tpu.memory_space<vmem>>, %arg4: memref<32x16xf32, #tpu.memory_space<vmem>>) attributes {dimension_semantics = [#tpu.dimension_semantics<parallel>], iteration_bounds = array<i64: 1>, scalar_prefetch = 0 : i64, scratch_operands = 0 : i64, tpu.core_type = #tpu.core_type<tc>, window_params = [{transform_indices = @transform_0, window_bounds = array<i64: 32, 288>}, {pipeline_mode = #tpu.pipeline_mode<synchronous>, transform_indices = @transform_1, window_bounds = array<i64: 288, 16>}, {pipeline_mode = #tpu.pipeline_mode<synchronous>, transform_indices = @transform_2, window_bounds = array<i64: 1, 16>}, {transform_indices = @transform_3, window_bounds = array<i64: 32, 16>}]} {
    %c0 = arith.constant 0 : index
    %c0_0 = arith.constant 0 : index
    %0 = vector.load %arg1[%c0, %c0_0] : memref<32x288xbf16, #tpu.memory_space<vmem>>, vector<32x288xbf16>
    %c0_1 = arith.constant 0 : index
    %c0_2 = arith.constant 0 : index
    %1 = vector.load %arg2[%c0_1, %c0_2] : memref<288x16xbf16, #tpu.memory_space<vmem>>, vector<288x16xbf16>
    %cst = arith.constant dense<0.000000e+00> : vector<32x16xf32>
    %2 = tpu.matmul %0, %1, %cst {dimension_numbers = #tpu.dot_dimension_numbers<[1], [0], [0], [1], [0, 0, 1, 1], [], []>} : vector<32x288xbf16>, vector<288x16xbf16>, vector<32x16xf32> -> vector<32x16xf32>
    %c0_3 = arith.constant 0 : index
    %c0_4 = arith.constant 0 : index
    %3 = vector.load %arg3[%c0_3, %c0_4] : memref<1x16xf32, #tpu.memory_space<vmem>>, vector<1x16xf32>
    %4 = vector.broadcast %3 : vector<1x16xf32> to vector<32x16xf32>
    %5 = arith.addf %2, %4 : vector<32x16xf32>
    %c0_5 = arith.constant 0 : index
    %c0_6 = arith.constant 0 : index
    %6 = vector.load %arg4[%c0_5, %c0_6] : memref<32x16xf32, #tpu.memory_space<vmem>>, vector<32x16xf32>
    tpu.vector_store %arg4[%c0_5, %c0_6], %5 {strides = array<i32>} : memref<32x16xf32, #tpu.memory_space<vmem>>, vector<32x16xf32>,
    return
  }
  func.func @transform_0(%arg0: i32) -> (i32, i32) {
    %c0_i32 = arith.constant 0 : i32
    %c0_i32_0 = arith.constant 0 : i32
    return %arg0, %c0_i32 : i32, i32
  }
  func.func @transform_1(%arg0: i32) -> (i32, i32) {
    %c0_i32 = arith.constant 0 : i32
    %c0_i32_0 = arith.constant 0 : i32
    %c0_i32_1 = arith.constant 0 : i32
    return %c0_i32, %c0_i32_0 : i32, i32
  }
  func.func @transform_2(%arg0: i32) -> (i32, i32) {
    %c0_i32 = arith.constant 0 : i32
    %c0_i32_0 = arith.constant 0 : i32
    %c0_i32_1 = arith.constant 0 : i32
    return %c0_i32, %c0_i32_0 : i32, i32
  }
  func.func @transform_3(%arg0: i32) -> (i32, i32) {
    %c0_i32 = arith.constant 0 : i32
    %c0_i32_0 = arith.constant 0 : i32
    return %arg0, %c0_i32 : i32, i32
  }
}

module attributes {stable_mosaic.version = 11 : i64} {
  func.func @_matmul_kernel(%arg0: i32, %arg1: memref<32x144xbf16, #tpu.memory_space<vmem>>, %arg2: memref<144x4xbf16, #tpu.memory_space<vmem>>, %arg3: memref<1x4xf32, #tpu.memory_space<vmem>>, %arg4: memref<32x4xf32, #tpu.memory_space<vmem>>) attributes {dimension_semantics = [#tpu.dimension_semantics<parallel>], iteration_bounds = array<i64: 1>, scalar_prefetch = 0 : i64, scratch_operands = 0 : i64, tpu.core_type = #tpu.core_type<tc>, window_params = [{transform_indices = @transform_0, window_bounds = array<i64: 32, 144>}, {pipeline_mode = #tpu.pipeline_mode<synchronous>, transform_indices = @transform_1, window_bounds = array<i64: 144, 4>}, {pipeline_mode = #tpu.pipeline_mode<synchronous>, transform_indices = @transform_2, window_bounds = array<i64: 1, 4>}, {transform_indices = @transform_3, window_bounds = array<i64: 32, 4>}]} {
    %c0 = arith.constant 0 : index
    %c0_0 = arith.constant 0 : index
    %0 = vector.load %arg1[%c0, %c0_0] : memref<32x144xbf16, #tpu.memory_space<vmem>>, vector<32x144xbf16>
    %c0_1 = arith.constant 0 : index
    %c0_2 = arith.constant 0 : index
    %1 = vector.load %arg2[%c0_1, %c0_2] : memref<144x4xbf16, #tpu.memory_space<vmem>>, vector<144x4xbf16>
    %cst = arith.constant dense<0.000000e+00> : vector<32x4xf32>
    %2 = tpu.matmul %0, %1, %cst {dimension_numbers = #tpu.dot_dimension_numbers<[1], [0], [0], [1], [0, 0, 1, 1], [], []>} : vector<32x144xbf16>, vector<144x4xbf16>, vector<32x4xf32> -> vector<32x4xf32>
    %c0_3 = arith.constant 0 : index
    %c0_4 = arith.constant 0 : index
    %3 = vector.load %arg3[%c0_3, %c0_4] : memref<1x4xf32, #tpu.memory_space<vmem>>, vector<1x4xf32>
    %4 = vector.broadcast %3 : vector<1x4xf32> to vector<32x4xf32>
    %5 = arith.addf %2, %4 : vector<32x4xf32>
    %cst_5 = arith.constant 0.000000e+00 : f32
    %6 = vector.broadcast %cst_5 : f32 to vector<32x4xf32>
    %7 = arith.maximumf %5, %6 : vector<32x4xf32>
    %c0_6 = arith.constant 0 : index
    %c0_7 = arith.constant 0 : index
    %8 = vector.load %arg4[%c0_6, %c0_7] : memref<32x4xf32, #tpu.memory_space<vmem>>, vector<32x4xf32>
    tpu.vector_store %arg4[%c0_6, %c0_7], %7 {strides = array<i32>} : memref<32x4xf32, #tpu.memory_space<vmem>>, vector<32x4xf32>,
    return
  }
  func.func @transform_0(%arg0: i32) -> (i32, i32) {
    %c0_i32 = arith.constant 0 : i32
    %c0_i32_0 = arith.constant 0 : i32
    return %arg0, %c0_i32 : i32, i32
  }
  func.func @transform_1(%arg0: i32) -> (i32, i32) {
    %c0_i32 = arith.constant 0 : i32
    %c0_i32_0 = arith.constant 0 : i32
    %c0_i32_1 = arith.constant 0 : i32
    return %c0_i32, %c0_i32_0 : i32, i32
  }
  func.func @transform_2(%arg0: i32) -> (i32, i32) {
    %c0_i32 = arith.constant 0 : i32
    %c0_i32_0 = arith.constant 0 : i32
    %c0_i32_1 = arith.constant 0 : i32
    return %c0_i32, %c0_i32_0 : i32, i32
  }
  func.func @transform_3(%arg0: i32) -> (i32, i32) {
    %c0_i32 = arith.constant 0 : i32
    %c0_i32_0 = arith.constant 0 : i32
    return %arg0, %c0_i32 : i32, i32
  }
}

module attributes {stable_mosaic.version = 11 : i64} {
  func.func @_matmul_kernel(%arg0: i32, %arg1: memref<32x4xbf16, #tpu.memory_space<vmem>>, %arg2: memref<4x1xbf16, #tpu.memory_space<vmem>>, %arg3: memref<1x1xf32, #tpu.memory_space<vmem>>, %arg4: memref<32x1xf32, #tpu.memory_space<vmem>>) attributes {dimension_semantics = [#tpu.dimension_semantics<parallel>], iteration_bounds = array<i64: 1>, scalar_prefetch = 0 : i64, scratch_operands = 0 : i64, tpu.core_type = #tpu.core_type<tc>, window_params = [{transform_indices = @transform_0, window_bounds = array<i64: 32, 4>}, {pipeline_mode = #tpu.pipeline_mode<synchronous>, transform_indices = @transform_1, window_bounds = array<i64: 4, 1>}, {pipeline_mode = #tpu.pipeline_mode<synchronous>, transform_indices = @transform_2, window_bounds = array<i64: 1, 1>}, {transform_indices = @transform_3, window_bounds = array<i64: 32, 1>}]} {
    %c0 = arith.constant 0 : index
    %c0_0 = arith.constant 0 : index
    %0 = vector.load %arg1[%c0, %c0_0] : memref<32x4xbf16, #tpu.memory_space<vmem>>, vector<32x4xbf16>
    %c0_1 = arith.constant 0 : index
    %c0_2 = arith.constant 0 : index
    %1 = vector.load %arg2[%c0_1, %c0_2] : memref<4x1xbf16, #tpu.memory_space<vmem>>, vector<4x1xbf16>
    %cst = arith.constant dense<0.000000e+00> : vector<32x1xf32>
    %2 = tpu.matmul %0, %1, %cst {dimension_numbers = #tpu.dot_dimension_numbers<[1], [0], [0], [1], [0, 0, 1, 1], [], []>} : vector<32x4xbf16>, vector<4x1xbf16>, vector<32x1xf32> -> vector<32x1xf32>
    %c0_3 = arith.constant 0 : index
    %c0_4 = arith.constant 0 : index
    %3 = vector.load %arg3[%c0_3, %c0_4] : memref<1x1xf32, #tpu.memory_space<vmem>>, vector<1x1xf32>
    %4 = vector.broadcast %3 : vector<1x1xf32> to vector<32x1xf32>
    %5 = arith.addf %2, %4 : vector<32x1xf32>
    %c0_5 = arith.constant 0 : index
    %c0_6 = arith.constant 0 : index
    %6 = vector.load %arg4[%c0_5, %c0_6] : memref<32x1xf32, #tpu.memory_space<vmem>>, vector<32x1xf32>
    tpu.vector_store %arg4[%c0_5, %c0_6], %5 {strides = array<i32>} : memref<32x1xf32, #tpu.memory_space<vmem>>, vector<32x1xf32>,
    return
  }
  func.func @transform_0(%arg0: i32) -> (i32, i32) {
    %c0_i32 = arith.constant 0 : i32
    %c0_i32_0 = arith.constant 0 : i32
    return %arg0, %c0_i32 : i32, i32
  }
  func.func @transform_1(%arg0: i32) -> (i32, i32) {
    %c0_i32 = arith.constant 0 : i32
    %c0_i32_0 = arith.constant 0 : i32
    %c0_i32_1 = arith.constant 0 : i32
    return %c0_i32, %c0_i32_0 : i32, i32
  }
  func.func @transform_2(%arg0: i32) -> (i32, i32) {
    %c0_i32 = arith.constant 0 : i32
    %c0_i32_0 = arith.constant 0 : i32
    %c0_i32_1 = arith.constant 0 : i32
    return %c0_i32, %c0_i32_0 : i32, i32
  }
  func.func @transform_3(%arg0: i32) -> (i32, i32) {
    %c0_i32 = arith.constant 0 : i32
    %c0_i32_0 = arith.constant 0 : i32
    return %arg0, %c0_i32 : i32, i32
  }
}

</mosaic_0001>

<llo_original>
// kernel: _lambda_.52
$region0: #{_lambda_.52}
  #allocation0 [shape = 'u32[]', space=smem, size = 0x4, offset = 0x4, fixed_abs, tag = 'smem constant byte address 0x4 - core index']
  #allocation1 [shape = 'u32[144,128]{1,0:T(1,128)}', space=vmem, size = 0x12000, scoped, tag = 'internal scratch']
  %s0 = inlined_call_operand.vmem [shape: bf16[128,72], index: 0, kind: input, shape index: {}]
  %s1 = inlined_call_operand.vmem [shape: bf16[72,8], index: 1, kind: input, shape index: {}]
  %s2 = inlined_call_operand.vmem [shape: f32[1,8], index: 2, kind: input, shape index: {}]
  %s3 = inlined_call_operand.vmem [shape: f32[128,8], index: 3, kind: output, shape index: {}]
  %s4 = sld [smem:[#allocation0]]
  $region22: #{_lambda_.52} parent=0
    _
  %s6 = ssub.s32 1, %s4
  %s7 = scalar_select 0, %s6, %s4
  // Predicated region
  $region2: #{_lambda_.52} parent=0 // pred_check
    _
  $region3: #{_lambda_.52} parent=0 // pred_check_branch
    %9 = sbr.rel (0) target = $region5
  $region4: #{_lambda_.52} parent=0 // pred_region
    _
  $region5: #{_lambda_.52} parent=0 // pred_fallthru
    _
  // Predicated region
  $region6: #{_lambda_.52} parent=0 // pred_check
    _
  $region7: #{_lambda_.52} parent=0 // pred_check_branch
    %11 = sbr.rel (0) target = $region9
  $region8: #{_lambda_.52} parent=0 // pred_region
    _
  $region9: #{_lambda_.52} parent=0 // pred_fallthru
    _
  // Predicated region
  $region10: #{_lambda_.52} parent=0 // pred_check
    _
  $region11: #{_lambda_.52} parent=0 // pred_check_branch
    %13 = sbr.rel (0) target = $region13
  $region12: #{_lambda_.52} parent=0 // pred_region
    _
  $region13: #{_lambda_.52} parent=0 // pred_fallthru
    _
  %v15 = vld [vmem:[%s0] sm:$0xf]
  %v16 = vld [vmem:[%s0 + $0x4] sm:$0xf]
  %v17 = vld [vmem:[%s0 + $0x8] sm:$0xf]
  %v18 = vld [vmem:[%s0 + $0xc] sm:$0xf]
  %v19 = vld [vmem:[%s0 + $0x10] sm:$0xf]
  %v20 = vld [vmem:[%s0 + $0x14] sm:$0xf]
  %v21 = vld [vmem:[%s0 + $0x18] sm:$0xf]
  %v22 = vld [vmem:[%s0 + $0x1c] sm:$0xf]
  %v23 = vld [vmem:[%s0 + $0x20] sm:$0xf]
  %v24 = vld [vmem:[%s0 + $0x24] sm:$0xf]
  %v25 = vld [vmem:[%s0 + $0x28] sm:$0xf]
  %v26 = vld [vmem:[%s0 + $0x2c] sm:$0xf]
  %v27 = vld [vmem:[%s0 + $0x30] sm:$0xf]
  %v28 = vld [vmem:[%s0 + $0x34] sm:$0xf]
  %v29 = vld [vmem:[%s0 + $0x38] sm:$0xf]
  %v30 = vld [vmem:[%s0 + $0x3c] sm:$0xf]
  %v31 = vld [vmem:[%s1] sm:$0xf]
  %v32 = vld [vmem:[%s1 + $0x4] sm:$0xf]
  %v33 = vld [vmem:[%s1 + $0x8] sm:$0xf]
  %v34 = vld [vmem:[%s1 + $0xc] sm:$0xf]
  %v35 = vld [vmem:[%s1 + $0x10] sm:$0xf]
  %v36 = vld [vmem:[%s1 + $0x14] sm:$0xf]
  %v37 = vld [vmem:[%s1 + $0x18] sm:$0xf]
  %v38 = vld [vmem:[%s1 + $0x1c] sm:$0xf]
  %v39 = vld [vmem:[%s1 + $0x20] sm:$0xf]
  %v40 = vld [vmem:[%s2] sm:$0x1]
  %v42 = vlaneseq
  %v43 = vshrl.u32 %v42, 7
  %v44 = vsub.s32 0, %v43
  %v45 = vrot.slane %v40, %v44
  %v63 = vunpack.c.l.b16 %v15
  %v64 = vunpack.c.l.b16 %v16
  %v65 = vunpack.c.l.b16 %v17
  %v66 = vunpack.c.l.b16 %v18
  %v67 = vunpack.c.l.b16 %v19
  %v68 = vunpack.c.l.b16 %v20
  %v69 = vunpack.c.l.b16 %v21
  %v70 = vunpack.c.l.b16 %v22
  %v71 = vunpack.c.l.b16 %v23
  %v72 = vunpack.c.l.b16 %v24
  %v73 = vunpack.c.l.b16 %v25
  %v74 = vunpack.c.l.b16 %v26
  %v75 = vunpack.c.l.b16 %v27
  %v76 = vunpack.c.l.b16 %v28
  %v77 = vunpack.c.l.b16 %v29
  %v78 = vunpack.c.l.b16 %v30
  %v79 = vpack.c.b16 %v64, %v63
  %v80 = vpack.c.b16 %v66, %v65
  %v81 = vpack.c.b16 %v68, %v67
  %v82 = vpack.c.b16 %v70, %v69
  %v83 = vpack.c.b16 %v72, %v71
  %v84 = vpack.c.b16 %v74, %v73
  %v85 = vpack.c.b16 %v76, %v75
  %v86 = vpack.c.b16 %v78, %v77
  %v96 = vunpack.c.l.b16 %v31
  %v97 = vunpack.c.l.b16 %v32
  %v98 = vunpack.c.l.b16 %v33
  %v99 = vunpack.c.l.b16 %v34
  %v100 = vunpack.c.l.b16 %v35
  %v101 = vunpack.c.l.b16 %v36
  %v102 = vunpack.c.l.b16 %v37
  %v103 = vunpack.c.l.b16 %v38
  %v104 = vunpack.c.l.b16 %v39
  %v105 = vpack.c.b16 %v97, %v96
  %v106 = vpack.c.b16 %v99, %v98
  %v107 = vpack.c.b16 %v101, %v100
  %v108 = vpack.c.b16 %v103, %v102
  %v109 = vpack.c.b16 %v104, %v104
  %vm114 = vcmask 588800
  %v116 = vsel %vm114, %v79, 0
  %v119 = vsel %vm114, %v80, 0
  %v122 = vsel %vm114, %v81, 0
  %v125 = vsel %vm114, %v82, 0
  %v128 = vsel %vm114, %v83, 0
  %v131 = vsel %vm114, %v84, 0
  %v134 = vsel %vm114, %v85, 0
  %v137 = vsel %vm114, %v86, 0
  %vm139 = vcmask 1043456
  %v141 = vsel %vm139, %v109, 0
  %143 = vmatprep.subr.bf16.mxu0 0
  %144 = vmatpush1.bf16.msra.mxu0 %v105
  %145 = vmatprep.subr.bf16.mxu0 0
  %146 = vmatpush1.bf16.msra.mxu0 %v106
  %147 = vmatprep.subr.bf16.mxu0 0
  %148 = vmatpush1.bf16.msra.mxu0 %v107
  %149 = vmatprep.subr.bf16.mxu0 0
  %150 = vmatpush1.bf16.msra.mxu0 %v108
  %151 = vmatprep.subr.bf16.mxu0 0
  %152 = vmatpush1.bf16.msra.mxu0 %v141
  %153 = vmatprep.subr.bf16.mxu0 0
  %154 = vmatpush1.bf16.msra.mxu0 0
  %155 = vmatprep.subr.bf16.mxu0 0
  %156 = vmatpush1.bf16.msra.mxu0 0
  %157 = vmatprep.subr.bf16.mxu0 0
  %158 = vmatpush1.bf16.msra.mxu0 0
  %159 = vmatprep.subr.bf16.mxu0 0
  %160 = vmatpush1.bf16.msra.mxu0 0
  %161 = vmatprep.subr.bf16.mxu0 0
  %162 = vmatpush1.bf16.msra.mxu0 0
  %163 = vmatprep.subr.bf16.mxu0 0
  %164 = vmatpush1.bf16.msra.mxu0 0
  %165 = vmatprep.subr.bf16.mxu0 0
  %166 = vmatpush1.bf16.msra.mxu0 0
  %167 = vmatprep.subr.bf16.mxu0 0
  %168 = vmatpush1.bf16.msra.mxu0 0
  %169 = vmatprep.subr.bf16.mxu0 0
  %170 = vmatpush1.bf16.msra.mxu0 0
  %171 = vmatprep.subr.bf16.mxu0 0
  %172 = vmatpush1.bf16.msra.mxu0 0
  %173 = vmatprep.subr.bf16.mxu0 0
  %174 = vmatpush1.bf16.msra.mxu0 0
  %175 = vmatprep.mubr.bf16.mxu0 0
  %176 = vmatmul.mubr.bf16.gmra.mrb[0].mxu0 %v116
  %v177 = vpop.f32.mrb[0].mxu0
  %v178 = vadd.f32 %v45, %v177
  %v179 = vpop.f32.mrb[0].mxu0
  %v180 = vpop.f32.mrb[0].mxu0
  %v181 = vadd.f32 %v45, %v180
  %v182 = vpop.f32.mrb[0].mxu0
  %183 = vmatprep.mubr.bf16.mxu0 0
  %184 = vmatmul.mubr.bf16.gmra.mrb[0].mxu0 %v119
  %v185 = vpop.f32.mrb[0].mxu0
  %v186 = vadd.f32 %v45, %v185
  %v187 = vpop.f32.mrb[0].mxu0
  %v188 = vpop.f32.mrb[0].mxu0
  %v189 = vadd.f32 %v45, %v188
  %v190 = vpop.f32.mrb[0].mxu0
  %191 = vmatprep.mubr.bf16.mxu0 0
  %192 = vmatmul.mubr.bf16.gmra.mrb[0].mxu0 %v122
  %v193 = vpop.f32.mrb[0].mxu0
  %v194 = vadd.f32 %v45, %v193
  %v195 = vpop.f32.mrb[0].mxu0
  %v196 = vpop.f32.mrb[0].mxu0
  %v197 = vadd.f32 %v45, %v196
  %v198 = vpop.f32.mrb[0].mxu0
  %199 = vmatprep.mubr.bf16.mxu0 0
  %200 = vmatmul.mubr.bf16.gmra.mrb[0].mxu0 %v125
  %v201 = vpop.f32.mrb[0].mxu0
  %v202 = vadd.f32 %v45, %v201
  %v203 = vpop.f32.mrb[0].mxu0
  %v204 = vpop.f32.mrb[0].mxu0
  %v205 = vadd.f32 %v45, %v204
  %v206 = vpop.f32.mrb[0].mxu0
  %207 = vmatprep.mubr.bf16.mxu0 0
  %208 = vmatmul.mubr.bf16.gmra.mrb[0].mxu0 %v128
  %v209 = vpop.f32.mrb[0].mxu0
  %v210 = vadd.f32 %v45, %v209
  %v211 = vpop.f32.mrb[0].mxu0
  %v212 = vpop.f32.mrb[0].mxu0
  %v213 = vadd.f32 %v45, %v212
  %v214 = vpop.f32.mrb[0].mxu0
  %215 = vmatprep.mubr.bf16.mxu0 0
  %216 = vmatmul.mubr.bf16.gmra.mrb[0].mxu0 %v131
  %v217 = vpop.f32.mrb[0].mxu0
  %v218 = vadd.f32 %v45, %v217
  %v219 = vpop.f32.mrb[0].mxu0
  %v220 = vpop.f32.mrb[0].mxu0
  %v221 = vadd.f32 %v45, %v220
  %v222 = vpop.f32.mrb[0].mxu0
  %223 = vmatprep.mubr.bf16.mxu0 0
  %224 = vmatmul.mubr.bf16.gmra.mrb[0].mxu0 %v134
  %v225 = vpop.f32.mrb[0].mxu0
  %v226 = vadd.f32 %v45, %v225
  %v227 = vpop.f32.mrb[0].mxu0
  %v228 = vpop.f32.mrb[0].mxu0
  %v229 = vadd.f32 %v45, %v228
  %v230 = vpop.f32.mrb[0].mxu0
  %231 = vmatprep.mubr.bf16.mxu0 0
  %232 = vmatmul.mubr.bf16.gmra.mrb[0].mxu0 %v137
  %v233 = vpop.f32.mrb[0].mxu0
  %v234 = vadd.f32 %v45, %v233
  %v235 = vpop.f32.mrb[0].mxu0
  %v236 = vpop.f32.mrb[0].mxu0
  %v237 = vadd.f32 %v45, %v236
  %v238 = vpop.f32.mrb[0].mxu0
  %239 = vdwg.mxu0
  %v240 = vmax.f32 %v178, 0.0
  %v241 = vmax.f32 %v181, 0.0
  %v242 = vmax.f32 %v186, 0.0
  %v243 = vmax.f32 %v189, 0.0
  %v244 = vmax.f32 %v194, 0.0
  %v245 = vmax.f32 %v197, 0.0
  %v246 = vmax.f32 %v202, 0.0
  %v247 = vmax.f32 %v205, 0.0
  %v248 = vmax.f32 %v210, 0.0
  %v249 = vmax.f32 %v213, 0.0
  %v250 = vmax.f32 %v218, 0.0
  %v251 = vmax.f32 %v221, 0.0
  %v252 = vmax.f32 %v226, 0.0
  %v253 = vmax.f32 %v229, 0.0
  %v254 = vmax.f32 %v234, 0.0
  %v255 = vmax.f32 %v237, 0.0
  %vm256 = vcmask 64512
  %257 = vst.msk [vmem:[%s3] sm:$0xff] %vm256, %v240
  %258 = vst.msk [vmem:[%s3 + $0x8] sm:$0xff] %vm256, %v241
  %259 = vst.msk [vmem:[%s3 + $0x10] sm:$0xff] %vm256, %v242
  %260 = vst.msk [vmem:[%s3 + $0x18] sm:$0xff] %vm256, %v243
  %261 = vst.msk [vmem:[%s3 + $0x20] sm:$0xff] %vm256, %v244
  %262 = vst.msk [vmem:[%s3 + $0x28] sm:$0xff] %vm256, %v245
  %263 = vst.msk [vmem:[%s3 + $0x30] sm:$0xff] %vm256, %v246
  %264 = vst.msk [vmem:[%s3 + $0x38] sm:$0xff] %vm256, %v247
  %265 = vst.msk [vmem:[%s3 + $0x40] sm:$0xff] %vm256, %v248
  %266 = vst.msk [vmem:[%s3 + $0x48] sm:$0xff] %vm256, %v249
  %267 = vst.msk [vmem:[%s3 + $0x50] sm:$0xff] %vm256, %v250
  %268 = vst.msk [vmem:[%s3 + $0x58] sm:$0xff] %vm256, %v251
  %269 = vst.msk [vmem:[%s3 + $0x60] sm:$0xff] %vm256, %v252
  %270 = vst.msk [vmem:[%s3 + $0x68] sm:$0xff] %vm256, %v253
  %271 = vst.msk [vmem:[%s3 + $0x70] sm:$0xff] %vm256, %v254
  %272 = vst.msk [vmem:[%s3 + $0x78] sm:$0xff] %vm256, %v255
  // Predicated region
  $region14: #{_lambda_.52} parent=0 // pred_check
    _
  $region15: #{_lambda_.52} parent=0 // pred_check_branch
    %274 = sbr.rel (0) target = $region17
  $region16: #{_lambda_.52} parent=0 // pred_region
    _
  $region17: #{_lambda_.52} parent=0 // pred_fallthru
    _
  // Predicated region
  $region18: #{_lambda_.52} parent=0 // pred_check
    _
  $region19: #{_lambda_.52} parent=0 // pred_check_branch
    %276 = sbr.rel (0) target = $region21
  $region20: #{_lambda_.52} parent=0 // pred_region
    _
  $region21: #{_lambda_.52} parent=0 // pred_fallthru
    _

// kernel: _lambda_.51
$region0: #{_lambda_.51}
  #allocation0 [shape = 'u32[]', space=smem, size = 0x4, offset = 0x4, fixed_abs, tag = 'smem constant byte address 0x4 - core index']
  #allocation1 [shape = 'u32[144,128]{1,0:T(1,128)}', space=vmem, size = 0x12000, scoped, tag = 'internal scratch']
  %s0 = inlined_call_operand.vmem [shape: bf16[128,9], index: 0, kind: input, shape index: {}]
  %s1 = inlined_call_operand.vmem [shape: bf16[9,8], index: 1, kind: input, shape index: {}]
  %s2 = inlined_call_operand.vmem [shape: f32[1,8], index: 2, kind: input, shape index: {}]
  %s3 = inlined_call_operand.vmem [shape: f32[128,8], index: 3, kind: output, shape index: {}]
  %s4 = sld [smem:[#allocation0]]
  $region22: #{_lambda_.51} parent=0
    _
  %s6 = ssub.s32 1, %s4
  %s7 = scalar_select 0, %s6, %s4
  // Predicated region
  $region2: #{_lambda_.51} parent=0 // pred_check
    _
  $region3: #{_lambda_.51} parent=0 // pred_check_branch
    %9 = sbr.rel (0) target = $region5
  $region4: #{_lambda_.51} parent=0 // pred_region
    _
  $region5: #{_lambda_.51} parent=0 // pred_fallthru
    _
  // Predicated region
  $region6: #{_lambda_.51} parent=0 // pred_check
    _
  $region7: #{_lambda_.51} parent=0 // pred_check_branch
    %11 = sbr.rel (0) target = $region9
  $region8: #{_lambda_.51} parent=0 // pred_region
    _
  $region9: #{_lambda_.51} parent=0 // pred_fallthru
    _
  // Predicated region
  $region10: #{_lambda_.51} parent=0 // pred_check
    _
  $region11: #{_lambda_.51} parent=0 // pred_check_branch
    %13 = sbr.rel (0) target = $region13
  $region12: #{_lambda_.51} parent=0 // pred_region
    _
  $region13: #{_lambda_.51} parent=0 // pred_fallthru
    _
  %v15 = vld [vmem:[%s0] sm:$0xf]
  %v16 = vld [vmem:[%s0 + $0x4] sm:$0xf]
  %v17 = vld [vmem:[%s0 + $0x8] sm:$0xf]
  %v18 = vld [vmem:[%s0 + $0xc] sm:$0xf]
  %v19 = vld [vmem:[%s0 + $0x10] sm:$0xf]
  %v20 = vld [vmem:[%s0 + $0x14] sm:$0xf]
  %v21 = vld [vmem:[%s0 + $0x18] sm:$0xf]
  %v22 = vld [vmem:[%s0 + $0x1c] sm:$0xf]
  %v23 = vld [vmem:[%s0 + $0x20] sm:$0xf]
  %v24 = vld [vmem:[%s0 + $0x24] sm:$0xf]
  %v25 = vld [vmem:[%s0 + $0x28] sm:$0xf]
  %v26 = vld [vmem:[%s0 + $0x2c] sm:$0xf]
  %v27 = vld [vmem:[%s0 + $0x30] sm:$0xf]
  %v28 = vld [vmem:[%s0 + $0x34] sm:$0xf]
  %v29 = vld [vmem:[%s0 + $0x38] sm:$0xf]
  %v30 = vld [vmem:[%s0 + $0x3c] sm:$0xf]
  %v31 = vld [vmem:[%s1] sm:$0xf]
  %v32 = vld [vmem:[%s1 + $0x4] sm:$0x1]
  %v33 = vld [vmem:[%s2] sm:$0x1]
  %v35 = vlaneseq
  %v36 = vshrl.u32 %v35, 7
  %v37 = vsub.s32 0, %v36
  %v38 = vrot.slane %v33, %v37
  %v56 = vunpack.c.l.b16 %v15
  %v57 = vunpack.c.l.b16 %v16
  %v58 = vunpack.c.l.b16 %v17
  %v59 = vunpack.c.l.b16 %v18
  %v60 = vunpack.c.l.b16 %v19
  %v61 = vunpack.c.l.b16 %v20
  %v62 = vunpack.c.l.b16 %v21
  %v63 = vunpack.c.l.b16 %v22
  %v64 = vunpack.c.l.b16 %v23
  %v65 = vunpack.c.l.b16 %v24
  %v66 = vunpack.c.l.b16 %v25
  %v67 = vunpack.c.l.b16 %v26
  %v68 = vunpack.c.l.b16 %v27
  %v69 = vunpack.c.l.b16 %v28
  %v70 = vunpack.c.l.b16 %v29
  %v71 = vunpack.c.l.b16 %v30
  %v72 = vpack.c.b16 %v57, %v56
  %v73 = vpack.c.b16 %v59, %v58
  %v74 = vpack.c.b16 %v61, %v60
  %v75 = vpack.c.b16 %v63, %v62
  %v76 = vpack.c.b16 %v65, %v64
  %v77 = vpack.c.b16 %v67, %v66
  %v78 = vpack.c.b16 %v69, %v68
  %v79 = vpack.c.b16 %v71, %v70
  %v82 = vunpack.c.l.b16 %v31
  %v83 = vunpack.c.l.b16 %v32
  %v84 = vpack.c.b16 %v83, %v82
  %vm85 = vcmask 72704
  %v87 = vsel %vm85, %v72, 0
  %v90 = vsel %vm85, %v73, 0
  %v93 = vsel %vm85, %v74, 0
  %v96 = vsel %vm85, %v75, 0
  %v99 = vsel %vm85, %v76, 0
  %v102 = vsel %vm85, %v77, 0
  %v105 = vsel %vm85, %v78, 0
  %v108 = vsel %vm85, %v79, 0
  %vm110 = vcmask 1043456
  %vm111 = vcmask 1044480
  %v112 = vsel %vm110, 4294967295, 65535
  %v113 = vsel %vm111, %v112, 0
  %v115 = vand.u32 %v84, %v113
  %117 = vmatprep.subr.bf16.mxu0 0
  %118 = vmatpush1.bf16.msra.mxu0 %v115
  %119 = vmatprep.subr.bf16.mxu0 0
  %120 = vmatpush1.bf16.msra.mxu0 0
  %121 = vmatprep.subr.bf16.mxu0 0
  %122 = vmatpush1.bf16.msra.mxu0 0
  %123 = vmatprep.subr.bf16.mxu0 0
  %124 = vmatpush1.bf16.msra.mxu0 0
  %125 = vmatprep.subr.bf16.mxu0 0
  %126 = vmatpush1.bf16.msra.mxu0 0
  %127 = vmatprep.subr.bf16.mxu0 0
  %128 = vmatpush1.bf16.msra.mxu0 0
  %129 = vmatprep.subr.bf16.mxu0 0
  %130 = vmatpush1.bf16.msra.mxu0 0
  %131 = vmatprep.subr.bf16.mxu0 0
  %132 = vmatpush1.bf16.msra.mxu0 0
  %133 = vmatprep.subr.bf16.mxu0 0
  %134 = vmatpush1.bf16.msra.mxu0 0
  %135 = vmatprep.subr.bf16.mxu0 0
  %136 = vmatpush1.bf16.msra.mxu0 0
  %137 = vmatprep.subr.bf16.mxu0 0
  %138 = vmatpush1.bf16.msra.mxu0 0
  %139 = vmatprep.subr.bf16.mxu0 0
  %140 = vmatpush1.bf16.msra.mxu0 0
  %141 = vmatprep.subr.bf16.mxu0 0
  %142 = vmatpush1.bf16.msra.mxu0 0
  %143 = vmatprep.subr.bf16.mxu0 0
  %144 = vmatpush1.bf16.msra.mxu0 0
  %145 = vmatprep.subr.bf16.mxu0 0
  %146 = vmatpush1.bf16.msra.mxu0 0
  %147 = vmatprep.subr.bf16.mxu0 0
  %148 = vmatpush1.bf16.msra.mxu0 0
  %149 = vmatprep.mubr.bf16.mxu0 0
  %150 = vmatmul.mubr.bf16.gmra.mrb[0].mxu0 %v87
  %v151 = vpop.f32.mrb[0].mxu0
  %v152 = vadd.f32 %v38, %v151
  %v153 = vpop.f32.mrb[0].mxu0
  %v154 = vpop.f32.mrb[0].mxu0
  %v155 = vadd.f32 %v38, %v154
  %v156 = vpop.f32.mrb[0].mxu0
  %157 = vmatprep.mubr.bf16.mxu0 0
  %158 = vmatmul.mubr.bf16.gmra.mrb[0].mxu0 %v90
  %v159 = vpop.f32.mrb[0].mxu0
  %v160 = vadd.f32 %v38, %v159
  %v161 = vpop.f32.mrb[0].mxu0
  %v162 = vpop.f32.mrb[0].mxu0
  %v163 = vadd.f32 %v38, %v162
  %v164 = vpop.f32.mrb[0].mxu0
  %165 = vmatprep.mubr.bf16.mxu0 0
  %166 = vmatmul.mubr.bf16.gmra.mrb[0].mxu0 %v93
  %v167 = vpop.f32.mrb[0].mxu0
  %v168 = vadd.f32 %v38, %v167
  %v169 = vpop.f32.mrb[0].mxu0
  %v170 = vpop.f32.mrb[0].mxu0
  %v171 = vadd.f32 %v38, %v170
  %v172 = vpop.f32.mrb[0].mxu0
  %173 = vmatprep.mubr.bf16.mxu0 0
  %174 = vmatmul.mubr.bf16.gmra.mrb[0].mxu0 %v96
  %v175 = vpop.f32.mrb[0].mxu0
  %v176 = vadd.f32 %v38, %v175
  %v177 = vpop.f32.mrb[0].mxu0
  %v178 = vpop.f32.mrb[0].mxu0
  %v179 = vadd.f32 %v38, %v178
  %v180 = vpop.f32.mrb[0].mxu0
  %181 = vmatprep.mubr.bf16.mxu0 0
  %182 = vmatmul.mubr.bf16.gmra.mrb[0].mxu0 %v99
  %v183 = vpop.f32.mrb[0].mxu0
  %v184 = vadd.f32 %v38, %v183
  %v185 = vpop.f32.mrb[0].mxu0
  %v186 = vpop.f32.mrb[0].mxu0
  %v187 = vadd.f32 %v38, %v186
  %v188 = vpop.f32.mrb[0].mxu0
  %189 = vmatprep.mubr.bf16.mxu0 0
  %190 = vmatmul.mubr.bf16.gmra.mrb[0].mxu0 %v102
  %v191 = vpop.f32.mrb[0].mxu0
  %v192 = vadd.f32 %v38, %v191
  %v193 = vpop.f32.mrb[0].mxu0
  %v194 = vpop.f32.mrb[0].mxu0
  %v195 = vadd.f32 %v38, %v194
  %v196 = vpop.f32.mrb[0].mxu0
  %197 = vmatprep.mubr.bf16.mxu0 0
  %198 = vmatmul.mubr.bf16.gmra.mrb[0].mxu0 %v105
  %v199 = vpop.f32.mrb[0].mxu0
  %v200 = vadd.f32 %v38, %v199
  %v201 = vpop.f32.mrb[0].mxu0
  %v202 = vpop.f32.mrb[0].mxu0
  %v203 = vadd.f32 %v38, %v202
  %v204 = vpop.f32.mrb[0].mxu0
  %205 = vmatprep.mubr.bf16.mxu0 0
  %206 = vmatmul.mubr.bf16.gmra.mrb[0].mxu0 %v108
  %v207 = vpop.f32.mrb[0].mxu0
  %v208 = vadd.f32 %v38, %v207
  %v209 = vpop.f32.mrb[0].mxu0
  %v210 = vpop.f32.mrb[0].mxu0
  %v211 = vadd.f32 %v38, %v210
  %v212 = vpop.f32.mrb[0].mxu0
  %213 = vdwg.mxu0
  %v214 = vmax.f32 %v152, 0.0
  %v215 = vmax.f32 %v155, 0.0
  %v216 = vmax.f32 %v160, 0.0
  %v217 = vmax.f32 %v163, 0.0
  %v218 = vmax.f32 %v168, 0.0
  %v219 = vmax.f32 %v171, 0.0
  %v220 = vmax.f32 %v176, 0.0
  %v221 = vmax.f32 %v179, 0.0
  %v222 = vmax.f32 %v184, 0.0
  %v223 = vmax.f32 %v187, 0.0
  %v224 = vmax.f32 %v192, 0.0
  %v225 = vmax.f32 %v195, 0.0
  %v226 = vmax.f32 %v200, 0.0
  %v227 = vmax.f32 %v203, 0.0
  %v228 = vmax.f32 %v208, 0.0
  %v229 = vmax.f32 %v211, 0.0
  %vm230 = vcmask 64512
  %231 = vst.msk [vmem:[%s3] sm:$0xff] %vm230, %v214
  %232 = vst.msk [vmem:[%s3 + $0x8] sm:$0xff] %vm230, %v215
  %233 = vst.msk [vmem:[%s3 + $0x10] sm:$0xff] %vm230, %v216
  %234 = vst.msk [vmem:[%s3 + $0x18] sm:$0xff] %vm230, %v217
  %235 = vst.msk [vmem:[%s3 + $0x20] sm:$0xff] %vm230, %v218
  %236 = vst.msk [vmem:[%s3 + $0x28] sm:$0xff] %vm230, %v219
  %237 = vst.msk [vmem:[%s3 + $0x30] sm:$0xff] %vm230, %v220
  %238 = vst.msk [vmem:[%s3 + $0x38] sm:$0xff] %vm230, %v221
  %239 = vst.msk [vmem:[%s3 + $0x40] sm:$0xff] %vm230, %v222
  %240 = vst.msk [vmem:[%s3 + $0x48] sm:$0xff] %vm230, %v223
  %241 = vst.msk [vmem:[%s3 + $0x50] sm:$0xff] %vm230, %v224
  %242 = vst.msk [vmem:[%s3 + $0x58] sm:$0xff] %vm230, %v225
  %243 = vst.msk [vmem:[%s3 + $0x60] sm:$0xff] %vm230, %v226
  %244 = vst.msk [vmem:[%s3 + $0x68] sm:$0xff] %vm230, %v227
  %245 = vst.msk [vmem:[%s3 + $0x70] sm:$0xff] %vm230, %v228
  %246 = vst.msk [vmem:[%s3 + $0x78] sm:$0xff] %vm230, %v229
  // Predicated region
  $region14: #{_lambda_.51} parent=0 // pred_check
    _
  $region15: #{_lambda_.51} parent=0 // pred_check_branch
    %248 = sbr.rel (0) target = $region17
  $region16: #{_lambda_.51} parent=0 // pred_region
    _
  $region17: #{_lambda_.51} parent=0 // pred_fallthru
    _
  // Predicated region
  $region18: #{_lambda_.51} parent=0 // pred_check
    _
  $region19: #{_lambda_.51} parent=0 // pred_check_branch
    %250 = sbr.rel (0) target = $region21
  $region20: #{_lambda_.51} parent=0 // pred_region
    _
  $region21: #{_lambda_.51} parent=0 // pred_fallthru
    _

// kernel: _lambda_.53
$region0: #{_lambda_.53}
  #allocation0 [shape = 'u32[]', space=smem, size = 0x4, offset = 0x4, fixed_abs, tag = 'smem constant byte address 0x4 - core index']
  #allocation1 [shape = 'u32[144,128]{1,0:T(1,128)}', space=vmem, size = 0x12000, scoped, tag = 'internal scratch']
  %s0 = inlined_call_operand.vmem [shape: bf16[128,72], index: 0, kind: input, shape index: {}]
  %s1 = inlined_call_operand.vmem [shape: bf16[72,16], index: 1, kind: input, shape index: {}]
  %s2 = inlined_call_operand.vmem [shape: f32[1,16], index: 2, kind: input, shape index: {}]
  %s3 = inlined_call_operand.vmem [shape: f32[128,16], index: 3, kind: output, shape index: {}]
  %s4 = sld [smem:[#allocation0]]
  $region22: #{_lambda_.53} parent=0
    _
  %s6 = ssub.s32 1, %s4
  %s7 = scalar_select 0, %s6, %s4
  // Predicated region
  $region2: #{_lambda_.53} parent=0 // pred_check
    _
  $region3: #{_lambda_.53} parent=0 // pred_check_branch
    %9 = sbr.rel (0) target = $region5
  $region4: #{_lambda_.53} parent=0 // pred_region
    _
  $region5: #{_lambda_.53} parent=0 // pred_fallthru
    _
  // Predicated region
  $region6: #{_lambda_.53} parent=0 // pred_check
    _
  $region7: #{_lambda_.53} parent=0 // pred_check_branch
    %11 = sbr.rel (0) target = $region9
  $region8: #{_lambda_.53} parent=0 // pred_region
    _
  $region9: #{_lambda_.53} parent=0 // pred_fallthru
    _
  // Predicated region
  $region10: #{_lambda_.53} parent=0 // pred_check
    _
  $region11: #{_lambda_.53} parent=0 // pred_check_branch
    %13 = sbr.rel (0) target = $region13
  $region12: #{_lambda_.53} parent=0 // pred_region
    _
  $region13: #{_lambda_.53} parent=0 // pred_fallthru
    _
  %v15 = vld [vmem:[%s0] sm:$0xf]
  %v16 = vld [vmem:[%s0 + $0x4] sm:$0xf]
  %v17 = vld [vmem:[%s0 + $0x8] sm:$0xf]
  %v18 = vld [vmem:[%s0 + $0xc] sm:$0xf]
  %v19 = vld [vmem:[%s0 + $0x10] sm:$0xf]
  %v20 = vld [vmem:[%s0 + $0x14] sm:$0xf]
  %v21 = vld [vmem:[%s0 + $0x18] sm:$0xf]
  %v22 = vld [vmem:[%s0 + $0x1c] sm:$0xf]
  %v23 = vld [vmem:[%s0 + $0x20] sm:$0xf]
  %v24 = vld [vmem:[%s0 + $0x24] sm:$0xf]
  %v25 = vld [vmem:[%s0 + $0x28] sm:$0xf]
  %v26 = vld [vmem:[%s0 + $0x2c] sm:$0xf]
  %v27 = vld [vmem:[%s0 + $0x30] sm:$0xf]
  %v28 = vld [vmem:[%s0 + $0x34] sm:$0xf]
  %v29 = vld [vmem:[%s0 + $0x38] sm:$0xf]
  %v30 = vld [vmem:[%s0 + $0x3c] sm:$0xf]
  %v31 = vld [vmem:[%s1] sm:$0xf]
  %v32 = vld [vmem:[%s1 + $0x4] sm:$0xf]
  %v33 = vld [vmem:[%s1 + $0x8] sm:$0xf]
  %v34 = vld [vmem:[%s1 + $0xc] sm:$0xf]
  %v35 = vld [vmem:[%s1 + $0x10] sm:$0xf]
  %v36 = vld [vmem:[%s1 + $0x14] sm:$0xf]
  %v37 = vld [vmem:[%s1 + $0x18] sm:$0xf]
  %v38 = vld [vmem:[%s1 + $0x1c] sm:$0xf]
  %v39 = vld [vmem:[%s1 + $0x20] sm:$0xf]
  %v40 = vld [vmem:[%s2] sm:$0x1]
  %v42 = vlaneseq
  %v43 = vshrl.u32 %v42, 7
  %v44 = vsub.s32 0, %v43
  %v45 = vrot.slane %v40, %v44
  %v63 = vunpack.c.l.b16 %v15
  %v64 = vunpack.c.l.b16 %v16
  %v65 = vunpack.c.l.b16 %v17
  %v66 = vunpack.c.l.b16 %v18
  %v67 = vunpack.c.l.b16 %v19
  %v68 = vunpack.c.l.b16 %v20
  %v69 = vunpack.c.l.b16 %v21
  %v70 = vunpack.c.l.b16 %v22
  %v71 = vunpack.c.l.b16 %v23
  %v72 = vunpack.c.l.b16 %v24
  %v73 = vunpack.c.l.b16 %v25
  %v74 = vunpack.c.l.b16 %v26
  %v75 = vunpack.c.l.b16 %v27
  %v76 = vunpack.c.l.b16 %v28
  %v77 = vunpack.c.l.b16 %v29
  %v78 = vunpack.c.l.b16 %v30
  %v79 = vpack.c.b16 %v64, %v63
  %v80 = vpack.c.b16 %v66, %v65
  %v81 = vpack.c.b16 %v68, %v67
  %v82 = vpack.c.b16 %v70, %v69
  %v83 = vpack.c.b16 %v72, %v71
  %v84 = vpack.c.b16 %v74, %v73
  %v85 = vpack.c.b16 %v76, %v75
  %v86 = vpack.c.b16 %v78, %v77
  %v96 = vunpack.c.l.b16 %v31
  %v97 = vunpack.c.l.b16 %v32
  %v98 = vunpack.c.l.b16 %v33
  %v99 = vunpack.c.l.b16 %v34
  %v100 = vunpack.c.l.b16 %v35
  %v101 = vunpack.c.l.b16 %v36
  %v102 = vunpack.c.l.b16 %v37
  %v103 = vunpack.c.l.b16 %v38
  %v104 = vunpack.c.l.b16 %v39
  %v105 = vpack.c.b16 %v97, %v96
  %v106 = vpack.c.b16 %v99, %v98
  %v107 = vpack.c.b16 %v101, %v100
  %v108 = vpack.c.b16 %v103, %v102
  %v109 = vpack.c.b16 %v104, %v104
  %vm114 = vcmask 588800
  %v116 = vsel %vm114, %v79, 0
  %v119 = vsel %vm114, %v80, 0
  %v122 = vsel %vm114, %v81, 0
  %v125 = vsel %vm114, %v82, 0
  %v128 = vsel %vm114, %v83, 0
  %v131 = vsel %vm114, %v84, 0
  %v134 = vsel %vm114, %v85, 0
  %v137 = vsel %vm114, %v86, 0
  %vm139 = vcmask 1043456
  %v141 = vsel %vm139, %v109, 0
  %143 = vmatprep.subr.bf16.mxu0 0
  %144 = vmatpush1.bf16.msra.mxu0 %v105
  %145 = vmatprep.subr.bf16.mxu0 0
  %146 = vmatpush1.bf16.msra.mxu0 %v106
  %147 = vmatprep.subr.bf16.mxu0 0
  %148 = vmatpush1.bf16.msra.mxu0 %v107
  %149 = vmatprep.subr.bf16.mxu0 0
  %150 = vmatpush1.bf16.msra.mxu0 %v108
  %151 = vmatprep.subr.bf16.mxu0 0
  %152 = vmatpush1.bf16.msra.mxu0 %v141
  %153 = vmatprep.subr.bf16.mxu0 0
  %154 = vmatpush1.bf16.msra.mxu0 0
  %155 = vmatprep.subr.bf16.mxu0 0
  %156 = vmatpush1.bf16.msra.mxu0 0
  %157 = vmatprep.subr.bf16.mxu0 0
  %158 = vmatpush1.bf16.msra.mxu0 0
  %159 = vmatprep.subr.bf16.mxu0 0
  %160 = vmatpush1.bf16.msra.mxu0 0
  %161 = vmatprep.subr.bf16.mxu0 0
  %162 = vmatpush1.bf16.msra.mxu0 0
  %163 = vmatprep.subr.bf16.mxu0 0
  %164 = vmatpush1.bf16.msra.mxu0 0
  %165 = vmatprep.subr.bf16.mxu0 0
  %166 = vmatpush1.bf16.msra.mxu0 0
  %167 = vmatprep.subr.bf16.mxu0 0
  %168 = vmatpush1.bf16.msra.mxu0 0
  %169 = vmatprep.subr.bf16.mxu0 0
  %170 = vmatpush1.bf16.msra.mxu0 0
  %171 = vmatprep.subr.bf16.mxu0 0
  %172 = vmatpush1.bf16.msra.mxu0 0
  %173 = vmatprep.subr.bf16.mxu0 0
  %174 = vmatpush1.bf16.msra.mxu0 0
  %175 = vmatprep.mubr.bf16.mxu0 0
  %176 = vmatmul.mubr.bf16.gmra.mrb[0].mxu0 %v116
  %v177 = vpop.f32.mrb[0].mxu0
  %v178 = vadd.f32 %v45, %v177
  %v179 = vpop.f32.mrb[0].mxu0
  %v180 = vpop.f32.mrb[0].mxu0
  %v181 = vadd.f32 %v45, %v180
  %v182 = vpop.f32.mrb[0].mxu0
  %183 = vmatprep.mubr.bf16.mxu0 0
  %184 = vmatmul.mubr.bf16.gmra.mrb[0].mxu0 %v119
  %v185 = vpop.f32.mrb[0].mxu0
  %v186 = vadd.f32 %v45, %v185
  %v187 = vpop.f32.mrb[0].mxu0
  %v188 = vpop.f32.mrb[0].mxu0
  %v189 = vadd.f32 %v45, %v188
  %v190 = vpop.f32.mrb[0].mxu0
  %191 = vmatprep.mubr.bf16.mxu0 0
  %192 = vmatmul.mubr.bf16.gmra.mrb[0].mxu0 %v122
  %v193 = vpop.f32.mrb[0].mxu0
  %v194 = vadd.f32 %v45, %v193
  %v195 = vpop.f32.mrb[0].mxu0
  %v196 = vpop.f32.mrb[0].mxu0
  %v197 = vadd.f32 %v45, %v196
  %v198 = vpop.f32.mrb[0].mxu0
  %199 = vmatprep.mubr.bf16.mxu0 0
  %200 = vmatmul.mubr.bf16.gmra.mrb[0].mxu0 %v125
  %v201 = vpop.f32.mrb[0].mxu0
  %v202 = vadd.f32 %v45, %v201
  %v203 = vpop.f32.mrb[0].mxu0
  %v204 = vpop.f32.mrb[0].mxu0
  %v205 = vadd.f32 %v45, %v204
  %v206 = vpop.f32.mrb[0].mxu0
  %207 = vmatprep.mubr.bf16.mxu0 0
  %208 = vmatmul.mubr.bf16.gmra.mrb[0].mxu0 %v128
  %v209 = vpop.f32.mrb[0].mxu0
  %v210 = vadd.f32 %v45, %v209
  %v211 = vpop.f32.mrb[0].mxu0
  %v212 = vpop.f32.mrb[0].mxu0
  %v213 = vadd.f32 %v45, %v212
  %v214 = vpop.f32.mrb[0].mxu0
  %215 = vmatprep.mubr.bf16.mxu0 0
  %216 = vmatmul.mubr.bf16.gmra.mrb[0].mxu0 %v131
  %v217 = vpop.f32.mrb[0].mxu0
  %v218 = vadd.f32 %v45, %v217
  %v219 = vpop.f32.mrb[0].mxu0
  %v220 = vpop.f32.mrb[0].mxu0
  %v221 = vadd.f32 %v45, %v220
  %v222 = vpop.f32.mrb[0].mxu0
  %223 = vmatprep.mubr.bf16.mxu0 0
  %224 = vmatmul.mubr.bf16.gmra.mrb[0].mxu0 %v134
  %v225 = vpop.f32.mrb[0].mxu0
  %v226 = vadd.f32 %v45, %v225
  %v227 = vpop.f32.mrb[0].mxu0
  %v228 = vpop.f32.mrb[0].mxu0
  %v229 = vadd.f32 %v45, %v228
  %v230 = vpop.f32.mrb[0].mxu0
  %231 = vmatprep.mubr.bf16.mxu0 0
  %232 = vmatmul.mubr.bf16.gmra.mrb[0].mxu0 %v137
  %v233 = vpop.f32.mrb[0].mxu0
  %v234 = vadd.f32 %v45, %v233
  %v235 = vpop.f32.mrb[0].mxu0
  %v236 = vpop.f32.mrb[0].mxu0
  %v237 = vadd.f32 %v45, %v236
  %v238 = vpop.f32.mrb[0].mxu0
  %239 = vdwg.mxu0
  %v240 = vmax.f32 %v178, 0.0
  %v241 = vmax.f32 %v181, 0.0
  %v242 = vmax.f32 %v186, 0.0
  %v243 = vmax.f32 %v189, 0.0
  %v244 = vmax.f32 %v194, 0.0
  %v245 = vmax.f32 %v197, 0.0
  %v246 = vmax.f32 %v202, 0.0
  %v247 = vmax.f32 %v205, 0.0
  %v248 = vmax.f32 %v210, 0.0
  %v249 = vmax.f32 %v213, 0.0
  %v250 = vmax.f32 %v218, 0.0
  %v251 = vmax.f32 %v221, 0.0
  %v252 = vmax.f32 %v226, 0.0
  %v253 = vmax.f32 %v229, 0.0
  %v254 = vmax.f32 %v234, 0.0
  %v255 = vmax.f32 %v237, 0.0
  %vm256 = vcmask 130048
  %257 = vst.msk [vmem:[%s3] sm:$0xff] %vm256, %v240
  %258 = vst.msk [vmem:[%s3 + $0x8] sm:$0xff] %vm256, %v241
  %259 = vst.msk [vmem:[%s3 + $0x10] sm:$0xff] %vm256, %v242
  %260 = vst.msk [vmem:[%s3 + $0x18] sm:$0xff] %vm256, %v243
  %261 = vst.msk [vmem:[%s3 + $0x20] sm:$0xff] %vm256, %v244
  %262 = vst.msk [vmem:[%s3 + $0x28] sm:$0xff] %vm256, %v245
  %263 = vst.msk [vmem:[%s3 + $0x30] sm:$0xff] %vm256, %v246
  %264 = vst.msk [vmem:[%s3 + $0x38] sm:$0xff] %vm256, %v247
  %265 = vst.msk [vmem:[%s3 + $0x40] sm:$0xff] %vm256, %v248
  %266 = vst.msk [vmem:[%s3 + $0x48] sm:$0xff] %vm256, %v249
  %267 = vst.msk [vmem:[%s3 + $0x50] sm:$0xff] %vm256, %v250
  %268 = vst.msk [vmem:[%s3 + $0x58] sm:$0xff] %vm256, %v251
  %269 = vst.msk [vmem:[%s3 + $0x60] sm:$0xff] %vm256, %v252
  %270 = vst.msk [vmem:[%s3 + $0x68] sm:$0xff] %vm256, %v253
  %271 = vst.msk [vmem:[%s3 + $0x70] sm:$0xff] %vm256, %v254
  %272 = vst.msk [vmem:[%s3 + $0x78] sm:$0xff] %vm256, %v255
  // Predicated region
  $region14: #{_lambda_.53} parent=0 // pred_check
    _
  $region15: #{_lambda_.53} parent=0 // pred_check_branch
    %274 = sbr.rel (0) target = $region17
  $region16: #{_lambda_.53} parent=0 // pred_region
    _
  $region17: #{_lambda_.53} parent=0 // pred_fallthru
    _
  // Predicated region
  $region18: #{_lambda_.53} parent=0 // pred_check
    _
  $region19: #{_lambda_.53} parent=0 // pred_check_branch
    %276 = sbr.rel (0) target = $region21
  $region20: #{_lambda_.53} parent=0 // pred_region
    _
  $region21: #{_lambda_.53} parent=0 // pred_fallthru
    _

// kernel: _lambda_.54
$region0: #{_lambda_.54}
  #allocation0 [shape = 'u32[]', space=smem, size = 0x4, offset = 0x4, fixed_abs, tag = 'smem constant byte address 0x4 - core index']
  #allocation1 [shape = 'u32[144,128]{1,0:T(1,128)}', space=vmem, size = 0x12000, scoped, tag = 'internal scratch']
  %s0 = inlined_call_operand.vmem [shape: bf16[32,144], index: 0, kind: input, shape index: {}]
  %s1 = inlined_call_operand.vmem [shape: bf16[144,16], index: 1, kind: input, shape index: {}]
  %s2 = inlined_call_operand.vmem [shape: f32[1,16], index: 2, kind: input, shape index: {}]
  %s3 = inlined_call_operand.vmem [shape: f32[32,16], index: 3, kind: output, shape index: {}]
  %s4 = sld [smem:[#allocation0]]
  $region22: #{_lambda_.54} parent=0
    _
  %s6 = ssub.s32 1, %s4
  %s7 = scalar_select 0, %s6, %s4
  // Predicated region
  $region2: #{_lambda_.54} parent=0 // pred_check
    _
  $region3: #{_lambda_.54} parent=0 // pred_check_branch
    %9 = sbr.rel (0) target = $region5
  $region4: #{_lambda_.54} parent=0 // pred_region
    _
  $region5: #{_lambda_.54} parent=0 // pred_fallthru
    _
  // Predicated region
  $region6: #{_lambda_.54} parent=0 // pred_check
    _
  $region7: #{_lambda_.54} parent=0 // pred_check_branch
    %11 = sbr.rel (0) target = $region9
  $region8: #{_lambda_.54} parent=0 // pred_region
    _
  $region9: #{_lambda_.54} parent=0 // pred_fallthru
    _
  // Predicated region
  $region10: #{_lambda_.54} parent=0 // pred_check
    _
  $region11: #{_lambda_.54} parent=0 // pred_check_branch
    %13 = sbr.rel (0) target = $region13
  $region12: #{_lambda_.54} parent=0 // pred_region
    _
  $region13: #{_lambda_.54} parent=0 // pred_fallthru
    _
  %v15 = vld [vmem:[%s0] sm:$0xff]
  %v16 = vld [vmem:[%s0 + $0x8] sm:$0xff]
  %v17 = vld [vmem:[%s0 + $0x10] sm:$0xff]
  %v18 = vld [vmem:[%s0 + $0x18] sm:$0xff]
  %v19 = vld [vmem:[%s1] sm:$0xf]
  %v20 = vld [vmem:[%s1 + $0x4] sm:$0xf]
  %v21 = vld [vmem:[%s1 + $0x8] sm:$0xf]
  %v22 = vld [vmem:[%s1 + $0xc] sm:$0xf]
  %v23 = vld [vmem:[%s1 + $0x10] sm:$0xf]
  %v24 = vld [vmem:[%s1 + $0x14] sm:$0xf]
  %v25 = vld [vmem:[%s1 + $0x18] sm:$0xf]
  %v26 = vld [vmem:[%s1 + $0x1c] sm:$0xf]
  %v27 = vld [vmem:[%s1 + $0x20] sm:$0xf]
  %v28 = vld [vmem:[%s1 + $0x24] sm:$0xf]
  %v29 = vld [vmem:[%s1 + $0x28] sm:$0xf]
  %v30 = vld [vmem:[%s1 + $0x2c] sm:$0xf]
  %v31 = vld [vmem:[%s1 + $0x30] sm:$0xf]
  %v32 = vld [vmem:[%s1 + $0x34] sm:$0xf]
  %v33 = vld [vmem:[%s1 + $0x38] sm:$0xf]
  %v34 = vld [vmem:[%s1 + $0x3c] sm:$0xf]
  %v35 = vld [vmem:[%s1 + $0x40] sm:$0xf]
  %v36 = vld [vmem:[%s1 + $0x44] sm:$0xf]
  %v37 = vld [vmem:[%s2] sm:$0x1]
  %v39 = vlaneseq
  %v40 = vshrl.u32 %v39, 7
  %v41 = vsub.s32 0, %v40
  %v42 = vrot.slane %v37, %v41
  %v48 = vunpack.c.l.b16 %v15
  %v49 = vunpack.c.h.b16 %v15
  %v50 = vunpack.c.l.b16 %v16
  %v51 = vunpack.c.h.b16 %v16
  %v52 = vunpack.c.l.b16 %v17
  %v53 = vunpack.c.h.b16 %v17
  %v54 = vunpack.c.l.b16 %v18
  %v55 = vunpack.c.h.b16 %v18
  %v56 = vpack.c.b16 %v50, %v48
  %v57 = vpack.c.b16 %v51, %v49
  %v58 = vpack.c.b16 %v54, %v52
  %v59 = vpack.c.b16 %v55, %v53
  %v80 = vunpack.c.l.b16 %v19
  %v81 = vunpack.c.l.b16 %v20
  %v82 = vunpack.c.l.b16 %v21
  %v83 = vunpack.c.l.b16 %v22
  %v84 = vunpack.c.l.b16 %v23
  %v85 = vunpack.c.l.b16 %v24
  %v86 = vunpack.c.l.b16 %v25
  %v87 = vunpack.c.l.b16 %v26
  %v88 = vunpack.c.l.b16 %v27
  %v89 = vunpack.c.l.b16 %v28
  %v90 = vunpack.c.l.b16 %v29
  %v91 = vunpack.c.l.b16 %v30
  %v92 = vunpack.c.l.b16 %v31
  %v93 = vunpack.c.l.b16 %v32
  %v94 = vunpack.c.l.b16 %v33
  %v95 = vunpack.c.l.b16 %v34
  %v96 = vunpack.c.l.b16 %v35
  %v97 = vunpack.c.l.b16 %v36
  %v98 = vpack.c.b16 %v81, %v80
  %v99 = vpack.c.b16 %v83, %v82
  %v100 = vpack.c.b16 %v85, %v84
  %v101 = vpack.c.b16 %v87, %v86
  %v102 = vpack.c.b16 %v89, %v88
  %v103 = vpack.c.b16 %v91, %v90
  %v104 = vpack.c.b16 %v93, %v92
  %v105 = vpack.c.b16 %v95, %v94
  %v106 = vpack.c.b16 %v97, %v96
  %vm116 = vcmask 130048
  %v118 = vsel %vm116, %v57, 0
  %v121 = vsel %vm116, %v59, 0
  %123 = vmatprep.subr.bf16.mxu0 0
  %124 = vmatpush1.bf16.msra.mxu0 %v98
  %125 = vmatprep.subr.bf16.mxu0 0
  %126 = vmatpush1.bf16.msra.mxu0 %v99
  %127 = vmatprep.subr.bf16.mxu0 0
  %128 = vmatpush1.bf16.msra.mxu0 %v100
  %129 = vmatprep.subr.bf16.mxu0 0
  %130 = vmatpush1.bf16.msra.mxu0 %v101
  %131 = vmatprep.subr.bf16.mxu0 0
  %132 = vmatpush1.bf16.msra.mxu0 %v102
  %133 = vmatprep.subr.bf16.mxu0 0
  %134 = vmatpush1.bf16.msra.mxu0 %v103
  %135 = vmatprep.subr.bf16.mxu0 0
  %136 = vmatpush1.bf16.msra.mxu0 %v104
  %137 = vmatprep.subr.bf16.mxu0 0
  %138 = vmatpush1.bf16.msra.mxu0 %v105
  %139 = vmatprep.subr.bf16.mxu0 0
  %140 = vmatpush1.bf16.msra.mxu0 %v106
  %141 = vmatprep.subr.bf16.mxu0 0
  %142 = vmatpush1.bf16.msra.mxu0 0
  %143 = vmatprep.subr.bf16.mxu0 0
  %144 = vmatpush1.bf16.msra.mxu0 0
  %145 = vmatprep.subr.bf16.mxu0 0
  %146 = vmatpush1.bf16.msra.mxu0 0
  %147 = vmatprep.subr.bf16.mxu0 0
  %148 = vmatpush1.bf16.msra.mxu0 0
  %149 = vmatprep.subr.bf16.mxu0 0
  %150 = vmatpush1.bf16.msra.mxu0 0
  %151 = vmatprep.subr.bf16.mxu0 0
  %152 = vmatpush1.bf16.msra.mxu0 0
  %153 = vmatprep.subr.bf16.mxu0 0
  %154 = vmatpush1.bf16.msra.mxu0 0
  %155 = vmatprep.mubr.bf16.mxu0 %v118
  %156 = vmatmul.mubr.bf16.gmra.mrb[0].mxu0 %v56
  %v157 = vpop.f32.mrb[0].mxu0
  %v158 = vadd.f32 %v42, %v157
  %v159 = vpop.f32.mrb[0].mxu0
  %v160 = vpop.f32.mrb[0].mxu0
  %v161 = vadd.f32 %v42, %v160
  %v162 = vpop.f32.mrb[0].mxu0
  %163 = vmatprep.mubr.bf16.mxu0 %v121
  %164 = vmatmul.mubr.bf16.gmra.mrb[0].mxu0 %v58
  %v165 = vpop.f32.mrb[0].mxu0
  %v166 = vadd.f32 %v42, %v165
  %v167 = vpop.f32.mrb[0].mxu0
  %v168 = vpop.f32.mrb[0].mxu0
  %v169 = vadd.f32 %v42, %v168
  %v170 = vpop.f32.mrb[0].mxu0
  %171 = vdwg.mxu0
  %v172 = vmax.f32 %v158, 0.0
  %v173 = vmax.f32 %v161, 0.0
  %v174 = vmax.f32 %v166, 0.0
  %v175 = vmax.f32 %v169, 0.0
  %176 = vst.msk [vmem:[%s3] sm:$0xff] %vm116, %v172
  %177 = vst.msk [vmem:[%s3 + $0x8] sm:$0xff] %vm116, %v173
  %178 = vst.msk [vmem:[%s3 + $0x10] sm:$0xff] %vm116, %v174
  %179 = vst.msk [vmem:[%s3 + $0x18] sm:$0xff] %vm116, %v175
  // Predicated region
  $region14: #{_lambda_.54} parent=0 // pred_check
    _
  $region15: #{_lambda_.54} parent=0 // pred_check_branch
    %181 = sbr.rel (0) target = $region17
  $region16: #{_lambda_.54} parent=0 // pred_region
    _
  $region17: #{_lambda_.54} parent=0 // pred_fallthru
    _
  // Predicated region
  $region18: #{_lambda_.54} parent=0 // pred_check
    _
  $region19: #{_lambda_.54} parent=0 // pred_check_branch
    %183 = sbr.rel (0) target = $region21
  $region20: #{_lambda_.54} parent=0 // pred_region
    _
  $region21: #{_lambda_.54} parent=0 // pred_fallthru
    _

// kernel: _lambda_.55
$region0: #{_lambda_.55}
  #allocation0 [shape = 'u32[]', space=smem, size = 0x4, offset = 0x4, fixed_abs, tag = 'smem constant byte address 0x4 - core index']
  #allocation1 [shape = 'u32[144,128]{1,0:T(1,128)}', space=vmem, size = 0x12000, scoped, tag = 'internal scratch']
  %s0 = inlined_call_operand.vmem [shape: bf16[32,144], index: 0, kind: input, shape index: {}]
  %s1 = inlined_call_operand.vmem [shape: bf16[144,16], index: 1, kind: input, shape index: {}]
  %s2 = inlined_call_operand.vmem [shape: f32[1,16], index: 2, kind: input, shape index: {}]
  %s3 = inlined_call_operand.vmem [shape: f32[32,16], index: 3, kind: input, shape index: {}]
  %s4 = inlined_call_operand.vmem [shape: f32[32,16], index: 4, kind: output, shape index: {}]
  %s5 = sld [smem:[#allocation0]]
  $region26: #{_lambda_.55} parent=0
    _
  %s7 = ssub.s32 1, %s5
  %s8 = scalar_select 0, %s7, %s5
  // Predicated region
  $region2: #{_lambda_.55} parent=0 // pred_check
    _
  $region3: #{_lambda_.55} parent=0 // pred_check_branch
    %10 = sbr.rel (0) target = $region5
  $region4: #{_lambda_.55} parent=0 // pred_region
    _
  $region5: #{_lambda_.55} parent=0 // pred_fallthru
    _
  // Predicated region
  $region6: #{_lambda_.55} parent=0 // pred_check
    _
  $region7: #{_lambda_.55} parent=0 // pred_check_branch
    %12 = sbr.rel (0) target = $region9
  $region8: #{_lambda_.55} parent=0 // pred_region
    _
  $region9: #{_lambda_.55} parent=0 // pred_fallthru
    _
  // Predicated region
  $region10: #{_lambda_.55} parent=0 // pred_check
    _
  $region11: #{_lambda_.55} parent=0 // pred_check_branch
    %14 = sbr.rel (0) target = $region13
  $region12: #{_lambda_.55} parent=0 // pred_region
    _
  $region13: #{_lambda_.55} parent=0 // pred_fallthru
    _
  // Predicated region
  $region14: #{_lambda_.55} parent=0 // pred_check
    _
  $region15: #{_lambda_.55} parent=0 // pred_check_branch
    %16 = sbr.rel (0) target = $region17
  $region16: #{_lambda_.55} parent=0 // pred_region
    _
  $region17: #{_lambda_.55} parent=0 // pred_fallthru
    _
  %v18 = vld [vmem:[%s0] sm:$0xff]
  %v19 = vld [vmem:[%s0 + $0x8] sm:$0xff]
  %v20 = vld [vmem:[%s0 + $0x10] sm:$0xff]
  %v21 = vld [vmem:[%s0 + $0x18] sm:$0xff]
  %v22 = vld [vmem:[%s1] sm:$0xf]
  %v23 = vld [vmem:[%s1 + $0x4] sm:$0xf]
  %v24 = vld [vmem:[%s1 + $0x8] sm:$0xf]
  %v25 = vld [vmem:[%s1 + $0xc] sm:$0xf]
  %v26 = vld [vmem:[%s1 + $0x10] sm:$0xf]
  %v27 = vld [vmem:[%s1 + $0x14] sm:$0xf]
  %v28 = vld [vmem:[%s1 + $0x18] sm:$0xf]
  %v29 = vld [vmem:[%s1 + $0x1c] sm:$0xf]
  %v30 = vld [vmem:[%s1 + $0x20] sm:$0xf]
  %v31 = vld [vmem:[%s1 + $0x24] sm:$0xf]
  %v32 = vld [vmem:[%s1 + $0x28] sm:$0xf]
  %v33 = vld [vmem:[%s1 + $0x2c] sm:$0xf]
  %v34 = vld [vmem:[%s1 + $0x30] sm:$0xf]
  %v35 = vld [vmem:[%s1 + $0x34] sm:$0xf]
  %v36 = vld [vmem:[%s1 + $0x38] sm:$0xf]
  %v37 = vld [vmem:[%s1 + $0x3c] sm:$0xf]
  %v38 = vld [vmem:[%s1 + $0x40] sm:$0xf]
  %v39 = vld [vmem:[%s1 + $0x44] sm:$0xf]
  %v40 = vld [vmem:[%s2] sm:$0x1]
  %v42 = vlaneseq
  %v43 = vshrl.u32 %v42, 7
  %v44 = vsub.s32 0, %v43
  %v45 = vrot.slane %v40, %v44
  %v51 = vunpack.c.l.b16 %v18
  %v52 = vunpack.c.h.b16 %v18
  %v53 = vunpack.c.l.b16 %v19
  %v54 = vunpack.c.h.b16 %v19
  %v55 = vunpack.c.l.b16 %v20
  %v56 = vunpack.c.h.b16 %v20
  %v57 = vunpack.c.l.b16 %v21
  %v58 = vunpack.c.h.b16 %v21
  %v59 = vpack.c.b16 %v53, %v51
  %v60 = vpack.c.b16 %v54, %v52
  %v61 = vpack.c.b16 %v57, %v55
  %v62 = vpack.c.b16 %v58, %v56
  %v83 = vunpack.c.l.b16 %v22
  %v84 = vunpack.c.l.b16 %v23
  %v85 = vunpack.c.l.b16 %v24
  %v86 = vunpack.c.l.b16 %v25
  %v87 = vunpack.c.l.b16 %v26
  %v88 = vunpack.c.l.b16 %v27
  %v89 = vunpack.c.l.b16 %v28
  %v90 = vunpack.c.l.b16 %v29
  %v91 = vunpack.c.l.b16 %v30
  %v92 = vunpack.c.l.b16 %v31
  %v93 = vunpack.c.l.b16 %v32
  %v94 = vunpack.c.l.b16 %v33
  %v95 = vunpack.c.l.b16 %v34
  %v96 = vunpack.c.l.b16 %v35
  %v97 = vunpack.c.l.b16 %v36
  %v98 = vunpack.c.l.b16 %v37
  %v99 = vunpack.c.l.b16 %v38
  %v100 = vunpack.c.l.b16 %v39
  %v101 = vpack.c.b16 %v84, %v83
  %v102 = vpack.c.b16 %v86, %v85
  %v103 = vpack.c.b16 %v88, %v87
  %v104 = vpack.c.b16 %v90, %v89
  %v105 = vpack.c.b16 %v92, %v91
  %v106 = vpack.c.b16 %v94, %v93
  %v107 = vpack.c.b16 %v96, %v95
  %v108 = vpack.c.b16 %v98, %v97
  %v109 = vpack.c.b16 %v100, %v99
  %vm119 = vcmask 130048
  %v121 = vsel %vm119, %v60, 0
  %v124 = vsel %vm119, %v62, 0
  %126 = vmatprep.subr.bf16.mxu0 0
  %127 = vmatpush1.bf16.msra.mxu0 %v101
  %128 = vmatprep.subr.bf16.mxu0 0
  %129 = vmatpush1.bf16.msra.mxu0 %v102
  %130 = vmatprep.subr.bf16.mxu0 0
  %131 = vmatpush1.bf16.msra.mxu0 %v103
  %132 = vmatprep.subr.bf16.mxu0 0
  %133 = vmatpush1.bf16.msra.mxu0 %v104
  %134 = vmatprep.subr.bf16.mxu0 0
  %135 = vmatpush1.bf16.msra.mxu0 %v105
  %136 = vmatprep.subr.bf16.mxu0 0
  %137 = vmatpush1.bf16.msra.mxu0 %v106
  %138 = vmatprep.subr.bf16.mxu0 0
  %139 = vmatpush1.bf16.msra.mxu0 %v107
  %140 = vmatprep.subr.bf16.mxu0 0
  %141 = vmatpush1.bf16.msra.mxu0 %v108
  %142 = vmatprep.subr.bf16.mxu0 0
  %143 = vmatpush1.bf16.msra.mxu0 %v109
  %144 = vmatprep.subr.bf16.mxu0 0
  %145 = vmatpush1.bf16.msra.mxu0 0
  %146 = vmatprep.subr.bf16.mxu0 0
  %147 = vmatpush1.bf16.msra.mxu0 0
  %148 = vmatprep.subr.bf16.mxu0 0
  %149 = vmatpush1.bf16.msra.mxu0 0
  %150 = vmatprep.subr.bf16.mxu0 0
  %151 = vmatpush1.bf16.msra.mxu0 0
  %152 = vmatprep.subr.bf16.mxu0 0
  %153 = vmatpush1.bf16.msra.mxu0 0
  %154 = vmatprep.subr.bf16.mxu0 0
  %155 = vmatpush1.bf16.msra.mxu0 0
  %156 = vmatprep.subr.bf16.mxu0 0
  %157 = vmatpush1.bf16.msra.mxu0 0
  %158 = vmatprep.mubr.bf16.mxu0 %v121
  %159 = vmatmul.mubr.bf16.gmra.mrb[0].mxu0 %v59
  %v160 = vpop.f32.mrb[0].mxu0
  %v161 = vadd.f32 %v45, %v160
  %v162 = vpop.f32.mrb[0].mxu0
  %v163 = vpop.f32.mrb[0].mxu0
  %v164 = vadd.f32 %v45, %v163
  %v165 = vpop.f32.mrb[0].mxu0
  %166 = vmatprep.mubr.bf16.mxu0 %v124
  %167 = vmatmul.mubr.bf16.gmra.mrb[0].mxu0 %v61
  %v168 = vpop.f32.mrb[0].mxu0
  %v169 = vadd.f32 %v45, %v168
  %v170 = vpop.f32.mrb[0].mxu0
  %v171 = vpop.f32.mrb[0].mxu0
  %v172 = vadd.f32 %v45, %v171
  %v173 = vpop.f32.mrb[0].mxu0
  %174 = vdwg.mxu0
  %v175 = vld [vmem:[%s3] sm:$0xff]
  %v176 = vld [vmem:[%s3 + $0x8] sm:$0xff]
  %v177 = vld [vmem:[%s3 + $0x10] sm:$0xff]
  %v178 = vld [vmem:[%s3 + $0x18] sm:$0xff]
  %v179 = vadd.f32 %v161, %v175
  %v180 = vadd.f32 %v164, %v176
  %v181 = vadd.f32 %v169, %v177
  %v182 = vadd.f32 %v172, %v178
  %v183 = vmax.f32 %v179, 0.0
  %v184 = vmax.f32 %v180, 0.0
  %v185 = vmax.f32 %v181, 0.0
  %v186 = vmax.f32 %v182, 0.0
  %187 = vst.msk [vmem:[%s4] sm:$0xff] %vm119, %v183
  %188 = vst.msk [vmem:[%s4 + $0x8] sm:$0xff] %vm119, %v184
  %189 = vst.msk [vmem:[%s4 + $0x10] sm:$0xff] %vm119, %v185
  %190 = vst.msk [vmem:[%s4 + $0x18] sm:$0xff] %vm119, %v186
  // Predicated region
  $region18: #{_lambda_.55} parent=0 // pred_check
    _
  $region19: #{_lambda_.55} parent=0 // pred_check_branch
    %192 = sbr.rel (0) target = $region21
  $region20: #{_lambda_.55} parent=0 // pred_region
    _
  $region21: #{_lambda_.55} parent=0 // pred_fallthru
    _
  // Predicated region
  $region22: #{_lambda_.55} parent=0 // pred_check
    _
  $region23: #{_lambda_.55} parent=0 // pred_check_branch
    %194 = sbr.rel (0) target = $region25
  $region24: #{_lambda_.55} parent=0 // pred_region
    _
  $region25: #{_lambda_.55} parent=0 // pred_fallthru
    _

// kernel: _lambda_.60
$region0: #{_lambda_.60}
  #allocation0 [shape = 'u32[]', space=smem, size = 0x4, offset = 0x4, fixed_abs, tag = 'smem constant byte address 0x4 - core index']
  #allocation1 [shape = 'u32[144,128]{1,0:T(1,128)}', space=vmem, size = 0x12000, scoped, tag = 'internal scratch']
  %s0 = inlined_call_operand.vmem [shape: bf16[8,144], index: 0, kind: input, shape index: {}]
  %s1 = inlined_call_operand.vmem [shape: bf16[144,64], index: 1, kind: input, shape index: {}]
  %s2 = inlined_call_operand.vmem [shape: f32[1,64], index: 2, kind: input, shape index: {}]
  %s3 = inlined_call_operand.vmem [shape: f32[8,64], index: 3, kind: output, shape index: {}]
  %s4 = sld [smem:[#allocation0]]
  $region22: #{_lambda_.60} parent=0
    _
  %s6 = ssub.s32 1, %s4
  %s7 = scalar_select 0, %s6, %s4
  // Predicated region
  $region2: #{_lambda_.60} parent=0 // pred_check
    _
  $region3: #{_lambda_.60} parent=0 // pred_check_branch
    %9 = sbr.rel (0) target = $region5
  $region4: #{_lambda_.60} parent=0 // pred_region
    _
  $region5: #{_lambda_.60} parent=0 // pred_fallthru
    _
  // Predicated region
  $region6: #{_lambda_.60} parent=0 // pred_check
    _
  $region7: #{_lambda_.60} parent=0 // pred_check_branch
    %11 = sbr.rel (0) target = $region9
  $region8: #{_lambda_.60} parent=0 // pred_region
    _
  $region9: #{_lambda_.60} parent=0 // pred_fallthru
    _
  // Predicated region
  $region10: #{_lambda_.60} parent=0 // pred_check
    _
  $region11: #{_lambda_.60} parent=0 // pred_check_branch
    %13 = sbr.rel (0) target = $region13
  $region12: #{_lambda_.60} parent=0 // pred_region
    _
  $region13: #{_lambda_.60} parent=0 // pred_fallthru
    _
  %v15 = vld [vmem:[%s0] sm:$0xff]
  %v16 = vld [vmem:[%s1] sm:$0xf]
  %v17 = vld [vmem:[%s1 + $0x4] sm:$0xf]
  %v18 = vld [vmem:[%s1 + $0x8] sm:$0xf]
  %v19 = vld [vmem:[%s1 + $0xc] sm:$0xf]
  %v20 = vld [vmem:[%s1 + $0x10] sm:$0xf]
  %v21 = vld [vmem:[%s1 + $0x14] sm:$0xf]
  %v22 = vld [vmem:[%s1 + $0x18] sm:$0xf]
  %v23 = vld [vmem:[%s1 + $0x1c] sm:$0xf]
  %v24 = vld [vmem:[%s1 + $0x20] sm:$0xf]
  %v25 = vld [vmem:[%s1 + $0x24] sm:$0xf]
  %v26 = vld [vmem:[%s1 + $0x28] sm:$0xf]
  %v27 = vld [vmem:[%s1 + $0x2c] sm:$0xf]
  %v28 = vld [vmem:[%s1 + $0x30] sm:$0xf]
  %v29 = vld [vmem:[%s1 + $0x34] sm:$0xf]
  %v30 = vld [vmem:[%s1 + $0x38] sm:$0xf]
  %v31 = vld [vmem:[%s1 + $0x3c] sm:$0xf]
  %v32 = vld [vmem:[%s1 + $0x40] sm:$0xf]
  %v33 = vld [vmem:[%s1 + $0x44] sm:$0xf]
  %v34 = vld [vmem:[%s2] sm:$0x1]
  %v36 = vlaneseq
  %v37 = vshrl.u32 %v36, 7
  %v38 = vsub.s32 0, %v37
  %v39 = vrot.slane %v34, %v38
  %v42 = vunpack.c.l.b16 %v15
  %v43 = vunpack.c.h.b16 %v15
  %v44 = vpack.c.b16 %v42, %v42
  %v45 = vpack.c.b16 %v43, %v43
  %v65 = vunpack.c.l.b16 %v16
  %v66 = vunpack.c.l.b16 %v17
  %v67 = vunpack.c.l.b16 %v18
  %v68 = vunpack.c.l.b16 %v19
  %v69 = vunpack.c.l.b16 %v20
  %v70 = vunpack.c.l.b16 %v21
  %v71 = vunpack.c.l.b16 %v22
  %v72 = vunpack.c.l.b16 %v23
  %v73 = vunpack.c.l.b16 %v24
  %v74 = vunpack.c.l.b16 %v25
  %v75 = vunpack.c.l.b16 %v26
  %v76 = vunpack.c.l.b16 %v27
  %v77 = vunpack.c.l.b16 %v28
  %v78 = vunpack.c.l.b16 %v29
  %v79 = vunpack.c.l.b16 %v30
  %v80 = vunpack.c.l.b16 %v31
  %v81 = vunpack.c.l.b16 %v32
  %v82 = vunpack.c.l.b16 %v33
  %v83 = vpack.c.b16 %v66, %v65
  %v84 = vpack.c.b16 %v68, %v67
  %v85 = vpack.c.b16 %v70, %v69
  %v86 = vpack.c.b16 %v72, %v71
  %v87 = vpack.c.b16 %v74, %v73
  %v88 = vpack.c.b16 %v76, %v75
  %v89 = vpack.c.b16 %v78, %v77
  %v90 = vpack.c.b16 %v80, %v79
  %v91 = vpack.c.b16 %v82, %v81
  %vm101 = vcmask 130048
  %v103 = vsel %vm101, %v45, 0
  %105 = vmatprep.subr.bf16.mxu0 0
  %106 = vmatpush1.bf16.msra.mxu0 %v83
  %107 = vmatprep.subr.bf16.mxu0 0
  %108 = vmatpush1.bf16.msra.mxu0 %v84
  %109 = vmatprep.subr.bf16.mxu0 0
  %110 = vmatpush1.bf16.msra.mxu0 %v85
  %111 = vmatprep.subr.bf16.mxu0 0
  %112 = vmatpush1.bf16.msra.mxu0 %v86
  %113 = vmatprep.subr.bf16.mxu0 0
  %114 = vmatpush1.bf16.msra.mxu0 %v87
  %115 = vmatprep.subr.bf16.mxu0 0
  %116 = vmatpush1.bf16.msra.mxu0 %v88
  %117 = vmatprep.subr.bf16.mxu0 0
  %118 = vmatpush1.bf16.msra.mxu0 %v89
  %119 = vmatprep.subr.bf16.mxu0 0
  %120 = vmatpush1.bf16.msra.mxu0 %v90
  %121 = vmatprep.subr.bf16.mxu0 0
  %122 = vmatpush1.bf16.msra.mxu0 %v91
  %123 = vmatprep.subr.bf16.mxu0 0
  %124 = vmatpush1.bf16.msra.mxu0 0
  %125 = vmatprep.subr.bf16.mxu0 0
  %126 = vmatpush1.bf16.msra.mxu0 0
  %127 = vmatprep.subr.bf16.mxu0 0
  %128 = vmatpush1.bf16.msra.mxu0 0
  %129 = vmatprep.subr.bf16.mxu0 0
  %130 = vmatpush1.bf16.msra.mxu0 0
  %131 = vmatprep.subr.bf16.mxu0 0
  %132 = vmatpush1.bf16.msra.mxu0 0
  %133 = vmatprep.subr.bf16.mxu0 0
  %134 = vmatpush1.bf16.msra.mxu0 0
  %135 = vmatprep.subr.bf16.mxu0 0
  %136 = vmatpush1.bf16.msra.mxu0 0
  %137 = vmatprep.mubr.bf16.mxu0 %v103
  %138 = vmatmul.mubr.bf16.gmra.mrb[0].mxu0 %v44
  %v139 = vpop.f32.mrb[0].mxu0
  %v140 = vadd.f32 %v39, %v139
  %v141 = vpop.f32.mrb[0].mxu0
  %v142 = vpop.f32.mrb[0].mxu0
  %v143 = vpop.f32.mrb[0].mxu0
  %144 = vdwg.mxu0
  %vm145 = vcmask 523264
  %146 = vst.msk [vmem:[%s3] sm:$0xff] %vm145, %v140
  // Predicated region
  $region14: #{_lambda_.60} parent=0 // pred_check
    _
  $region15: #{_lambda_.60} parent=0 // pred_check_branch
    %148 = sbr.rel (0) target = $region17
  $region16: #{_lambda_.60} parent=0 // pred_region
    _
  $region17: #{_lambda_.60} parent=0 // pred_fallthru
    _
  // Predicated region
  $region18: #{_lambda_.60} parent=0 // pred_check
    _
  $region19: #{_lambda_.60} parent=0 // pred_check_branch
    %150 = sbr.rel (0) target = $region21
  $region20: #{_lambda_.60} parent=0 // pred_region
    _
  $region21: #{_lambda_.60} parent=0 // pred_fallthru
    _

// kernel: _lambda_.62
$region0: #{_lambda_.62}
  #allocation0 [shape = 'u32[]', space=smem, size = 0x4, offset = 0x4, fixed_abs, tag = 'smem constant byte address 0x4 - core index']
  #allocation1 [shape = 'u32[144,128]{1,0:T(1,128)}', space=vmem, size = 0x12000, scoped, tag = 'internal scratch']
  %s0 = inlined_call_operand.vmem [shape: bf16[8,288], index: 0, kind: input, shape index: {}]
  %s1 = inlined_call_operand.vmem [shape: bf16[288,32], index: 1, kind: input, shape index: {}]
  %s2 = inlined_call_operand.vmem [shape: f32[1,32], index: 2, kind: input, shape index: {}]
  %s3 = inlined_call_operand.vmem [shape: f32[8,32], index: 3, kind: output, shape index: {}]
  %s4 = sld [smem:[#allocation0]]
  $region22: #{_lambda_.62} parent=0
    _
  %s6 = ssub.s32 1, %s4
  %s7 = scalar_select 0, %s6, %s4
  // Predicated region
  $region2: #{_lambda_.62} parent=0 // pred_check
    _
  $region3: #{_lambda_.62} parent=0 // pred_check_branch
    %9 = sbr.rel (0) target = $region5
  $region4: #{_lambda_.62} parent=0 // pred_region
    _
  $region5: #{_lambda_.62} parent=0 // pred_fallthru
    _
  // Predicated region
  $region6: #{_lambda_.62} parent=0 // pred_check
    _
  $region7: #{_lambda_.62} parent=0 // pred_check_branch
    %11 = sbr.rel (0) target = $region9
  $region8: #{_lambda_.62} parent=0 // pred_region
    _
  $region9: #{_lambda_.62} parent=0 // pred_fallthru
    _
  // Predicated region
  $region10: #{_lambda_.62} parent=0 // pred_check
    _
  $region11: #{_lambda_.62} parent=0 // pred_check_branch
    %13 = sbr.rel (0) target = $region13
  $region12: #{_lambda_.62} parent=0 // pred_region
    _
  $region13: #{_lambda_.62} parent=0 // pred_fallthru
    _
  %v15 = vld [vmem:[%s0] sm:$0xff]
  %v16 = vld [vmem:[%s0 + $0x8] sm:$0xf]
  %v17 = vld [vmem:[%s1] sm:$0xf]
  %v18 = vld [vmem:[%s1 + $0x4] sm:$0xf]
  %v19 = vld [vmem:[%s1 + $0x8] sm:$0xf]
  %v20 = vld [vmem:[%s1 + $0xc] sm:$0xf]
  %v21 = vld [vmem:[%s1 + $0x10] sm:$0xf]
  %v22 = vld [vmem:[%s1 + $0x14] sm:$0xf]
  %v23 = vld [vmem:[%s1 + $0x18] sm:$0xf]
  %v24 = vld [vmem:[%s1 + $0x1c] sm:$0xf]
  %v25 = vld [vmem:[%s1 + $0x20] sm:$0xf]
  %v26 = vld [vmem:[%s1 + $0x24] sm:$0xf]
  %v27 = vld [vmem:[%s1 + $0x28] sm:$0xf]
  %v28 = vld [vmem:[%s1 + $0x2c] sm:$0xf]
  %v29 = vld [vmem:[%s1 + $0x30] sm:$0xf]
  %v30 = vld [vmem:[%s1 + $0x34] sm:$0xf]
  %v31 = vld [vmem:[%s1 + $0x38] sm:$0xf]
  %v32 = vld [vmem:[%s1 + $0x3c] sm:$0xf]
  %v33 = vld [vmem:[%s1 + $0x40] sm:$0xf]
  %v34 = vld [vmem:[%s1 + $0x44] sm:$0xf]
  %v35 = vld [vmem:[%s1 + $0x48] sm:$0xf]
  %v36 = vld [vmem:[%s1 + $0x4c] sm:$0xf]
  %v37 = vld [vmem:[%s1 + $0x50] sm:$0xf]
  %v38 = vld [vmem:[%s1 + $0x54] sm:$0xf]
  %v39 = vld [vmem:[%s1 + $0x58] sm:$0xf]
  %v40 = vld [vmem:[%s1 + $0x5c] sm:$0xf]
  %v41 = vld [vmem:[%s1 + $0x60] sm:$0xf]
  %v42 = vld [vmem:[%s1 + $0x64] sm:$0xf]
  %v43 = vld [vmem:[%s1 + $0x68] sm:$0xf]
  %v44 = vld [vmem:[%s1 + $0x6c] sm:$0xf]
  %v45 = vld [vmem:[%s1 + $0x70] sm:$0xf]
  %v46 = vld [vmem:[%s1 + $0x74] sm:$0xf]
  %v47 = vld [vmem:[%s1 + $0x78] sm:$0xf]
  %v48 = vld [vmem:[%s1 + $0x7c] sm:$0xf]
  %v49 = vld [vmem:[%s1 + $0x80] sm:$0xf]
  %v50 = vld [vmem:[%s1 + $0x84] sm:$0xf]
  %v51 = vld [vmem:[%s1 + $0x88] sm:$0xf]
  %v52 = vld [vmem:[%s1 + $0x8c] sm:$0xf]
  %v53 = vld [vmem:[%s2] sm:$0x1]
  %v55 = vlaneseq
  %v56 = vshrl.u32 %v55, 7
  %v57 = vsub.s32 0, %v56
  %v58 = vrot.slane %v53, %v57
  %v62 = vunpack.c.l.b16 %v15
  %v63 = vunpack.c.h.b16 %v15
  %v64 = vunpack.c.l.b16 %v16
  %v65 = vpack.c.b16 %v62, %v62
  %v66 = vpack.c.b16 %v63, %v63
  %v67 = vpack.c.b16 %v64, %v64
  %v106 = vunpack.c.l.b16 %v17
  %v107 = vunpack.c.l.b16 %v18
  %v108 = vunpack.c.l.b16 %v19
  %v109 = vunpack.c.l.b16 %v20
  %v110 = vunpack.c.l.b16 %v21
  %v111 = vunpack.c.l.b16 %v22
  %v112 = vunpack.c.l.b16 %v23
  %v113 = vunpack.c.l.b16 %v24
  %v114 = vunpack.c.l.b16 %v25
  %v115 = vunpack.c.l.b16 %v26
  %v116 = vunpack.c.l.b16 %v27
  %v117 = vunpack.c.l.b16 %v28
  %v118 = vunpack.c.l.b16 %v29
  %v119 = vunpack.c.l.b16 %v30
  %v120 = vunpack.c.l.b16 %v31
  %v121 = vunpack.c.l.b16 %v32
  %v122 = vunpack.c.l.b16 %v33
  %v123 = vunpack.c.l.b16 %v34
  %v124 = vunpack.c.l.b16 %v35
  %v125 = vunpack.c.l.b16 %v36
  %v126 = vunpack.c.l.b16 %v37
  %v127 = vunpack.c.l.b16 %v38
  %v128 = vunpack.c.l.b16 %v39
  %v129 = vunpack.c.l.b16 %v40
  %v130 = vunpack.c.l.b16 %v41
  %v131 = vunpack.c.l.b16 %v42
  %v132 = vunpack.c.l.b16 %v43
  %v133 = vunpack.c.l.b16 %v44
  %v134 = vunpack.c.l.b16 %v45
  %v135 = vunpack.c.l.b16 %v46
  %v136 = vunpack.c.l.b16 %v47
  %v137 = vunpack.c.l.b16 %v48
  %v138 = vunpack.c.l.b16 %v49
  %v139 = vunpack.c.l.b16 %v50
  %v140 = vunpack.c.l.b16 %v51
  %v141 = vunpack.c.l.b16 %v52
  %v142 = vpack.c.b16 %v107, %v106
  %v143 = vpack.c.b16 %v109, %v108
  %v144 = vpack.c.b16 %v111, %v110
  %v145 = vpack.c.b16 %v113, %v112
  %v146 = vpack.c.b16 %v115, %v114
  %v147 = vpack.c.b16 %v117, %v116
  %v148 = vpack.c.b16 %v119, %v118
  %v149 = vpack.c.b16 %v121, %v120
  %v150 = vpack.c.b16 %v123, %v122
  %v151 = vpack.c.b16 %v125, %v124
  %v152 = vpack.c.b16 %v127, %v126
  %v153 = vpack.c.b16 %v129, %v128
  %v154 = vpack.c.b16 %v131, %v130
  %v155 = vpack.c.b16 %v133, %v132
  %v156 = vpack.c.b16 %v135, %v134
  %v157 = vpack.c.b16 %v137, %v136
  %v158 = vpack.c.b16 %v139, %v138
  %v159 = vpack.c.b16 %v141, %v140
  %vm178 = vcmask 261120
  %v180 = vsel %vm178, %v67, 0
  %182 = vmatprep.subr.bf16.mxu0 0
  %183 = vmatpush1.bf16.msra.mxu0 %v142
  %184 = vmatprep.subr.bf16.mxu0 0
  %185 = vmatpush1.bf16.msra.mxu0 %v143
  %186 = vmatprep.subr.bf16.mxu0 0
  %187 = vmatpush1.bf16.msra.mxu0 %v144
  %188 = vmatprep.subr.bf16.mxu0 0
  %189 = vmatpush1.bf16.msra.mxu0 %v145
  %190 = vmatprep.subr.bf16.mxu0 0
  %191 = vmatpush1.bf16.msra.mxu0 %v146
  %192 = vmatprep.subr.bf16.mxu0 0
  %193 = vmatpush1.bf16.msra.mxu0 %v147
  %194 = vmatprep.subr.bf16.mxu0 0
  %195 = vmatpush1.bf16.msra.mxu0 %v148
  %196 = vmatprep.subr.bf16.mxu0 0
  %197 = vmatpush1.bf16.msra.mxu0 %v149
  %198 = vmatprep.subr.bf16.mxu0 0
  %199 = vmatpush1.bf16.msra.mxu0 %v150
  %200 = vmatprep.subr.bf16.mxu0 0
  %201 = vmatpush1.bf16.msra.mxu0 %v151
  %202 = vmatprep.subr.bf16.mxu0 0
  %203 = vmatpush1.bf16.msra.mxu0 %v152
  %204 = vmatprep.subr.bf16.mxu0 0
  %205 = vmatpush1.bf16.msra.mxu0 %v153
  %206 = vmatprep.subr.bf16.mxu0 0
  %207 = vmatpush1.bf16.msra.mxu0 %v154
  %208 = vmatprep.subr.bf16.mxu0 0
  %209 = vmatpush1.bf16.msra.mxu0 %v155
  %210 = vmatprep.subr.bf16.mxu0 0
  %211 = vmatpush1.bf16.msra.mxu0 %v156
  %212 = vmatprep.subr.bf16.mxu0 0
  %213 = vmatpush1.bf16.msra.mxu0 %v157
  %214 = vmatprep.mubr.bf16.mxu0 %v66
  %215 = vmatmul.mubr.bf16.gmra.mrb[0].mxu0 %v65
  %v216 = vpop.f32.mrb[0].mxu0
  %v217 = vadd.f32 %v58, %v216
  %v218 = vpop.f32.mrb[0].mxu0
  %v219 = vpop.f32.mrb[0].mxu0
  %v220 = vpop.f32.mrb[0].mxu0
  %221 = vdwg.mxu0
  %222 = vmatprep.subr.bf16.mxu0 0
  %223 = vmatpush1.bf16.msra.mxu0 %v158
  %224 = vmatprep.subr.bf16.mxu0 0
  %225 = vmatpush1.bf16.msra.mxu0 %v159
  %226 = vmatprep.subr.bf16.mxu0 0
  %227 = vmatpush1.bf16.msra.mxu0 0
  %228 = vmatprep.subr.bf16.mxu0 0
  %229 = vmatpush1.bf16.msra.mxu0 0
  %230 = vmatprep.subr.bf16.mxu0 0
  %231 = vmatpush1.bf16.msra.mxu0 0
  %232 = vmatprep.subr.bf16.mxu0 0
  %233 = vmatpush1.bf16.msra.mxu0 0
  %234 = vmatprep.subr.bf16.mxu0 0
  %235 = vmatpush1.bf16.msra.mxu0 0
  %236 = vmatprep.subr.bf16.mxu0 0
  %237 = vmatpush1.bf16.msra.mxu0 0
  %238 = vmatprep.subr.bf16.mxu0 0
  %239 = vmatpush1.bf16.msra.mxu0 0
  %240 = vmatprep.subr.bf16.mxu0 0
  %241 = vmatpush1.bf16.msra.mxu0 0
  %242 = vmatprep.subr.bf16.mxu0 0
  %243 = vmatpush1.bf16.msra.mxu0 0
  %244 = vmatprep.subr.bf16.mxu0 0
  %245 = vmatpush1.bf16.msra.mxu0 0
  %246 = vmatprep.subr.bf16.mxu0 0
  %247 = vmatpush1.bf16.msra.mxu0 0
  %248 = vmatprep.subr.bf16.mxu0 0
  %249 = vmatpush1.bf16.msra.mxu0 0
  %250 = vmatprep.subr.bf16.mxu0 0
  %251 = vmatpush1.bf16.msra.mxu0 0
  %252 = vmatprep.subr.bf16.mxu0 0
  %253 = vmatpush1.bf16.msra.mxu0 0
  %254 = vmatprep.mubr.bf16.mxu0 0
  %255 = vmatmul.mubr.bf16.gmra.mrb[0].mxu0 %v180
  %v256 = vpop.f32.mrb[0].mxu0
  %v257 = vadd.f32 %v217, %v256
  %v258 = vpop.f32.mrb[0].mxu0
  %v259 = vpop.f32.mrb[0].mxu0
  %v260 = vpop.f32.mrb[0].mxu0
  %261 = vdwg.mxu0
  %v262 = vmax.f32 %v257, 0.0
  %263 = vst.msk [vmem:[%s3] sm:$0xff] %vm178, %v262
  // Predicated region
  $region14: #{_lambda_.62} parent=0 // pred_check
    _
  $region15: #{_lambda_.62} parent=0 // pred_check_branch
    %265 = sbr.rel (0) target = $region17
  $region16: #{_lambda_.62} parent=0 // pred_region
    _
  $region17: #{_lambda_.62} parent=0 // pred_fallthru
    _
  // Predicated region
  $region18: #{_lambda_.62} parent=0 // pred_check
    _
  $region19: #{_lambda_.62} parent=0 // pred_check_branch
    %267 = sbr.rel (0) target = $region21
  $region20: #{_lambda_.62} parent=0 // pred_region
    _
  $region21: #{_lambda_.62} parent=0 // pred_fallthru
    _

// kernel: _lambda_.61
$region0: #{_lambda_.61}
  #allocation0 [shape = 'u32[]', space=smem, size = 0x4, offset = 0x4, fixed_abs, tag = 'smem constant byte address 0x4 - core index']
  #allocation1 [shape = 'u32[144,128]{1,0:T(1,128)}', space=vmem, size = 0x12000, scoped, tag = 'internal scratch']
  %s0 = inlined_call_operand.vmem [shape: bf16[8,288], index: 0, kind: input, shape index: {}]
  %s1 = inlined_call_operand.vmem [shape: bf16[288,32], index: 1, kind: input, shape index: {}]
  %s2 = inlined_call_operand.vmem [shape: f32[1,32], index: 2, kind: input, shape index: {}]
  %s3 = inlined_call_operand.vmem [shape: f32[8,32], index: 3, kind: input, shape index: {}]
  %s4 = inlined_call_operand.vmem [shape: f32[8,32], index: 4, kind: output, shape index: {}]
  %s5 = sld [smem:[#allocation0]]
  $region26: #{_lambda_.61} parent=0
    _
  %s7 = ssub.s32 1, %s5
  %s8 = scalar_select 0, %s7, %s5
  // Predicated region
  $region2: #{_lambda_.61} parent=0 // pred_check
    _
  $region3: #{_lambda_.61} parent=0 // pred_check_branch
    %10 = sbr.rel (0) target = $region5
  $region4: #{_lambda_.61} parent=0 // pred_region
    _
  $region5: #{_lambda_.61} parent=0 // pred_fallthru
    _
  // Predicated region
  $region6: #{_lambda_.61} parent=0 // pred_check
    _
  $region7: #{_lambda_.61} parent=0 // pred_check_branch
    %12 = sbr.rel (0) target = $region9
  $region8: #{_lambda_.61} parent=0 // pred_region
    _
  $region9: #{_lambda_.61} parent=0 // pred_fallthru
    _
  // Predicated region
  $region10: #{_lambda_.61} parent=0 // pred_check
    _
  $region11: #{_lambda_.61} parent=0 // pred_check_branch
    %14 = sbr.rel (0) target = $region13
  $region12: #{_lambda_.61} parent=0 // pred_region
    _
  $region13: #{_lambda_.61} parent=0 // pred_fallthru
    _
  // Predicated region
  $region14: #{_lambda_.61} parent=0 // pred_check
    _
  $region15: #{_lambda_.61} parent=0 // pred_check_branch
    %16 = sbr.rel (0) target = $region17
  $region16: #{_lambda_.61} parent=0 // pred_region
    _
  $region17: #{_lambda_.61} parent=0 // pred_fallthru
    _
  %v18 = vld [vmem:[%s0] sm:$0xff]
  %v19 = vld [vmem:[%s0 + $0x8] sm:$0xf]
  %v20 = vld [vmem:[%s1] sm:$0xf]
  %v21 = vld [vmem:[%s1 + $0x4] sm:$0xf]
  %v22 = vld [vmem:[%s1 + $0x8] sm:$0xf]
  %v23 = vld [vmem:[%s1 + $0xc] sm:$0xf]
  %v24 = vld [vmem:[%s1 + $0x10] sm:$0xf]
  %v25 = vld [vmem:[%s1 + $0x14] sm:$0xf]
  %v26 = vld [vmem:[%s1 + $0x18] sm:$0xf]
  %v27 = vld [vmem:[%s1 + $0x1c] sm:$0xf]
  %v28 = vld [vmem:[%s1 + $0x20] sm:$0xf]
  %v29 = vld [vmem:[%s1 + $0x24] sm:$0xf]
  %v30 = vld [vmem:[%s1 + $0x28] sm:$0xf]
  %v31 = vld [vmem:[%s1 + $0x2c] sm:$0xf]
  %v32 = vld [vmem:[%s1 + $0x30] sm:$0xf]
  %v33 = vld [vmem:[%s1 + $0x34] sm:$0xf]
  %v34 = vld [vmem:[%s1 + $0x38] sm:$0xf]
  %v35 = vld [vmem:[%s1 + $0x3c] sm:$0xf]
  %v36 = vld [vmem:[%s1 + $0x40] sm:$0xf]
  %v37 = vld [vmem:[%s1 + $0x44] sm:$0xf]
  %v38 = vld [vmem:[%s1 + $0x48] sm:$0xf]
  %v39 = vld [vmem:[%s1 + $0x4c] sm:$0xf]
  %v40 = vld [vmem:[%s1 + $0x50] sm:$0xf]
  %v41 = vld [vmem:[%s1 + $0x54] sm:$0xf]
  %v42 = vld [vmem:[%s1 + $0x58] sm:$0xf]
  %v43 = vld [vmem:[%s1 + $0x5c] sm:$0xf]
  %v44 = vld [vmem:[%s1 + $0x60] sm:$0xf]
  %v45 = vld [vmem:[%s1 + $0x64] sm:$0xf]
  %v46 = vld [vmem:[%s1 + $0x68] sm:$0xf]
  %v47 = vld [vmem:[%s1 + $0x6c] sm:$0xf]
  %v48 = vld [vmem:[%s1 + $0x70] sm:$0xf]
  %v49 = vld [vmem:[%s1 + $0x74] sm:$0xf]
  %v50 = vld [vmem:[%s1 + $0x78] sm:$0xf]
  %v51 = vld [vmem:[%s1 + $0x7c] sm:$0xf]
  %v52 = vld [vmem:[%s1 + $0x80] sm:$0xf]
  %v53 = vld [vmem:[%s1 + $0x84] sm:$0xf]
  %v54 = vld [vmem:[%s1 + $0x88] sm:$0xf]
  %v55 = vld [vmem:[%s1 + $0x8c] sm:$0xf]
  %v56 = vld [vmem:[%s2] sm:$0x1]
  %v58 = vlaneseq
  %v59 = vshrl.u32 %v58, 7
  %v60 = vsub.s32 0, %v59
  %v61 = vrot.slane %v56, %v60
  %v65 = vunpack.c.l.b16 %v18
  %v66 = vunpack.c.h.b16 %v18
  %v67 = vunpack.c.l.b16 %v19
  %v68 = vpack.c.b16 %v65, %v65
  %v69 = vpack.c.b16 %v66, %v66
  %v70 = vpack.c.b16 %v67, %v67
  %v109 = vunpack.c.l.b16 %v20
  %v110 = vunpack.c.l.b16 %v21
  %v111 = vunpack.c.l.b16 %v22
  %v112 = vunpack.c.l.b16 %v23
  %v113 = vunpack.c.l.b16 %v24
  %v114 = vunpack.c.l.b16 %v25
  %v115 = vunpack.c.l.b16 %v26
  %v116 = vunpack.c.l.b16 %v27
  %v117 = vunpack.c.l.b16 %v28
  %v118 = vunpack.c.l.b16 %v29
  %v119 = vunpack.c.l.b16 %v30
  %v120 = vunpack.c.l.b16 %v31
  %v121 = vunpack.c.l.b16 %v32
  %v122 = vunpack.c.l.b16 %v33
  %v123 = vunpack.c.l.b16 %v34
  %v124 = vunpack.c.l.b16 %v35
  %v125 = vunpack.c.l.b16 %v36
  %v126 = vunpack.c.l.b16 %v37
  %v127 = vunpack.c.l.b16 %v38
  %v128 = vunpack.c.l.b16 %v39
  %v129 = vunpack.c.l.b16 %v40
  %v130 = vunpack.c.l.b16 %v41
  %v131 = vunpack.c.l.b16 %v42
  %v132 = vunpack.c.l.b16 %v43
  %v133 = vunpack.c.l.b16 %v44
  %v134 = vunpack.c.l.b16 %v45
  %v135 = vunpack.c.l.b16 %v46
  %v136 = vunpack.c.l.b16 %v47
  %v137 = vunpack.c.l.b16 %v48
  %v138 = vunpack.c.l.b16 %v49
  %v139 = vunpack.c.l.b16 %v50
  %v140 = vunpack.c.l.b16 %v51
  %v141 = vunpack.c.l.b16 %v52
  %v142 = vunpack.c.l.b16 %v53
  %v143 = vunpack.c.l.b16 %v54
  %v144 = vunpack.c.l.b16 %v55
  %v145 = vpack.c.b16 %v110, %v109
  %v146 = vpack.c.b16 %v112, %v111
  %v147 = vpack.c.b16 %v114, %v113
  %v148 = vpack.c.b16 %v116, %v115
  %v149 = vpack.c.b16 %v118, %v117
  %v150 = vpack.c.b16 %v120, %v119
  %v151 = vpack.c.b16 %v122, %v121
  %v152 = vpack.c.b16 %v124, %v123
  %v153 = vpack.c.b16 %v126, %v125
  %v154 = vpack.c.b16 %v128, %v127
  %v155 = vpack.c.b16 %v130, %v129
  %v156 = vpack.c.b16 %v132, %v131
  %v157 = vpack.c.b16 %v134, %v133
  %v158 = vpack.c.b16 %v136, %v135
  %v159 = vpack.c.b16 %v138, %v137
  %v160 = vpack.c.b16 %v140, %v139
  %v161 = vpack.c.b16 %v142, %v141
  %v162 = vpack.c.b16 %v144, %v143
  %vm181 = vcmask 261120
  %v183 = vsel %vm181, %v70, 0
  %185 = vmatprep.subr.bf16.mxu0 0
  %186 = vmatpush1.bf16.msra.mxu0 %v145
  %187 = vmatprep.subr.bf16.mxu0 0
  %188 = vmatpush1.bf16.msra.mxu0 %v146
  %189 = vmatprep.subr.bf16.mxu0 0
  %190 = vmatpush1.bf16.msra.mxu0 %v147
  %191 = vmatprep.subr.bf16.mxu0 0
  %192 = vmatpush1.bf16.msra.mxu0 %v148
  %193 = vmatprep.subr.bf16.mxu0 0
  %194 = vmatpush1.bf16.msra.mxu0 %v149
  %195 = vmatprep.subr.bf16.mxu0 0
  %196 = vmatpush1.bf16.msra.mxu0 %v150
  %197 = vmatprep.subr.bf16.mxu0 0
  %198 = vmatpush1.bf16.msra.mxu0 %v151
  %199 = vmatprep.subr.bf16.mxu0 0
  %200 = vmatpush1.bf16.msra.mxu0 %v152
  %201 = vmatprep.subr.bf16.mxu0 0
  %202 = vmatpush1.bf16.msra.mxu0 %v153
  %203 = vmatprep.subr.bf16.mxu0 0
  %204 = vmatpush1.bf16.msra.mxu0 %v154
  %205 = vmatprep.subr.bf16.mxu0 0
  %206 = vmatpush1.bf16.msra.mxu0 %v155
  %207 = vmatprep.subr.bf16.mxu0 0
  %208 = vmatpush1.bf16.msra.mxu0 %v156
  %209 = vmatprep.subr.bf16.mxu0 0
  %210 = vmatpush1.bf16.msra.mxu0 %v157
  %211 = vmatprep.subr.bf16.mxu0 0
  %212 = vmatpush1.bf16.msra.mxu0 %v158
  %213 = vmatprep.subr.bf16.mxu0 0
  %214 = vmatpush1.bf16.msra.mxu0 %v159
  %215 = vmatprep.subr.bf16.mxu0 0
  %216 = vmatpush1.bf16.msra.mxu0 %v160
  %217 = vmatprep.mubr.bf16.mxu0 %v69
  %218 = vmatmul.mubr.bf16.gmra.mrb[0].mxu0 %v68
  %v219 = vpop.f32.mrb[0].mxu0
  %v220 = vadd.f32 %v61, %v219
  %v221 = vpop.f32.mrb[0].mxu0
  %v222 = vpop.f32.mrb[0].mxu0
  %v223 = vpop.f32.mrb[0].mxu0
  %224 = vdwg.mxu0
  %225 = vmatprep.subr.bf16.mxu0 0
  %226 = vmatpush1.bf16.msra.mxu0 %v161
  %227 = vmatprep.subr.bf16.mxu0 0
  %228 = vmatpush1.bf16.msra.mxu0 %v162
  %229 = vmatprep.subr.bf16.mxu0 0
  %230 = vmatpush1.bf16.msra.mxu0 0
  %231 = vmatprep.subr.bf16.mxu0 0
  %232 = vmatpush1.bf16.msra.mxu0 0
  %233 = vmatprep.subr.bf16.mxu0 0
  %234 = vmatpush1.bf16.msra.mxu0 0
  %235 = vmatprep.subr.bf16.mxu0 0
  %236 = vmatpush1.bf16.msra.mxu0 0
  %237 = vmatprep.subr.bf16.mxu0 0
  %238 = vmatpush1.bf16.msra.mxu0 0
  %239 = vmatprep.subr.bf16.mxu0 0
  %240 = vmatpush1.bf16.msra.mxu0 0
  %241 = vmatprep.subr.bf16.mxu0 0
  %242 = vmatpush1.bf16.msra.mxu0 0
  %243 = vmatprep.subr.bf16.mxu0 0
  %244 = vmatpush1.bf16.msra.mxu0 0
  %245 = vmatprep.subr.bf16.mxu0 0
  %246 = vmatpush1.bf16.msra.mxu0 0
  %247 = vmatprep.subr.bf16.mxu0 0
  %248 = vmatpush1.bf16.msra.mxu0 0
  %249 = vmatprep.subr.bf16.mxu0 0
  %250 = vmatpush1.bf16.msra.mxu0 0
  %251 = vmatprep.subr.bf16.mxu0 0
  %252 = vmatpush1.bf16.msra.mxu0 0
  %253 = vmatprep.subr.bf16.mxu0 0
  %254 = vmatpush1.bf16.msra.mxu0 0
  %255 = vmatprep.subr.bf16.mxu0 0
  %256 = vmatpush1.bf16.msra.mxu0 0
  %257 = vmatprep.mubr.bf16.mxu0 0
  %258 = vmatmul.mubr.bf16.gmra.mrb[0].mxu0 %v183
  %v259 = vpop.f32.mrb[0].mxu0
  %v260 = vadd.f32 %v220, %v259
  %v261 = vpop.f32.mrb[0].mxu0
  %v262 = vpop.f32.mrb[0].mxu0
  %v263 = vpop.f32.mrb[0].mxu0
  %264 = vdwg.mxu0
  %v265 = vld [vmem:[%s3] sm:$0xff]
  %v266 = vadd.f32 %v260, %v265
  %v267 = vmax.f32 %v266, 0.0
  %268 = vst.msk [vmem:[%s4] sm:$0xff] %vm181, %v267
  // Predicated region
  $region18: #{_lambda_.61} parent=0 // pred_check
    _
  $region19: #{_lambda_.61} parent=0 // pred_check_branch
    %270 = sbr.rel (0) target = $region21
  $region20: #{_lambda_.61} parent=0 // pred_region
    _
  $region21: #{_lambda_.61} parent=0 // pred_fallthru
    _
  // Predicated region
  $region22: #{_lambda_.61} parent=0 // pred_check
    _
  $region23: #{_lambda_.61} parent=0 // pred_check_branch
    %272 = sbr.rel (0) target = $region25
  $region24: #{_lambda_.61} parent=0 // pred_region
    _
  $region25: #{_lambda_.61} parent=0 // pred_fallthru
    _

// kernel: _lambda_.66
$region0: #{_lambda_.66}
  #allocation0 [shape = 'u32[]', space=smem, size = 0x4, offset = 0x4, fixed_abs, tag = 'smem constant byte address 0x4 - core index']
  #allocation1 [shape = 'u32[144,128]{1,0:T(1,128)}', space=vmem, size = 0x12000, scoped, tag = 'internal scratch']
  %s0 = inlined_call_operand.vmem [shape: bf16[2,288], index: 0, kind: input, shape index: {}]
  %s1 = inlined_call_operand.vmem [shape: bf16[288,128], index: 1, kind: input, shape index: {}]
  %s2 = inlined_call_operand.vmem [shape: f32[1,128], index: 2, kind: input, shape index: {}]
  %s3 = inlined_call_operand.vmem [shape: f32[2,128], index: 3, kind: output, shape index: {}]
  %s4 = sld [smem:[#allocation0]]
  $region22: #{_lambda_.66} parent=0
    _
  %s6 = ssub.s32 1, %s4
  %s7 = scalar_select 0, %s6, %s4
  // Predicated region
  $region2: #{_lambda_.66} parent=0 // pred_check
    _
  $region3: #{_lambda_.66} parent=0 // pred_check_branch
    %9 = sbr.rel (0) target = $region5
  $region4: #{_lambda_.66} parent=0 // pred_region
    _
  $region5: #{_lambda_.66} parent=0 // pred_fallthru
    _
  // Predicated region
  $region6: #{_lambda_.66} parent=0 // pred_check
    _
  $region7: #{_lambda_.66} parent=0 // pred_check_branch
    %11 = sbr.rel (0) target = $region9
  $region8: #{_lambda_.66} parent=0 // pred_region
    _
  $region9: #{_lambda_.66} parent=0 // pred_fallthru
    _
  // Predicated region
  $region10: #{_lambda_.66} parent=0 // pred_check
    _
  $region11: #{_lambda_.66} parent=0 // pred_check_branch
    %13 = sbr.rel (0) target = $region13
  $region12: #{_lambda_.66} parent=0 // pred_region
    _
  $region13: #{_lambda_.66} parent=0 // pred_fallthru
    _
  %v15 = vld [vmem:[%s0] sm:$0x7]
  %v16 = vld [vmem:[%s1] sm:$0xf]
  %v17 = vld [vmem:[%s1 + $0x4] sm:$0xf]
  %v18 = vld [vmem:[%s1 + $0x8] sm:$0xf]
  %v19 = vld [vmem:[%s1 + $0xc] sm:$0xf]
  %v20 = vld [vmem:[%s1 + $0x10] sm:$0xf]
  %v21 = vld [vmem:[%s1 + $0x14] sm:$0xf]
  %v22 = vld [vmem:[%s1 + $0x18] sm:$0xf]
  %v23 = vld [vmem:[%s1 + $0x1c] sm:$0xf]
  %v24 = vld [vmem:[%s1 + $0x20] sm:$0xf]
  %v25 = vld [vmem:[%s1 + $0x24] sm:$0xf]
  %v26 = vld [vmem:[%s1 + $0x28] sm:$0xf]
  %v27 = vld [vmem:[%s1 + $0x2c] sm:$0xf]
  %v28 = vld [vmem:[%s1 + $0x30] sm:$0xf]
  %v29 = vld [vmem:[%s1 + $0x34] sm:$0xf]
  %v30 = vld [vmem:[%s1 + $0x38] sm:$0xf]
  %v31 = vld [vmem:[%s1 + $0x3c] sm:$0xf]
  %v32 = vld [vmem:[%s1 + $0x40] sm:$0xf]
  %v33 = vld [vmem:[%s1 + $0x44] sm:$0xf]
  %v34 = vld [vmem:[%s1 + $0x48] sm:$0xf]
  %v35 = vld [vmem:[%s1 + $0x4c] sm:$0xf]
  %v36 = vld [vmem:[%s1 + $0x50] sm:$0xf]
  %v37 = vld [vmem:[%s1 + $0x54] sm:$0xf]
  %v38 = vld [vmem:[%s1 + $0x58] sm:$0xf]
  %v39 = vld [vmem:[%s1 + $0x5c] sm:$0xf]
  %v40 = vld [vmem:[%s1 + $0x60] sm:$0xf]
  %v41 = vld [vmem:[%s1 + $0x64] sm:$0xf]
  %v42 = vld [vmem:[%s1 + $0x68] sm:$0xf]
  %v43 = vld [vmem:[%s1 + $0x6c] sm:$0xf]
  %v44 = vld [vmem:[%s1 + $0x70] sm:$0xf]
  %v45 = vld [vmem:[%s1 + $0x74] sm:$0xf]
  %v46 = vld [vmem:[%s1 + $0x78] sm:$0xf]
  %v47 = vld [vmem:[%s1 + $0x7c] sm:$0xf]
  %v48 = vld [vmem:[%s1 + $0x80] sm:$0xf]
  %v49 = vld [vmem:[%s1 + $0x84] sm:$0xf]
  %v50 = vld [vmem:[%s1 + $0x88] sm:$0xf]
  %v51 = vld [vmem:[%s1 + $0x8c] sm:$0xf]
  %v52 = vld [vmem:[%s2] sm:$0x1]
  %v54 = vlaneseq
  %v55 = vshrl.u32 %v54, 7
  %v56 = vsub.s32 0, %v55
  %v57 = vrot.slane %v52, %v56
  %v61 = vunpack.c.l.s4 1966171168
  %v62 = vunpack.c.0.s8 %v61
  %v63 = vlaneseq
  %v64 = vshrl.u32 %v63, 7
  %v65 = vsub.s32 %v62, %v64
  %v66 = vrot.slane %v15, %v65
  %v67 = vcombine.high %v66, %v66
  %v69 = vunpack.c.l.s4 1966171168
  %v70 = vunpack.c.0.s8 %v69
  %v71 = vlaneseq
  %v72 = vshrl.u32 %v71, 7
  %v73 = vsub.s32 %v70, %v72
  %v74 = vrot.slane %v66, %v73
  %v76 = vunpack.c.l.s4 1966171168
  %v77 = vunpack.c.0.s8 %v76
  %v78 = vlaneseq
  %v79 = vshrl.u32 %v78, 7
  %v80 = vsub.s32 %v77, %v79
  %v81 = vrot.slane %v67, %v80
  %v82 = vcombine.high %v74, %v74
  %v121 = vunpack.c.l.b16 %v16
  %v122 = vunpack.c.l.b16 %v17
  %v123 = vunpack.c.l.b16 %v18
  %v124 = vunpack.c.l.b16 %v19
  %v125 = vunpack.c.l.b16 %v20
  %v126 = vunpack.c.l.b16 %v21
  %v127 = vunpack.c.l.b16 %v22
  %v128 = vunpack.c.l.b16 %v23
  %v129 = vunpack.c.l.b16 %v24
  %v130 = vunpack.c.l.b16 %v25
  %v131 = vunpack.c.l.b16 %v26
  %v132 = vunpack.c.l.b16 %v27
  %v133 = vunpack.c.l.b16 %v28
  %v134 = vunpack.c.l.b16 %v29
  %v135 = vunpack.c.l.b16 %v30
  %v136 = vunpack.c.l.b16 %v31
  %v137 = vunpack.c.l.b16 %v32
  %v138 = vunpack.c.l.b16 %v33
  %v139 = vunpack.c.l.b16 %v34
  %v140 = vunpack.c.l.b16 %v35
  %v141 = vunpack.c.l.b16 %v36
  %v142 = vunpack.c.l.b16 %v37
  %v143 = vunpack.c.l.b16 %v38
  %v144 = vunpack.c.l.b16 %v39
  %v145 = vunpack.c.l.b16 %v40
  %v146 = vunpack.c.l.b16 %v41
  %v147 = vunpack.c.l.b16 %v42
  %v148 = vunpack.c.l.b16 %v43
  %v149 = vunpack.c.l.b16 %v44
  %v150 = vunpack.c.l.b16 %v45
  %v151 = vunpack.c.l.b16 %v46
  %v152 = vunpack.c.l.b16 %v47
  %v153 = vunpack.c.l.b16 %v48
  %v154 = vunpack.c.l.b16 %v49
  %v155 = vunpack.c.l.b16 %v50
  %v156 = vunpack.c.l.b16 %v51
  %v157 = vpack.c.b16 %v122, %v121
  %v158 = vpack.c.b16 %v124, %v123
  %v159 = vpack.c.b16 %v126, %v125
  %v160 = vpack.c.b16 %v128, %v127
  %v161 = vpack.c.b16 %v130, %v129
  %v162 = vpack.c.b16 %v132, %v131
  %v163 = vpack.c.b16 %v134, %v133
  %v164 = vpack.c.b16 %v136, %v135
  %v165 = vpack.c.b16 %v138, %v137
  %v166 = vpack.c.b16 %v140, %v139
  %v167 = vpack.c.b16 %v142, %v141
  %v168 = vpack.c.b16 %v144, %v143
  %v169 = vpack.c.b16 %v146, %v145
  %v170 = vpack.c.b16 %v148, %v147
  %v171 = vpack.c.b16 %v150, %v149
  %v172 = vpack.c.b16 %v152, %v151
  %v173 = vpack.c.b16 %v154, %v153
  %v174 = vpack.c.b16 %v156, %v155
  %vm193 = vcmask 261120
  %v195 = vsel %vm193, %v82, 0
  %197 = vmatprep.subr.bf16.mxu0 0
  %198 = vmatpush1.bf16.msra.mxu0 %v157
  %199 = vmatprep.subr.bf16.mxu0 0
  %200 = vmatpush1.bf16.msra.mxu0 %v158
  %201 = vmatprep.subr.bf16.mxu0 0
  %202 = vmatpush1.bf16.msra.mxu0 %v159
  %203 = vmatprep.subr.bf16.mxu0 0
  %204 = vmatpush1.bf16.msra.mxu0 %v160
  %205 = vmatprep.subr.bf16.mxu0 0
  %206 = vmatpush1.bf16.msra.mxu0 %v161
  %207 = vmatprep.subr.bf16.mxu0 0
  %208 = vmatpush1.bf16.msra.mxu0 %v162
  %209 = vmatprep.subr.bf16.mxu0 0
  %210 = vmatpush1.bf16.msra.mxu0 %v163
  %211 = vmatprep.subr.bf16.mxu0 0
  %212 = vmatpush1.bf16.msra.mxu0 %v164
  %213 = vmatprep.subr.bf16.mxu0 0
  %214 = vmatpush1.bf16.msra.mxu0 %v165
  %215 = vmatprep.subr.bf16.mxu0 0
  %216 = vmatpush1.bf16.msra.mxu0 %v166
  %217 = vmatprep.subr.bf16.mxu0 0
  %218 = vmatpush1.bf16.msra.mxu0 %v167
  %219 = vmatprep.subr.bf16.mxu0 0
  %220 = vmatpush1.bf16.msra.mxu0 %v168
  %221 = vmatprep.subr.bf16.mxu0 0
  %222 = vmatpush1.bf16.msra.mxu0 %v169
  %223 = vmatprep.subr.bf16.mxu0 0
  %224 = vmatpush1.bf16.msra.mxu0 %v170
  %225 = vmatprep.subr.bf16.mxu0 0
  %226 = vmatpush1.bf16.msra.mxu0 %v171
  %227 = vmatprep.subr.bf16.mxu0 0
  %228 = vmatpush1.bf16.msra.mxu0 %v172
  %229 = vmatprep.mubr.bf16.mxu0 %v81
  %230 = vmatmul.mubr.bf16.gmra.mrb[0].mxu0 %v74
  %v231 = vpop.f32.mrb[0].mxu0
  %v232 = vadd.f32 %v57, %v231
  %v233 = vpop.f32.mrb[0].mxu0
  %v234 = vpop.f32.mrb[0].mxu0
  %v235 = vpop.f32.mrb[0].mxu0
  %236 = vdwg.mxu0
  %237 = vmatprep.subr.bf16.mxu0 0
  %238 = vmatpush1.bf16.msra.mxu0 %v173
  %239 = vmatprep.subr.bf16.mxu0 0
  %240 = vmatpush1.bf16.msra.mxu0 %v174
  %241 = vmatprep.subr.bf16.mxu0 0
  %242 = vmatpush1.bf16.msra.mxu0 0
  %243 = vmatprep.subr.bf16.mxu0 0
  %244 = vmatpush1.bf16.msra.mxu0 0
  %245 = vmatprep.subr.bf16.mxu0 0
  %246 = vmatpush1.bf16.msra.mxu0 0
  %247 = vmatprep.subr.bf16.mxu0 0
  %248 = vmatpush1.bf16.msra.mxu0 0
  %249 = vmatprep.subr.bf16.mxu0 0
  %250 = vmatpush1.bf16.msra.mxu0 0
  %251 = vmatprep.subr.bf16.mxu0 0
  %252 = vmatpush1.bf16.msra.mxu0 0
  %253 = vmatprep.subr.bf16.mxu0 0
  %254 = vmatpush1.bf16.msra.mxu0 0
  %255 = vmatprep.subr.bf16.mxu0 0
  %256 = vmatpush1.bf16.msra.mxu0 0
  %257 = vmatprep.subr.bf16.mxu0 0
  %258 = vmatpush1.bf16.msra.mxu0 0
  %259 = vmatprep.subr.bf16.mxu0 0
  %260 = vmatpush1.bf16.msra.mxu0 0
  %261 = vmatprep.subr.bf16.mxu0 0
  %262 = vmatpush1.bf16.msra.mxu0 0
  %263 = vmatprep.subr.bf16.mxu0 0
  %264 = vmatpush1.bf16.msra.mxu0 0
  %265 = vmatprep.subr.bf16.mxu0 0
  %266 = vmatpush1.bf16.msra.mxu0 0
  %267 = vmatprep.subr.bf16.mxu0 0
  %268 = vmatpush1.bf16.msra.mxu0 0
  %269 = vmatprep.mubr.bf16.mxu0 0
  %270 = vmatmul.mubr.bf16.gmra.mrb[0].mxu0 %v195
  %v271 = vpop.f32.mrb[0].mxu0
  %v272 = vadd.f32 %v232, %v271
  %v273 = vpop.f32.mrb[0].mxu0
  %v274 = vpop.f32.mrb[0].mxu0
  %v275 = vpop.f32.mrb[0].mxu0
  %276 = vdwg.mxu0
  %277 = vst [vmem:[%s3] sm:$0x3] %v272
  // Predicated region
  $region14: #{_lambda_.66} parent=0 // pred_check
    _
  $region15: #{_lambda_.66} parent=0 // pred_check_branch
    %279 = sbr.rel (0) target = $region17
  $region16: #{_lambda_.66} parent=0 // pred_region
    _
  $region17: #{_lambda_.66} parent=0 // pred_fallthru
    _
  // Predicated region
  $region18: #{_lambda_.66} parent=0 // pred_check
    _
  $region19: #{_lambda_.66} parent=0 // pred_check_branch
    %281 = sbr.rel (0) target = $region21
  $region20: #{_lambda_.66} parent=0 // pred_region
    _
  $region21: #{_lambda_.66} parent=0 // pred_fallthru
    _

// kernel: _lambda_.67
$region0: #{_lambda_.67}
  #allocation0 [shape = 'u32[]', space=smem, size = 0x4, offset = 0x4, fixed_abs, tag = 'smem constant byte address 0x4 - core index']
  #allocation1 [shape = 'u32[144,128]{1,0:T(1,128)}', space=vmem, size = 0x12000, scoped, tag = 'internal scratch']
  %s0 = inlined_call_operand.vmem [shape: bf16[2,576], index: 0, kind: input, shape index: {}]
  %s1 = inlined_call_operand.vmem [shape: bf16[576,64], index: 1, kind: input, shape index: {}]
  %s2 = inlined_call_operand.vmem [shape: f32[1,64], index: 2, kind: input, shape index: {}]
  %s3 = inlined_call_operand.vmem [shape: f32[2,64], index: 3, kind: input, shape index: {}]
  %s4 = inlined_call_operand.vmem [shape: f32[2,64], index: 4, kind: output, shape index: {}]
  %s5 = sld [smem:[#allocation0]]
  $region26: #{_lambda_.67} parent=0
    _
  %s7 = ssub.s32 1, %s5
  %s8 = scalar_select 0, %s7, %s5
  // Predicated region
  $region2: #{_lambda_.67} parent=0 // pred_check
    _
  $region3: #{_lambda_.67} parent=0 // pred_check_branch
    %10 = sbr.rel (0) target = $region5
  $region4: #{_lambda_.67} parent=0 // pred_region
    _
  $region5: #{_lambda_.67} parent=0 // pred_fallthru
    _
  // Predicated region
  $region6: #{_lambda_.67} parent=0 // pred_check
    _
  $region7: #{_lambda_.67} parent=0 // pred_check_branch
    %12 = sbr.rel (0) target = $region9
  $region8: #{_lambda_.67} parent=0 // pred_region
    _
  $region9: #{_lambda_.67} parent=0 // pred_fallthru
    _
  // Predicated region
  $region10: #{_lambda_.67} parent=0 // pred_check
    _
  $region11: #{_lambda_.67} parent=0 // pred_check_branch
    %14 = sbr.rel (0) target = $region13
  $region12: #{_lambda_.67} parent=0 // pred_region
    _
  $region13: #{_lambda_.67} parent=0 // pred_fallthru
    _
  // Predicated region
  $region14: #{_lambda_.67} parent=0 // pred_check
    _
  $region15: #{_lambda_.67} parent=0 // pred_check_branch
    %16 = sbr.rel (0) target = $region17
  $region16: #{_lambda_.67} parent=0 // pred_region
    _
  $region17: #{_lambda_.67} parent=0 // pred_fallthru
    _
  %v18 = vld [vmem:[%s0] sm:$0x1f]
  %v19 = vld [vmem:[%s1] sm:$0xf]
  %v20 = vld [vmem:[%s1 + $0x4] sm:$0xf]
  %v21 = vld [vmem:[%s1 + $0x8] sm:$0xf]
  %v22 = vld [vmem:[%s1 + $0xc] sm:$0xf]
  %v23 = vld [vmem:[%s1 + $0x10] sm:$0xf]
  %v24 = vld [vmem:[%s1 + $0x14] sm:$0xf]
  %v25 = vld [vmem:[%s1 + $0x18] sm:$0xf]
  %v26 = vld [vmem:[%s1 + $0x1c] sm:$0xf]
  %v27 = vld [vmem:[%s1 + $0x20] sm:$0xf]
  %v28 = vld [vmem:[%s1 + $0x24] sm:$0xf]
  %v29 = vld [vmem:[%s1 + $0x28] sm:$0xf]
  %v30 = vld [vmem:[%s1 + $0x2c] sm:$0xf]
  %v31 = vld [vmem:[%s1 + $0x30] sm:$0xf]
  %v32 = vld [vmem:[%s1 + $0x34] sm:$0xf]
  %v33 = vld [vmem:[%s1 + $0x38] sm:$0xf]
  %v34 = vld [vmem:[%s1 + $0x3c] sm:$0xf]
  %v35 = vld [vmem:[%s1 + $0x40] sm:$0xf]
  %v36 = vld [vmem:[%s1 + $0x44] sm:$0xf]
  %v37 = vld [vmem:[%s1 + $0x48] sm:$0xf]
  %v38 = vld [vmem:[%s1 + $0x4c] sm:$0xf]
  %v39 = vld [vmem:[%s1 + $0x50] sm:$0xf]
  %v40 = vld [vmem:[%s1 + $0x54] sm:$0xf]
  %v41 = vld [vmem:[%s1 + $0x58] sm:$0xf]
  %v42 = vld [vmem:[%s1 + $0x5c] sm:$0xf]
  %v43 = vld [vmem:[%s1 + $0x60] sm:$0xf]
  %v44 = vld [vmem:[%s1 + $0x64] sm:$0xf]
  %v45 = vld [vmem:[%s1 + $0x68] sm:$0xf]
  %v46 = vld [vmem:[%s1 + $0x6c] sm:$0xf]
  %v47 = vld [vmem:[%s1 + $0x70] sm:$0xf]
  %v48 = vld [vmem:[%s1 + $0x74] sm:$0xf]
  %v49 = vld [vmem:[%s1 + $0x78] sm:$0xf]
  %v50 = vld [vmem:[%s1 + $0x7c] sm:$0xf]
  %v51 = vld [vmem:[%s1 + $0x80] sm:$0xf]
  %v52 = vld [vmem:[%s1 + $0x84] sm:$0xf]
  %v53 = vld [vmem:[%s1 + $0x88] sm:$0xf]
  %v54 = vld [vmem:[%s1 + $0x8c] sm:$0xf]
  %v55 = vld [vmem:[%s1 + $0x90] sm:$0xf]
  %v56 = vld [vmem:[%s1 + $0x94] sm:$0xf]
  %v57 = vld [vmem:[%s1 + $0x98] sm:$0xf]
  %v58 = vld [vmem:[%s1 + $0x9c] sm:$0xf]
  %v59 = vld [vmem:[%s1 + $0xa0] sm:$0xf]
  %v60 = vld [vmem:[%s1 + $0xa4] sm:$0xf]
  %v61 = vld [vmem:[%s1 + $0xa8] sm:$0xf]
  %v62 = vld [vmem:[%s1 + $0xac] sm:$0xf]
  %v63 = vld [vmem:[%s1 + $0xb0] sm:$0xf]
  %v64 = vld [vmem:[%s1 + $0xb4] sm:$0xf]
  %v65 = vld [vmem:[%s1 + $0xb8] sm:$0xf]
  %v66 = vld [vmem:[%s1 + $0xbc] sm:$0xf]
  %v67 = vld [vmem:[%s1 + $0xc0] sm:$0xf]
  %v68 = vld [vmem:[%s1 + $0xc4] sm:$0xf]
  %v69 = vld [vmem:[%s1 + $0xc8] sm:$0xf]
  %v70 = vld [vmem:[%s1 + $0xcc] sm:$0xf]
  %v71 = vld [vmem:[%s1 + $0xd0] sm:$0xf]
  %v72 = vld [vmem:[%s1 + $0xd4] sm:$0xf]
  %v73 = vld [vmem:[%s1 + $0xd8] sm:$0xf]
  %v74 = vld [vmem:[%s1 + $0xdc] sm:$0xf]
  %v75 = vld [vmem:[%s1 + $0xe0] sm:$0xf]
  %v76 = vld [vmem:[%s1 + $0xe4] sm:$0xf]
  %v77 = vld [vmem:[%s1 + $0xe8] sm:$0xf]
  %v78 = vld [vmem:[%s1 + $0xec] sm:$0xf]
  %v79 = vld [vmem:[%s1 + $0xf0] sm:$0xf]
  %v80 = vld [vmem:[%s1 + $0xf4] sm:$0xf]
  %v81 = vld [vmem:[%s1 + $0xf8] sm:$0xf]
  %v82 = vld [vmem:[%s1 + $0xfc] sm:$0xf]
  %v83 = vld [vmem:[%s1 + $0x100] sm:$0xf]
  %v84 = vld [vmem:[%s1 + $0x104] sm:$0xf]
  %v85 = vld [vmem:[%s1 + $0x108] sm:$0xf]
  %v86 = vld [vmem:[%s1 + $0x10c] sm:$0xf]
  %v87 = vld [vmem:[%s1 + $0x110] sm:$0xf]
  %v88 = vld [vmem:[%s1 + $0x114] sm:$0xf]
  %v89 = vld [vmem:[%s1 + $0x118] sm:$0xf]
  %v90 = vld [vmem:[%s1 + $0x11c] sm:$0xf]
  %v91 = vld [vmem:[%s2] sm:$0x1]
  %v93 = vlaneseq
  %v94 = vshrl.u32 %v93, 7
  %v95 = vsub.s32 0, %v94
  %v96 = vrot.slane %v91, %v95
  %v99 = vcombine.high %v18, %v18
  %v101 = vunpack.c.l.s4 1966171168
  %v102 = vunpack.c.0.s8 %v101
  %v103 = vlaneseq
  %v104 = vshrl.u32 %v103, 7
  %v105 = vsub.s32 %v102, %v104
  %v106 = vrot.slane %v18, %v105
  %v108 = vunpack.c.l.s4 1966171168
  %v109 = vunpack.c.0.s8 %v108
  %v110 = vlaneseq
  %v111 = vshrl.u32 %v110, 7
  %v112 = vsub.s32 %v109, %v111
  %v113 = vrot.slane %v99, %v112
  %v114 = vcombine.high %v106, %v106
  %v116 = vunpack.c.l.s4 1966171168
  %v117 = vunpack.c.0.s8 %v116
  %v118 = vlaneseq
  %v119 = vshrl.u32 %v118, 7
  %v120 = vsub.s32 %v117, %v119
  %v121 = vrot.slane %v106, %v120
  %v123 = vunpack.c.l.s4 1966171168
  %v124 = vunpack.c.0.s8 %v123
  %v125 = vlaneseq
  %v126 = vshrl.u32 %v125, 7
  %v127 = vsub.s32 %v124, %v126
  %v128 = vrot.slane %v113, %v127
  %v130 = vunpack.c.l.s4 1966171168
  %v131 = vunpack.c.0.s8 %v130
  %v132 = vlaneseq
  %v133 = vshrl.u32 %v132, 7
  %v134 = vsub.s32 %v131, %v133
  %v135 = vrot.slane %v114, %v134
  %v136 = vcombine.high %v121, %v121
  %v137 = vcombine.high %v135, %v135
  %v214 = vunpack.c.l.b16 %v19
  %v215 = vunpack.c.l.b16 %v20
  %v216 = vunpack.c.l.b16 %v21
  %v217 = vunpack.c.l.b16 %v22
  %v218 = vunpack.c.l.b16 %v23
  %v219 = vunpack.c.l.b16 %v24
  %v220 = vunpack.c.l.b16 %v25
  %v221 = vunpack.c.l.b16 %v26
  %v222 = vunpack.c.l.b16 %v27
  %v223 = vunpack.c.l.b16 %v28
  %v224 = vunpack.c.l.b16 %v29
  %v225 = vunpack.c.l.b16 %v30
  %v226 = vunpack.c.l.b16 %v31
  %v227 = vunpack.c.l.b16 %v32
  %v228 = vunpack.c.l.b16 %v33
  %v229 = vunpack.c.l.b16 %v34
  %v230 = vunpack.c.l.b16 %v35
  %v231 = vunpack.c.l.b16 %v36
  %v232 = vunpack.c.l.b16 %v37
  %v233 = vunpack.c.l.b16 %v38
  %v234 = vunpack.c.l.b16 %v39
  %v235 = vunpack.c.l.b16 %v40
  %v236 = vunpack.c.l.b16 %v41
  %v237 = vunpack.c.l.b16 %v42
  %v238 = vunpack.c.l.b16 %v43
  %v239 = vunpack.c.l.b16 %v44
  %v240 = vunpack.c.l.b16 %v45
  %v241 = vunpack.c.l.b16 %v46
  %v242 = vunpack.c.l.b16 %v47
  %v243 = vunpack.c.l.b16 %v48
  %v244 = vunpack.c.l.b16 %v49
  %v245 = vunpack.c.l.b16 %v50
  %v246 = vunpack.c.l.b16 %v51
  %v247 = vunpack.c.l.b16 %v52
  %v248 = vunpack.c.l.b16 %v53
  %v249 = vunpack.c.l.b16 %v54
  %v250 = vunpack.c.l.b16 %v55
  %v251 = vunpack.c.l.b16 %v56
  %v252 = vunpack.c.l.b16 %v57
  %v253 = vunpack.c.l.b16 %v58
  %v254 = vunpack.c.l.b16 %v59
  %v255 = vunpack.c.l.b16 %v60
  %v256 = vunpack.c.l.b16 %v61
  %v257 = vunpack.c.l.b16 %v62
  %v258 = vunpack.c.l.b16 %v63
  %v259 = vunpack.c.l.b16 %v64
  %v260 = vunpack.c.l.b16 %v65
  %v261 = vunpack.c.l.b16 %v66
  %v262 = vunpack.c.l.b16 %v67
  %v263 = vunpack.c.l.b16 %v68
  %v264 = vunpack.c.l.b16 %v69
  %v265 = vunpack.c.l.b16 %v70
  %v266 = vunpack.c.l.b16 %v71
  %v267 = vunpack.c.l.b16 %v72
  %v268 = vunpack.c.l.b16 %v73
  %v269 = vunpack.c.l.b16 %v74
  %v270 = vunpack.c.l.b16 %v75
  %v271 = vunpack.c.l.b16 %v76
  %v272 = vunpack.c.l.b16 %v77
  %v273 = vunpack.c.l.b16 %v78
  %v274 = vunpack.c.l.b16 %v79
  %v275 = vunpack.c.l.b16 %v80
  %v276 = vunpack.c.l.b16 %v81
  %v277 = vunpack.c.l.b16 %v82
  %v278 = vunpack.c.l.b16 %v83
  %v279 = vunpack.c.l.b16 %v84
  %v280 = vunpack.c.l.b16 %v85
  %v281 = vunpack.c.l.b16 %v86
  %v282 = vunpack.c.l.b16 %v87
  %v283 = vunpack.c.l.b16 %v88
  %v284 = vunpack.c.l.b16 %v89
  %v285 = vunpack.c.l.b16 %v90
  %v286 = vpack.c.b16 %v215, %v214
  %v287 = vpack.c.b16 %v217, %v216
  %v288 = vpack.c.b16 %v219, %v218
  %v289 = vpack.c.b16 %v221, %v220
  %v290 = vpack.c.b16 %v223, %v222
  %v291 = vpack.c.b16 %v225, %v224
  %v292 = vpack.c.b16 %v227, %v226
  %v293 = vpack.c.b16 %v229, %v228
  %v294 = vpack.c.b16 %v231, %v230
  %v295 = vpack.c.b16 %v233, %v232
  %v296 = vpack.c.b16 %v235, %v234
  %v297 = vpack.c.b16 %v237, %v236
  %v298 = vpack.c.b16 %v239, %v238
  %v299 = vpack.c.b16 %v241, %v240
  %v300 = vpack.c.b16 %v243, %v242
  %v301 = vpack.c.b16 %v245, %v244
  %v302 = vpack.c.b16 %v247, %v246
  %v303 = vpack.c.b16 %v249, %v248
  %v304 = vpack.c.b16 %v251, %v250
  %v305 = vpack.c.b16 %v253, %v252
  %v306 = vpack.c.b16 %v255, %v254
  %v307 = vpack.c.b16 %v257, %v256
  %v308 = vpack.c.b16 %v259, %v258
  %v309 = vpack.c.b16 %v261, %v260
  %v310 = vpack.c.b16 %v263, %v262
  %v311 = vpack.c.b16 %v265, %v264
  %v312 = vpack.c.b16 %v267, %v266
  %v313 = vpack.c.b16 %v269, %v268
  %v314 = vpack.c.b16 %v271, %v270
  %v315 = vpack.c.b16 %v273, %v272
  %v316 = vpack.c.b16 %v275, %v274
  %v317 = vpack.c.b16 %v277, %v276
  %v318 = vpack.c.b16 %v279, %v278
  %v319 = vpack.c.b16 %v281, %v280
  %v320 = vpack.c.b16 %v283, %v282
  %v321 = vpack.c.b16 %v285, %v284
  %vm358 = vcmask 523264
  %v360 = vsel %vm358, %v128, 0
  %362 = vmatprep.subr.bf16.mxu0 0
  %363 = vmatpush1.bf16.msra.mxu0 %v286
  %364 = vmatprep.subr.bf16.mxu0 0
  %365 = vmatpush1.bf16.msra.mxu0 %v287
  %366 = vmatprep.subr.bf16.mxu0 0
  %367 = vmatpush1.bf16.msra.mxu0 %v288
  %368 = vmatprep.subr.bf16.mxu0 0
  %369 = vmatpush1.bf16.msra.mxu0 %v289
  %370 = vmatprep.subr.bf16.mxu0 0
  %371 = vmatpush1.bf16.msra.mxu0 %v290
  %372 = vmatprep.subr.bf16.mxu0 0
  %373 = vmatpush1.bf16.msra.mxu0 %v291
  %374 = vmatprep.subr.bf16.mxu0 0
  %375 = vmatpush1.bf16.msra.mxu0 %v292
  %376 = vmatprep.subr.bf16.mxu0 0
  %377 = vmatpush1.bf16.msra.mxu0 %v293
  %378 = vmatprep.subr.bf16.mxu0 0
  %379 = vmatpush1.bf16.msra.mxu0 %v294
  %380 = vmatprep.subr.bf16.mxu0 0
  %381 = vmatpush1.bf16.msra.mxu0 %v295
  %382 = vmatprep.subr.bf16.mxu0 0
  %383 = vmatpush1.bf16.msra.mxu0 %v296
  %384 = vmatprep.subr.bf16.mxu0 0
  %385 = vmatpush1.bf16.msra.mxu0 %v297
  %386 = vmatprep.subr.bf16.mxu0 0
  %387 = vmatpush1.bf16.msra.mxu0 %v298
  %388 = vmatprep.subr.bf16.mxu0 0
  %389 = vmatpush1.bf16.msra.mxu0 %v299
  %390 = vmatprep.subr.bf16.mxu0 0
  %391 = vmatpush1.bf16.msra.mxu0 %v300
  %392 = vmatprep.subr.bf16.mxu0 0
  %393 = vmatpush1.bf16.msra.mxu0 %v301
  %394 = vmatprep.mubr.bf16.mxu0 %v135
  %395 = vmatmul.mubr.bf16.gmra.mrb[0].mxu0 %v121
  %v396 = vpop.f32.mrb[0].mxu0
  %v397 = vadd.f32 %v96, %v396
  %v398 = vpop.f32.mrb[0].mxu0
  %v399 = vpop.f32.mrb[0].mxu0
  %v400 = vpop.f32.mrb[0].mxu0
  %401 = vdwg.mxu0
  %402 = vmatprep.subr.bf16.mxu0 0
  %403 = vmatpush1.bf16.msra.mxu0 %v302
  %404 = vmatprep.subr.bf16.mxu0 0
  %405 = vmatpush1.bf16.msra.mxu0 %v303
  %406 = vmatprep.subr.bf16.mxu0 0
  %407 = vmatpush1.bf16.msra.mxu0 %v304
  %408 = vmatprep.subr.bf16.mxu0 0
  %409 = vmatpush1.bf16.msra.mxu0 %v305
  %410 = vmatprep.subr.bf16.mxu0 0
  %411 = vmatpush1.bf16.msra.mxu0 %v306
  %412 = vmatprep.subr.bf16.mxu0 0
  %413 = vmatpush1.bf16.msra.mxu0 %v307
  %414 = vmatprep.subr.bf16.mxu0 0
  %415 = vmatpush1.bf16.msra.mxu0 %v308
  %416 = vmatprep.subr.bf16.mxu0 0
  %417 = vmatpush1.bf16.msra.mxu0 %v309
  %418 = vmatprep.subr.bf16.mxu0 0
  %419 = vmatpush1.bf16.msra.mxu0 %v310
  %420 = vmatprep.subr.bf16.mxu0 0
  %421 = vmatpush1.bf16.msra.mxu0 %v311
  %422 = vmatprep.subr.bf16.mxu0 0
  %423 = vmatpush1.bf16.msra.mxu0 %v312
  %424 = vmatprep.subr.bf16.mxu0 0
  %425 = vmatpush1.bf16.msra.mxu0 %v313
  %426 = vmatprep.subr.bf16.mxu0 0
  %427 = vmatpush1.bf16.msra.mxu0 %v314
  %428 = vmatprep.subr.bf16.mxu0 0
  %429 = vmatpush1.bf16.msra.mxu0 %v315
  %430 = vmatprep.subr.bf16.mxu0 0
  %431 = vmatpush1.bf16.msra.mxu0 %v316
  %432 = vmatprep.subr.bf16.mxu0 0
  %433 = vmatpush1.bf16.msra.mxu0 %v317
  %434 = vmatprep.mubr.bf16.mxu0 %v137
  %435 = vmatmul.mubr.bf16.gmra.mrb[0].mxu0 %v136
  %v436 = vpop.f32.mrb[0].mxu0
  %v437 = vadd.f32 %v397, %v436
  %v438 = vpop.f32.mrb[0].mxu0
  %v439 = vpop.f32.mrb[0].mxu0
  %v440 = vpop.f32.mrb[0].mxu0
  %441 = vdwg.mxu0
  %442 = vmatprep.subr.bf16.mxu0 0
  %443 = vmatpush1.bf16.msra.mxu0 %v318
  %444 = vmatprep.subr.bf16.mxu0 0
  %445 = vmatpush1.bf16.msra.mxu0 %v319
  %446 = vmatprep.subr.bf16.mxu0 0
  %447 = vmatpush1.bf16.msra.mxu0 %v320
  %448 = vmatprep.subr.bf16.mxu0 0
  %449 = vmatpush1.bf16.msra.mxu0 %v321
  %450 = vmatprep.subr.bf16.mxu0 0
  %451 = vmatpush1.bf16.msra.mxu0 0
  %452 = vmatprep.subr.bf16.mxu0 0
  %453 = vmatpush1.bf16.msra.mxu0 0
  %454 = vmatprep.subr.bf16.mxu0 0
  %455 = vmatpush1.bf16.msra.mxu0 0
  %456 = vmatprep.subr.bf16.mxu0 0
  %457 = vmatpush1.bf16.msra.mxu0 0
  %458 = vmatprep.subr.bf16.mxu0 0
  %459 = vmatpush1.bf16.msra.mxu0 0
  %460 = vmatprep.subr.bf16.mxu0 0
  %461 = vmatpush1.bf16.msra.mxu0 0
  %462 = vmatprep.subr.bf16.mxu0 0
  %463 = vmatpush1.bf16.msra.mxu0 0
  %464 = vmatprep.subr.bf16.mxu0 0
  %465 = vmatpush1.bf16.msra.mxu0 0
  %466 = vmatprep.subr.bf16.mxu0 0
  %467 = vmatpush1.bf16.msra.mxu0 0
  %468 = vmatprep.subr.bf16.mxu0 0
  %469 = vmatpush1.bf16.msra.mxu0 0
  %470 = vmatprep.subr.bf16.mxu0 0
  %471 = vmatpush1.bf16.msra.mxu0 0
  %472 = vmatprep.subr.bf16.mxu0 0
  %473 = vmatpush1.bf16.msra.mxu0 0
  %474 = vmatprep.mubr.bf16.mxu0 0
  %475 = vmatmul.mubr.bf16.gmra.mrb[0].mxu0 %v360
  %v476 = vpop.f32.mrb[0].mxu0
  %v477 = vadd.f32 %v437, %v476
  %v478 = vpop.f32.mrb[0].mxu0
  %v479 = vpop.f32.mrb[0].mxu0
  %v480 = vpop.f32.mrb[0].mxu0
  %481 = vdwg.mxu0
  %v482 = vld [vmem:[%s3] sm:$0x3]
  %v483 = vadd.f32 %v477, %v482
  %v484 = vmax.f32 %v483, 0.0
  %vm485 = vcmask 517120
  %486 = vst.msk [vmem:[%s4] sm:$0x3] %vm485, %v484
  // Predicated region
  $region18: #{_lambda_.67} parent=0 // pred_check
    _
  $region19: #{_lambda_.67} parent=0 // pred_check_branch
    %488 = sbr.rel (0) target = $region21
  $region20: #{_lambda_.67} parent=0 // pred_region
    _
  $region21: #{_lambda_.67} parent=0 // pred_fallthru
    _
  // Predicated region
  $region22: #{_lambda_.67} parent=0 // pred_check
    _
  $region23: #{_lambda_.67} parent=0 // pred_check_branch
    %490 = sbr.rel (0) target = $region25
  $region24: #{_lambda_.67} parent=0 // pred_region
    _
  $region25: #{_lambda_.67} parent=0 // pred_fallthru
    _

// kernel: _lambda_.68
$region0: #{_lambda_.68}
  #allocation0 [shape = 'u32[]', space=smem, size = 0x4, offset = 0x4, fixed_abs, tag = 'smem constant byte address 0x4 - core index']
  #allocation1 [shape = 'u32[144,128]{1,0:T(1,128)}', space=vmem, size = 0x12000, scoped, tag = 'internal scratch']
  %s0 = inlined_call_operand.vmem [shape: bf16[2,576], index: 0, kind: input, shape index: {}]
  %s1 = inlined_call_operand.vmem [shape: bf16[576,64], index: 1, kind: input, shape index: {}]
  %s2 = inlined_call_operand.vmem [shape: f32[1,64], index: 2, kind: input, shape index: {}]
  %s3 = inlined_call_operand.vmem [shape: f32[2,64], index: 3, kind: output, shape index: {}]
  %s4 = sld [smem:[#allocation0]]
  $region22: #{_lambda_.68} parent=0
    _
  %s6 = ssub.s32 1, %s4
  %s7 = scalar_select 0, %s6, %s4
  // Predicated region
  $region2: #{_lambda_.68} parent=0 // pred_check
    _
  $region3: #{_lambda_.68} parent=0 // pred_check_branch
    %9 = sbr.rel (0) target = $region5
  $region4: #{_lambda_.68} parent=0 // pred_region
    _
  $region5: #{_lambda_.68} parent=0 // pred_fallthru
    _
  // Predicated region
  $region6: #{_lambda_.68} parent=0 // pred_check
    _
  $region7: #{_lambda_.68} parent=0 // pred_check_branch
    %11 = sbr.rel (0) target = $region9
  $region8: #{_lambda_.68} parent=0 // pred_region
    _
  $region9: #{_lambda_.68} parent=0 // pred_fallthru
    _
  // Predicated region
  $region10: #{_lambda_.68} parent=0 // pred_check
    _
  $region11: #{_lambda_.68} parent=0 // pred_check_branch
    %13 = sbr.rel (0) target = $region13
  $region12: #{_lambda_.68} parent=0 // pred_region
    _
  $region13: #{_lambda_.68} parent=0 // pred_fallthru
    _
  %v15 = vld [vmem:[%s0] sm:$0x1f]
  %v16 = vld [vmem:[%s1] sm:$0xf]
  %v17 = vld [vmem:[%s1 + $0x4] sm:$0xf]
  %v18 = vld [vmem:[%s1 + $0x8] sm:$0xf]
  %v19 = vld [vmem:[%s1 + $0xc] sm:$0xf]
  %v20 = vld [vmem:[%s1 + $0x10] sm:$0xf]
  %v21 = vld [vmem:[%s1 + $0x14] sm:$0xf]
  %v22 = vld [vmem:[%s1 + $0x18] sm:$0xf]
  %v23 = vld [vmem:[%s1 + $0x1c] sm:$0xf]
  %v24 = vld [vmem:[%s1 + $0x20] sm:$0xf]
  %v25 = vld [vmem:[%s1 + $0x24] sm:$0xf]
  %v26 = vld [vmem:[%s1 + $0x28] sm:$0xf]
  %v27 = vld [vmem:[%s1 + $0x2c] sm:$0xf]
  %v28 = vld [vmem:[%s1 + $0x30] sm:$0xf]
  %v29 = vld [vmem:[%s1 + $0x34] sm:$0xf]
  %v30 = vld [vmem:[%s1 + $0x38] sm:$0xf]
  %v31 = vld [vmem:[%s1 + $0x3c] sm:$0xf]
  %v32 = vld [vmem:[%s1 + $0x40] sm:$0xf]
  %v33 = vld [vmem:[%s1 + $0x44] sm:$0xf]
  %v34 = vld [vmem:[%s1 + $0x48] sm:$0xf]
  %v35 = vld [vmem:[%s1 + $0x4c] sm:$0xf]
  %v36 = vld [vmem:[%s1 + $0x50] sm:$0xf]
  %v37 = vld [vmem:[%s1 + $0x54] sm:$0xf]
  %v38 = vld [vmem:[%s1 + $0x58] sm:$0xf]
  %v39 = vld [vmem:[%s1 + $0x5c] sm:$0xf]
  %v40 = vld [vmem:[%s1 + $0x60] sm:$0xf]
  %v41 = vld [vmem:[%s1 + $0x64] sm:$0xf]
  %v42 = vld [vmem:[%s1 + $0x68] sm:$0xf]
  %v43 = vld [vmem:[%s1 + $0x6c] sm:$0xf]
  %v44 = vld [vmem:[%s1 + $0x70] sm:$0xf]
  %v45 = vld [vmem:[%s1 + $0x74] sm:$0xf]
  %v46 = vld [vmem:[%s1 + $0x78] sm:$0xf]
  %v47 = vld [vmem:[%s1 + $0x7c] sm:$0xf]
  %v48 = vld [vmem:[%s1 + $0x80] sm:$0xf]
  %v49 = vld [vmem:[%s1 + $0x84] sm:$0xf]
  %v50 = vld [vmem:[%s1 + $0x88] sm:$0xf]
  %v51 = vld [vmem:[%s1 + $0x8c] sm:$0xf]
  %v52 = vld [vmem:[%s1 + $0x90] sm:$0xf]
  %v53 = vld [vmem:[%s1 + $0x94] sm:$0xf]
  %v54 = vld [vmem:[%s1 + $0x98] sm:$0xf]
  %v55 = vld [vmem:[%s1 + $0x9c] sm:$0xf]
  %v56 = vld [vmem:[%s1 + $0xa0] sm:$0xf]
  %v57 = vld [vmem:[%s1 + $0xa4] sm:$0xf]
  %v58 = vld [vmem:[%s1 + $0xa8] sm:$0xf]
  %v59 = vld [vmem:[%s1 + $0xac] sm:$0xf]
  %v60 = vld [vmem:[%s1 + $0xb0] sm:$0xf]
  %v61 = vld [vmem:[%s1 + $0xb4] sm:$0xf]
  %v62 = vld [vmem:[%s1 + $0xb8] sm:$0xf]
  %v63 = vld [vmem:[%s1 + $0xbc] sm:$0xf]
  %v64 = vld [vmem:[%s1 + $0xc0] sm:$0xf]
  %v65 = vld [vmem:[%s1 + $0xc4] sm:$0xf]
  %v66 = vld [vmem:[%s1 + $0xc8] sm:$0xf]
  %v67 = vld [vmem:[%s1 + $0xcc] sm:$0xf]
  %v68 = vld [vmem:[%s1 + $0xd0] sm:$0xf]
  %v69 = vld [vmem:[%s1 + $0xd4] sm:$0xf]
  %v70 = vld [vmem:[%s1 + $0xd8] sm:$0xf]
  %v71 = vld [vmem:[%s1 + $0xdc] sm:$0xf]
  %v72 = vld [vmem:[%s1 + $0xe0] sm:$0xf]
  %v73 = vld [vmem:[%s1 + $0xe4] sm:$0xf]
  %v74 = vld [vmem:[%s1 + $0xe8] sm:$0xf]
  %v75 = vld [vmem:[%s1 + $0xec] sm:$0xf]
  %v76 = vld [vmem:[%s1 + $0xf0] sm:$0xf]
  %v77 = vld [vmem:[%s1 + $0xf4] sm:$0xf]
  %v78 = vld [vmem:[%s1 + $0xf8] sm:$0xf]
  %v79 = vld [vmem:[%s1 + $0xfc] sm:$0xf]
  %v80 = vld [vmem:[%s1 + $0x100] sm:$0xf]
  %v81 = vld [vmem:[%s1 + $0x104] sm:$0xf]
  %v82 = vld [vmem:[%s1 + $0x108] sm:$0xf]
  %v83 = vld [vmem:[%s1 + $0x10c] sm:$0xf]
  %v84 = vld [vmem:[%s1 + $0x110] sm:$0xf]
  %v85 = vld [vmem:[%s1 + $0x114] sm:$0xf]
  %v86 = vld [vmem:[%s1 + $0x118] sm:$0xf]
  %v87 = vld [vmem:[%s1 + $0x11c] sm:$0xf]
  %v88 = vld [vmem:[%s2] sm:$0x1]
  %v90 = vlaneseq
  %v91 = vshrl.u32 %v90, 7
  %v92 = vsub.s32 0, %v91
  %v93 = vrot.slane %v88, %v92
  %v96 = vcombine.high %v15, %v15
  %v98 = vunpack.c.l.s4 1966171168
  %v99 = vunpack.c.0.s8 %v98
  %v100 = vlaneseq
  %v101 = vshrl.u32 %v100, 7
  %v102 = vsub.s32 %v99, %v101
  %v103 = vrot.slane %v15, %v102
  %v105 = vunpack.c.l.s4 1966171168
  %v106 = vunpack.c.0.s8 %v105
  %v107 = vlaneseq
  %v108 = vshrl.u32 %v107, 7
  %v109 = vsub.s32 %v106, %v108
  %v110 = vrot.slane %v96, %v109
  %v111 = vcombine.high %v103, %v103
  %v113 = vunpack.c.l.s4 1966171168
  %v114 = vunpack.c.0.s8 %v113
  %v115 = vlaneseq
  %v116 = vshrl.u32 %v115, 7
  %v117 = vsub.s32 %v114, %v116
  %v118 = vrot.slane %v103, %v117
  %v120 = vunpack.c.l.s4 1966171168
  %v121 = vunpack.c.0.s8 %v120
  %v122 = vlaneseq
  %v123 = vshrl.u32 %v122, 7
  %v124 = vsub.s32 %v121, %v123
  %v125 = vrot.slane %v110, %v124
  %v127 = vunpack.c.l.s4 1966171168
  %v128 = vunpack.c.0.s8 %v127
  %v129 = vlaneseq
  %v130 = vshrl.u32 %v129, 7
  %v131 = vsub.s32 %v128, %v130
  %v132 = vrot.slane %v111, %v131
  %v133 = vcombine.high %v118, %v118
  %v134 = vcombine.high %v132, %v132
  %v211 = vunpack.c.l.b16 %v16
  %v212 = vunpack.c.l.b16 %v17
  %v213 = vunpack.c.l.b16 %v18
  %v214 = vunpack.c.l.b16 %v19
  %v215 = vunpack.c.l.b16 %v20
  %v216 = vunpack.c.l.b16 %v21
  %v217 = vunpack.c.l.b16 %v22
  %v218 = vunpack.c.l.b16 %v23
  %v219 = vunpack.c.l.b16 %v24
  %v220 = vunpack.c.l.b16 %v25
  %v221 = vunpack.c.l.b16 %v26
  %v222 = vunpack.c.l.b16 %v27
  %v223 = vunpack.c.l.b16 %v28
  %v224 = vunpack.c.l.b16 %v29
  %v225 = vunpack.c.l.b16 %v30
  %v226 = vunpack.c.l.b16 %v31
  %v227 = vunpack.c.l.b16 %v32
  %v228 = vunpack.c.l.b16 %v33
  %v229 = vunpack.c.l.b16 %v34
  %v230 = vunpack.c.l.b16 %v35
  %v231 = vunpack.c.l.b16 %v36
  %v232 = vunpack.c.l.b16 %v37
  %v233 = vunpack.c.l.b16 %v38
  %v234 = vunpack.c.l.b16 %v39
  %v235 = vunpack.c.l.b16 %v40
  %v236 = vunpack.c.l.b16 %v41
  %v237 = vunpack.c.l.b16 %v42
  %v238 = vunpack.c.l.b16 %v43
  %v239 = vunpack.c.l.b16 %v44
  %v240 = vunpack.c.l.b16 %v45
  %v241 = vunpack.c.l.b16 %v46
  %v242 = vunpack.c.l.b16 %v47
  %v243 = vunpack.c.l.b16 %v48
  %v244 = vunpack.c.l.b16 %v49
  %v245 = vunpack.c.l.b16 %v50
  %v246 = vunpack.c.l.b16 %v51
  %v247 = vunpack.c.l.b16 %v52
  %v248 = vunpack.c.l.b16 %v53
  %v249 = vunpack.c.l.b16 %v54
  %v250 = vunpack.c.l.b16 %v55
  %v251 = vunpack.c.l.b16 %v56
  %v252 = vunpack.c.l.b16 %v57
  %v253 = vunpack.c.l.b16 %v58
  %v254 = vunpack.c.l.b16 %v59
  %v255 = vunpack.c.l.b16 %v60
  %v256 = vunpack.c.l.b16 %v61
  %v257 = vunpack.c.l.b16 %v62
  %v258 = vunpack.c.l.b16 %v63
  %v259 = vunpack.c.l.b16 %v64
  %v260 = vunpack.c.l.b16 %v65
  %v261 = vunpack.c.l.b16 %v66
  %v262 = vunpack.c.l.b16 %v67
  %v263 = vunpack.c.l.b16 %v68
  %v264 = vunpack.c.l.b16 %v69
  %v265 = vunpack.c.l.b16 %v70
  %v266 = vunpack.c.l.b16 %v71
  %v267 = vunpack.c.l.b16 %v72
  %v268 = vunpack.c.l.b16 %v73
  %v269 = vunpack.c.l.b16 %v74
  %v270 = vunpack.c.l.b16 %v75
  %v271 = vunpack.c.l.b16 %v76
  %v272 = vunpack.c.l.b16 %v77
  %v273 = vunpack.c.l.b16 %v78
  %v274 = vunpack.c.l.b16 %v79
  %v275 = vunpack.c.l.b16 %v80
  %v276 = vunpack.c.l.b16 %v81
  %v277 = vunpack.c.l.b16 %v82
  %v278 = vunpack.c.l.b16 %v83
  %v279 = vunpack.c.l.b16 %v84
  %v280 = vunpack.c.l.b16 %v85
  %v281 = vunpack.c.l.b16 %v86
  %v282 = vunpack.c.l.b16 %v87
  %v283 = vpack.c.b16 %v212, %v211
  %v284 = vpack.c.b16 %v214, %v213
  %v285 = vpack.c.b16 %v216, %v215
  %v286 = vpack.c.b16 %v218, %v217
  %v287 = vpack.c.b16 %v220, %v219
  %v288 = vpack.c.b16 %v222, %v221
  %v289 = vpack.c.b16 %v224, %v223
  %v290 = vpack.c.b16 %v226, %v225
  %v291 = vpack.c.b16 %v228, %v227
  %v292 = vpack.c.b16 %v230, %v229
  %v293 = vpack.c.b16 %v232, %v231
  %v294 = vpack.c.b16 %v234, %v233
  %v295 = vpack.c.b16 %v236, %v235
  %v296 = vpack.c.b16 %v238, %v237
  %v297 = vpack.c.b16 %v240, %v239
  %v298 = vpack.c.b16 %v242, %v241
  %v299 = vpack.c.b16 %v244, %v243
  %v300 = vpack.c.b16 %v246, %v245
  %v301 = vpack.c.b16 %v248, %v247
  %v302 = vpack.c.b16 %v250, %v249
  %v303 = vpack.c.b16 %v252, %v251
  %v304 = vpack.c.b16 %v254, %v253
  %v305 = vpack.c.b16 %v256, %v255
  %v306 = vpack.c.b16 %v258, %v257
  %v307 = vpack.c.b16 %v260, %v259
  %v308 = vpack.c.b16 %v262, %v261
  %v309 = vpack.c.b16 %v264, %v263
  %v310 = vpack.c.b16 %v266, %v265
  %v311 = vpack.c.b16 %v268, %v267
  %v312 = vpack.c.b16 %v270, %v269
  %v313 = vpack.c.b16 %v272, %v271
  %v314 = vpack.c.b16 %v274, %v273
  %v315 = vpack.c.b16 %v276, %v275
  %v316 = vpack.c.b16 %v278, %v277
  %v317 = vpack.c.b16 %v280, %v279
  %v318 = vpack.c.b16 %v282, %v281
  %vm355 = vcmask 523264
  %v357 = vsel %vm355, %v125, 0
  %359 = vmatprep.subr.bf16.mxu0 0
  %360 = vmatpush1.bf16.msra.mxu0 %v283
  %361 = vmatprep.subr.bf16.mxu0 0
  %362 = vmatpush1.bf16.msra.mxu0 %v284
  %363 = vmatprep.subr.bf16.mxu0 0
  %364 = vmatpush1.bf16.msra.mxu0 %v285
  %365 = vmatprep.subr.bf16.mxu0 0
  %366 = vmatpush1.bf16.msra.mxu0 %v286
  %367 = vmatprep.subr.bf16.mxu0 0
  %368 = vmatpush1.bf16.msra.mxu0 %v287
  %369 = vmatprep.subr.bf16.mxu0 0
  %370 = vmatpush1.bf16.msra.mxu0 %v288
  %371 = vmatprep.subr.bf16.mxu0 0
  %372 = vmatpush1.bf16.msra.mxu0 %v289
  %373 = vmatprep.subr.bf16.mxu0 0
  %374 = vmatpush1.bf16.msra.mxu0 %v290
  %375 = vmatprep.subr.bf16.mxu0 0
  %376 = vmatpush1.bf16.msra.mxu0 %v291
  %377 = vmatprep.subr.bf16.mxu0 0
  %378 = vmatpush1.bf16.msra.mxu0 %v292
  %379 = vmatprep.subr.bf16.mxu0 0
  %380 = vmatpush1.bf16.msra.mxu0 %v293
  %381 = vmatprep.subr.bf16.mxu0 0
  %382 = vmatpush1.bf16.msra.mxu0 %v294
  %383 = vmatprep.subr.bf16.mxu0 0
  %384 = vmatpush1.bf16.msra.mxu0 %v295
  %385 = vmatprep.subr.bf16.mxu0 0
  %386 = vmatpush1.bf16.msra.mxu0 %v296
  %387 = vmatprep.subr.bf16.mxu0 0
  %388 = vmatpush1.bf16.msra.mxu0 %v297
  %389 = vmatprep.subr.bf16.mxu0 0
  %390 = vmatpush1.bf16.msra.mxu0 %v298
  %391 = vmatprep.mubr.bf16.mxu0 %v132
  %392 = vmatmul.mubr.bf16.gmra.mrb[0].mxu0 %v118
  %v393 = vpop.f32.mrb[0].mxu0
  %v394 = vadd.f32 %v93, %v393
  %v395 = vpop.f32.mrb[0].mxu0
  %v396 = vpop.f32.mrb[0].mxu0
  %v397 = vpop.f32.mrb[0].mxu0
  %398 = vdwg.mxu0
  %399 = vmatprep.subr.bf16.mxu0 0
  %400 = vmatpush1.bf16.msra.mxu0 %v299
  %401 = vmatprep.subr.bf16.mxu0 0
  %402 = vmatpush1.bf16.msra.mxu0 %v300
  %403 = vmatprep.subr.bf16.mxu0 0
  %404 = vmatpush1.bf16.msra.mxu0 %v301
  %405 = vmatprep.subr.bf16.mxu0 0
  %406 = vmatpush1.bf16.msra.mxu0 %v302
  %407 = vmatprep.subr.bf16.mxu0 0
  %408 = vmatpush1.bf16.msra.mxu0 %v303
  %409 = vmatprep.subr.bf16.mxu0 0
  %410 = vmatpush1.bf16.msra.mxu0 %v304
  %411 = vmatprep.subr.bf16.mxu0 0
  %412 = vmatpush1.bf16.msra.mxu0 %v305
  %413 = vmatprep.subr.bf16.mxu0 0
  %414 = vmatpush1.bf16.msra.mxu0 %v306
  %415 = vmatprep.subr.bf16.mxu0 0
  %416 = vmatpush1.bf16.msra.mxu0 %v307
  %417 = vmatprep.subr.bf16.mxu0 0
  %418 = vmatpush1.bf16.msra.mxu0 %v308
  %419 = vmatprep.subr.bf16.mxu0 0
  %420 = vmatpush1.bf16.msra.mxu0 %v309
  %421 = vmatprep.subr.bf16.mxu0 0
  %422 = vmatpush1.bf16.msra.mxu0 %v310
  %423 = vmatprep.subr.bf16.mxu0 0
  %424 = vmatpush1.bf16.msra.mxu0 %v311
  %425 = vmatprep.subr.bf16.mxu0 0
  %426 = vmatpush1.bf16.msra.mxu0 %v312
  %427 = vmatprep.subr.bf16.mxu0 0
  %428 = vmatpush1.bf16.msra.mxu0 %v313
  %429 = vmatprep.subr.bf16.mxu0 0
  %430 = vmatpush1.bf16.msra.mxu0 %v314
  %431 = vmatprep.mubr.bf16.mxu0 %v134
  %432 = vmatmul.mubr.bf16.gmra.mrb[0].mxu0 %v133
  %v433 = vpop.f32.mrb[0].mxu0
  %v434 = vadd.f32 %v394, %v433
  %v435 = vpop.f32.mrb[0].mxu0
  %v436 = vpop.f32.mrb[0].mxu0
  %v437 = vpop.f32.mrb[0].mxu0
  %438 = vdwg.mxu0
  %439 = vmatprep.subr.bf16.mxu0 0
  %440 = vmatpush1.bf16.msra.mxu0 %v315
  %441 = vmatprep.subr.bf16.mxu0 0
  %442 = vmatpush1.bf16.msra.mxu0 %v316
  %443 = vmatprep.subr.bf16.mxu0 0
  %444 = vmatpush1.bf16.msra.mxu0 %v317
  %445 = vmatprep.subr.bf16.mxu0 0
  %446 = vmatpush1.bf16.msra.mxu0 %v318
  %447 = vmatprep.subr.bf16.mxu0 0
  %448 = vmatpush1.bf16.msra.mxu0 0
  %449 = vmatprep.subr.bf16.mxu0 0
  %450 = vmatpush1.bf16.msra.mxu0 0
  %451 = vmatprep.subr.bf16.mxu0 0
  %452 = vmatpush1.bf16.msra.mxu0 0
  %453 = vmatprep.subr.bf16.mxu0 0
  %454 = vmatpush1.bf16.msra.mxu0 0
  %455 = vmatprep.subr.bf16.mxu0 0
  %456 = vmatpush1.bf16.msra.mxu0 0
  %457 = vmatprep.subr.bf16.mxu0 0
  %458 = vmatpush1.bf16.msra.mxu0 0
  %459 = vmatprep.subr.bf16.mxu0 0
  %460 = vmatpush1.bf16.msra.mxu0 0
  %461 = vmatprep.subr.bf16.mxu0 0
  %462 = vmatpush1.bf16.msra.mxu0 0
  %463 = vmatprep.subr.bf16.mxu0 0
  %464 = vmatpush1.bf16.msra.mxu0 0
  %465 = vmatprep.subr.bf16.mxu0 0
  %466 = vmatpush1.bf16.msra.mxu0 0
  %467 = vmatprep.subr.bf16.mxu0 0
  %468 = vmatpush1.bf16.msra.mxu0 0
  %469 = vmatprep.subr.bf16.mxu0 0
  %470 = vmatpush1.bf16.msra.mxu0 0
  %471 = vmatprep.mubr.bf16.mxu0 0
  %472 = vmatmul.mubr.bf16.gmra.mrb[0].mxu0 %v357
  %v473 = vpop.f32.mrb[0].mxu0
  %v474 = vadd.f32 %v434, %v473
  %v475 = vpop.f32.mrb[0].mxu0
  %v476 = vpop.f32.mrb[0].mxu0
  %v477 = vpop.f32.mrb[0].mxu0
  %478 = vdwg.mxu0
  %v479 = vmax.f32 %v474, 0.0
  %vm480 = vcmask 517120
  %481 = vst.msk [vmem:[%s3] sm:$0x3] %vm480, %v479
  // Predicated region
  $region14: #{_lambda_.68} parent=0 // pred_check
    _
  $region15: #{_lambda_.68} parent=0 // pred_check_branch
    %483 = sbr.rel (0) target = $region17
  $region16: #{_lambda_.68} parent=0 // pred_region
    _
  $region17: #{_lambda_.68} parent=0 // pred_fallthru
    _
  // Predicated region
  $region18: #{_lambda_.68} parent=0 // pred_check
    _
  $region19: #{_lambda_.68} parent=0 // pred_check_branch
    %485 = sbr.rel (0) target = $region21
  $region20: #{_lambda_.68} parent=0 // pred_region
    _
  $region21: #{_lambda_.68} parent=0 // pred_fallthru
    _

// kernel: _lambda_.72
$region0: #{_lambda_.72}
  #allocation0 [shape = 'u32[]', space=smem, size = 0x4, offset = 0x4, fixed_abs, tag = 'smem constant byte address 0x4 - core index']
  #allocation1 [shape = 'u32[144,128]{1,0:T(1,128)}', space=vmem, size = 0x12000, scoped, tag = 'internal scratch']
  %s0 = inlined_call_operand.vmem [shape: bf16[2,576], index: 0, kind: input, shape index: {}]
  %s1 = inlined_call_operand.vmem [shape: bf16[576,128], index: 1, kind: input, shape index: {}]
  %s2 = inlined_call_operand.vmem [shape: f32[1,128], index: 2, kind: input, shape index: {}]
  %s3 = inlined_call_operand.vmem [shape: f32[2,128], index: 3, kind: output, shape index: {}]
  %s4 = sld [smem:[#allocation0]]
  $region22: #{_lambda_.72} parent=0
    _
  %s6 = ssub.s32 1, %s4
  %s7 = scalar_select 0, %s6, %s4
  // Predicated region
  $region2: #{_lambda_.72} parent=0 // pred_check
    _
  $region3: #{_lambda_.72} parent=0 // pred_check_branch
    %9 = sbr.rel (0) target = $region5
  $region4: #{_lambda_.72} parent=0 // pred_region
    _
  $region5: #{_lambda_.72} parent=0 // pred_fallthru
    _
  // Predicated region
  $region6: #{_lambda_.72} parent=0 // pred_check
    _
  $region7: #{_lambda_.72} parent=0 // pred_check_branch
    %11 = sbr.rel (0) target = $region9
  $region8: #{_lambda_.72} parent=0 // pred_region
    _
  $region9: #{_lambda_.72} parent=0 // pred_fallthru
    _
  // Predicated region
  $region10: #{_lambda_.72} parent=0 // pred_check
    _
  $region11: #{_lambda_.72} parent=0 // pred_check_branch
    %13 = sbr.rel (0) target = $region13
  $region12: #{_lambda_.72} parent=0 // pred_region
    _
  $region13: #{_lambda_.72} parent=0 // pred_fallthru
    _
  %v15 = vld [vmem:[%s0] sm:$0x1f]
  %v16 = vld [vmem:[%s1] sm:$0xf]
  %v17 = vld [vmem:[%s1 + $0x4] sm:$0xf]
  %v18 = vld [vmem:[%s1 + $0x8] sm:$0xf]
  %v19 = vld [vmem:[%s1 + $0xc] sm:$0xf]
  %v20 = vld [vmem:[%s1 + $0x10] sm:$0xf]
  %v21 = vld [vmem:[%s1 + $0x14] sm:$0xf]
  %v22 = vld [vmem:[%s1 + $0x18] sm:$0xf]
  %v23 = vld [vmem:[%s1 + $0x1c] sm:$0xf]
  %v24 = vld [vmem:[%s1 + $0x20] sm:$0xf]
  %v25 = vld [vmem:[%s1 + $0x24] sm:$0xf]
  %v26 = vld [vmem:[%s1 + $0x28] sm:$0xf]
  %v27 = vld [vmem:[%s1 + $0x2c] sm:$0xf]
  %v28 = vld [vmem:[%s1 + $0x30] sm:$0xf]
  %v29 = vld [vmem:[%s1 + $0x34] sm:$0xf]
  %v30 = vld [vmem:[%s1 + $0x38] sm:$0xf]
  %v31 = vld [vmem:[%s1 + $0x3c] sm:$0xf]
  %v32 = vld [vmem:[%s1 + $0x40] sm:$0xf]
  %v33 = vld [vmem:[%s1 + $0x44] sm:$0xf]
  %v34 = vld [vmem:[%s1 + $0x48] sm:$0xf]
  %v35 = vld [vmem:[%s1 + $0x4c] sm:$0xf]
  %v36 = vld [vmem:[%s1 + $0x50] sm:$0xf]
  %v37 = vld [vmem:[%s1 + $0x54] sm:$0xf]
  %v38 = vld [vmem:[%s1 + $0x58] sm:$0xf]
  %v39 = vld [vmem:[%s1 + $0x5c] sm:$0xf]
  %v40 = vld [vmem:[%s1 + $0x60] sm:$0xf]
  %v41 = vld [vmem:[%s1 + $0x64] sm:$0xf]
  %v42 = vld [vmem:[%s1 + $0x68] sm:$0xf]
  %v43 = vld [vmem:[%s1 + $0x6c] sm:$0xf]
  %v44 = vld [vmem:[%s1 + $0x70] sm:$0xf]
  %v45 = vld [vmem:[%s1 + $0x74] sm:$0xf]
  %v46 = vld [vmem:[%s1 + $0x78] sm:$0xf]
  %v47 = vld [vmem:[%s1 + $0x7c] sm:$0xf]
  %v48 = vld [vmem:[%s1 + $0x80] sm:$0xf]
  %v49 = vld [vmem:[%s1 + $0x84] sm:$0xf]
  %v50 = vld [vmem:[%s1 + $0x88] sm:$0xf]
  %v51 = vld [vmem:[%s1 + $0x8c] sm:$0xf]
  %v52 = vld [vmem:[%s1 + $0x90] sm:$0xf]
  %v53 = vld [vmem:[%s1 + $0x94] sm:$0xf]
  %v54 = vld [vmem:[%s1 + $0x98] sm:$0xf]
  %v55 = vld [vmem:[%s1 + $0x9c] sm:$0xf]
  %v56 = vld [vmem:[%s1 + $0xa0] sm:$0xf]
  %v57 = vld [vmem:[%s1 + $0xa4] sm:$0xf]
  %v58 = vld [vmem:[%s1 + $0xa8] sm:$0xf]
  %v59 = vld [vmem:[%s1 + $0xac] sm:$0xf]
  %v60 = vld [vmem:[%s1 + $0xb0] sm:$0xf]
  %v61 = vld [vmem:[%s1 + $0xb4] sm:$0xf]
  %v62 = vld [vmem:[%s1 + $0xb8] sm:$0xf]
  %v63 = vld [vmem:[%s1 + $0xbc] sm:$0xf]
  %v64 = vld [vmem:[%s1 + $0xc0] sm:$0xf]
  %v65 = vld [vmem:[%s1 + $0xc4] sm:$0xf]
  %v66 = vld [vmem:[%s1 + $0xc8] sm:$0xf]
  %v67 = vld [vmem:[%s1 + $0xcc] sm:$0xf]
  %v68 = vld [vmem:[%s1 + $0xd0] sm:$0xf]
  %v69 = vld [vmem:[%s1 + $0xd4] sm:$0xf]
  %v70 = vld [vmem:[%s1 + $0xd8] sm:$0xf]
  %v71 = vld [vmem:[%s1 + $0xdc] sm:$0xf]
  %v72 = vld [vmem:[%s1 + $0xe0] sm:$0xf]
  %v73 = vld [vmem:[%s1 + $0xe4] sm:$0xf]
  %v74 = vld [vmem:[%s1 + $0xe8] sm:$0xf]
  %v75 = vld [vmem:[%s1 + $0xec] sm:$0xf]
  %v76 = vld [vmem:[%s1 + $0xf0] sm:$0xf]
  %v77 = vld [vmem:[%s1 + $0xf4] sm:$0xf]
  %v78 = vld [vmem:[%s1 + $0xf8] sm:$0xf]
  %v79 = vld [vmem:[%s1 + $0xfc] sm:$0xf]
  %v80 = vld [vmem:[%s1 + $0x100] sm:$0xf]
  %v81 = vld [vmem:[%s1 + $0x104] sm:$0xf]
  %v82 = vld [vmem:[%s1 + $0x108] sm:$0xf]
  %v83 = vld [vmem:[%s1 + $0x10c] sm:$0xf]
  %v84 = vld [vmem:[%s1 + $0x110] sm:$0xf]
  %v85 = vld [vmem:[%s1 + $0x114] sm:$0xf]
  %v86 = vld [vmem:[%s1 + $0x118] sm:$0xf]
  %v87 = vld [vmem:[%s1 + $0x11c] sm:$0xf]
  %v88 = vld [vmem:[%s2] sm:$0x1]
  %v90 = vlaneseq
  %v91 = vshrl.u32 %v90, 7
  %v92 = vsub.s32 0, %v91
  %v93 = vrot.slane %v88, %v92
  %v96 = vcombine.high %v15, %v15
  %v98 = vunpack.c.l.s4 1966171168
  %v99 = vunpack.c.0.s8 %v98
  %v100 = vlaneseq
  %v101 = vshrl.u32 %v100, 7
  %v102 = vsub.s32 %v99, %v101
  %v103 = vrot.slane %v15, %v102
  %v105 = vunpack.c.l.s4 1966171168
  %v106 = vunpack.c.0.s8 %v105
  %v107 = vlaneseq
  %v108 = vshrl.u32 %v107, 7
  %v109 = vsub.s32 %v106, %v108
  %v110 = vrot.slane %v96, %v109
  %v111 = vcombine.high %v103, %v103
  %v113 = vunpack.c.l.s4 1966171168
  %v114 = vunpack.c.0.s8 %v113
  %v115 = vlaneseq
  %v116 = vshrl.u32 %v115, 7
  %v117 = vsub.s32 %v114, %v116
  %v118 = vrot.slane %v103, %v117
  %v120 = vunpack.c.l.s4 1966171168
  %v121 = vunpack.c.0.s8 %v120
  %v122 = vlaneseq
  %v123 = vshrl.u32 %v122, 7
  %v124 = vsub.s32 %v121, %v123
  %v125 = vrot.slane %v110, %v124
  %v127 = vunpack.c.l.s4 1966171168
  %v128 = vunpack.c.0.s8 %v127
  %v129 = vlaneseq
  %v130 = vshrl.u32 %v129, 7
  %v131 = vsub.s32 %v128, %v130
  %v132 = vrot.slane %v111, %v131
  %v133 = vcombine.high %v118, %v118
  %v134 = vcombine.high %v132, %v132
  %v211 = vunpack.c.l.b16 %v16
  %v212 = vunpack.c.l.b16 %v17
  %v213 = vunpack.c.l.b16 %v18
  %v214 = vunpack.c.l.b16 %v19
  %v215 = vunpack.c.l.b16 %v20
  %v216 = vunpack.c.l.b16 %v21
  %v217 = vunpack.c.l.b16 %v22
  %v218 = vunpack.c.l.b16 %v23
  %v219 = vunpack.c.l.b16 %v24
  %v220 = vunpack.c.l.b16 %v25
  %v221 = vunpack.c.l.b16 %v26
  %v222 = vunpack.c.l.b16 %v27
  %v223 = vunpack.c.l.b16 %v28
  %v224 = vunpack.c.l.b16 %v29
  %v225 = vunpack.c.l.b16 %v30
  %v226 = vunpack.c.l.b16 %v31
  %v227 = vunpack.c.l.b16 %v32
  %v228 = vunpack.c.l.b16 %v33
  %v229 = vunpack.c.l.b16 %v34
  %v230 = vunpack.c.l.b16 %v35
  %v231 = vunpack.c.l.b16 %v36
  %v232 = vunpack.c.l.b16 %v37
  %v233 = vunpack.c.l.b16 %v38
  %v234 = vunpack.c.l.b16 %v39
  %v235 = vunpack.c.l.b16 %v40
  %v236 = vunpack.c.l.b16 %v41
  %v237 = vunpack.c.l.b16 %v42
  %v238 = vunpack.c.l.b16 %v43
  %v239 = vunpack.c.l.b16 %v44
  %v240 = vunpack.c.l.b16 %v45
  %v241 = vunpack.c.l.b16 %v46
  %v242 = vunpack.c.l.b16 %v47
  %v243 = vunpack.c.l.b16 %v48
  %v244 = vunpack.c.l.b16 %v49
  %v245 = vunpack.c.l.b16 %v50
  %v246 = vunpack.c.l.b16 %v51
  %v247 = vunpack.c.l.b16 %v52
  %v248 = vunpack.c.l.b16 %v53
  %v249 = vunpack.c.l.b16 %v54
  %v250 = vunpack.c.l.b16 %v55
  %v251 = vunpack.c.l.b16 %v56
  %v252 = vunpack.c.l.b16 %v57
  %v253 = vunpack.c.l.b16 %v58
  %v254 = vunpack.c.l.b16 %v59
  %v255 = vunpack.c.l.b16 %v60
  %v256 = vunpack.c.l.b16 %v61
  %v257 = vunpack.c.l.b16 %v62
  %v258 = vunpack.c.l.b16 %v63
  %v259 = vunpack.c.l.b16 %v64
  %v260 = vunpack.c.l.b16 %v65
  %v261 = vunpack.c.l.b16 %v66
  %v262 = vunpack.c.l.b16 %v67
  %v263 = vunpack.c.l.b16 %v68
  %v264 = vunpack.c.l.b16 %v69
  %v265 = vunpack.c.l.b16 %v70
  %v266 = vunpack.c.l.b16 %v71
  %v267 = vunpack.c.l.b16 %v72
  %v268 = vunpack.c.l.b16 %v73
  %v269 = vunpack.c.l.b16 %v74
  %v270 = vunpack.c.l.b16 %v75
  %v271 = vunpack.c.l.b16 %v76
  %v272 = vunpack.c.l.b16 %v77
  %v273 = vunpack.c.l.b16 %v78
  %v274 = vunpack.c.l.b16 %v79
  %v275 = vunpack.c.l.b16 %v80
  %v276 = vunpack.c.l.b16 %v81
  %v277 = vunpack.c.l.b16 %v82
  %v278 = vunpack.c.l.b16 %v83
  %v279 = vunpack.c.l.b16 %v84
  %v280 = vunpack.c.l.b16 %v85
  %v281 = vunpack.c.l.b16 %v86
  %v282 = vunpack.c.l.b16 %v87
  %v283 = vpack.c.b16 %v212, %v211
  %v284 = vpack.c.b16 %v214, %v213
  %v285 = vpack.c.b16 %v216, %v215
  %v286 = vpack.c.b16 %v218, %v217
  %v287 = vpack.c.b16 %v220, %v219
  %v288 = vpack.c.b16 %v222, %v221
  %v289 = vpack.c.b16 %v224, %v223
  %v290 = vpack.c.b16 %v226, %v225
  %v291 = vpack.c.b16 %v228, %v227
  %v292 = vpack.c.b16 %v230, %v229
  %v293 = vpack.c.b16 %v232, %v231
  %v294 = vpack.c.b16 %v234, %v233
  %v295 = vpack.c.b16 %v236, %v235
  %v296 = vpack.c.b16 %v238, %v237
  %v297 = vpack.c.b16 %v240, %v239
  %v298 = vpack.c.b16 %v242, %v241
  %v299 = vpack.c.b16 %v244, %v243
  %v300 = vpack.c.b16 %v246, %v245
  %v301 = vpack.c.b16 %v248, %v247
  %v302 = vpack.c.b16 %v250, %v249
  %v303 = vpack.c.b16 %v252, %v251
  %v304 = vpack.c.b16 %v254, %v253
  %v305 = vpack.c.b16 %v256, %v255
  %v306 = vpack.c.b16 %v258, %v257
  %v307 = vpack.c.b16 %v260, %v259
  %v308 = vpack.c.b16 %v262, %v261
  %v309 = vpack.c.b16 %v264, %v263
  %v310 = vpack.c.b16 %v266, %v265
  %v311 = vpack.c.b16 %v268, %v267
  %v312 = vpack.c.b16 %v270, %v269
  %v313 = vpack.c.b16 %v272, %v271
  %v314 = vpack.c.b16 %v274, %v273
  %v315 = vpack.c.b16 %v276, %v275
  %v316 = vpack.c.b16 %v278, %v277
  %v317 = vpack.c.b16 %v280, %v279
  %v318 = vpack.c.b16 %v282, %v281
  %vm355 = vcmask 523264
  %v357 = vsel %vm355, %v125, 0
  %359 = vmatprep.subr.bf16.mxu0 0
  %360 = vmatpush1.bf16.msra.mxu0 %v283
  %361 = vmatprep.subr.bf16.mxu0 0
  %362 = vmatpush1.bf16.msra.mxu0 %v284
  %363 = vmatprep.subr.bf16.mxu0 0
  %364 = vmatpush1.bf16.msra.mxu0 %v285
  %365 = vmatprep.subr.bf16.mxu0 0
  %366 = vmatpush1.bf16.msra.mxu0 %v286
  %367 = vmatprep.subr.bf16.mxu0 0
  %368 = vmatpush1.bf16.msra.mxu0 %v287
  %369 = vmatprep.subr.bf16.mxu0 0
  %370 = vmatpush1.bf16.msra.mxu0 %v288
  %371 = vmatprep.subr.bf16.mxu0 0
  %372 = vmatpush1.bf16.msra.mxu0 %v289
  %373 = vmatprep.subr.bf16.mxu0 0
  %374 = vmatpush1.bf16.msra.mxu0 %v290
  %375 = vmatprep.subr.bf16.mxu0 0
  %376 = vmatpush1.bf16.msra.mxu0 %v291
  %377 = vmatprep.subr.bf16.mxu0 0
  %378 = vmatpush1.bf16.msra.mxu0 %v292
  %379 = vmatprep.subr.bf16.mxu0 0
  %380 = vmatpush1.bf16.msra.mxu0 %v293
  %381 = vmatprep.subr.bf16.mxu0 0
  %382 = vmatpush1.bf16.msra.mxu0 %v294
  %383 = vmatprep.subr.bf16.mxu0 0
  %384 = vmatpush1.bf16.msra.mxu0 %v295
  %385 = vmatprep.subr.bf16.mxu0 0
  %386 = vmatpush1.bf16.msra.mxu0 %v296
  %387 = vmatprep.subr.bf16.mxu0 0
  %388 = vmatpush1.bf16.msra.mxu0 %v297
  %389 = vmatprep.subr.bf16.mxu0 0
  %390 = vmatpush1.bf16.msra.mxu0 %v298
  %391 = vmatprep.mubr.bf16.mxu0 %v132
  %392 = vmatmul.mubr.bf16.gmra.mrb[0].mxu0 %v118
  %v393 = vpop.f32.mrb[0].mxu0
  %v394 = vadd.f32 %v93, %v393
  %v395 = vpop.f32.mrb[0].mxu0
  %v396 = vpop.f32.mrb[0].mxu0
  %v397 = vpop.f32.mrb[0].mxu0
  %398 = vdwg.mxu0
  %399 = vmatprep.subr.bf16.mxu0 0
  %400 = vmatpush1.bf16.msra.mxu0 %v299
  %401 = vmatprep.subr.bf16.mxu0 0
  %402 = vmatpush1.bf16.msra.mxu0 %v300
  %403 = vmatprep.subr.bf16.mxu0 0
  %404 = vmatpush1.bf16.msra.mxu0 %v301
  %405 = vmatprep.subr.bf16.mxu0 0
  %406 = vmatpush1.bf16.msra.mxu0 %v302
  %407 = vmatprep.subr.bf16.mxu0 0
  %408 = vmatpush1.bf16.msra.mxu0 %v303
  %409 = vmatprep.subr.bf16.mxu0 0
  %410 = vmatpush1.bf16.msra.mxu0 %v304
  %411 = vmatprep.subr.bf16.mxu0 0
  %412 = vmatpush1.bf16.msra.mxu0 %v305
  %413 = vmatprep.subr.bf16.mxu0 0
  %414 = vmatpush1.bf16.msra.mxu0 %v306
  %415 = vmatprep.subr.bf16.mxu0 0
  %416 = vmatpush1.bf16.msra.mxu0 %v307
  %417 = vmatprep.subr.bf16.mxu0 0
  %418 = vmatpush1.bf16.msra.mxu0 %v308
  %419 = vmatprep.subr.bf16.mxu0 0
  %420 = vmatpush1.bf16.msra.mxu0 %v309
  %421 = vmatprep.subr.bf16.mxu0 0
  %422 = vmatpush1.bf16.msra.mxu0 %v310
  %423 = vmatprep.subr.bf16.mxu0 0
  %424 = vmatpush1.bf16.msra.mxu0 %v311
  %425 = vmatprep.subr.bf16.mxu0 0
  %426 = vmatpush1.bf16.msra.mxu0 %v312
  %427 = vmatprep.subr.bf16.mxu0 0
  %428 = vmatpush1.bf16.msra.mxu0 %v313
  %429 = vmatprep.subr.bf16.mxu0 0
  %430 = vmatpush1.bf16.msra.mxu0 %v314
  %431 = vmatprep.mubr.bf16.mxu0 %v134
  %432 = vmatmul.mubr.bf16.gmra.mrb[0].mxu0 %v133
  %v433 = vpop.f32.mrb[0].mxu0
  %v434 = vadd.f32 %v394, %v433
  %v435 = vpop.f32.mrb[0].mxu0
  %v436 = vpop.f32.mrb[0].mxu0
  %v437 = vpop.f32.mrb[0].mxu0
  %438 = vdwg.mxu0
  %439 = vmatprep.subr.bf16.mxu0 0
  %440 = vmatpush1.bf16.msra.mxu0 %v315
  %441 = vmatprep.subr.bf16.mxu0 0
  %442 = vmatpush1.bf16.msra.mxu0 %v316
  %443 = vmatprep.subr.bf16.mxu0 0
  %444 = vmatpush1.bf16.msra.mxu0 %v317
  %445 = vmatprep.subr.bf16.mxu0 0
  %446 = vmatpush1.bf16.msra.mxu0 %v318
  %447 = vmatprep.subr.bf16.mxu0 0
  %448 = vmatpush1.bf16.msra.mxu0 0
  %449 = vmatprep.subr.bf16.mxu0 0
  %450 = vmatpush1.bf16.msra.mxu0 0
  %451 = vmatprep.subr.bf16.mxu0 0
  %452 = vmatpush1.bf16.msra.mxu0 0
  %453 = vmatprep.subr.bf16.mxu0 0
  %454 = vmatpush1.bf16.msra.mxu0 0
  %455 = vmatprep.subr.bf16.mxu0 0
  %456 = vmatpush1.bf16.msra.mxu0 0
  %457 = vmatprep.subr.bf16.mxu0 0
  %458 = vmatpush1.bf16.msra.mxu0 0
  %459 = vmatprep.subr.bf16.mxu0 0
  %460 = vmatpush1.bf16.msra.mxu0 0
  %461 = vmatprep.subr.bf16.mxu0 0
  %462 = vmatpush1.bf16.msra.mxu0 0
  %463 = vmatprep.subr.bf16.mxu0 0
  %464 = vmatpush1.bf16.msra.mxu0 0
  %465 = vmatprep.subr.bf16.mxu0 0
  %466 = vmatpush1.bf16.msra.mxu0 0
  %467 = vmatprep.subr.bf16.mxu0 0
  %468 = vmatpush1.bf16.msra.mxu0 0
  %469 = vmatprep.subr.bf16.mxu0 0
  %470 = vmatpush1.bf16.msra.mxu0 0
  %471 = vmatprep.mubr.bf16.mxu0 0
  %472 = vmatmul.mubr.bf16.gmra.mrb[0].mxu0 %v357
  %v473 = vpop.f32.mrb[0].mxu0
  %v474 = vadd.f32 %v434, %v473
  %v475 = vpop.f32.mrb[0].mxu0
  %v476 = vpop.f32.mrb[0].mxu0
  %v477 = vpop.f32.mrb[0].mxu0
  %478 = vdwg.mxu0
  %479 = vst [vmem:[%s3] sm:$0x3] %v474
  // Predicated region
  $region14: #{_lambda_.72} parent=0 // pred_check
    _
  $region15: #{_lambda_.72} parent=0 // pred_check_branch
    %481 = sbr.rel (0) target = $region17
  $region16: #{_lambda_.72} parent=0 // pred_region
    _
  $region17: #{_lambda_.72} parent=0 // pred_fallthru
    _
  // Predicated region
  $region18: #{_lambda_.72} parent=0 // pred_check
    _
  $region19: #{_lambda_.72} parent=0 // pred_check_branch
    %483 = sbr.rel (0) target = $region21
  $region20: #{_lambda_.72} parent=0 // pred_region
    _
  $region21: #{_lambda_.72} parent=0 // pred_fallthru
    _

// kernel: _lambda_.73
$region0: #{_lambda_.73}
  #allocation0 [shape = 'u32[]', space=smem, size = 0x4, offset = 0x4, fixed_abs, tag = 'smem constant byte address 0x4 - core index']
  #allocation1 [shape = 'u32[144,128]{1,0:T(1,128)}', space=vmem, size = 0x12000, scoped, tag = 'internal scratch']
  %s0 = inlined_call_operand.vmem [shape: bf16[8,32], index: 0, kind: input, shape index: {}]
  %s1 = inlined_call_operand.vmem [shape: bf16[32,32], index: 1, kind: input, shape index: {}]
  %s2 = inlined_call_operand.vmem [shape: f32[1,32], index: 2, kind: input, shape index: {}]
  %s3 = inlined_call_operand.vmem [shape: f32[8,32], index: 3, kind: output, shape index: {}]
  %s4 = sld [smem:[#allocation0]]
  $region22: #{_lambda_.73} parent=0
    _
  %s6 = ssub.s32 1, %s4
  %s7 = scalar_select 0, %s6, %s4
  // Predicated region
  $region2: #{_lambda_.73} parent=0 // pred_check
    _
  $region3: #{_lambda_.73} parent=0 // pred_check_branch
    %9 = sbr.rel (0) target = $region5
  $region4: #{_lambda_.73} parent=0 // pred_region
    _
  $region5: #{_lambda_.73} parent=0 // pred_fallthru
    _
  // Predicated region
  $region6: #{_lambda_.73} parent=0 // pred_check
    _
  $region7: #{_lambda_.73} parent=0 // pred_check_branch
    %11 = sbr.rel (0) target = $region9
  $region8: #{_lambda_.73} parent=0 // pred_region
    _
  $region9: #{_lambda_.73} parent=0 // pred_fallthru
    _
  // Predicated region
  $region10: #{_lambda_.73} parent=0 // pred_check
    _
  $region11: #{_lambda_.73} parent=0 // pred_check_branch
    %13 = sbr.rel (0) target = $region13
  $region12: #{_lambda_.73} parent=0 // pred_region
    _
  $region13: #{_lambda_.73} parent=0 // pred_fallthru
    _
  %v15 = vld [vmem:[%s0] sm:$0xf]
  %v16 = vld [vmem:[%s1] sm:$0xf]
  %v17 = vld [vmem:[%s1 + $0x4] sm:$0xf]
  %v18 = vld [vmem:[%s1 + $0x8] sm:$0xf]
  %v19 = vld [vmem:[%s1 + $0xc] sm:$0xf]
  %v20 = vld [vmem:[%s2] sm:$0x1]
  %v22 = vlaneseq
  %v23 = vshrl.u32 %v22, 7
  %v24 = vsub.s32 0, %v23
  %v25 = vrot.slane %v20, %v24
  %v31 = vunpack.c.l.b16 %v16
  %v32 = vunpack.c.l.b16 %v17
  %v33 = vunpack.c.l.b16 %v18
  %v34 = vunpack.c.l.b16 %v19
  %v35 = vpack.c.b16 %v32, %v31
  %v36 = vpack.c.b16 %v34, %v33
  %vm39 = vcmask 261120
  %v41 = vsel %vm39, %v15, 0
  %43 = vmatprep.subr.bf16.mxu0 0
  %44 = vmatpush1.bf16.msra.mxu0 %v35
  %45 = vmatprep.subr.bf16.mxu0 0
  %46 = vmatpush1.bf16.msra.mxu0 %v36
  %47 = vmatprep.subr.bf16.mxu0 0
  %48 = vmatpush1.bf16.msra.mxu0 0
  %49 = vmatprep.subr.bf16.mxu0 0
  %50 = vmatpush1.bf16.msra.mxu0 0
  %51 = vmatprep.subr.bf16.mxu0 0
  %52 = vmatpush1.bf16.msra.mxu0 0
  %53 = vmatprep.subr.bf16.mxu0 0
  %54 = vmatpush1.bf16.msra.mxu0 0
  %55 = vmatprep.subr.bf16.mxu0 0
  %56 = vmatpush1.bf16.msra.mxu0 0
  %57 = vmatprep.subr.bf16.mxu0 0
  %58 = vmatpush1.bf16.msra.mxu0 0
  %59 = vmatprep.subr.bf16.mxu0 0
  %60 = vmatpush1.bf16.msra.mxu0 0
  %61 = vmatprep.subr.bf16.mxu0 0
  %62 = vmatpush1.bf16.msra.mxu0 0
  %63 = vmatprep.subr.bf16.mxu0 0
  %64 = vmatpush1.bf16.msra.mxu0 0
  %65 = vmatprep.subr.bf16.mxu0 0
  %66 = vmatpush1.bf16.msra.mxu0 0
  %67 = vmatprep.subr.bf16.mxu0 0
  %68 = vmatpush1.bf16.msra.mxu0 0
  %69 = vmatprep.subr.bf16.mxu0 0
  %70 = vmatpush1.bf16.msra.mxu0 0
  %71 = vmatprep.subr.bf16.mxu0 0
  %72 = vmatpush1.bf16.msra.mxu0 0
  %73 = vmatprep.subr.bf16.mxu0 0
  %74 = vmatpush1.bf16.msra.mxu0 0
  %75 = vmatprep.mubr.bf16.mxu0 0
  %76 = vmatmul.mubr.bf16.gmra.mrb[0].mxu0 %v41
  %v77 = vpop.f32.mrb[0].mxu0
  %v78 = vadd.f32 %v25, %v77
  %v79 = vpop.f32.mrb[0].mxu0
  %v80 = vpop.f32.mrb[0].mxu0
  %v81 = vpop.f32.mrb[0].mxu0
  %82 = vdwg.mxu0
  %v83 = vmax.f32 %v78, 0.0
  %84 = vst.msk [vmem:[%s3] sm:$0xff] %vm39, %v83
  // Predicated region
  $region14: #{_lambda_.73} parent=0 // pred_check
    _
  $region15: #{_lambda_.73} parent=0 // pred_check_branch
    %86 = sbr.rel (0) target = $region17
  $region16: #{_lambda_.73} parent=0 // pred_region
    _
  $region17: #{_lambda_.73} parent=0 // pred_fallthru
    _
  // Predicated region
  $region18: #{_lambda_.73} parent=0 // pred_check
    _
  $region19: #{_lambda_.73} parent=0 // pred_check_branch
    %88 = sbr.rel (0) target = $region21
  $region20: #{_lambda_.73} parent=0 // pred_region
    _
  $region21: #{_lambda_.73} parent=0 // pred_fallthru
    _

// kernel: _lambda_.74
$region0: #{_lambda_.74}
  #allocation0 [shape = 'u32[]', space=smem, size = 0x4, offset = 0x4, fixed_abs, tag = 'smem constant byte address 0x4 - core index']
  #allocation1 [shape = 'u32[144,128]{1,0:T(1,128)}', space=vmem, size = 0x12000, scoped, tag = 'internal scratch']
  %s0 = inlined_call_operand.vmem [shape: bf16[2,32], index: 0, kind: input, shape index: {}]
  %s1 = inlined_call_operand.vmem [shape: bf16[32,8], index: 1, kind: input, shape index: {}]
  %s2 = inlined_call_operand.vmem [shape: f32[1,8], index: 2, kind: input, shape index: {}]
  %s3 = inlined_call_operand.vmem [shape: f32[2,8], index: 3, kind: output, shape index: {}]
  %s4 = sld [smem:[#allocation0]]
  $region22: #{_lambda_.74} parent=0
    _
  %s6 = ssub.s32 1, %s4
  %s7 = scalar_select 0, %s6, %s4
  // Predicated region
  $region2: #{_lambda_.74} parent=0 // pred_check
    _
  $region3: #{_lambda_.74} parent=0 // pred_check_branch
    %9 = sbr.rel (0) target = $region5
  $region4: #{_lambda_.74} parent=0 // pred_region
    _
  $region5: #{_lambda_.74} parent=0 // pred_fallthru
    _
  // Predicated region
  $region6: #{_lambda_.74} parent=0 // pred_check
    _
  $region7: #{_lambda_.74} parent=0 // pred_check_branch
    %11 = sbr.rel (0) target = $region9
  $region8: #{_lambda_.74} parent=0 // pred_region
    _
  $region9: #{_lambda_.74} parent=0 // pred_fallthru
    _
  // Predicated region
  $region10: #{_lambda_.74} parent=0 // pred_check
    _
  $region11: #{_lambda_.74} parent=0 // pred_check_branch
    %13 = sbr.rel (0) target = $region13
  $region12: #{_lambda_.74} parent=0 // pred_region
    _
  $region13: #{_lambda_.74} parent=0 // pred_fallthru
    _
  %v15 = vld [vmem:[%s0] sm:$0x1]
  %v16 = vld [vmem:[%s1] sm:$0xf]
  %v17 = vld [vmem:[%s1 + $0x4] sm:$0xf]
  %v18 = vld [vmem:[%s1 + $0x8] sm:$0xf]
  %v19 = vld [vmem:[%s1 + $0xc] sm:$0xf]
  %v20 = vld [vmem:[%s2] sm:$0x1]
  %v22 = vlaneseq
  %v23 = vshrl.u32 %v22, 7
  %v24 = vsub.s32 0, %v23
  %v25 = vrot.slane %v20, %v24
  %v31 = vunpack.c.l.b16 %v16
  %v32 = vunpack.c.l.b16 %v17
  %v33 = vunpack.c.l.b16 %v18
  %v34 = vunpack.c.l.b16 %v19
  %v35 = vpack.c.b16 %v32, %v31
  %v36 = vpack.c.b16 %v34, %v33
  %vm39 = vcmask 261120
  %v41 = vsel %vm39, %v15, 0
  %43 = vmatprep.subr.bf16.mxu0 0
  %44 = vmatpush1.bf16.msra.mxu0 %v35
  %45 = vmatprep.subr.bf16.mxu0 0
  %46 = vmatpush1.bf16.msra.mxu0 %v36
  %47 = vmatprep.subr.bf16.mxu0 0
  %48 = vmatpush1.bf16.msra.mxu0 0
  %49 = vmatprep.subr.bf16.mxu0 0
  %50 = vmatpush1.bf16.msra.mxu0 0
  %51 = vmatprep.subr.bf16.mxu0 0
  %52 = vmatpush1.bf16.msra.mxu0 0
  %53 = vmatprep.subr.bf16.mxu0 0
  %54 = vmatpush1.bf16.msra.mxu0 0
  %55 = vmatprep.subr.bf16.mxu0 0
  %56 = vmatpush1.bf16.msra.mxu0 0
  %57 = vmatprep.subr.bf16.mxu0 0
  %58 = vmatpush1.bf16.msra.mxu0 0
  %59 = vmatprep.subr.bf16.mxu0 0
  %60 = vmatpush1.bf16.msra.mxu0 0
  %61 = vmatprep.subr.bf16.mxu0 0
  %62 = vmatpush1.bf16.msra.mxu0 0
  %63 = vmatprep.subr.bf16.mxu0 0
  %64 = vmatpush1.bf16.msra.mxu0 0
  %65 = vmatprep.subr.bf16.mxu0 0
  %66 = vmatpush1.bf16.msra.mxu0 0
  %67 = vmatprep.subr.bf16.mxu0 0
  %68 = vmatpush1.bf16.msra.mxu0 0
  %69 = vmatprep.subr.bf16.mxu0 0
  %70 = vmatpush1.bf16.msra.mxu0 0
  %71 = vmatprep.subr.bf16.mxu0 0
  %72 = vmatpush1.bf16.msra.mxu0 0
  %73 = vmatprep.subr.bf16.mxu0 0
  %74 = vmatpush1.bf16.msra.mxu0 0
  %75 = vmatprep.mubr.bf16.mxu0 0
  %76 = vmatmul.mubr.bf16.gmra.mrb[0].mxu0 %v41
  %v77 = vpop.f32.mrb[0].mxu0
  %v78 = vadd.f32 %v25, %v77
  %v79 = vpop.f32.mrb[0].mxu0
  %v80 = vpop.f32.mrb[0].mxu0
  %v81 = vpop.f32.mrb[0].mxu0
  %82 = vdwg.mxu0
  %v83 = vmax.f32 %v78, 0.0
  %vm84 = vcmask 58368
  %85 = vst.msk [vmem:[%s3] sm:$0x3] %vm84, %v83
  // Predicated region
  $region14: #{_lambda_.74} parent=0 // pred_check
    _
  $region15: #{_lambda_.74} parent=0 // pred_check_branch
    %87 = sbr.rel (0) target = $region17
  $region16: #{_lambda_.74} parent=0 // pred_region
    _
  $region17: #{_lambda_.74} parent=0 // pred_fallthru
    _
  // Predicated region
  $region18: #{_lambda_.74} parent=0 // pred_check
    _
  $region19: #{_lambda_.74} parent=0 // pred_check_branch
    %89 = sbr.rel (0) target = $region21
  $region20: #{_lambda_.74} parent=0 // pred_region
    _
  $region21: #{_lambda_.74} parent=0 // pred_fallthru
    _

// kernel: _lambda_.75
$region0: #{_lambda_.75}
  #allocation0 [shape = 'u32[]', space=smem, size = 0x4, offset = 0x4, fixed_abs, tag = 'smem constant byte address 0x4 - core index']
  #allocation1 [shape = 'u32[144,128]{1,0:T(1,128)}', space=vmem, size = 0x12000, scoped, tag = 'internal scratch']
  %s0 = inlined_call_operand.vmem [shape: bf16[2,8], index: 0, kind: input, shape index: {}]
  %s1 = inlined_call_operand.vmem [shape: bf16[8,32], index: 1, kind: input, shape index: {}]
  %s2 = inlined_call_operand.vmem [shape: f32[1,32], index: 2, kind: input, shape index: {}]
  %s3 = inlined_call_operand.vmem [shape: f32[2,32], index: 3, kind: output, shape index: {}]
  %s4 = sld [smem:[#allocation0]]
  $region22: #{_lambda_.75} parent=0
    _
  %s6 = ssub.s32 1, %s4
  %s7 = scalar_select 0, %s6, %s4
  // Predicated region
  $region2: #{_lambda_.75} parent=0 // pred_check
    _
  $region3: #{_lambda_.75} parent=0 // pred_check_branch
    %9 = sbr.rel (0) target = $region5
  $region4: #{_lambda_.75} parent=0 // pred_region
    _
  $region5: #{_lambda_.75} parent=0 // pred_fallthru
    _
  // Predicated region
  $region6: #{_lambda_.75} parent=0 // pred_check
    _
  $region7: #{_lambda_.75} parent=0 // pred_check_branch
    %11 = sbr.rel (0) target = $region9
  $region8: #{_lambda_.75} parent=0 // pred_region
    _
  $region9: #{_lambda_.75} parent=0 // pred_fallthru
    _
  // Predicated region
  $region10: #{_lambda_.75} parent=0 // pred_check
    _
  $region11: #{_lambda_.75} parent=0 // pred_check_branch
    %13 = sbr.rel (0) target = $region13
  $region12: #{_lambda_.75} parent=0 // pred_region
    _
  $region13: #{_lambda_.75} parent=0 // pred_fallthru
    _
  %v15 = vld [vmem:[%s0] sm:$0x1]
  %v16 = vld [vmem:[%s1] sm:$0xf]
  %v17 = vld [vmem:[%s2] sm:$0x1]
  %v19 = vlaneseq
  %v20 = vshrl.u32 %v19, 7
  %v21 = vsub.s32 0, %v20
  %v22 = vrot.slane %v17, %v21
  %vm24 = vcmask 64512
  %v26 = vsel %vm24, %v15, 0
  %vm28 = vcmask 1043456
  %v30 = vsel %vm28, %v16, 0
  %32 = vmatprep.subr.bf16.mxu0 0
  %33 = vmatpush1.bf16.msra.mxu0 %v30
  %34 = vmatprep.subr.bf16.mxu0 0
  %35 = vmatpush1.bf16.msra.mxu0 0
  %36 = vmatprep.subr.bf16.mxu0 0
  %37 = vmatpush1.bf16.msra.mxu0 0
  %38 = vmatprep.subr.bf16.mxu0 0
  %39 = vmatpush1.bf16.msra.mxu0 0
  %40 = vmatprep.subr.bf16.mxu0 0
  %41 = vmatpush1.bf16.msra.mxu0 0
  %42 = vmatprep.subr.bf16.mxu0 0
  %43 = vmatpush1.bf16.msra.mxu0 0
  %44 = vmatprep.subr.bf16.mxu0 0
  %45 = vmatpush1.bf16.msra.mxu0 0
  %46 = vmatprep.subr.bf16.mxu0 0
  %47 = vmatpush1.bf16.msra.mxu0 0
  %48 = vmatprep.subr.bf16.mxu0 0
  %49 = vmatpush1.bf16.msra.mxu0 0
  %50 = vmatprep.subr.bf16.mxu0 0
  %51 = vmatpush1.bf16.msra.mxu0 0
  %52 = vmatprep.subr.bf16.mxu0 0
  %53 = vmatpush1.bf16.msra.mxu0 0
  %54 = vmatprep.subr.bf16.mxu0 0
  %55 = vmatpush1.bf16.msra.mxu0 0
  %56 = vmatprep.subr.bf16.mxu0 0
  %57 = vmatpush1.bf16.msra.mxu0 0
  %58 = vmatprep.subr.bf16.mxu0 0
  %59 = vmatpush1.bf16.msra.mxu0 0
  %60 = vmatprep.subr.bf16.mxu0 0
  %61 = vmatpush1.bf16.msra.mxu0 0
  %62 = vmatprep.subr.bf16.mxu0 0
  %63 = vmatpush1.bf16.msra.mxu0 0
  %64 = vmatprep.mubr.bf16.mxu0 0
  %65 = vmatmul.mubr.bf16.gmra.mrb[0].mxu0 %v26
  %v66 = vpop.f32.mrb[0].mxu0
  %v67 = vadd.f32 %v22, %v66
  %v68 = vpop.f32.mrb[0].mxu0
  %v69 = vpop.f32.mrb[0].mxu0
  %v70 = vpop.f32.mrb[0].mxu0
  %71 = vdwg.mxu0
  %v72 = vsub.f32 0.0, %v67
  %v73 = vmul.f32 %v72, 1.442695
  %v74 = vpow.pop %v73
  %v75 = vadd.f32 %v74, 1.0
  %v76 = vrcp.pop %v75
  %vm77 = vcmask 254976
  %78 = vst.msk [vmem:[%s3] sm:$0x3] %vm77, %v76
  // Predicated region
  $region14: #{_lambda_.75} parent=0 // pred_check
    _
  $region15: #{_lambda_.75} parent=0 // pred_check_branch
    %80 = sbr.rel (0) target = $region17
  $region16: #{_lambda_.75} parent=0 // pred_region
    _
  $region17: #{_lambda_.75} parent=0 // pred_fallthru
    _
  // Predicated region
  $region18: #{_lambda_.75} parent=0 // pred_check
    _
  $region19: #{_lambda_.75} parent=0 // pred_check_branch
    %82 = sbr.rel (0) target = $region21
  $region20: #{_lambda_.75} parent=0 // pred_region
    _
  $region21: #{_lambda_.75} parent=0 // pred_fallthru
    _

// kernel: _lambda_.76
$region0: #{_lambda_.76}
  #allocation0 [shape = 'u32[]', space=smem, size = 0x4, offset = 0x4, fixed_abs, tag = 'smem constant byte address 0x4 - core index']
  #allocation1 [shape = 'u32[144,128]{1,0:T(1,128)}', space=vmem, size = 0x12000, scoped, tag = 'internal scratch']
  %s0 = inlined_call_operand.vmem [shape: bf16[8,32], index: 0, kind: input, shape index: {}]
  %s1 = inlined_call_operand.vmem [shape: bf16[32,8], index: 1, kind: input, shape index: {}]
  %s2 = inlined_call_operand.vmem [shape: f32[1,8], index: 2, kind: input, shape index: {}]
  %s3 = inlined_call_operand.vmem [shape: f32[8,8], index: 3, kind: output, shape index: {}]
  %s4 = sld [smem:[#allocation0]]
  $region22: #{_lambda_.76} parent=0
    _
  %s6 = ssub.s32 1, %s4
  %s7 = scalar_select 0, %s6, %s4
  // Predicated region
  $region2: #{_lambda_.76} parent=0 // pred_check
    _
  $region3: #{_lambda_.76} parent=0 // pred_check_branch
    %9 = sbr.rel (0) target = $region5
  $region4: #{_lambda_.76} parent=0 // pred_region
    _
  $region5: #{_lambda_.76} parent=0 // pred_fallthru
    _
  // Predicated region
  $region6: #{_lambda_.76} parent=0 // pred_check
    _
  $region7: #{_lambda_.76} parent=0 // pred_check_branch
    %11 = sbr.rel (0) target = $region9
  $region8: #{_lambda_.76} parent=0 // pred_region
    _
  $region9: #{_lambda_.76} parent=0 // pred_fallthru
    _
  // Predicated region
  $region10: #{_lambda_.76} parent=0 // pred_check
    _
  $region11: #{_lambda_.76} parent=0 // pred_check_branch
    %13 = sbr.rel (0) target = $region13
  $region12: #{_lambda_.76} parent=0 // pred_region
    _
  $region13: #{_lambda_.76} parent=0 // pred_fallthru
    _
  %v15 = vld [vmem:[%s0] sm:$0xf]
  %v16 = vld [vmem:[%s1] sm:$0xf]
  %v17 = vld [vmem:[%s1 + $0x4] sm:$0xf]
  %v18 = vld [vmem:[%s1 + $0x8] sm:$0xf]
  %v19 = vld [vmem:[%s1 + $0xc] sm:$0xf]
  %v20 = vld [vmem:[%s2] sm:$0x1]
  %v22 = vlaneseq
  %v23 = vshrl.u32 %v22, 7
  %v24 = vsub.s32 0, %v23
  %v25 = vrot.slane %v20, %v24
  %v31 = vunpack.c.l.b16 %v16
  %v32 = vunpack.c.l.b16 %v17
  %v33 = vunpack.c.l.b16 %v18
  %v34 = vunpack.c.l.b16 %v19
  %v35 = vpack.c.b16 %v32, %v31
  %v36 = vpack.c.b16 %v34, %v33
  %vm39 = vcmask 261120
  %v41 = vsel %vm39, %v15, 0
  %43 = vmatprep.subr.bf16.mxu0 0
  %44 = vmatpush1.bf16.msra.mxu0 %v35
  %45 = vmatprep.subr.bf16.mxu0 0
  %46 = vmatpush1.bf16.msra.mxu0 %v36
  %47 = vmatprep.subr.bf16.mxu0 0
  %48 = vmatpush1.bf16.msra.mxu0 0
  %49 = vmatprep.subr.bf16.mxu0 0
  %50 = vmatpush1.bf16.msra.mxu0 0
  %51 = vmatprep.subr.bf16.mxu0 0
  %52 = vmatpush1.bf16.msra.mxu0 0
  %53 = vmatprep.subr.bf16.mxu0 0
  %54 = vmatpush1.bf16.msra.mxu0 0
  %55 = vmatprep.subr.bf16.mxu0 0
  %56 = vmatpush1.bf16.msra.mxu0 0
  %57 = vmatprep.subr.bf16.mxu0 0
  %58 = vmatpush1.bf16.msra.mxu0 0
  %59 = vmatprep.subr.bf16.mxu0 0
  %60 = vmatpush1.bf16.msra.mxu0 0
  %61 = vmatprep.subr.bf16.mxu0 0
  %62 = vmatpush1.bf16.msra.mxu0 0
  %63 = vmatprep.subr.bf16.mxu0 0
  %64 = vmatpush1.bf16.msra.mxu0 0
  %65 = vmatprep.subr.bf16.mxu0 0
  %66 = vmatpush1.bf16.msra.mxu0 0
  %67 = vmatprep.subr.bf16.mxu0 0
  %68 = vmatpush1.bf16.msra.mxu0 0
  %69 = vmatprep.subr.bf16.mxu0 0
  %70 = vmatpush1.bf16.msra.mxu0 0
  %71 = vmatprep.subr.bf16.mxu0 0
  %72 = vmatpush1.bf16.msra.mxu0 0
  %73 = vmatprep.subr.bf16.mxu0 0
  %74 = vmatpush1.bf16.msra.mxu0 0
  %75 = vmatprep.mubr.bf16.mxu0 0
  %76 = vmatmul.mubr.bf16.gmra.mrb[0].mxu0 %v41
  %v77 = vpop.f32.mrb[0].mxu0
  %v78 = vadd.f32 %v25, %v77
  %v79 = vpop.f32.mrb[0].mxu0
  %v80 = vpop.f32.mrb[0].mxu0
  %v81 = vpop.f32.mrb[0].mxu0
  %82 = vdwg.mxu0
  %v83 = vmax.f32 %v78, 0.0
  %vm84 = vcmask 64512
  %85 = vst.msk [vmem:[%s3] sm:$0xff] %vm84, %v83
  // Predicated region
  $region14: #{_lambda_.76} parent=0 // pred_check
    _
  $region15: #{_lambda_.76} parent=0 // pred_check_branch
    %87 = sbr.rel (0) target = $region17
  $region16: #{_lambda_.76} parent=0 // pred_region
    _
  $region17: #{_lambda_.76} parent=0 // pred_fallthru
    _
  // Predicated region
  $region18: #{_lambda_.76} parent=0 // pred_check
    _
  $region19: #{_lambda_.76} parent=0 // pred_check_branch
    %89 = sbr.rel (0) target = $region21
  $region20: #{_lambda_.76} parent=0 // pred_region
    _
  $region21: #{_lambda_.76} parent=0 // pred_fallthru
    _

// kernel: _lambda_.77
$region0: #{_lambda_.77}
  #allocation0 [shape = 'u32[]', space=smem, size = 0x4, offset = 0x4, fixed_abs, tag = 'smem constant byte address 0x4 - core index']
  #allocation1 [shape = 'u32[144,128]{1,0:T(1,128)}', space=vmem, size = 0x12000, scoped, tag = 'internal scratch']
  #allocation2 [shape = 'f32[1,1]{1,0:T(1,128)S(1)}', space=vmem, size = 0x200, scoped, tag = 'scoped memory for _lambda_.77']
  %s0 = inlined_call_operand.vmem [shape: bf16[8,18], index: 0, kind: input, shape index: {}]
  %s1 = inlined_call_operand.vmem [shape: bf16[18,1], index: 1, kind: input, shape index: {}]
  %s2 = inlined_call_operand.<no memory space> [shape: f32[1,1], index: 2, kind: input, shape index: {}]
  %s3 = inlined_call_operand.vmem [shape: f32[8,1], index: 3, kind: output, shape index: {}]
  %s4 = sld [smem:[#allocation0]]
  $region22: #{_lambda_.77} parent=0
    _
  %s6 = ssub.s32 1, %s4
  %s7 = scalar_select 0, %s6, %s4
  %v8 = vstv %s2
  %9 = vst [vmem:[#allocation2] sm:$0x1] %v8
  // Predicated region
  $region2: #{_lambda_.77} parent=0 // pred_check
    _
  $region3: #{_lambda_.77} parent=0 // pred_check_branch
    %11 = sbr.rel (0) target = $region5
  $region4: #{_lambda_.77} parent=0 // pred_region
    _
  $region5: #{_lambda_.77} parent=0 // pred_fallthru
    _
  // Predicated region
  $region6: #{_lambda_.77} parent=0 // pred_check
    _
  $region7: #{_lambda_.77} parent=0 // pred_check_branch
    %13 = sbr.rel (0) target = $region9
  $region8: #{_lambda_.77} parent=0 // pred_region
    _
  $region9: #{_lambda_.77} parent=0 // pred_fallthru
    _
  // Predicated region
  $region10: #{_lambda_.77} parent=0 // pred_check
    _
  $region11: #{_lambda_.77} parent=0 // pred_check_branch
    %15 = sbr.rel (0) target = $region13
  $region12: #{_lambda_.77} parent=0 // pred_region
    _
  $region13: #{_lambda_.77} parent=0 // pred_fallthru
    _
  %v17 = vld [vmem:[%s0] sm:$0xf]
  %v18 = vld [vmem:[%s1] sm:$0xf]
  %v19 = vld [vmem:[%s1 + $0x4] sm:$0xf]
  %v20 = vld [vmem:[%s1 + $0x8] sm:$0x1]
  %v21 = vld [vmem:[#allocation2] sm:$0x1]
  %v23 = vlaneseq
  %v24 = vshrl.u32 %v23, 7
  %v25 = vsub.s32 0, %v24
  %v26 = vrot.slane %v21, %v25
  %v31 = vunpack.c.l.b16 %v18
  %v32 = vunpack.c.l.b16 %v19
  %v33 = vunpack.c.l.b16 %v20
  %v34 = vpack.c.b16 %v32, %v31
  %v35 = vpack.c.b16 %v33, %v33
  %vm37 = vcmask 146432
  %v39 = vsel %vm37, %v17, 0
  %vm41 = vcmask 1040384
  %v43 = vsel %vm41, %v35, 0
  %45 = vmatprep.subr.bf16.mxu0 0
  %46 = vmatpush1.bf16.msra.mxu0 %v34
  %47 = vmatprep.subr.bf16.mxu0 0
  %48 = vmatpush1.bf16.msra.mxu0 %v43
  %49 = vmatprep.subr.bf16.mxu0 0
  %50 = vmatpush1.bf16.msra.mxu0 0
  %51 = vmatprep.subr.bf16.mxu0 0
  %52 = vmatpush1.bf16.msra.mxu0 0
  %53 = vmatprep.subr.bf16.mxu0 0
  %54 = vmatpush1.bf16.msra.mxu0 0
  %55 = vmatprep.subr.bf16.mxu0 0
  %56 = vmatpush1.bf16.msra.mxu0 0
  %57 = vmatprep.subr.bf16.mxu0 0
  %58 = vmatpush1.bf16.msra.mxu0 0
  %59 = vmatprep.subr.bf16.mxu0 0
  %60 = vmatpush1.bf16.msra.mxu0 0
  %61 = vmatprep.subr.bf16.mxu0 0
  %62 = vmatpush1.bf16.msra.mxu0 0
  %63 = vmatprep.subr.bf16.mxu0 0
  %64 = vmatpush1.bf16.msra.mxu0 0
  %65 = vmatprep.subr.bf16.mxu0 0
  %66 = vmatpush1.bf16.msra.mxu0 0
  %67 = vmatprep.subr.bf16.mxu0 0
  %68 = vmatpush1.bf16.msra.mxu0 0
  %69 = vmatprep.subr.bf16.mxu0 0
  %70 = vmatpush1.bf16.msra.mxu0 0
  %71 = vmatprep.subr.bf16.mxu0 0
  %72 = vmatpush1.bf16.msra.mxu0 0
  %73 = vmatprep.subr.bf16.mxu0 0
  %74 = vmatpush1.bf16.msra.mxu0 0
  %75 = vmatprep.subr.bf16.mxu0 0
  %76 = vmatpush1.bf16.msra.mxu0 0
  %77 = vmatprep.mubr.bf16.mxu0 0
  %78 = vmatmul.mubr.bf16.gmra.mrb[0].mxu0 %v39
  %v79 = vpop.f32.mrb[0].mxu0
  %v80 = vadd.f32 %v26, %v79
  %v81 = vpop.f32.mrb[0].mxu0
  %v82 = vpop.f32.mrb[0].mxu0
  %v83 = vpop.f32.mrb[0].mxu0
  %84 = vdwg.mxu0
  %v85 = vsub.f32 0.0, %v80
  %v86 = vmul.f32 %v85, 1.442695
  %v87 = vpow.pop %v86
  %v88 = vadd.f32 %v87, 1.0
  %v89 = vrcp.pop %v88
  %vm90 = vcmask 7168
  %91 = vst.msk [vmem:[%s3] sm:$0xff] %vm90, %v89
  // Predicated region
  $region14: #{_lambda_.77} parent=0 // pred_check
    _
  $region15: #{_lambda_.77} parent=0 // pred_check_branch
    %93 = sbr.rel (0) target = $region17
  $region16: #{_lambda_.77} parent=0 // pred_region
    _
  $region17: #{_lambda_.77} parent=0 // pred_fallthru
    _
  // Predicated region
  $region18: #{_lambda_.77} parent=0 // pred_check
    _
  $region19: #{_lambda_.77} parent=0 // pred_check_branch
    %95 = sbr.rel (0) target = $region21
  $region20: #{_lambda_.77} parent=0 // pred_region
    _
  $region21: #{_lambda_.77} parent=0 // pred_fallthru
    _

// kernel: _lambda_.78
$region0: #{_lambda_.78}
  #allocation0 [shape = 'u32[]', space=smem, size = 0x4, offset = 0x4, fixed_abs, tag = 'smem constant byte address 0x4 - core index']
  #allocation1 [shape = 'u32[144,128]{1,0:T(1,128)}', space=vmem, size = 0x12000, scoped, tag = 'internal scratch']
  %s0 = inlined_call_operand.vmem [shape: bf16[16,288], index: 0, kind: input, shape index: {}]
  %s1 = inlined_call_operand.vmem [shape: bf16[288,32], index: 1, kind: input, shape index: {}]
  %s2 = inlined_call_operand.vmem [shape: f32[1,32], index: 2, kind: input, shape index: {}]
  %s3 = inlined_call_operand.vmem [shape: f32[16,32], index: 3, kind: output, shape index: {}]
  %s4 = sld [smem:[#allocation0]]
  $region22: #{_lambda_.78} parent=0
    _
  %s6 = ssub.s32 1, %s4
  %s7 = scalar_select 0, %s6, %s4
  // Predicated region
  $region2: #{_lambda_.78} parent=0 // pred_check
    _
  $region3: #{_lambda_.78} parent=0 // pred_check_branch
    %9 = sbr.rel (0) target = $region5
  $region4: #{_lambda_.78} parent=0 // pred_region
    _
  $region5: #{_lambda_.78} parent=0 // pred_fallthru
    _
  // Predicated region
  $region6: #{_lambda_.78} parent=0 // pred_check
    _
  $region7: #{_lambda_.78} parent=0 // pred_check_branch
    %11 = sbr.rel (0) target = $region9
  $region8: #{_lambda_.78} parent=0 // pred_region
    _
  $region9: #{_lambda_.78} parent=0 // pred_fallthru
    _
  // Predicated region
  $region10: #{_lambda_.78} parent=0 // pred_check
    _
  $region11: #{_lambda_.78} parent=0 // pred_check_branch
    %13 = sbr.rel (0) target = $region13
  $region12: #{_lambda_.78} parent=0 // pred_region
    _
  $region13: #{_lambda_.78} parent=0 // pred_fallthru
    _
  %v15 = vld [vmem:[%s0] sm:$0xff]
  %v16 = vld [vmem:[%s0 + $0x8] sm:$0xf]
  %v17 = vld [vmem:[%s0 + $0xc] sm:$0xff]
  %v18 = vld [vmem:[%s0 + $0x14] sm:$0xf]
  %v19 = vld [vmem:[%s1] sm:$0xf]
  %v20 = vld [vmem:[%s1 + $0x4] sm:$0xf]
  %v21 = vld [vmem:[%s1 + $0x8] sm:$0xf]
  %v22 = vld [vmem:[%s1 + $0xc] sm:$0xf]
  %v23 = vld [vmem:[%s1 + $0x10] sm:$0xf]
  %v24 = vld [vmem:[%s1 + $0x14] sm:$0xf]
  %v25 = vld [vmem:[%s1 + $0x18] sm:$0xf]
  %v26 = vld [vmem:[%s1 + $0x1c] sm:$0xf]
  %v27 = vld [vmem:[%s1 + $0x20] sm:$0xf]
  %v28 = vld [vmem:[%s1 + $0x24] sm:$0xf]
  %v29 = vld [vmem:[%s1 + $0x28] sm:$0xf]
  %v30 = vld [vmem:[%s1 + $0x2c] sm:$0xf]
  %v31 = vld [vmem:[%s1 + $0x30] sm:$0xf]
  %v32 = vld [vmem:[%s1 + $0x34] sm:$0xf]
  %v33 = vld [vmem:[%s1 + $0x38] sm:$0xf]
  %v34 = vld [vmem:[%s1 + $0x3c] sm:$0xf]
  %v35 = vld [vmem:[%s1 + $0x40] sm:$0xf]
  %v36 = vld [vmem:[%s1 + $0x44] sm:$0xf]
  %v37 = vld [vmem:[%s1 + $0x48] sm:$0xf]
  %v38 = vld [vmem:[%s1 + $0x4c] sm:$0xf]
  %v39 = vld [vmem:[%s1 + $0x50] sm:$0xf]
  %v40 = vld [vmem:[%s1 + $0x54] sm:$0xf]
  %v41 = vld [vmem:[%s1 + $0x58] sm:$0xf]
  %v42 = vld [vmem:[%s1 + $0x5c] sm:$0xf]
  %v43 = vld [vmem:[%s1 + $0x60] sm:$0xf]
  %v44 = vld [vmem:[%s1 + $0x64] sm:$0xf]
  %v45 = vld [vmem:[%s1 + $0x68] sm:$0xf]
  %v46 = vld [vmem:[%s1 + $0x6c] sm:$0xf]
  %v47 = vld [vmem:[%s1 + $0x70] sm:$0xf]
  %v48 = vld [vmem:[%s1 + $0x74] sm:$0xf]
  %v49 = vld [vmem:[%s1 + $0x78] sm:$0xf]
  %v50 = vld [vmem:[%s1 + $0x7c] sm:$0xf]
  %v51 = vld [vmem:[%s1 + $0x80] sm:$0xf]
  %v52 = vld [vmem:[%s1 + $0x84] sm:$0xf]
  %v53 = vld [vmem:[%s1 + $0x88] sm:$0xf]
  %v54 = vld [vmem:[%s1 + $0x8c] sm:$0xf]
  %v55 = vld [vmem:[%s2] sm:$0x1]
  %v57 = vlaneseq
  %v58 = vshrl.u32 %v57, 7
  %v59 = vsub.s32 0, %v58
  %v60 = vrot.slane %v55, %v59
  %v66 = vunpack.c.l.b16 %v15
  %v67 = vunpack.c.h.b16 %v15
  %v68 = vunpack.c.l.b16 %v16
  %v69 = vunpack.c.l.b16 %v17
  %v70 = vunpack.c.h.b16 %v17
  %v71 = vunpack.c.l.b16 %v18
  %v72 = vpack.c.b16 %v69, %v66
  %v73 = vpack.c.b16 %v70, %v67
  %v74 = vpack.c.b16 %v71, %v68
  %v113 = vunpack.c.l.b16 %v19
  %v114 = vunpack.c.l.b16 %v20
  %v115 = vunpack.c.l.b16 %v21
  %v116 = vunpack.c.l.b16 %v22
  %v117 = vunpack.c.l.b16 %v23
  %v118 = vunpack.c.l.b16 %v24
  %v119 = vunpack.c.l.b16 %v25
  %v120 = vunpack.c.l.b16 %v26
  %v121 = vunpack.c.l.b16 %v27
  %v122 = vunpack.c.l.b16 %v28
  %v123 = vunpack.c.l.b16 %v29
  %v124 = vunpack.c.l.b16 %v30
  %v125 = vunpack.c.l.b16 %v31
  %v126 = vunpack.c.l.b16 %v32
  %v127 = vunpack.c.l.b16 %v33
  %v128 = vunpack.c.l.b16 %v34
  %v129 = vunpack.c.l.b16 %v35
  %v130 = vunpack.c.l.b16 %v36
  %v131 = vunpack.c.l.b16 %v37
  %v132 = vunpack.c.l.b16 %v38
  %v133 = vunpack.c.l.b16 %v39
  %v134 = vunpack.c.l.b16 %v40
  %v135 = vunpack.c.l.b16 %v41
  %v136 = vunpack.c.l.b16 %v42
  %v137 = vunpack.c.l.b16 %v43
  %v138 = vunpack.c.l.b16 %v44
  %v139 = vunpack.c.l.b16 %v45
  %v140 = vunpack.c.l.b16 %v46
  %v141 = vunpack.c.l.b16 %v47
  %v142 = vunpack.c.l.b16 %v48
  %v143 = vunpack.c.l.b16 %v49
  %v144 = vunpack.c.l.b16 %v50
  %v145 = vunpack.c.l.b16 %v51
  %v146 = vunpack.c.l.b16 %v52
  %v147 = vunpack.c.l.b16 %v53
  %v148 = vunpack.c.l.b16 %v54
  %v149 = vpack.c.b16 %v114, %v113
  %v150 = vpack.c.b16 %v116, %v115
  %v151 = vpack.c.b16 %v118, %v117
  %v152 = vpack.c.b16 %v120, %v119
  %v153 = vpack.c.b16 %v122, %v121
  %v154 = vpack.c.b16 %v124, %v123
  %v155 = vpack.c.b16 %v126, %v125
  %v156 = vpack.c.b16 %v128, %v127
  %v157 = vpack.c.b16 %v130, %v129
  %v158 = vpack.c.b16 %v132, %v131
  %v159 = vpack.c.b16 %v134, %v133
  %v160 = vpack.c.b16 %v136, %v135
  %v161 = vpack.c.b16 %v138, %v137
  %v162 = vpack.c.b16 %v140, %v139
  %v163 = vpack.c.b16 %v142, %v141
  %v164 = vpack.c.b16 %v144, %v143
  %v165 = vpack.c.b16 %v146, %v145
  %v166 = vpack.c.b16 %v148, %v147
  %vm185 = vcmask 261120
  %v187 = vsel %vm185, %v74, 0
  %189 = vmatprep.subr.bf16.mxu0 0
  %190 = vmatpush1.bf16.msra.mxu0 %v149
  %191 = vmatprep.subr.bf16.mxu0 0
  %192 = vmatpush1.bf16.msra.mxu0 %v150
  %193 = vmatprep.subr.bf16.mxu0 0
  %194 = vmatpush1.bf16.msra.mxu0 %v151
  %195 = vmatprep.subr.bf16.mxu0 0
  %196 = vmatpush1.bf16.msra.mxu0 %v152
  %197 = vmatprep.subr.bf16.mxu0 0
  %198 = vmatpush1.bf16.msra.mxu0 %v153
  %199 = vmatprep.subr.bf16.mxu0 0
  %200 = vmatpush1.bf16.msra.mxu0 %v154
  %201 = vmatprep.subr.bf16.mxu0 0
  %202 = vmatpush1.bf16.msra.mxu0 %v155
  %203 = vmatprep.subr.bf16.mxu0 0
  %204 = vmatpush1.bf16.msra.mxu0 %v156
  %205 = vmatprep.subr.bf16.mxu0 0
  %206 = vmatpush1.bf16.msra.mxu0 %v157
  %207 = vmatprep.subr.bf16.mxu0 0
  %208 = vmatpush1.bf16.msra.mxu0 %v158
  %209 = vmatprep.subr.bf16.mxu0 0
  %210 = vmatpush1.bf16.msra.mxu0 %v159
  %211 = vmatprep.subr.bf16.mxu0 0
  %212 = vmatpush1.bf16.msra.mxu0 %v160
  %213 = vmatprep.subr.bf16.mxu0 0
  %214 = vmatpush1.bf16.msra.mxu0 %v161
  %215 = vmatprep.subr.bf16.mxu0 0
  %216 = vmatpush1.bf16.msra.mxu0 %v162
  %217 = vmatprep.subr.bf16.mxu0 0
  %218 = vmatpush1.bf16.msra.mxu0 %v163
  %219 = vmatprep.subr.bf16.mxu0 0
  %220 = vmatpush1.bf16.msra.mxu0 %v164
  %221 = vmatprep.mubr.bf16.mxu0 %v73
  %222 = vmatmul.mubr.bf16.gmra.mrb[0].mxu0 %v72
  %v223 = vpop.f32.mrb[0].mxu0
  %v224 = vadd.f32 %v60, %v223
  %v225 = vpop.f32.mrb[0].mxu0
  %v226 = vpop.f32.mrb[0].mxu0
  %v227 = vadd.f32 %v60, %v226
  %v228 = vpop.f32.mrb[0].mxu0
  %229 = vdwg.mxu0
  %230 = vmatprep.subr.bf16.mxu0 0
  %231 = vmatpush1.bf16.msra.mxu0 %v165
  %232 = vmatprep.subr.bf16.mxu0 0
  %233 = vmatpush1.bf16.msra.mxu0 %v166
  %234 = vmatprep.subr.bf16.mxu0 0
  %235 = vmatpush1.bf16.msra.mxu0 0
  %236 = vmatprep.subr.bf16.mxu0 0
  %237 = vmatpush1.bf16.msra.mxu0 0
  %238 = vmatprep.subr.bf16.mxu0 0
  %239 = vmatpush1.bf16.msra.mxu0 0
  %240 = vmatprep.subr.bf16.mxu0 0
  %241 = vmatpush1.bf16.msra.mxu0 0
  %242 = vmatprep.subr.bf16.mxu0 0
  %243 = vmatpush1.bf16.msra.mxu0 0
  %244 = vmatprep.subr.bf16.mxu0 0
  %245 = vmatpush1.bf16.msra.mxu0 0
  %246 = vmatprep.subr.bf16.mxu0 0
  %247 = vmatpush1.bf16.msra.mxu0 0
  %248 = vmatprep.subr.bf16.mxu0 0
  %249 = vmatpush1.bf16.msra.mxu0 0
  %250 = vmatprep.subr.bf16.mxu0 0
  %251 = vmatpush1.bf16.msra.mxu0 0
  %252 = vmatprep.subr.bf16.mxu0 0
  %253 = vmatpush1.bf16.msra.mxu0 0
  %254 = vmatprep.subr.bf16.mxu0 0
  %255 = vmatpush1.bf16.msra.mxu0 0
  %256 = vmatprep.subr.bf16.mxu0 0
  %257 = vmatpush1.bf16.msra.mxu0 0
  %258 = vmatprep.subr.bf16.mxu0 0
  %259 = vmatpush1.bf16.msra.mxu0 0
  %260 = vmatprep.subr.bf16.mxu0 0
  %261 = vmatpush1.bf16.msra.mxu0 0
  %262 = vmatprep.mubr.bf16.mxu0 0
  %263 = vmatmul.mubr.bf16.gmra.mrb[0].mxu0 %v187
  %v264 = vpop.f32.mrb[0].mxu0
  %v265 = vadd.f32 %v224, %v264
  %v266 = vpop.f32.mrb[0].mxu0
  %v267 = vpop.f32.mrb[0].mxu0
  %v268 = vadd.f32 %v227, %v267
  %v269 = vpop.f32.mrb[0].mxu0
  %270 = vdwg.mxu0
  %v271 = vmax.f32 %v265, 0.0
  %v272 = vmax.f32 %v268, 0.0
  %273 = vst.msk [vmem:[%s3] sm:$0xff] %vm185, %v271
  %274 = vst.msk [vmem:[%s3 + $0x8] sm:$0xff] %vm185, %v272
  // Predicated region
  $region14: #{_lambda_.78} parent=0 // pred_check
    _
  $region15: #{_lambda_.78} parent=0 // pred_check_branch
    %276 = sbr.rel (0) target = $region17
  $region16: #{_lambda_.78} parent=0 // pred_region
    _
  $region17: #{_lambda_.78} parent=0 // pred_fallthru
    _
  // Predicated region
  $region18: #{_lambda_.78} parent=0 // pred_check
    _
  $region19: #{_lambda_.78} parent=0 // pred_check_branch
    %278 = sbr.rel (0) target = $region21
  $region20: #{_lambda_.78} parent=0 // pred_region
    _
  $region21: #{_lambda_.78} parent=0 // pred_fallthru
    _

// kernel: _lambda_.86
$region0: #{_lambda_.86}
  #allocation0 [shape = 'u32[]', space=smem, size = 0x4, offset = 0x4, fixed_abs, tag = 'smem constant byte address 0x4 - core index']
  #allocation1 [shape = 'u32[144,128]{1,0:T(1,128)}', space=vmem, size = 0x12000, scoped, tag = 'internal scratch']
  %s0 = inlined_call_operand.vmem [shape: bf16[8,288], index: 0, kind: input, shape index: {}]
  %s1 = inlined_call_operand.vmem [shape: bf16[288,64], index: 1, kind: input, shape index: {}]
  %s2 = inlined_call_operand.vmem [shape: f32[1,64], index: 2, kind: input, shape index: {}]
  %s3 = inlined_call_operand.vmem [shape: f32[8,64], index: 3, kind: output, shape index: {}]
  %s4 = sld [smem:[#allocation0]]
  $region22: #{_lambda_.86} parent=0
    _
  %s6 = ssub.s32 1, %s4
  %s7 = scalar_select 0, %s6, %s4
  // Predicated region
  $region2: #{_lambda_.86} parent=0 // pred_check
    _
  $region3: #{_lambda_.86} parent=0 // pred_check_branch
    %9 = sbr.rel (0) target = $region5
  $region4: #{_lambda_.86} parent=0 // pred_region
    _
  $region5: #{_lambda_.86} parent=0 // pred_fallthru
    _
  // Predicated region
  $region6: #{_lambda_.86} parent=0 // pred_check
    _
  $region7: #{_lambda_.86} parent=0 // pred_check_branch
    %11 = sbr.rel (0) target = $region9
  $region8: #{_lambda_.86} parent=0 // pred_region
    _
  $region9: #{_lambda_.86} parent=0 // pred_fallthru
    _
  // Predicated region
  $region10: #{_lambda_.86} parent=0 // pred_check
    _
  $region11: #{_lambda_.86} parent=0 // pred_check_branch
    %13 = sbr.rel (0) target = $region13
  $region12: #{_lambda_.86} parent=0 // pred_region
    _
  $region13: #{_lambda_.86} parent=0 // pred_fallthru
    _
  %v15 = vld [vmem:[%s0] sm:$0xff]
  %v16 = vld [vmem:[%s0 + $0x8] sm:$0xf]
  %v17 = vld [vmem:[%s1] sm:$0xf]
  %v18 = vld [vmem:[%s1 + $0x4] sm:$0xf]
  %v19 = vld [vmem:[%s1 + $0x8] sm:$0xf]
  %v20 = vld [vmem:[%s1 + $0xc] sm:$0xf]
  %v21 = vld [vmem:[%s1 + $0x10] sm:$0xf]
  %v22 = vld [vmem:[%s1 + $0x14] sm:$0xf]
  %v23 = vld [vmem:[%s1 + $0x18] sm:$0xf]
  %v24 = vld [vmem:[%s1 + $0x1c] sm:$0xf]
  %v25 = vld [vmem:[%s1 + $0x20] sm:$0xf]
  %v26 = vld [vmem:[%s1 + $0x24] sm:$0xf]
  %v27 = vld [vmem:[%s1 + $0x28] sm:$0xf]
  %v28 = vld [vmem:[%s1 + $0x2c] sm:$0xf]
  %v29 = vld [vmem:[%s1 + $0x30] sm:$0xf]
  %v30 = vld [vmem:[%s1 + $0x34] sm:$0xf]
  %v31 = vld [vmem:[%s1 + $0x38] sm:$0xf]
  %v32 = vld [vmem:[%s1 + $0x3c] sm:$0xf]
  %v33 = vld [vmem:[%s1 + $0x40] sm:$0xf]
  %v34 = vld [vmem:[%s1 + $0x44] sm:$0xf]
  %v35 = vld [vmem:[%s1 + $0x48] sm:$0xf]
  %v36 = vld [vmem:[%s1 + $0x4c] sm:$0xf]
  %v37 = vld [vmem:[%s1 + $0x50] sm:$0xf]
  %v38 = vld [vmem:[%s1 + $0x54] sm:$0xf]
  %v39 = vld [vmem:[%s1 + $0x58] sm:$0xf]
  %v40 = vld [vmem:[%s1 + $0x5c] sm:$0xf]
  %v41 = vld [vmem:[%s1 + $0x60] sm:$0xf]
  %v42 = vld [vmem:[%s1 + $0x64] sm:$0xf]
  %v43 = vld [vmem:[%s1 + $0x68] sm:$0xf]
  %v44 = vld [vmem:[%s1 + $0x6c] sm:$0xf]
  %v45 = vld [vmem:[%s1 + $0x70] sm:$0xf]
  %v46 = vld [vmem:[%s1 + $0x74] sm:$0xf]
  %v47 = vld [vmem:[%s1 + $0x78] sm:$0xf]
  %v48 = vld [vmem:[%s1 + $0x7c] sm:$0xf]
  %v49 = vld [vmem:[%s1 + $0x80] sm:$0xf]
  %v50 = vld [vmem:[%s1 + $0x84] sm:$0xf]
  %v51 = vld [vmem:[%s1 + $0x88] sm:$0xf]
  %v52 = vld [vmem:[%s1 + $0x8c] sm:$0xf]
  %v53 = vld [vmem:[%s2] sm:$0x1]
  %v55 = vlaneseq
  %v56 = vshrl.u32 %v55, 7
  %v57 = vsub.s32 0, %v56
  %v58 = vrot.slane %v53, %v57
  %v62 = vunpack.c.l.b16 %v15
  %v63 = vunpack.c.h.b16 %v15
  %v64 = vunpack.c.l.b16 %v16
  %v65 = vpack.c.b16 %v62, %v62
  %v66 = vpack.c.b16 %v63, %v63
  %v67 = vpack.c.b16 %v64, %v64
  %v106 = vunpack.c.l.b16 %v17
  %v107 = vunpack.c.l.b16 %v18
  %v108 = vunpack.c.l.b16 %v19
  %v109 = vunpack.c.l.b16 %v20
  %v110 = vunpack.c.l.b16 %v21
  %v111 = vunpack.c.l.b16 %v22
  %v112 = vunpack.c.l.b16 %v23
  %v113 = vunpack.c.l.b16 %v24
  %v114 = vunpack.c.l.b16 %v25
  %v115 = vunpack.c.l.b16 %v26
  %v116 = vunpack.c.l.b16 %v27
  %v117 = vunpack.c.l.b16 %v28
  %v118 = vunpack.c.l.b16 %v29
  %v119 = vunpack.c.l.b16 %v30
  %v120 = vunpack.c.l.b16 %v31
  %v121 = vunpack.c.l.b16 %v32
  %v122 = vunpack.c.l.b16 %v33
  %v123 = vunpack.c.l.b16 %v34
  %v124 = vunpack.c.l.b16 %v35
  %v125 = vunpack.c.l.b16 %v36
  %v126 = vunpack.c.l.b16 %v37
  %v127 = vunpack.c.l.b16 %v38
  %v128 = vunpack.c.l.b16 %v39
  %v129 = vunpack.c.l.b16 %v40
  %v130 = vunpack.c.l.b16 %v41
  %v131 = vunpack.c.l.b16 %v42
  %v132 = vunpack.c.l.b16 %v43
  %v133 = vunpack.c.l.b16 %v44
  %v134 = vunpack.c.l.b16 %v45
  %v135 = vunpack.c.l.b16 %v46
  %v136 = vunpack.c.l.b16 %v47
  %v137 = vunpack.c.l.b16 %v48
  %v138 = vunpack.c.l.b16 %v49
  %v139 = vunpack.c.l.b16 %v50
  %v140 = vunpack.c.l.b16 %v51
  %v141 = vunpack.c.l.b16 %v52
  %v142 = vpack.c.b16 %v107, %v106
  %v143 = vpack.c.b16 %v109, %v108
  %v144 = vpack.c.b16 %v111, %v110
  %v145 = vpack.c.b16 %v113, %v112
  %v146 = vpack.c.b16 %v115, %v114
  %v147 = vpack.c.b16 %v117, %v116
  %v148 = vpack.c.b16 %v119, %v118
  %v149 = vpack.c.b16 %v121, %v120
  %v150 = vpack.c.b16 %v123, %v122
  %v151 = vpack.c.b16 %v125, %v124
  %v152 = vpack.c.b16 %v127, %v126
  %v153 = vpack.c.b16 %v129, %v128
  %v154 = vpack.c.b16 %v131, %v130
  %v155 = vpack.c.b16 %v133, %v132
  %v156 = vpack.c.b16 %v135, %v134
  %v157 = vpack.c.b16 %v137, %v136
  %v158 = vpack.c.b16 %v139, %v138
  %v159 = vpack.c.b16 %v141, %v140
  %vm178 = vcmask 261120
  %v180 = vsel %vm178, %v67, 0
  %182 = vmatprep.subr.bf16.mxu0 0
  %183 = vmatpush1.bf16.msra.mxu0 %v142
  %184 = vmatprep.subr.bf16.mxu0 0
  %185 = vmatpush1.bf16.msra.mxu0 %v143
  %186 = vmatprep.subr.bf16.mxu0 0
  %187 = vmatpush1.bf16.msra.mxu0 %v144
  %188 = vmatprep.subr.bf16.mxu0 0
  %189 = vmatpush1.bf16.msra.mxu0 %v145
  %190 = vmatprep.subr.bf16.mxu0 0
  %191 = vmatpush1.bf16.msra.mxu0 %v146
  %192 = vmatprep.subr.bf16.mxu0 0
  %193 = vmatpush1.bf16.msra.mxu0 %v147
  %194 = vmatprep.subr.bf16.mxu0 0
  %195 = vmatpush1.bf16.msra.mxu0 %v148
  %196 = vmatprep.subr.bf16.mxu0 0
  %197 = vmatpush1.bf16.msra.mxu0 %v149
  %198 = vmatprep.subr.bf16.mxu0 0
  %199 = vmatpush1.bf16.msra.mxu0 %v150
  %200 = vmatprep.subr.bf16.mxu0 0
  %201 = vmatpush1.bf16.msra.mxu0 %v151
  %202 = vmatprep.subr.bf16.mxu0 0
  %203 = vmatpush1.bf16.msra.mxu0 %v152
  %204 = vmatprep.subr.bf16.mxu0 0
  %205 = vmatpush1.bf16.msra.mxu0 %v153
  %206 = vmatprep.subr.bf16.mxu0 0
  %207 = vmatpush1.bf16.msra.mxu0 %v154
  %208 = vmatprep.subr.bf16.mxu0 0
  %209 = vmatpush1.bf16.msra.mxu0 %v155
  %210 = vmatprep.subr.bf16.mxu0 0
  %211 = vmatpush1.bf16.msra.mxu0 %v156
  %212 = vmatprep.subr.bf16.mxu0 0
  %213 = vmatpush1.bf16.msra.mxu0 %v157
  %214 = vmatprep.mubr.bf16.mxu0 %v66
  %215 = vmatmul.mubr.bf16.gmra.mrb[0].mxu0 %v65
  %v216 = vpop.f32.mrb[0].mxu0
  %v217 = vadd.f32 %v58, %v216
  %v218 = vpop.f32.mrb[0].mxu0
  %v219 = vpop.f32.mrb[0].mxu0
  %v220 = vpop.f32.mrb[0].mxu0
  %221 = vdwg.mxu0
  %222 = vmatprep.subr.bf16.mxu0 0
  %223 = vmatpush1.bf16.msra.mxu0 %v158
  %224 = vmatprep.subr.bf16.mxu0 0
  %225 = vmatpush1.bf16.msra.mxu0 %v159
  %226 = vmatprep.subr.bf16.mxu0 0
  %227 = vmatpush1.bf16.msra.mxu0 0
  %228 = vmatprep.subr.bf16.mxu0 0
  %229 = vmatpush1.bf16.msra.mxu0 0
  %230 = vmatprep.subr.bf16.mxu0 0
  %231 = vmatpush1.bf16.msra.mxu0 0
  %232 = vmatprep.subr.bf16.mxu0 0
  %233 = vmatpush1.bf16.msra.mxu0 0
  %234 = vmatprep.subr.bf16.mxu0 0
  %235 = vmatpush1.bf16.msra.mxu0 0
  %236 = vmatprep.subr.bf16.mxu0 0
  %237 = vmatpush1.bf16.msra.mxu0 0
  %238 = vmatprep.subr.bf16.mxu0 0
  %239 = vmatpush1.bf16.msra.mxu0 0
  %240 = vmatprep.subr.bf16.mxu0 0
  %241 = vmatpush1.bf16.msra.mxu0 0
  %242 = vmatprep.subr.bf16.mxu0 0
  %243 = vmatpush1.bf16.msra.mxu0 0
  %244 = vmatprep.subr.bf16.mxu0 0
  %245 = vmatpush1.bf16.msra.mxu0 0
  %246 = vmatprep.subr.bf16.mxu0 0
  %247 = vmatpush1.bf16.msra.mxu0 0
  %248 = vmatprep.subr.bf16.mxu0 0
  %249 = vmatpush1.bf16.msra.mxu0 0
  %250 = vmatprep.subr.bf16.mxu0 0
  %251 = vmatpush1.bf16.msra.mxu0 0
  %252 = vmatprep.subr.bf16.mxu0 0
  %253 = vmatpush1.bf16.msra.mxu0 0
  %254 = vmatprep.mubr.bf16.mxu0 0
  %255 = vmatmul.mubr.bf16.gmra.mrb[0].mxu0 %v180
  %v256 = vpop.f32.mrb[0].mxu0
  %v257 = vadd.f32 %v217, %v256
  %v258 = vpop.f32.mrb[0].mxu0
  %v259 = vpop.f32.mrb[0].mxu0
  %v260 = vpop.f32.mrb[0].mxu0
  %261 = vdwg.mxu0
  %vm262 = vcmask 523264
  %263 = vst.msk [vmem:[%s3] sm:$0xff] %vm262, %v257
  // Predicated region
  $region14: #{_lambda_.86} parent=0 // pred_check
    _
  $region15: #{_lambda_.86} parent=0 // pred_check_branch
    %265 = sbr.rel (0) target = $region17
  $region16: #{_lambda_.86} parent=0 // pred_region
    _
  $region17: #{_lambda_.86} parent=0 // pred_fallthru
    _
  // Predicated region
  $region18: #{_lambda_.86} parent=0 // pred_check
    _
  $region19: #{_lambda_.86} parent=0 // pred_check_branch
    %267 = sbr.rel (0) target = $region21
  $region20: #{_lambda_.86} parent=0 // pred_region
    _
  $region21: #{_lambda_.86} parent=0 // pred_fallthru
    _

// kernel: _lambda_.79
$region0: #{_lambda_.79}
  #allocation0 [shape = 'u32[]', space=smem, size = 0x4, offset = 0x4, fixed_abs, tag = 'smem constant byte address 0x4 - core index']
  #allocation1 [shape = 'u32[144,128]{1,0:T(1,128)}', space=vmem, size = 0x12000, scoped, tag = 'internal scratch']
  %s0 = inlined_call_operand.vmem [shape: bf16[8,576], index: 0, kind: input, shape index: {}]
  %s1 = inlined_call_operand.vmem [shape: bf16[576,32], index: 1, kind: input, shape index: {}]
  %s2 = inlined_call_operand.vmem [shape: f32[1,32], index: 2, kind: input, shape index: {}]
  %s3 = inlined_call_operand.vmem [shape: f32[8,32], index: 3, kind: output, shape index: {}]
  %s4 = sld [smem:[#allocation0]]
  $region22: #{_lambda_.79} parent=0
    _
  %s6 = ssub.s32 1, %s4
  %s7 = scalar_select 0, %s6, %s4
  // Predicated region
  $region2: #{_lambda_.79} parent=0 // pred_check
    _
  $region3: #{_lambda_.79} parent=0 // pred_check_branch
    %9 = sbr.rel (0) target = $region5
  $region4: #{_lambda_.79} parent=0 // pred_region
    _
  $region5: #{_lambda_.79} parent=0 // pred_fallthru
    _
  // Predicated region
  $region6: #{_lambda_.79} parent=0 // pred_check
    _
  $region7: #{_lambda_.79} parent=0 // pred_check_branch
    %11 = sbr.rel (0) target = $region9
  $region8: #{_lambda_.79} parent=0 // pred_region
    _
  $region9: #{_lambda_.79} parent=0 // pred_fallthru
    _
  // Predicated region
  $region10: #{_lambda_.79} parent=0 // pred_check
    _
  $region11: #{_lambda_.79} parent=0 // pred_check_branch
    %13 = sbr.rel (0) target = $region13
  $region12: #{_lambda_.79} parent=0 // pred_region
    _
  $region13: #{_lambda_.79} parent=0 // pred_fallthru
    _
  %v15 = vld [vmem:[%s0] sm:$0xff]
  %v16 = vld [vmem:[%s0 + $0x8] sm:$0xff]
  %v17 = vld [vmem:[%s0 + $0x10] sm:$0xf]
  %v18 = vld [vmem:[%s1] sm:$0xf]
  %v19 = vld [vmem:[%s1 + $0x4] sm:$0xf]
  %v20 = vld [vmem:[%s1 + $0x8] sm:$0xf]
  %v21 = vld [vmem:[%s1 + $0xc] sm:$0xf]
  %v22 = vld [vmem:[%s1 + $0x10] sm:$0xf]
  %v23 = vld [vmem:[%s1 + $0x14] sm:$0xf]
  %v24 = vld [vmem:[%s1 + $0x18] sm:$0xf]
  %v25 = vld [vmem:[%s1 + $0x1c] sm:$0xf]
  %v26 = vld [vmem:[%s1 + $0x20] sm:$0xf]
  %v27 = vld [vmem:[%s1 + $0x24] sm:$0xf]
  %v28 = vld [vmem:[%s1 + $0x28] sm:$0xf]
  %v29 = vld [vmem:[%s1 + $0x2c] sm:$0xf]
  %v30 = vld [vmem:[%s1 + $0x30] sm:$0xf]
  %v31 = vld [vmem:[%s1 + $0x34] sm:$0xf]
  %v32 = vld [vmem:[%s1 + $0x38] sm:$0xf]
  %v33 = vld [vmem:[%s1 + $0x3c] sm:$0xf]
  %v34 = vld [vmem:[%s1 + $0x40] sm:$0xf]
  %v35 = vld [vmem:[%s1 + $0x44] sm:$0xf]
  %v36 = vld [vmem:[%s1 + $0x48] sm:$0xf]
  %v37 = vld [vmem:[%s1 + $0x4c] sm:$0xf]
  %v38 = vld [vmem:[%s1 + $0x50] sm:$0xf]
  %v39 = vld [vmem:[%s1 + $0x54] sm:$0xf]
  %v40 = vld [vmem:[%s1 + $0x58] sm:$0xf]
  %v41 = vld [vmem:[%s1 + $0x5c] sm:$0xf]
  %v42 = vld [vmem:[%s1 + $0x60] sm:$0xf]
  %v43 = vld [vmem:[%s1 + $0x64] sm:$0xf]
  %v44 = vld [vmem:[%s1 + $0x68] sm:$0xf]
  %v45 = vld [vmem:[%s1 + $0x6c] sm:$0xf]
  %v46 = vld [vmem:[%s1 + $0x70] sm:$0xf]
  %v47 = vld [vmem:[%s1 + $0x74] sm:$0xf]
  %v48 = vld [vmem:[%s1 + $0x78] sm:$0xf]
  %v49 = vld [vmem:[%s1 + $0x7c] sm:$0xf]
  %v50 = vld [vmem:[%s1 + $0x80] sm:$0xf]
  %v51 = vld [vmem:[%s1 + $0x84] sm:$0xf]
  %v52 = vld [vmem:[%s1 + $0x88] sm:$0xf]
  %v53 = vld [vmem:[%s1 + $0x8c] sm:$0xf]
  %v54 = vld [vmem:[%s1 + $0x90] sm:$0xf]
  %v55 = vld [vmem:[%s1 + $0x94] sm:$0xf]
  %v56 = vld [vmem:[%s1 + $0x98] sm:$0xf]
  %v57 = vld [vmem:[%s1 + $0x9c] sm:$0xf]
  %v58 = vld [vmem:[%s1 + $0xa0] sm:$0xf]
  %v59 = vld [vmem:[%s1 + $0xa4] sm:$0xf]
  %v60 = vld [vmem:[%s1 + $0xa8] sm:$0xf]
  %v61 = vld [vmem:[%s1 + $0xac] sm:$0xf]
  %v62 = vld [vmem:[%s1 + $0xb0] sm:$0xf]
  %v63 = vld [vmem:[%s1 + $0xb4] sm:$0xf]
  %v64 = vld [vmem:[%s1 + $0xb8] sm:$0xf]
  %v65 = vld [vmem:[%s1 + $0xbc] sm:$0xf]
  %v66 = vld [vmem:[%s1 + $0xc0] sm:$0xf]
  %v67 = vld [vmem:[%s1 + $0xc4] sm:$0xf]
  %v68 = vld [vmem:[%s1 + $0xc8] sm:$0xf]
  %v69 = vld [vmem:[%s1 + $0xcc] sm:$0xf]
  %v70 = vld [vmem:[%s1 + $0xd0] sm:$0xf]
  %v71 = vld [vmem:[%s1 + $0xd4] sm:$0xf]
  %v72 = vld [vmem:[%s1 + $0xd8] sm:$0xf]
  %v73 = vld [vmem:[%s1 + $0xdc] sm:$0xf]
  %v74 = vld [vmem:[%s1 + $0xe0] sm:$0xf]
  %v75 = vld [vmem:[%s1 + $0xe4] sm:$0xf]
  %v76 = vld [vmem:[%s1 + $0xe8] sm:$0xf]
  %v77 = vld [vmem:[%s1 + $0xec] sm:$0xf]
  %v78 = vld [vmem:[%s1 + $0xf0] sm:$0xf]
  %v79 = vld [vmem:[%s1 + $0xf4] sm:$0xf]
  %v80 = vld [vmem:[%s1 + $0xf8] sm:$0xf]
  %v81 = vld [vmem:[%s1 + $0xfc] sm:$0xf]
  %v82 = vld [vmem:[%s1 + $0x100] sm:$0xf]
  %v83 = vld [vmem:[%s1 + $0x104] sm:$0xf]
  %v84 = vld [vmem:[%s1 + $0x108] sm:$0xf]
  %v85 = vld [vmem:[%s1 + $0x10c] sm:$0xf]
  %v86 = vld [vmem:[%s1 + $0x110] sm:$0xf]
  %v87 = vld [vmem:[%s1 + $0x114] sm:$0xf]
  %v88 = vld [vmem:[%s1 + $0x118] sm:$0xf]
  %v89 = vld [vmem:[%s1 + $0x11c] sm:$0xf]
  %v90 = vld [vmem:[%s2] sm:$0x1]
  %v92 = vlaneseq
  %v93 = vshrl.u32 %v92, 7
  %v94 = vsub.s32 0, %v93
  %v95 = vrot.slane %v90, %v94
  %v100 = vunpack.c.l.b16 %v15
  %v101 = vunpack.c.h.b16 %v15
  %v102 = vunpack.c.l.b16 %v16
  %v103 = vunpack.c.h.b16 %v16
  %v104 = vunpack.c.l.b16 %v17
  %v105 = vpack.c.b16 %v100, %v100
  %v106 = vpack.c.b16 %v101, %v101
  %v107 = vpack.c.b16 %v102, %v102
  %v108 = vpack.c.b16 %v103, %v103
  %v109 = vpack.c.b16 %v104, %v104
  %v186 = vunpack.c.l.b16 %v18
  %v187 = vunpack.c.l.b16 %v19
  %v188 = vunpack.c.l.b16 %v20
  %v189 = vunpack.c.l.b16 %v21
  %v190 = vunpack.c.l.b16 %v22
  %v191 = vunpack.c.l.b16 %v23
  %v192 = vunpack.c.l.b16 %v24
  %v193 = vunpack.c.l.b16 %v25
  %v194 = vunpack.c.l.b16 %v26
  %v195 = vunpack.c.l.b16 %v27
  %v196 = vunpack.c.l.b16 %v28
  %v197 = vunpack.c.l.b16 %v29
  %v198 = vunpack.c.l.b16 %v30
  %v199 = vunpack.c.l.b16 %v31
  %v200 = vunpack.c.l.b16 %v32
  %v201 = vunpack.c.l.b16 %v33
  %v202 = vunpack.c.l.b16 %v34
  %v203 = vunpack.c.l.b16 %v35
  %v204 = vunpack.c.l.b16 %v36
  %v205 = vunpack.c.l.b16 %v37
  %v206 = vunpack.c.l.b16 %v38
  %v207 = vunpack.c.l.b16 %v39
  %v208 = vunpack.c.l.b16 %v40
  %v209 = vunpack.c.l.b16 %v41
  %v210 = vunpack.c.l.b16 %v42
  %v211 = vunpack.c.l.b16 %v43
  %v212 = vunpack.c.l.b16 %v44
  %v213 = vunpack.c.l.b16 %v45
  %v214 = vunpack.c.l.b16 %v46
  %v215 = vunpack.c.l.b16 %v47
  %v216 = vunpack.c.l.b16 %v48
  %v217 = vunpack.c.l.b16 %v49
  %v218 = vunpack.c.l.b16 %v50
  %v219 = vunpack.c.l.b16 %v51
  %v220 = vunpack.c.l.b16 %v52
  %v221 = vunpack.c.l.b16 %v53
  %v222 = vunpack.c.l.b16 %v54
  %v223 = vunpack.c.l.b16 %v55
  %v224 = vunpack.c.l.b16 %v56
  %v225 = vunpack.c.l.b16 %v57
  %v226 = vunpack.c.l.b16 %v58
  %v227 = vunpack.c.l.b16 %v59
  %v228 = vunpack.c.l.b16 %v60
  %v229 = vunpack.c.l.b16 %v61
  %v230 = vunpack.c.l.b16 %v62
  %v231 = vunpack.c.l.b16 %v63
  %v232 = vunpack.c.l.b16 %v64
  %v233 = vunpack.c.l.b16 %v65
  %v234 = vunpack.c.l.b16 %v66
  %v235 = vunpack.c.l.b16 %v67
  %v236 = vunpack.c.l.b16 %v68
  %v237 = vunpack.c.l.b16 %v69
  %v238 = vunpack.c.l.b16 %v70
  %v239 = vunpack.c.l.b16 %v71
  %v240 = vunpack.c.l.b16 %v72
  %v241 = vunpack.c.l.b16 %v73
  %v242 = vunpack.c.l.b16 %v74
  %v243 = vunpack.c.l.b16 %v75
  %v244 = vunpack.c.l.b16 %v76
  %v245 = vunpack.c.l.b16 %v77
  %v246 = vunpack.c.l.b16 %v78
  %v247 = vunpack.c.l.b16 %v79
  %v248 = vunpack.c.l.b16 %v80
  %v249 = vunpack.c.l.b16 %v81
  %v250 = vunpack.c.l.b16 %v82
  %v251 = vunpack.c.l.b16 %v83
  %v252 = vunpack.c.l.b16 %v84
  %v253 = vunpack.c.l.b16 %v85
  %v254 = vunpack.c.l.b16 %v86
  %v255 = vunpack.c.l.b16 %v87
  %v256 = vunpack.c.l.b16 %v88
  %v257 = vunpack.c.l.b16 %v89
  %v258 = vpack.c.b16 %v187, %v186
  %v259 = vpack.c.b16 %v189, %v188
  %v260 = vpack.c.b16 %v191, %v190
  %v261 = vpack.c.b16 %v193, %v192
  %v262 = vpack.c.b16 %v195, %v194
  %v263 = vpack.c.b16 %v197, %v196
  %v264 = vpack.c.b16 %v199, %v198
  %v265 = vpack.c.b16 %v201, %v200
  %v266 = vpack.c.b16 %v203, %v202
  %v267 = vpack.c.b16 %v205, %v204
  %v268 = vpack.c.b16 %v207, %v206
  %v269 = vpack.c.b16 %v209, %v208
  %v270 = vpack.c.b16 %v211, %v210
  %v271 = vpack.c.b16 %v213, %v212
  %v272 = vpack.c.b16 %v215, %v214
  %v273 = vpack.c.b16 %v217, %v216
  %v274 = vpack.c.b16 %v219, %v218
  %v275 = vpack.c.b16 %v221, %v220
  %v276 = vpack.c.b16 %v223, %v222
  %v277 = vpack.c.b16 %v225, %v224
  %v278 = vpack.c.b16 %v227, %v226
  %v279 = vpack.c.b16 %v229, %v228
  %v280 = vpack.c.b16 %v231, %v230
  %v281 = vpack.c.b16 %v233, %v232
  %v282 = vpack.c.b16 %v235, %v234
  %v283 = vpack.c.b16 %v237, %v236
  %v284 = vpack.c.b16 %v239, %v238
  %v285 = vpack.c.b16 %v241, %v240
  %v286 = vpack.c.b16 %v243, %v242
  %v287 = vpack.c.b16 %v245, %v244
  %v288 = vpack.c.b16 %v247, %v246
  %v289 = vpack.c.b16 %v249, %v248
  %v290 = vpack.c.b16 %v251, %v250
  %v291 = vpack.c.b16 %v253, %v252
  %v292 = vpack.c.b16 %v255, %v254
  %v293 = vpack.c.b16 %v257, %v256
  %vm330 = vcmask 523264
  %v332 = vsel %vm330, %v109, 0
  %334 = vmatprep.subr.bf16.mxu0 0
  %335 = vmatpush1.bf16.msra.mxu0 %v258
  %336 = vmatprep.subr.bf16.mxu0 0
  %337 = vmatpush1.bf16.msra.mxu0 %v259
  %338 = vmatprep.subr.bf16.mxu0 0
  %339 = vmatpush1.bf16.msra.mxu0 %v260
  %340 = vmatprep.subr.bf16.mxu0 0
  %341 = vmatpush1.bf16.msra.mxu0 %v261
  %342 = vmatprep.subr.bf16.mxu0 0
  %343 = vmatpush1.bf16.msra.mxu0 %v262
  %344 = vmatprep.subr.bf16.mxu0 0
  %345 = vmatpush1.bf16.msra.mxu0 %v263
  %346 = vmatprep.subr.bf16.mxu0 0
  %347 = vmatpush1.bf16.msra.mxu0 %v264
  %348 = vmatprep.subr.bf16.mxu0 0
  %349 = vmatpush1.bf16.msra.mxu0 %v265
  %350 = vmatprep.subr.bf16.mxu0 0
  %351 = vmatpush1.bf16.msra.mxu0 %v266
  %352 = vmatprep.subr.bf16.mxu0 0
  %353 = vmatpush1.bf16.msra.mxu0 %v267
  %354 = vmatprep.subr.bf16.mxu0 0
  %355 = vmatpush1.bf16.msra.mxu0 %v268
  %356 = vmatprep.subr.bf16.mxu0 0
  %357 = vmatpush1.bf16.msra.mxu0 %v269
  %358 = vmatprep.subr.bf16.mxu0 0
  %359 = vmatpush1.bf16.msra.mxu0 %v270
  %360 = vmatprep.subr.bf16.mxu0 0
  %361 = vmatpush1.bf16.msra.mxu0 %v271
  %362 = vmatprep.subr.bf16.mxu0 0
  %363 = vmatpush1.bf16.msra.mxu0 %v272
  %364 = vmatprep.subr.bf16.mxu0 0
  %365 = vmatpush1.bf16.msra.mxu0 %v273
  %366 = vmatprep.mubr.bf16.mxu0 %v106
  %367 = vmatmul.mubr.bf16.gmra.mrb[0].mxu0 %v105
  %v368 = vpop.f32.mrb[0].mxu0
  %v369 = vadd.f32 %v95, %v368
  %v370 = vpop.f32.mrb[0].mxu0
  %v371 = vpop.f32.mrb[0].mxu0
  %v372 = vpop.f32.mrb[0].mxu0
  %373 = vdwg.mxu0
  %374 = vmatprep.subr.bf16.mxu0 0
  %375 = vmatpush1.bf16.msra.mxu0 %v274
  %376 = vmatprep.subr.bf16.mxu0 0
  %377 = vmatpush1.bf16.msra.mxu0 %v275
  %378 = vmatprep.subr.bf16.mxu0 0
  %379 = vmatpush1.bf16.msra.mxu0 %v276
  %380 = vmatprep.subr.bf16.mxu0 0
  %381 = vmatpush1.bf16.msra.mxu0 %v277
  %382 = vmatprep.subr.bf16.mxu0 0
  %383 = vmatpush1.bf16.msra.mxu0 %v278
  %384 = vmatprep.subr.bf16.mxu0 0
  %385 = vmatpush1.bf16.msra.mxu0 %v279
  %386 = vmatprep.subr.bf16.mxu0 0
  %387 = vmatpush1.bf16.msra.mxu0 %v280
  %388 = vmatprep.subr.bf16.mxu0 0
  %389 = vmatpush1.bf16.msra.mxu0 %v281
  %390 = vmatprep.subr.bf16.mxu0 0
  %391 = vmatpush1.bf16.msra.mxu0 %v282
  %392 = vmatprep.subr.bf16.mxu0 0
  %393 = vmatpush1.bf16.msra.mxu0 %v283
  %394 = vmatprep.subr.bf16.mxu0 0
  %395 = vmatpush1.bf16.msra.mxu0 %v284
  %396 = vmatprep.subr.bf16.mxu0 0
  %397 = vmatpush1.bf16.msra.mxu0 %v285
  %398 = vmatprep.subr.bf16.mxu0 0
  %399 = vmatpush1.bf16.msra.mxu0 %v286
  %400 = vmatprep.subr.bf16.mxu0 0
  %401 = vmatpush1.bf16.msra.mxu0 %v287
  %402 = vmatprep.subr.bf16.mxu0 0
  %403 = vmatpush1.bf16.msra.mxu0 %v288
  %404 = vmatprep.subr.bf16.mxu0 0
  %405 = vmatpush1.bf16.msra.mxu0 %v289
  %406 = vmatprep.mubr.bf16.mxu0 %v108
  %407 = vmatmul.mubr.bf16.gmra.mrb[0].mxu0 %v107
  %v408 = vpop.f32.mrb[0].mxu0
  %v409 = vadd.f32 %v369, %v408
  %v410 = vpop.f32.mrb[0].mxu0
  %v411 = vpop.f32.mrb[0].mxu0
  %v412 = vpop.f32.mrb[0].mxu0
  %413 = vdwg.mxu0
  %414 = vmatprep.subr.bf16.mxu0 0
  %415 = vmatpush1.bf16.msra.mxu0 %v290
  %416 = vmatprep.subr.bf16.mxu0 0
  %417 = vmatpush1.bf16.msra.mxu0 %v291
  %418 = vmatprep.subr.bf16.mxu0 0
  %419 = vmatpush1.bf16.msra.mxu0 %v292
  %420 = vmatprep.subr.bf16.mxu0 0
  %421 = vmatpush1.bf16.msra.mxu0 %v293
  %422 = vmatprep.subr.bf16.mxu0 0
  %423 = vmatpush1.bf16.msra.mxu0 0
  %424 = vmatprep.subr.bf16.mxu0 0
  %425 = vmatpush1.bf16.msra.mxu0 0
  %426 = vmatprep.subr.bf16.mxu0 0
  %427 = vmatpush1.bf16.msra.mxu0 0
  %428 = vmatprep.subr.bf16.mxu0 0
  %429 = vmatpush1.bf16.msra.mxu0 0
  %430 = vmatprep.subr.bf16.mxu0 0
  %431 = vmatpush1.bf16.msra.mxu0 0
  %432 = vmatprep.subr.bf16.mxu0 0
  %433 = vmatpush1.bf16.msra.mxu0 0
  %434 = vmatprep.subr.bf16.mxu0 0
  %435 = vmatpush1.bf16.msra.mxu0 0
  %436 = vmatprep.subr.bf16.mxu0 0
  %437 = vmatpush1.bf16.msra.mxu0 0
  %438 = vmatprep.subr.bf16.mxu0 0
  %439 = vmatpush1.bf16.msra.mxu0 0
  %440 = vmatprep.subr.bf16.mxu0 0
  %441 = vmatpush1.bf16.msra.mxu0 0
  %442 = vmatprep.subr.bf16.mxu0 0
  %443 = vmatpush1.bf16.msra.mxu0 0
  %444 = vmatprep.subr.bf16.mxu0 0
  %445 = vmatpush1.bf16.msra.mxu0 0
  %446 = vmatprep.mubr.bf16.mxu0 0
  %447 = vmatmul.mubr.bf16.gmra.mrb[0].mxu0 %v332
  %v448 = vpop.f32.mrb[0].mxu0
  %v449 = vadd.f32 %v409, %v448
  %v450 = vpop.f32.mrb[0].mxu0
  %v451 = vpop.f32.mrb[0].mxu0
  %v452 = vpop.f32.mrb[0].mxu0
  %453 = vdwg.mxu0
  %vm454 = vcmask 261120
  %455 = vst.msk [vmem:[%s3] sm:$0xff] %vm454, %v449
  // Predicated region
  $region14: #{_lambda_.79} parent=0 // pred_check
    _
  $region15: #{_lambda_.79} parent=0 // pred_check_branch
    %457 = sbr.rel (0) target = $region17
  $region16: #{_lambda_.79} parent=0 // pred_region
    _
  $region17: #{_lambda_.79} parent=0 // pred_fallthru
    _
  // Predicated region
  $region18: #{_lambda_.79} parent=0 // pred_check
    _
  $region19: #{_lambda_.79} parent=0 // pred_check_branch
    %459 = sbr.rel (0) target = $region21
  $region20: #{_lambda_.79} parent=0 // pred_region
    _
  $region21: #{_lambda_.79} parent=0 // pred_fallthru
    _

// kernel: _lambda_.87
$region0: #{_lambda_.87}
  #allocation0 [shape = 'u32[]', space=smem, size = 0x4, offset = 0x4, fixed_abs, tag = 'smem constant byte address 0x4 - core index']
  #allocation1 [shape = 'u32[144,128]{1,0:T(1,128)}', space=vmem, size = 0x12000, scoped, tag = 'internal scratch']
  %s0 = inlined_call_operand.vmem [shape: bf16[32,16], index: 0, kind: input, shape index: {}]
  %s1 = inlined_call_operand.vmem [shape: bf16[16,16], index: 1, kind: input, shape index: {}]
  %s2 = inlined_call_operand.vmem [shape: f32[1,16], index: 2, kind: input, shape index: {}]
  %s3 = inlined_call_operand.vmem [shape: f32[32,16], index: 3, kind: output, shape index: {}]
  %s4 = sld [smem:[#allocation0]]
  $region22: #{_lambda_.87} parent=0
    _
  %s6 = ssub.s32 1, %s4
  %s7 = scalar_select 0, %s6, %s4
  // Predicated region
  $region2: #{_lambda_.87} parent=0 // pred_check
    _
  $region3: #{_lambda_.87} parent=0 // pred_check_branch
    %9 = sbr.rel (0) target = $region5
  $region4: #{_lambda_.87} parent=0 // pred_region
    _
  $region5: #{_lambda_.87} parent=0 // pred_fallthru
    _
  // Predicated region
  $region6: #{_lambda_.87} parent=0 // pred_check
    _
  $region7: #{_lambda_.87} parent=0 // pred_check_branch
    %11 = sbr.rel (0) target = $region9
  $region8: #{_lambda_.87} parent=0 // pred_region
    _
  $region9: #{_lambda_.87} parent=0 // pred_fallthru
    _
  // Predicated region
  $region10: #{_lambda_.87} parent=0 // pred_check
    _
  $region11: #{_lambda_.87} parent=0 // pred_check_branch
    %13 = sbr.rel (0) target = $region13
  $region12: #{_lambda_.87} parent=0 // pred_region
    _
  $region13: #{_lambda_.87} parent=0 // pred_fallthru
    _
  %v15 = vld [vmem:[%s0] sm:$0xf]
  %v16 = vld [vmem:[%s0 + $0x4] sm:$0xf]
  %v17 = vld [vmem:[%s0 + $0x8] sm:$0xf]
  %v18 = vld [vmem:[%s0 + $0xc] sm:$0xf]
  %v19 = vld [vmem:[%s1] sm:$0xf]
  %v20 = vld [vmem:[%s1 + $0x4] sm:$0xf]
  %v21 = vld [vmem:[%s2] sm:$0x1]
  %v23 = vlaneseq
  %v24 = vshrl.u32 %v23, 7
  %v25 = vsub.s32 0, %v24
  %v26 = vrot.slane %v21, %v25
  %v32 = vunpack.c.l.b16 %v15
  %v33 = vunpack.c.l.b16 %v16
  %v34 = vunpack.c.l.b16 %v17
  %v35 = vunpack.c.l.b16 %v18
  %v36 = vpack.c.b16 %v33, %v32
  %v37 = vpack.c.b16 %v35, %v34
  %v40 = vunpack.c.l.b16 %v19
  %v41 = vunpack.c.l.b16 %v20
  %v42 = vpack.c.b16 %v41, %v40
  %vm44 = vcmask 130048
  %v46 = vsel %vm44, %v36, 0
  %v49 = vsel %vm44, %v37, 0
  %51 = vmatprep.subr.bf16.mxu0 0
  %52 = vmatpush1.bf16.msra.mxu0 %v42
  %53 = vmatprep.subr.bf16.mxu0 0
  %54 = vmatpush1.bf16.msra.mxu0 0
  %55 = vmatprep.subr.bf16.mxu0 0
  %56 = vmatpush1.bf16.msra.mxu0 0
  %57 = vmatprep.subr.bf16.mxu0 0
  %58 = vmatpush1.bf16.msra.mxu0 0
  %59 = vmatprep.subr.bf16.mxu0 0
  %60 = vmatpush1.bf16.msra.mxu0 0
  %61 = vmatprep.subr.bf16.mxu0 0
  %62 = vmatpush1.bf16.msra.mxu0 0
  %63 = vmatprep.subr.bf16.mxu0 0
  %64 = vmatpush1.bf16.msra.mxu0 0
  %65 = vmatprep.subr.bf16.mxu0 0
  %66 = vmatpush1.bf16.msra.mxu0 0
  %67 = vmatprep.subr.bf16.mxu0 0
  %68 = vmatpush1.bf16.msra.mxu0 0
  %69 = vmatprep.subr.bf16.mxu0 0
  %70 = vmatpush1.bf16.msra.mxu0 0
  %71 = vmatprep.subr.bf16.mxu0 0
  %72 = vmatpush1.bf16.msra.mxu0 0
  %73 = vmatprep.subr.bf16.mxu0 0
  %74 = vmatpush1.bf16.msra.mxu0 0
  %75 = vmatprep.subr.bf16.mxu0 0
  %76 = vmatpush1.bf16.msra.mxu0 0
  %77 = vmatprep.subr.bf16.mxu0 0
  %78 = vmatpush1.bf16.msra.mxu0 0
  %79 = vmatprep.subr.bf16.mxu0 0
  %80 = vmatpush1.bf16.msra.mxu0 0
  %81 = vmatprep.subr.bf16.mxu0 0
  %82 = vmatpush1.bf16.msra.mxu0 0
  %83 = vmatprep.mubr.bf16.mxu0 0
  %84 = vmatmul.mubr.bf16.gmra.mrb[0].mxu0 %v46
  %v85 = vpop.f32.mrb[0].mxu0
  %v86 = vadd.f32 %v26, %v85
  %v87 = vpop.f32.mrb[0].mxu0
  %v88 = vpop.f32.mrb[0].mxu0
  %v89 = vadd.f32 %v26, %v88
  %v90 = vpop.f32.mrb[0].mxu0
  %91 = vmatprep.mubr.bf16.mxu0 0
  %92 = vmatmul.mubr.bf16.gmra.mrb[0].mxu0 %v49
  %v93 = vpop.f32.mrb[0].mxu0
  %v94 = vadd.f32 %v26, %v93
  %v95 = vpop.f32.mrb[0].mxu0
  %v96 = vpop.f32.mrb[0].mxu0
  %v97 = vadd.f32 %v26, %v96
  %v98 = vpop.f32.mrb[0].mxu0
  %99 = vdwg.mxu0
  %v100 = vmax.f32 %v86, 0.0
  %v101 = vmax.f32 %v89, 0.0
  %v102 = vmax.f32 %v94, 0.0
  %v103 = vmax.f32 %v97, 0.0
  %104 = vst.msk [vmem:[%s3] sm:$0xff] %vm44, %v100
  %105 = vst.msk [vmem:[%s3 + $0x8] sm:$0xff] %vm44, %v101
  %106 = vst.msk [vmem:[%s3 + $0x10] sm:$0xff] %vm44, %v102
  %107 = vst.msk [vmem:[%s3 + $0x18] sm:$0xff] %vm44, %v103
  // Predicated region
  $region14: #{_lambda_.87} parent=0 // pred_check
    _
  $region15: #{_lambda_.87} parent=0 // pred_check_branch
    %109 = sbr.rel (0) target = $region17
  $region16: #{_lambda_.87} parent=0 // pred_region
    _
  $region17: #{_lambda_.87} parent=0 // pred_fallthru
    _
  // Predicated region
  $region18: #{_lambda_.87} parent=0 // pred_check
    _
  $region19: #{_lambda_.87} parent=0 // pred_check_branch
    %111 = sbr.rel (0) target = $region21
  $region20: #{_lambda_.87} parent=0 // pred_region
    _
  $region21: #{_lambda_.87} parent=0 // pred_fallthru
    _

// kernel: _lambda_.88
$region0: #{_lambda_.88}
  #allocation0 [shape = 'u32[]', space=smem, size = 0x4, offset = 0x4, fixed_abs, tag = 'smem constant byte address 0x4 - core index']
  #allocation1 [shape = 'u32[144,128]{1,0:T(1,128)}', space=vmem, size = 0x12000, scoped, tag = 'internal scratch']
  %s0 = inlined_call_operand.vmem [shape: bf16[2,16], index: 0, kind: input, shape index: {}]
  %s1 = inlined_call_operand.vmem [shape: bf16[16,4], index: 1, kind: input, shape index: {}]
  %s2 = inlined_call_operand.vmem [shape: f32[1,4], index: 2, kind: input, shape index: {}]
  %s3 = inlined_call_operand.vmem [shape: f32[2,4], index: 3, kind: output, shape index: {}]
  %s4 = sld [smem:[#allocation0]]
  $region22: #{_lambda_.88} parent=0
    _
  %s6 = ssub.s32 1, %s4
  %s7 = scalar_select 0, %s6, %s4
  // Predicated region
  $region2: #{_lambda_.88} parent=0 // pred_check
    _
  $region3: #{_lambda_.88} parent=0 // pred_check_branch
    %9 = sbr.rel (0) target = $region5
  $region4: #{_lambda_.88} parent=0 // pred_region
    _
  $region5: #{_lambda_.88} parent=0 // pred_fallthru
    _
  // Predicated region
  $region6: #{_lambda_.88} parent=0 // pred_check
    _
  $region7: #{_lambda_.88} parent=0 // pred_check_branch
    %11 = sbr.rel (0) target = $region9
  $region8: #{_lambda_.88} parent=0 // pred_region
    _
  $region9: #{_lambda_.88} parent=0 // pred_fallthru
    _
  // Predicated region
  $region10: #{_lambda_.88} parent=0 // pred_check
    _
  $region11: #{_lambda_.88} parent=0 // pred_check_branch
    %13 = sbr.rel (0) target = $region13
  $region12: #{_lambda_.88} parent=0 // pred_region
    _
  $region13: #{_lambda_.88} parent=0 // pred_fallthru
    _
  %v15 = vld [vmem:[%s0] sm:$0x1]
  %v16 = vld [vmem:[%s1] sm:$0xf]
  %v17 = vld [vmem:[%s1 + $0x4] sm:$0xf]
  %v18 = vld [vmem:[%s2] sm:$0x1]
  %v20 = vlaneseq
  %v21 = vshrl.u32 %v20, 7
  %v22 = vsub.s32 0, %v21
  %v23 = vrot.slane %v18, %v22
  %v27 = vunpack.c.l.b16 %v16
  %v28 = vunpack.c.l.b16 %v17
  %v29 = vpack.c.b16 %v28, %v27
  %vm31 = vcmask 130048
  %v33 = vsel %vm31, %v15, 0
  %35 = vmatprep.subr.bf16.mxu0 0
  %36 = vmatpush1.bf16.msra.mxu0 %v29
  %37 = vmatprep.subr.bf16.mxu0 0
  %38 = vmatpush1.bf16.msra.mxu0 0
  %39 = vmatprep.subr.bf16.mxu0 0
  %40 = vmatpush1.bf16.msra.mxu0 0
  %41 = vmatprep.subr.bf16.mxu0 0
  %42 = vmatpush1.bf16.msra.mxu0 0
  %43 = vmatprep.subr.bf16.mxu0 0
  %44 = vmatpush1.bf16.msra.mxu0 0
  %45 = vmatprep.subr.bf16.mxu0 0
  %46 = vmatpush1.bf16.msra.mxu0 0
  %47 = vmatprep.subr.bf16.mxu0 0
  %48 = vmatpush1.bf16.msra.mxu0 0
  %49 = vmatprep.subr.bf16.mxu0 0
  %50 = vmatpush1.bf16.msra.mxu0 0
  %51 = vmatprep.subr.bf16.mxu0 0
  %52 = vmatpush1.bf16.msra.mxu0 0
  %53 = vmatprep.subr.bf16.mxu0 0
  %54 = vmatpush1.bf16.msra.mxu0 0
  %55 = vmatprep.subr.bf16.mxu0 0
  %56 = vmatpush1.bf16.msra.mxu0 0
  %57 = vmatprep.subr.bf16.mxu0 0
  %58 = vmatpush1.bf16.msra.mxu0 0
  %59 = vmatprep.subr.bf16.mxu0 0
  %60 = vmatpush1.bf16.msra.mxu0 0
  %61 = vmatprep.subr.bf16.mxu0 0
  %62 = vmatpush1.bf16.msra.mxu0 0
  %63 = vmatprep.subr.bf16.mxu0 0
  %64 = vmatpush1.bf16.msra.mxu0 0
  %65 = vmatprep.subr.bf16.mxu0 0
  %66 = vmatpush1.bf16.msra.mxu0 0
  %67 = vmatprep.mubr.bf16.mxu0 0
  %68 = vmatmul.mubr.bf16.gmra.mrb[0].mxu0 %v33
  %v69 = vpop.f32.mrb[0].mxu0
  %v70 = vadd.f32 %v23, %v69
  %v71 = vpop.f32.mrb[0].mxu0
  %v72 = vpop.f32.mrb[0].mxu0
  %v73 = vpop.f32.mrb[0].mxu0
  %74 = vdwg.mxu0
  %v75 = vmax.f32 %v70, 0.0
  %vm76 = vcmask 25600
  %77 = vst.msk [vmem:[%s3] sm:$0x3] %vm76, %v75
  // Predicated region
  $region14: #{_lambda_.88} parent=0 // pred_check
    _
  $region15: #{_lambda_.88} parent=0 // pred_check_branch
    %79 = sbr.rel (0) target = $region17
  $region16: #{_lambda_.88} parent=0 // pred_region
    _
  $region17: #{_lambda_.88} parent=0 // pred_fallthru
    _
  // Predicated region
  $region18: #{_lambda_.88} parent=0 // pred_check
    _
  $region19: #{_lambda_.88} parent=0 // pred_check_branch
    %81 = sbr.rel (0) target = $region21
  $region20: #{_lambda_.88} parent=0 // pred_region
    _
  $region21: #{_lambda_.88} parent=0 // pred_fallthru
    _

// kernel: _lambda_.89
$region0: #{_lambda_.89}
  #allocation0 [shape = 'u32[]', space=smem, size = 0x4, offset = 0x4, fixed_abs, tag = 'smem constant byte address 0x4 - core index']
  #allocation1 [shape = 'u32[144,128]{1,0:T(1,128)}', space=vmem, size = 0x12000, scoped, tag = 'internal scratch']
  %s0 = inlined_call_operand.vmem [shape: bf16[2,4], index: 0, kind: input, shape index: {}]
  %s1 = inlined_call_operand.vmem [shape: bf16[4,16], index: 1, kind: input, shape index: {}]
  %s2 = inlined_call_operand.vmem [shape: f32[1,16], index: 2, kind: input, shape index: {}]
  %s3 = inlined_call_operand.vmem [shape: f32[2,16], index: 3, kind: output, shape index: {}]
  %s4 = sld [smem:[#allocation0]]
  $region22: #{_lambda_.89} parent=0
    _
  %s6 = ssub.s32 1, %s4
  %s7 = scalar_select 0, %s6, %s4
  // Predicated region
  $region2: #{_lambda_.89} parent=0 // pred_check
    _
  $region3: #{_lambda_.89} parent=0 // pred_check_branch
    %9 = sbr.rel (0) target = $region5
  $region4: #{_lambda_.89} parent=0 // pred_region
    _
  $region5: #{_lambda_.89} parent=0 // pred_fallthru
    _
  // Predicated region
  $region6: #{_lambda_.89} parent=0 // pred_check
    _
  $region7: #{_lambda_.89} parent=0 // pred_check_branch
    %11 = sbr.rel (0) target = $region9
  $region8: #{_lambda_.89} parent=0 // pred_region
    _
  $region9: #{_lambda_.89} parent=0 // pred_fallthru
    _
  // Predicated region
  $region10: #{_lambda_.89} parent=0 // pred_check
    _
  $region11: #{_lambda_.89} parent=0 // pred_check_branch
    %13 = sbr.rel (0) target = $region13
  $region12: #{_lambda_.89} parent=0 // pred_region
    _
  $region13: #{_lambda_.89} parent=0 // pred_fallthru
    _
  %v15 = vld [vmem:[%s0] sm:$0x1]
  %v16 = vld [vmem:[%s1] sm:$0x3]
  %v17 = vld [vmem:[%s2] sm:$0x1]
  %v19 = vlaneseq
  %v20 = vshrl.u32 %v19, 7
  %v21 = vsub.s32 0, %v20
  %v22 = vrot.slane %v17, %v21
  %vm24 = vcmask 31744
  %v26 = vsel %vm24, %v15, 0
  %vm28 = vcmask 1041408
  %v30 = vsel %vm28, %v16, 0
  %32 = vmatprep.subr.bf16.mxu0 0
  %33 = vmatpush1.bf16.msra.mxu0 %v30
  %34 = vmatprep.subr.bf16.mxu0 0
  %35 = vmatpush1.bf16.msra.mxu0 0
  %36 = vmatprep.subr.bf16.mxu0 0
  %37 = vmatpush1.bf16.msra.mxu0 0
  %38 = vmatprep.subr.bf16.mxu0 0
  %39 = vmatpush1.bf16.msra.mxu0 0
  %40 = vmatprep.subr.bf16.mxu0 0
  %41 = vmatpush1.bf16.msra.mxu0 0
  %42 = vmatprep.subr.bf16.mxu0 0
  %43 = vmatpush1.bf16.msra.mxu0 0
  %44 = vmatprep.subr.bf16.mxu0 0
  %45 = vmatpush1.bf16.msra.mxu0 0
  %46 = vmatprep.subr.bf16.mxu0 0
  %47 = vmatpush1.bf16.msra.mxu0 0
  %48 = vmatprep.subr.bf16.mxu0 0
  %49 = vmatpush1.bf16.msra.mxu0 0
  %50 = vmatprep.subr.bf16.mxu0 0
  %51 = vmatpush1.bf16.msra.mxu0 0
  %52 = vmatprep.subr.bf16.mxu0 0
  %53 = vmatpush1.bf16.msra.mxu0 0
  %54 = vmatprep.subr.bf16.mxu0 0
  %55 = vmatpush1.bf16.msra.mxu0 0
  %56 = vmatprep.subr.bf16.mxu0 0
  %57 = vmatpush1.bf16.msra.mxu0 0
  %58 = vmatprep.subr.bf16.mxu0 0
  %59 = vmatpush1.bf16.msra.mxu0 0
  %60 = vmatprep.subr.bf16.mxu0 0
  %61 = vmatpush1.bf16.msra.mxu0 0
  %62 = vmatprep.subr.bf16.mxu0 0
  %63 = vmatpush1.bf16.msra.mxu0 0
  %64 = vmatprep.mubr.bf16.mxu0 0
  %65 = vmatmul.mubr.bf16.gmra.mrb[0].mxu0 %v26
  %v66 = vpop.f32.mrb[0].mxu0
  %v67 = vadd.f32 %v22, %v66
  %v68 = vpop.f32.mrb[0].mxu0
  %v69 = vpop.f32.mrb[0].mxu0
  %v70 = vpop.f32.mrb[0].mxu0
  %71 = vdwg.mxu0
  %v72 = vsub.f32 0.0, %v67
  %v73 = vmul.f32 %v72, 1.442695
  %v74 = vpow.pop %v73
  %v75 = vadd.f32 %v74, 1.0
  %v76 = vrcp.pop %v75
  %vm77 = vcmask 123904
  %78 = vst.msk [vmem:[%s3] sm:$0x3] %vm77, %v76
  // Predicated region
  $region14: #{_lambda_.89} parent=0 // pred_check
    _
  $region15: #{_lambda_.89} parent=0 // pred_check_branch
    %80 = sbr.rel (0) target = $region17
  $region16: #{_lambda_.89} parent=0 // pred_region
    _
  $region17: #{_lambda_.89} parent=0 // pred_fallthru
    _
  // Predicated region
  $region18: #{_lambda_.89} parent=0 // pred_check
    _
  $region19: #{_lambda_.89} parent=0 // pred_check_branch
    %82 = sbr.rel (0) target = $region21
  $region20: #{_lambda_.89} parent=0 // pred_region
    _
  $region21: #{_lambda_.89} parent=0 // pred_fallthru
    _

// kernel: _lambda_.90
$region0: #{_lambda_.90}
  #allocation0 [shape = 'u32[]', space=smem, size = 0x4, offset = 0x4, fixed_abs, tag = 'smem constant byte address 0x4 - core index']
  #allocation1 [shape = 'u32[144,128]{1,0:T(1,128)}', space=vmem, size = 0x12000, scoped, tag = 'internal scratch']
  %s0 = inlined_call_operand.vmem [shape: bf16[32,16], index: 0, kind: input, shape index: {}]
  %s1 = inlined_call_operand.vmem [shape: bf16[16,4], index: 1, kind: input, shape index: {}]
  %s2 = inlined_call_operand.vmem [shape: f32[1,4], index: 2, kind: input, shape index: {}]
  %s3 = inlined_call_operand.vmem [shape: f32[32,4], index: 3, kind: output, shape index: {}]
  %s4 = sld [smem:[#allocation0]]
  $region22: #{_lambda_.90} parent=0
    _
  %s6 = ssub.s32 1, %s4
  %s7 = scalar_select 0, %s6, %s4
  // Predicated region
  $region2: #{_lambda_.90} parent=0 // pred_check
    _
  $region3: #{_lambda_.90} parent=0 // pred_check_branch
    %9 = sbr.rel (0) target = $region5
  $region4: #{_lambda_.90} parent=0 // pred_region
    _
  $region5: #{_lambda_.90} parent=0 // pred_fallthru
    _
  // Predicated region
  $region6: #{_lambda_.90} parent=0 // pred_check
    _
  $region7: #{_lambda_.90} parent=0 // pred_check_branch
    %11 = sbr.rel (0) target = $region9
  $region8: #{_lambda_.90} parent=0 // pred_region
    _
  $region9: #{_lambda_.90} parent=0 // pred_fallthru
    _
  // Predicated region
  $region10: #{_lambda_.90} parent=0 // pred_check
    _
  $region11: #{_lambda_.90} parent=0 // pred_check_branch
    %13 = sbr.rel (0) target = $region13
  $region12: #{_lambda_.90} parent=0 // pred_region
    _
  $region13: #{_lambda_.90} parent=0 // pred_fallthru
    _
  %v15 = vld [vmem:[%s0] sm:$0xf]
  %v16 = vld [vmem:[%s0 + $0x4] sm:$0xf]
  %v17 = vld [vmem:[%s0 + $0x8] sm:$0xf]
  %v18 = vld [vmem:[%s0 + $0xc] sm:$0xf]
  %v19 = vld [vmem:[%s1] sm:$0xf]
  %v20 = vld [vmem:[%s1 + $0x4] sm:$0xf]
  %v21 = vld [vmem:[%s2] sm:$0x1]
  %v23 = vlaneseq
  %v24 = vshrl.u32 %v23, 7
  %v25 = vsub.s32 0, %v24
  %v26 = vrot.slane %v21, %v25
  %v32 = vunpack.c.l.b16 %v15
  %v33 = vunpack.c.l.b16 %v16
  %v34 = vunpack.c.l.b16 %v17
  %v35 = vunpack.c.l.b16 %v18
  %v36 = vpack.c.b16 %v33, %v32
  %v37 = vpack.c.b16 %v35, %v34
  %v40 = vunpack.c.l.b16 %v19
  %v41 = vunpack.c.l.b16 %v20
  %v42 = vpack.c.b16 %v41, %v40
  %vm44 = vcmask 130048
  %v46 = vsel %vm44, %v36, 0
  %v49 = vsel %vm44, %v37, 0
  %51 = vmatprep.subr.bf16.mxu0 0
  %52 = vmatpush1.bf16.msra.mxu0 %v42
  %53 = vmatprep.subr.bf16.mxu0 0
  %54 = vmatpush1.bf16.msra.mxu0 0
  %55 = vmatprep.subr.bf16.mxu0 0
  %56 = vmatpush1.bf16.msra.mxu0 0
  %57 = vmatprep.subr.bf16.mxu0 0
  %58 = vmatpush1.bf16.msra.mxu0 0
  %59 = vmatprep.subr.bf16.mxu0 0
  %60 = vmatpush1.bf16.msra.mxu0 0
  %61 = vmatprep.subr.bf16.mxu0 0
  %62 = vmatpush1.bf16.msra.mxu0 0
  %63 = vmatprep.subr.bf16.mxu0 0
  %64 = vmatpush1.bf16.msra.mxu0 0
  %65 = vmatprep.subr.bf16.mxu0 0
  %66 = vmatpush1.bf16.msra.mxu0 0
  %67 = vmatprep.subr.bf16.mxu0 0
  %68 = vmatpush1.bf16.msra.mxu0 0
  %69 = vmatprep.subr.bf16.mxu0 0
  %70 = vmatpush1.bf16.msra.mxu0 0
  %71 = vmatprep.subr.bf16.mxu0 0
  %72 = vmatpush1.bf16.msra.mxu0 0
  %73 = vmatprep.subr.bf16.mxu0 0
  %74 = vmatpush1.bf16.msra.mxu0 0
  %75 = vmatprep.subr.bf16.mxu0 0
  %76 = vmatpush1.bf16.msra.mxu0 0
  %77 = vmatprep.subr.bf16.mxu0 0
  %78 = vmatpush1.bf16.msra.mxu0 0
  %79 = vmatprep.subr.bf16.mxu0 0
  %80 = vmatpush1.bf16.msra.mxu0 0
  %81 = vmatprep.subr.bf16.mxu0 0
  %82 = vmatpush1.bf16.msra.mxu0 0
  %83 = vmatprep.mubr.bf16.mxu0 0
  %84 = vmatmul.mubr.bf16.gmra.mrb[0].mxu0 %v46
  %v85 = vpop.f32.mrb[0].mxu0
  %v86 = vadd.f32 %v26, %v85
  %v87 = vpop.f32.mrb[0].mxu0
  %v88 = vpop.f32.mrb[0].mxu0
  %v89 = vadd.f32 %v26, %v88
  %v90 = vpop.f32.mrb[0].mxu0
  %91 = vmatprep.mubr.bf16.mxu0 0
  %92 = vmatmul.mubr.bf16.gmra.mrb[0].mxu0 %v49
  %v93 = vpop.f32.mrb[0].mxu0
  %v94 = vadd.f32 %v26, %v93
  %v95 = vpop.f32.mrb[0].mxu0
  %v96 = vpop.f32.mrb[0].mxu0
  %v97 = vadd.f32 %v26, %v96
  %v98 = vpop.f32.mrb[0].mxu0
  %99 = vdwg.mxu0
  %v100 = vmax.f32 %v86, 0.0
  %v101 = vmax.f32 %v89, 0.0
  %v102 = vmax.f32 %v94, 0.0
  %v103 = vmax.f32 %v97, 0.0
  %vm104 = vcmask 31744
  %105 = vst.msk [vmem:[%s3] sm:$0xff] %vm104, %v100
  %106 = vst.msk [vmem:[%s3 + $0x8] sm:$0xff] %vm104, %v101
  %107 = vst.msk [vmem:[%s3 + $0x10] sm:$0xff] %vm104, %v102
  %108 = vst.msk [vmem:[%s3 + $0x18] sm:$0xff] %vm104, %v103
  // Predicated region
  $region14: #{_lambda_.90} parent=0 // pred_check
    _
  $region15: #{_lambda_.90} parent=0 // pred_check_branch
    %110 = sbr.rel (0) target = $region17
  $region16: #{_lambda_.90} parent=0 // pred_region
    _
  $region17: #{_lambda_.90} parent=0 // pred_fallthru
    _
  // Predicated region
  $region18: #{_lambda_.90} parent=0 // pred_check
    _
  $region19: #{_lambda_.90} parent=0 // pred_check_branch
    %112 = sbr.rel (0) target = $region21
  $region20: #{_lambda_.90} parent=0 // pred_region
    _
  $region21: #{_lambda_.90} parent=0 // pred_fallthru
    _

// kernel: _lambda_.91
$region0: #{_lambda_.91}
  #allocation0 [shape = 'u32[]', space=smem, size = 0x4, offset = 0x4, fixed_abs, tag = 'smem constant byte address 0x4 - core index']
  #allocation1 [shape = 'u32[144,128]{1,0:T(1,128)}', space=vmem, size = 0x12000, scoped, tag = 'internal scratch']
  #allocation2 [shape = 'f32[1,1]{1,0:T(1,128)S(1)}', space=vmem, size = 0x200, scoped, tag = 'scoped memory for _lambda_.91']
  %s0 = inlined_call_operand.vmem [shape: bf16[32,18], index: 0, kind: input, shape index: {}]
  %s1 = inlined_call_operand.vmem [shape: bf16[18,1], index: 1, kind: input, shape index: {}]
  %s2 = inlined_call_operand.<no memory space> [shape: f32[1,1], index: 2, kind: input, shape index: {}]
  %s3 = inlined_call_operand.vmem [shape: f32[32,1], index: 3, kind: output, shape index: {}]
  %s4 = sld [smem:[#allocation0]]
  $region22: #{_lambda_.91} parent=0
    _
  %s6 = ssub.s32 1, %s4
  %s7 = scalar_select 0, %s6, %s4
  %v8 = vstv %s2
  %9 = vst [vmem:[#allocation2] sm:$0x1] %v8
  // Predicated region
  $region2: #{_lambda_.91} parent=0 // pred_check
    _
  $region3: #{_lambda_.91} parent=0 // pred_check_branch
    %11 = sbr.rel (0) target = $region5
  $region4: #{_lambda_.91} parent=0 // pred_region
    _
  $region5: #{_lambda_.91} parent=0 // pred_fallthru
    _
  // Predicated region
  $region6: #{_lambda_.91} parent=0 // pred_check
    _
  $region7: #{_lambda_.91} parent=0 // pred_check_branch
    %13 = sbr.rel (0) target = $region9
  $region8: #{_lambda_.91} parent=0 // pred_region
    _
  $region9: #{_lambda_.91} parent=0 // pred_fallthru
    _
  // Predicated region
  $region10: #{_lambda_.91} parent=0 // pred_check
    _
  $region11: #{_lambda_.91} parent=0 // pred_check_branch
    %15 = sbr.rel (0) target = $region13
  $region12: #{_lambda_.91} parent=0 // pred_region
    _
  $region13: #{_lambda_.91} parent=0 // pred_fallthru
    _
  %v17 = vld [vmem:[%s0] sm:$0xf]
  %v18 = vld [vmem:[%s0 + $0x4] sm:$0xf]
  %v19 = vld [vmem:[%s0 + $0x8] sm:$0xf]
  %v20 = vld [vmem:[%s0 + $0xc] sm:$0xf]
  %v21 = vld [vmem:[%s1] sm:$0xf]
  %v22 = vld [vmem:[%s1 + $0x4] sm:$0xf]
  %v23 = vld [vmem:[%s1 + $0x8] sm:$0x1]
  %v24 = vld [vmem:[#allocation2] sm:$0x1]
  %v26 = vlaneseq
  %v27 = vshrl.u32 %v26, 7
  %v28 = vsub.s32 0, %v27
  %v29 = vrot.slane %v24, %v28
  %v35 = vunpack.c.l.b16 %v17
  %v36 = vunpack.c.l.b16 %v18
  %v37 = vunpack.c.l.b16 %v19
  %v38 = vunpack.c.l.b16 %v20
  %v39 = vpack.c.b16 %v36, %v35
  %v40 = vpack.c.b16 %v38, %v37
  %v44 = vunpack.c.l.b16 %v21
  %v45 = vunpack.c.l.b16 %v22
  %v46 = vunpack.c.l.b16 %v23
  %v47 = vpack.c.b16 %v45, %v44
  %v48 = vpack.c.b16 %v46, %v46
  %vm50 = vcmask 146432
  %v52 = vsel %vm50, %v39, 0
  %v55 = vsel %vm50, %v40, 0
  %vm57 = vcmask 1040384
  %v59 = vsel %vm57, %v48, 0
  %61 = vmatprep.subr.bf16.mxu0 0
  %62 = vmatpush1.bf16.msra.mxu0 %v47
  %63 = vmatprep.subr.bf16.mxu0 0
  %64 = vmatpush1.bf16.msra.mxu0 %v59
  %65 = vmatprep.subr.bf16.mxu0 0
  %66 = vmatpush1.bf16.msra.mxu0 0
  %67 = vmatprep.subr.bf16.mxu0 0
  %68 = vmatpush1.bf16.msra.mxu0 0
  %69 = vmatprep.subr.bf16.mxu0 0
  %70 = vmatpush1.bf16.msra.mxu0 0
  %71 = vmatprep.subr.bf16.mxu0 0
  %72 = vmatpush1.bf16.msra.mxu0 0
  %73 = vmatprep.subr.bf16.mxu0 0
  %74 = vmatpush1.bf16.msra.mxu0 0
  %75 = vmatprep.subr.bf16.mxu0 0
  %76 = vmatpush1.bf16.msra.mxu0 0
  %77 = vmatprep.subr.bf16.mxu0 0
  %78 = vmatpush1.bf16.msra.mxu0 0
  %79 = vmatprep.subr.bf16.mxu0 0
  %80 = vmatpush1.bf16.msra.mxu0 0
  %81 = vmatprep.subr.bf16.mxu0 0
  %82 = vmatpush1.bf16.msra.mxu0 0
  %83 = vmatprep.subr.bf16.mxu0 0
  %84 = vmatpush1.bf16.msra.mxu0 0
  %85 = vmatprep.subr.bf16.mxu0 0
  %86 = vmatpush1.bf16.msra.mxu0 0
  %87 = vmatprep.subr.bf16.mxu0 0
  %88 = vmatpush1.bf16.msra.mxu0 0
  %89 = vmatprep.subr.bf16.mxu0 0
  %90 = vmatpush1.bf16.msra.mxu0 0
  %91 = vmatprep.subr.bf16.mxu0 0
  %92 = vmatpush1.bf16.msra.mxu0 0
  %93 = vmatprep.mubr.bf16.mxu0 0
  %94 = vmatmul.mubr.bf16.gmra.mrb[0].mxu0 %v52
  %v95 = vpop.f32.mrb[0].mxu0
  %v96 = vadd.f32 %v29, %v95
  %v97 = vpop.f32.mrb[0].mxu0
  %v98 = vpop.f32.mrb[0].mxu0
  %v99 = vadd.f32 %v29, %v98
  %v100 = vpop.f32.mrb[0].mxu0
  %101 = vmatprep.mubr.bf16.mxu0 0
  %102 = vmatmul.mubr.bf16.gmra.mrb[0].mxu0 %v55
  %v103 = vpop.f32.mrb[0].mxu0
  %v104 = vadd.f32 %v29, %v103
  %v105 = vpop.f32.mrb[0].mxu0
  %v106 = vpop.f32.mrb[0].mxu0
  %v107 = vadd.f32 %v29, %v106
  %v108 = vpop.f32.mrb[0].mxu0
  %109 = vdwg.mxu0
  %v110 = vsub.f32 0.0, %v96
  %v111 = vsub.f32 0.0, %v99
  %v112 = vsub.f32 0.0, %v104
  %v113 = vsub.f32 0.0, %v107
  %v114 = vmul.f32 %v110, 1.442695
  %v115 = vpow.pop %v114
  %v116 = vmul.f32 %v111, 1.442695
  %v117 = vpow.pop %v116
  %v118 = vmul.f32 %v112, 1.442695
  %v119 = vpow.pop %v118
  %v120 = vmul.f32 %v113, 1.442695
  %v121 = vpow.pop %v120
  %v122 = vadd.f32 %v115, 1.0
  %v123 = vadd.f32 %v117, 1.0
  %v124 = vadd.f32 %v119, 1.0
  %v125 = vadd.f32 %v121, 1.0
  %v126 = vrcp.pop %v122
  %v127 = vrcp.pop %v123
  %v128 = vrcp.pop %v124
  %v129 = vrcp.pop %v125
  %vm130 = vcmask 7168
  %131 = vst.msk [vmem:[%s3] sm:$0xff] %vm130, %v126
  %132 = vst.msk [vmem:[%s3 + $0x8] sm:$0xff] %vm130, %v127
  %133 = vst.msk [vmem:[%s3 + $0x10] sm:$0xff] %vm130, %v128
  %134 = vst.msk [vmem:[%s3 + $0x18] sm:$0xff] %vm130, %v129
  // Predicated region
  $region14: #{_lambda_.91} parent=0 // pred_check
    _
  $region15: #{_lambda_.91} parent=0 // pred_check_branch
    %136 = sbr.rel (0) target = $region17
  $region16: #{_lambda_.91} parent=0 // pred_region
    _
  $region17: #{_lambda_.91} parent=0 // pred_fallthru
    _
  // Predicated region
  $region18: #{_lambda_.91} parent=0 // pred_check
    _
  $region19: #{_lambda_.91} parent=0 // pred_check_branch
    %138 = sbr.rel (0) target = $region21
  $region20: #{_lambda_.91} parent=0 // pred_region
    _
  $region21: #{_lambda_.91} parent=0 // pred_fallthru
    _

// kernel: _lambda_.92
$region0: #{_lambda_.92}
  #allocation0 [shape = 'u32[]', space=smem, size = 0x4, offset = 0x4, fixed_abs, tag = 'smem constant byte address 0x4 - core index']
  #allocation1 [shape = 'u32[144,128]{1,0:T(1,128)}', space=vmem, size = 0x12000, scoped, tag = 'internal scratch']
  %s0 = inlined_call_operand.vmem [shape: bf16[64,144], index: 0, kind: input, shape index: {}]
  %s1 = inlined_call_operand.vmem [shape: bf16[144,16], index: 1, kind: input, shape index: {}]
  %s2 = inlined_call_operand.vmem [shape: f32[1,16], index: 2, kind: input, shape index: {}]
  %s3 = inlined_call_operand.vmem [shape: f32[64,16], index: 3, kind: output, shape index: {}]
  %s4 = sld [smem:[#allocation0]]
  $region22: #{_lambda_.92} parent=0
    _
  %s6 = ssub.s32 1, %s4
  %s7 = scalar_select 0, %s6, %s4
  // Predicated region
  $region2: #{_lambda_.92} parent=0 // pred_check
    _
  $region3: #{_lambda_.92} parent=0 // pred_check_branch
    %9 = sbr.rel (0) target = $region5
  $region4: #{_lambda_.92} parent=0 // pred_region
    _
  $region5: #{_lambda_.92} parent=0 // pred_fallthru
    _
  // Predicated region
  $region6: #{_lambda_.92} parent=0 // pred_check
    _
  $region7: #{_lambda_.92} parent=0 // pred_check_branch
    %11 = sbr.rel (0) target = $region9
  $region8: #{_lambda_.92} parent=0 // pred_region
    _
  $region9: #{_lambda_.92} parent=0 // pred_fallthru
    _
  // Predicated region
  $region10: #{_lambda_.92} parent=0 // pred_check
    _
  $region11: #{_lambda_.92} parent=0 // pred_check_branch
    %13 = sbr.rel (0) target = $region13
  $region12: #{_lambda_.92} parent=0 // pred_region
    _
  $region13: #{_lambda_.92} parent=0 // pred_fallthru
    _
  %v15 = vld [vmem:[%s0] sm:$0xff]
  %v16 = vld [vmem:[%s0 + $0x8] sm:$0xff]
  %v17 = vld [vmem:[%s0 + $0x10] sm:$0xff]
  %v18 = vld [vmem:[%s0 + $0x18] sm:$0xff]
  %v19 = vld [vmem:[%s0 + $0x20] sm:$0xff]
  %v20 = vld [vmem:[%s0 + $0x28] sm:$0xff]
  %v21 = vld [vmem:[%s0 + $0x30] sm:$0xff]
  %v22 = vld [vmem:[%s0 + $0x38] sm:$0xff]
  %v23 = vld [vmem:[%s1] sm:$0xf]
  %v24 = vld [vmem:[%s1 + $0x4] sm:$0xf]
  %v25 = vld [vmem:[%s1 + $0x8] sm:$0xf]
  %v26 = vld [vmem:[%s1 + $0xc] sm:$0xf]
  %v27 = vld [vmem:[%s1 + $0x10] sm:$0xf]
  %v28 = vld [vmem:[%s1 + $0x14] sm:$0xf]
  %v29 = vld [vmem:[%s1 + $0x18] sm:$0xf]
  %v30 = vld [vmem:[%s1 + $0x1c] sm:$0xf]
  %v31 = vld [vmem:[%s1 + $0x20] sm:$0xf]
  %v32 = vld [vmem:[%s1 + $0x24] sm:$0xf]
  %v33 = vld [vmem:[%s1 + $0x28] sm:$0xf]
  %v34 = vld [vmem:[%s1 + $0x2c] sm:$0xf]
  %v35 = vld [vmem:[%s1 + $0x30] sm:$0xf]
  %v36 = vld [vmem:[%s1 + $0x34] sm:$0xf]
  %v37 = vld [vmem:[%s1 + $0x38] sm:$0xf]
  %v38 = vld [vmem:[%s1 + $0x3c] sm:$0xf]
  %v39 = vld [vmem:[%s1 + $0x40] sm:$0xf]
  %v40 = vld [vmem:[%s1 + $0x44] sm:$0xf]
  %v41 = vld [vmem:[%s2] sm:$0x1]
  %v43 = vlaneseq
  %v44 = vshrl.u32 %v43, 7
  %v45 = vsub.s32 0, %v44
  %v46 = vrot.slane %v41, %v45
  %v56 = vunpack.c.l.b16 %v15
  %v57 = vunpack.c.h.b16 %v15
  %v58 = vunpack.c.l.b16 %v16
  %v59 = vunpack.c.h.b16 %v16
  %v60 = vunpack.c.l.b16 %v17
  %v61 = vunpack.c.h.b16 %v17
  %v62 = vunpack.c.l.b16 %v18
  %v63 = vunpack.c.h.b16 %v18
  %v64 = vunpack.c.l.b16 %v19
  %v65 = vunpack.c.h.b16 %v19
  %v66 = vunpack.c.l.b16 %v20
  %v67 = vunpack.c.h.b16 %v20
  %v68 = vunpack.c.l.b16 %v21
  %v69 = vunpack.c.h.b16 %v21
  %v70 = vunpack.c.l.b16 %v22
  %v71 = vunpack.c.h.b16 %v22
  %v72 = vpack.c.b16 %v58, %v56
  %v73 = vpack.c.b16 %v59, %v57
  %v74 = vpack.c.b16 %v62, %v60
  %v75 = vpack.c.b16 %v63, %v61
  %v76 = vpack.c.b16 %v66, %v64
  %v77 = vpack.c.b16 %v67, %v65
  %v78 = vpack.c.b16 %v70, %v68
  %v79 = vpack.c.b16 %v71, %v69
  %v102 = vunpack.c.l.b16 %v23
  %v103 = vunpack.c.l.b16 %v24
  %v104 = vunpack.c.l.b16 %v25
  %v105 = vunpack.c.l.b16 %v26
  %v106 = vunpack.c.l.b16 %v27
  %v107 = vunpack.c.l.b16 %v28
  %v108 = vunpack.c.l.b16 %v29
  %v109 = vunpack.c.l.b16 %v30
  %v110 = vunpack.c.l.b16 %v31
  %v111 = vunpack.c.l.b16 %v32
  %v112 = vunpack.c.l.b16 %v33
  %v113 = vunpack.c.l.b16 %v34
  %v114 = vunpack.c.l.b16 %v35
  %v115 = vunpack.c.l.b16 %v36
  %v116 = vunpack.c.l.b16 %v37
  %v117 = vunpack.c.l.b16 %v38
  %v118 = vunpack.c.l.b16 %v39
  %v119 = vunpack.c.l.b16 %v40
  %v120 = vpack.c.b16 %v103, %v102
  %v121 = vpack.c.b16 %v105, %v104
  %v122 = vpack.c.b16 %v107, %v106
  %v123 = vpack.c.b16 %v109, %v108
  %v124 = vpack.c.b16 %v111, %v110
  %v125 = vpack.c.b16 %v113, %v112
  %v126 = vpack.c.b16 %v115, %v114
  %v127 = vpack.c.b16 %v117, %v116
  %v128 = vpack.c.b16 %v119, %v118
  %vm138 = vcmask 130048
  %v140 = vsel %vm138, %v73, 0
  %v143 = vsel %vm138, %v75, 0
  %v146 = vsel %vm138, %v77, 0
  %v149 = vsel %vm138, %v79, 0
  %151 = vmatprep.subr.bf16.mxu0 0
  %152 = vmatpush1.bf16.msra.mxu0 %v120
  %153 = vmatprep.subr.bf16.mxu0 0
  %154 = vmatpush1.bf16.msra.mxu0 %v121
  %155 = vmatprep.subr.bf16.mxu0 0
  %156 = vmatpush1.bf16.msra.mxu0 %v122
  %157 = vmatprep.subr.bf16.mxu0 0
  %158 = vmatpush1.bf16.msra.mxu0 %v123
  %159 = vmatprep.subr.bf16.mxu0 0
  %160 = vmatpush1.bf16.msra.mxu0 %v124
  %161 = vmatprep.subr.bf16.mxu0 0
  %162 = vmatpush1.bf16.msra.mxu0 %v125
  %163 = vmatprep.subr.bf16.mxu0 0
  %164 = vmatpush1.bf16.msra.mxu0 %v126
  %165 = vmatprep.subr.bf16.mxu0 0
  %166 = vmatpush1.bf16.msra.mxu0 %v127
  %167 = vmatprep.subr.bf16.mxu0 0
  %168 = vmatpush1.bf16.msra.mxu0 %v128
  %169 = vmatprep.subr.bf16.mxu0 0
  %170 = vmatpush1.bf16.msra.mxu0 0
  %171 = vmatprep.subr.bf16.mxu0 0
  %172 = vmatpush1.bf16.msra.mxu0 0
  %173 = vmatprep.subr.bf16.mxu0 0
  %174 = vmatpush1.bf16.msra.mxu0 0
  %175 = vmatprep.subr.bf16.mxu0 0
  %176 = vmatpush1.bf16.msra.mxu0 0
  %177 = vmatprep.subr.bf16.mxu0 0
  %178 = vmatpush1.bf16.msra.mxu0 0
  %179 = vmatprep.subr.bf16.mxu0 0
  %180 = vmatpush1.bf16.msra.mxu0 0
  %181 = vmatprep.subr.bf16.mxu0 0
  %182 = vmatpush1.bf16.msra.mxu0 0
  %183 = vmatprep.mubr.bf16.mxu0 %v140
  %184 = vmatmul.mubr.bf16.gmra.mrb[0].mxu0 %v72
  %v185 = vpop.f32.mrb[0].mxu0
  %v186 = vadd.f32 %v46, %v185
  %v187 = vpop.f32.mrb[0].mxu0
  %v188 = vpop.f32.mrb[0].mxu0
  %v189 = vadd.f32 %v46, %v188
  %v190 = vpop.f32.mrb[0].mxu0
  %191 = vmatprep.mubr.bf16.mxu0 %v143
  %192 = vmatmul.mubr.bf16.gmra.mrb[0].mxu0 %v74
  %v193 = vpop.f32.mrb[0].mxu0
  %v194 = vadd.f32 %v46, %v193
  %v195 = vpop.f32.mrb[0].mxu0
  %v196 = vpop.f32.mrb[0].mxu0
  %v197 = vadd.f32 %v46, %v196
  %v198 = vpop.f32.mrb[0].mxu0
  %199 = vmatprep.mubr.bf16.mxu0 %v146
  %200 = vmatmul.mubr.bf16.gmra.mrb[0].mxu0 %v76
  %v201 = vpop.f32.mrb[0].mxu0
  %v202 = vadd.f32 %v46, %v201
  %v203 = vpop.f32.mrb[0].mxu0
  %v204 = vpop.f32.mrb[0].mxu0
  %v205 = vadd.f32 %v46, %v204
  %v206 = vpop.f32.mrb[0].mxu0
  %207 = vmatprep.mubr.bf16.mxu0 %v149
  %208 = vmatmul.mubr.bf16.gmra.mrb[0].mxu0 %v78
  %v209 = vpop.f32.mrb[0].mxu0
  %v210 = vadd.f32 %v46, %v209
  %v211 = vpop.f32.mrb[0].mxu0
  %v212 = vpop.f32.mrb[0].mxu0
  %v213 = vadd.f32 %v46, %v212
  %v214 = vpop.f32.mrb[0].mxu0
  %215 = vdwg.mxu0
  %v216 = vmax.f32 %v186, 0.0
  %v217 = vmax.f32 %v189, 0.0
  %v218 = vmax.f32 %v194, 0.0
  %v219 = vmax.f32 %v197, 0.0
  %v220 = vmax.f32 %v202, 0.0
  %v221 = vmax.f32 %v205, 0.0
  %v222 = vmax.f32 %v210, 0.0
  %v223 = vmax.f32 %v213, 0.0
  %224 = vst.msk [vmem:[%s3] sm:$0xff] %vm138, %v216
  %225 = vst.msk [vmem:[%s3 + $0x8] sm:$0xff] %vm138, %v217
  %226 = vst.msk [vmem:[%s3 + $0x10] sm:$0xff] %vm138, %v218
  %227 = vst.msk [vmem:[%s3 + $0x18] sm:$0xff] %vm138, %v219
  %228 = vst.msk [vmem:[%s3 + $0x20] sm:$0xff] %vm138, %v220
  %229 = vst.msk [vmem:[%s3 + $0x28] sm:$0xff] %vm138, %v221
  %230 = vst.msk [vmem:[%s3 + $0x30] sm:$0xff] %vm138, %v222
  %231 = vst.msk [vmem:[%s3 + $0x38] sm:$0xff] %vm138, %v223
  // Predicated region
  $region14: #{_lambda_.92} parent=0 // pred_check
    _
  $region15: #{_lambda_.92} parent=0 // pred_check_branch
    %233 = sbr.rel (0) target = $region17
  $region16: #{_lambda_.92} parent=0 // pred_region
    _
  $region17: #{_lambda_.92} parent=0 // pred_fallthru
    _
  // Predicated region
  $region18: #{_lambda_.92} parent=0 // pred_check
    _
  $region19: #{_lambda_.92} parent=0 // pred_check_branch
    %235 = sbr.rel (0) target = $region21
  $region20: #{_lambda_.92} parent=0 // pred_region
    _
  $region21: #{_lambda_.92} parent=0 // pred_fallthru
    _

// kernel: _lambda_.93
$region0: #{_lambda_.93}
  #allocation0 [shape = 'u32[]', space=smem, size = 0x4, offset = 0x4, fixed_abs, tag = 'smem constant byte address 0x4 - core index']
  #allocation1 [shape = 'u32[144,128]{1,0:T(1,128)}', space=vmem, size = 0x12000, scoped, tag = 'internal scratch']
  %s0 = inlined_call_operand.vmem [shape: bf16[32,288], index: 0, kind: input, shape index: {}]
  %s1 = inlined_call_operand.vmem [shape: bf16[288,16], index: 1, kind: input, shape index: {}]
  %s2 = inlined_call_operand.vmem [shape: f32[1,16], index: 2, kind: input, shape index: {}]
  %s3 = inlined_call_operand.vmem [shape: f32[32,16], index: 3, kind: output, shape index: {}]
  %s4 = sld [smem:[#allocation0]]
  $region22: #{_lambda_.93} parent=0
    _
  %s6 = ssub.s32 1, %s4
  %s7 = scalar_select 0, %s6, %s4
  // Predicated region
  $region2: #{_lambda_.93} parent=0 // pred_check
    _
  $region3: #{_lambda_.93} parent=0 // pred_check_branch
    %9 = sbr.rel (0) target = $region5
  $region4: #{_lambda_.93} parent=0 // pred_region
    _
  $region5: #{_lambda_.93} parent=0 // pred_fallthru
    _
  // Predicated region
  $region6: #{_lambda_.93} parent=0 // pred_check
    _
  $region7: #{_lambda_.93} parent=0 // pred_check_branch
    %11 = sbr.rel (0) target = $region9
  $region8: #{_lambda_.93} parent=0 // pred_region
    _
  $region9: #{_lambda_.93} parent=0 // pred_fallthru
    _
  // Predicated region
  $region10: #{_lambda_.93} parent=0 // pred_check
    _
  $region11: #{_lambda_.93} parent=0 // pred_check_branch
    %13 = sbr.rel (0) target = $region13
  $region12: #{_lambda_.93} parent=0 // pred_region
    _
  $region13: #{_lambda_.93} parent=0 // pred_fallthru
    _
  %v15 = vld [vmem:[%s0] sm:$0xff]
  %v16 = vld [vmem:[%s0 + $0x8] sm:$0xf]
  %v17 = vld [vmem:[%s0 + $0xc] sm:$0xff]
  %v18 = vld [vmem:[%s0 + $0x14] sm:$0xf]
  %v19 = vld [vmem:[%s0 + $0x18] sm:$0xff]
  %v20 = vld [vmem:[%s0 + $0x20] sm:$0xf]
  %v21 = vld [vmem:[%s0 + $0x24] sm:$0xff]
  %v22 = vld [vmem:[%s0 + $0x2c] sm:$0xf]
  %v23 = vld [vmem:[%s1] sm:$0xf]
  %v24 = vld [vmem:[%s1 + $0x4] sm:$0xf]
  %v25 = vld [vmem:[%s1 + $0x8] sm:$0xf]
  %v26 = vld [vmem:[%s1 + $0xc] sm:$0xf]
  %v27 = vld [vmem:[%s1 + $0x10] sm:$0xf]
  %v28 = vld [vmem:[%s1 + $0x14] sm:$0xf]
  %v29 = vld [vmem:[%s1 + $0x18] sm:$0xf]
  %v30 = vld [vmem:[%s1 + $0x1c] sm:$0xf]
  %v31 = vld [vmem:[%s1 + $0x20] sm:$0xf]
  %v32 = vld [vmem:[%s1 + $0x24] sm:$0xf]
  %v33 = vld [vmem:[%s1 + $0x28] sm:$0xf]
  %v34 = vld [vmem:[%s1 + $0x2c] sm:$0xf]
  %v35 = vld [vmem:[%s1 + $0x30] sm:$0xf]
  %v36 = vld [vmem:[%s1 + $0x34] sm:$0xf]
  %v37 = vld [vmem:[%s1 + $0x38] sm:$0xf]
  %v38 = vld [vmem:[%s1 + $0x3c] sm:$0xf]
  %v39 = vld [vmem:[%s1 + $0x40] sm:$0xf]
  %v40 = vld [vmem:[%s1 + $0x44] sm:$0xf]
  %v41 = vld [vmem:[%s1 + $0x48] sm:$0xf]
  %v42 = vld [vmem:[%s1 + $0x4c] sm:$0xf]
  %v43 = vld [vmem:[%s1 + $0x50] sm:$0xf]
  %v44 = vld [vmem:[%s1 + $0x54] sm:$0xf]
  %v45 = vld [vmem:[%s1 + $0x58] sm:$0xf]
  %v46 = vld [vmem:[%s1 + $0x5c] sm:$0xf]
  %v47 = vld [vmem:[%s1 + $0x60] sm:$0xf]
  %v48 = vld [vmem:[%s1 + $0x64] sm:$0xf]
  %v49 = vld [vmem:[%s1 + $0x68] sm:$0xf]
  %v50 = vld [vmem:[%s1 + $0x6c] sm:$0xf]
  %v51 = vld [vmem:[%s1 + $0x70] sm:$0xf]
  %v52 = vld [vmem:[%s1 + $0x74] sm:$0xf]
  %v53 = vld [vmem:[%s1 + $0x78] sm:$0xf]
  %v54 = vld [vmem:[%s1 + $0x7c] sm:$0xf]
  %v55 = vld [vmem:[%s1 + $0x80] sm:$0xf]
  %v56 = vld [vmem:[%s1 + $0x84] sm:$0xf]
  %v57 = vld [vmem:[%s1 + $0x88] sm:$0xf]
  %v58 = vld [vmem:[%s1 + $0x8c] sm:$0xf]
  %v59 = vld [vmem:[%s2] sm:$0x1]
  %v61 = vlaneseq
  %v62 = vshrl.u32 %v61, 7
  %v63 = vsub.s32 0, %v62
  %v64 = vrot.slane %v59, %v63
  %v74 = vunpack.c.l.b16 %v15
  %v75 = vunpack.c.h.b16 %v15
  %v76 = vunpack.c.l.b16 %v16
  %v77 = vunpack.c.l.b16 %v17
  %v78 = vunpack.c.h.b16 %v17
  %v79 = vunpack.c.l.b16 %v18
  %v80 = vunpack.c.l.b16 %v19
  %v81 = vunpack.c.h.b16 %v19
  %v82 = vunpack.c.l.b16 %v20
  %v83 = vunpack.c.l.b16 %v21
  %v84 = vunpack.c.h.b16 %v21
  %v85 = vunpack.c.l.b16 %v22
  %v86 = vpack.c.b16 %v77, %v74
  %v87 = vpack.c.b16 %v78, %v75
  %v88 = vpack.c.b16 %v79, %v76
  %v89 = vpack.c.b16 %v83, %v80
  %v90 = vpack.c.b16 %v84, %v81
  %v91 = vpack.c.b16 %v85, %v82
  %v132 = vunpack.c.l.b16 %v23
  %v133 = vunpack.c.l.b16 %v24
  %v134 = vunpack.c.l.b16 %v25
  %v135 = vunpack.c.l.b16 %v26
  %v136 = vunpack.c.l.b16 %v27
  %v137 = vunpack.c.l.b16 %v28
  %v138 = vunpack.c.l.b16 %v29
  %v139 = vunpack.c.l.b16 %v30
  %v140 = vunpack.c.l.b16 %v31
  %v141 = vunpack.c.l.b16 %v32
  %v142 = vunpack.c.l.b16 %v33
  %v143 = vunpack.c.l.b16 %v34
  %v144 = vunpack.c.l.b16 %v35
  %v145 = vunpack.c.l.b16 %v36
  %v146 = vunpack.c.l.b16 %v37
  %v147 = vunpack.c.l.b16 %v38
  %v148 = vunpack.c.l.b16 %v39
  %v149 = vunpack.c.l.b16 %v40
  %v150 = vunpack.c.l.b16 %v41
  %v151 = vunpack.c.l.b16 %v42
  %v152 = vunpack.c.l.b16 %v43
  %v153 = vunpack.c.l.b16 %v44
  %v154 = vunpack.c.l.b16 %v45
  %v155 = vunpack.c.l.b16 %v46
  %v156 = vunpack.c.l.b16 %v47
  %v157 = vunpack.c.l.b16 %v48
  %v158 = vunpack.c.l.b16 %v49
  %v159 = vunpack.c.l.b16 %v50
  %v160 = vunpack.c.l.b16 %v51
  %v161 = vunpack.c.l.b16 %v52
  %v162 = vunpack.c.l.b16 %v53
  %v163 = vunpack.c.l.b16 %v54
  %v164 = vunpack.c.l.b16 %v55
  %v165 = vunpack.c.l.b16 %v56
  %v166 = vunpack.c.l.b16 %v57
  %v167 = vunpack.c.l.b16 %v58
  %v168 = vpack.c.b16 %v133, %v132
  %v169 = vpack.c.b16 %v135, %v134
  %v170 = vpack.c.b16 %v137, %v136
  %v171 = vpack.c.b16 %v139, %v138
  %v172 = vpack.c.b16 %v141, %v140
  %v173 = vpack.c.b16 %v143, %v142
  %v174 = vpack.c.b16 %v145, %v144
  %v175 = vpack.c.b16 %v147, %v146
  %v176 = vpack.c.b16 %v149, %v148
  %v177 = vpack.c.b16 %v151, %v150
  %v178 = vpack.c.b16 %v153, %v152
  %v179 = vpack.c.b16 %v155, %v154
  %v180 = vpack.c.b16 %v157, %v156
  %v181 = vpack.c.b16 %v159, %v158
  %v182 = vpack.c.b16 %v161, %v160
  %v183 = vpack.c.b16 %v163, %v162
  %v184 = vpack.c.b16 %v165, %v164
  %v185 = vpack.c.b16 %v167, %v166
  %vm204 = vcmask 261120
  %v206 = vsel %vm204, %v88, 0
  %v209 = vsel %vm204, %v91, 0
  %211 = vmatprep.subr.bf16.mxu0 0
  %212 = vmatpush1.bf16.msra.mxu0 %v168
  %213 = vmatprep.subr.bf16.mxu0 0
  %214 = vmatpush1.bf16.msra.mxu0 %v169
  %215 = vmatprep.subr.bf16.mxu0 0
  %216 = vmatpush1.bf16.msra.mxu0 %v170
  %217 = vmatprep.subr.bf16.mxu0 0
  %218 = vmatpush1.bf16.msra.mxu0 %v171
  %219 = vmatprep.subr.bf16.mxu0 0
  %220 = vmatpush1.bf16.msra.mxu0 %v172
  %221 = vmatprep.subr.bf16.mxu0 0
  %222 = vmatpush1.bf16.msra.mxu0 %v173
  %223 = vmatprep.subr.bf16.mxu0 0
  %224 = vmatpush1.bf16.msra.mxu0 %v174
  %225 = vmatprep.subr.bf16.mxu0 0
  %226 = vmatpush1.bf16.msra.mxu0 %v175
  %227 = vmatprep.subr.bf16.mxu0 0
  %228 = vmatpush1.bf16.msra.mxu0 %v176
  %229 = vmatprep.subr.bf16.mxu0 0
  %230 = vmatpush1.bf16.msra.mxu0 %v177
  %231 = vmatprep.subr.bf16.mxu0 0
  %232 = vmatpush1.bf16.msra.mxu0 %v178
  %233 = vmatprep.subr.bf16.mxu0 0
  %234 = vmatpush1.bf16.msra.mxu0 %v179
  %235 = vmatprep.subr.bf16.mxu0 0
  %236 = vmatpush1.bf16.msra.mxu0 %v180
  %237 = vmatprep.subr.bf16.mxu0 0
  %238 = vmatpush1.bf16.msra.mxu0 %v181
  %239 = vmatprep.subr.bf16.mxu0 0
  %240 = vmatpush1.bf16.msra.mxu0 %v182
  %241 = vmatprep.subr.bf16.mxu0 0
  %242 = vmatpush1.bf16.msra.mxu0 %v183
  %243 = vmatprep.mubr.bf16.mxu0 %v87
  %244 = vmatmul.mubr.bf16.gmra.mrb[0].mxu0 %v86
  %v245 = vpop.f32.mrb[0].mxu0
  %v246 = vadd.f32 %v64, %v245
  %v247 = vpop.f32.mrb[0].mxu0
  %v248 = vpop.f32.mrb[0].mxu0
  %v249 = vadd.f32 %v64, %v248
  %v250 = vpop.f32.mrb[0].mxu0
  %251 = vmatprep.mubr.bf16.mxu0 %v90
  %252 = vmatmul.mubr.bf16.gmra.mrb[0].mxu0 %v89
  %v253 = vpop.f32.mrb[0].mxu0
  %v254 = vadd.f32 %v64, %v253
  %v255 = vpop.f32.mrb[0].mxu0
  %v256 = vpop.f32.mrb[0].mxu0
  %v257 = vadd.f32 %v64, %v256
  %v258 = vpop.f32.mrb[0].mxu0
  %259 = vdwg.mxu0
  %260 = vmatprep.subr.bf16.mxu0 0
  %261 = vmatpush1.bf16.msra.mxu0 %v184
  %262 = vmatprep.subr.bf16.mxu0 0
  %263 = vmatpush1.bf16.msra.mxu0 %v185
  %264 = vmatprep.subr.bf16.mxu0 0
  %265 = vmatpush1.bf16.msra.mxu0 0
  %266 = vmatprep.subr.bf16.mxu0 0
  %267 = vmatpush1.bf16.msra.mxu0 0
  %268 = vmatprep.subr.bf16.mxu0 0
  %269 = vmatpush1.bf16.msra.mxu0 0
  %270 = vmatprep.subr.bf16.mxu0 0
  %271 = vmatpush1.bf16.msra.mxu0 0
  %272 = vmatprep.subr.bf16.mxu0 0
  %273 = vmatpush1.bf16.msra.mxu0 0
  %274 = vmatprep.subr.bf16.mxu0 0
  %275 = vmatpush1.bf16.msra.mxu0 0
  %276 = vmatprep.subr.bf16.mxu0 0
  %277 = vmatpush1.bf16.msra.mxu0 0
  %278 = vmatprep.subr.bf16.mxu0 0
  %279 = vmatpush1.bf16.msra.mxu0 0
  %280 = vmatprep.subr.bf16.mxu0 0
  %281 = vmatpush1.bf16.msra.mxu0 0
  %282 = vmatprep.subr.bf16.mxu0 0
  %283 = vmatpush1.bf16.msra.mxu0 0
  %284 = vmatprep.subr.bf16.mxu0 0
  %285 = vmatpush1.bf16.msra.mxu0 0
  %286 = vmatprep.subr.bf16.mxu0 0
  %287 = vmatpush1.bf16.msra.mxu0 0
  %288 = vmatprep.subr.bf16.mxu0 0
  %289 = vmatpush1.bf16.msra.mxu0 0
  %290 = vmatprep.subr.bf16.mxu0 0
  %291 = vmatpush1.bf16.msra.mxu0 0
  %292 = vmatprep.mubr.bf16.mxu0 0
  %293 = vmatmul.mubr.bf16.gmra.mrb[0].mxu0 %v206
  %v294 = vpop.f32.mrb[0].mxu0
  %v295 = vadd.f32 %v246, %v294
  %v296 = vpop.f32.mrb[0].mxu0
  %v297 = vpop.f32.mrb[0].mxu0
  %v298 = vadd.f32 %v249, %v297
  %v299 = vpop.f32.mrb[0].mxu0
  %300 = vmatprep.mubr.bf16.mxu0 0
  %301 = vmatmul.mubr.bf16.gmra.mrb[0].mxu0 %v209
  %v302 = vpop.f32.mrb[0].mxu0
  %v303 = vadd.f32 %v254, %v302
  %v304 = vpop.f32.mrb[0].mxu0
  %v305 = vpop.f32.mrb[0].mxu0
  %v306 = vadd.f32 %v257, %v305
  %v307 = vpop.f32.mrb[0].mxu0
  %308 = vdwg.mxu0
  %vm309 = vcmask 130048
  %310 = vst.msk [vmem:[%s3] sm:$0xff] %vm309, %v295
  %311 = vst.msk [vmem:[%s3 + $0x8] sm:$0xff] %vm309, %v298
  %312 = vst.msk [vmem:[%s3 + $0x10] sm:$0xff] %vm309, %v303
  %313 = vst.msk [vmem:[%s3 + $0x18] sm:$0xff] %vm309, %v306
  // Predicated region
  $region14: #{_lambda_.93} parent=0 // pred_check
    _
  $region15: #{_lambda_.93} parent=0 // pred_check_branch
    %315 = sbr.rel (0) target = $region17
  $region16: #{_lambda_.93} parent=0 // pred_region
    _
  $region17: #{_lambda_.93} parent=0 // pred_fallthru
    _
  // Predicated region
  $region18: #{_lambda_.93} parent=0 // pred_check
    _
  $region19: #{_lambda_.93} parent=0 // pred_check_branch
    %317 = sbr.rel (0) target = $region21
  $region20: #{_lambda_.93} parent=0 // pred_region
    _
  $region21: #{_lambda_.93} parent=0 // pred_fallthru
    _

// kernel: _lambda_.100
$region0: #{_lambda_.100}
  #allocation0 [shape = 'u32[]', space=smem, size = 0x4, offset = 0x4, fixed_abs, tag = 'smem constant byte address 0x4 - core index']
  #allocation1 [shape = 'u32[144,128]{1,0:T(1,128)}', space=vmem, size = 0x12000, scoped, tag = 'internal scratch']
  %s0 = inlined_call_operand.vmem [shape: bf16[32,144], index: 0, kind: input, shape index: {}]
  %s1 = inlined_call_operand.vmem [shape: bf16[144,4], index: 1, kind: input, shape index: {}]
  %s2 = inlined_call_operand.vmem [shape: f32[1,4], index: 2, kind: input, shape index: {}]
  %s3 = inlined_call_operand.vmem [shape: f32[32,4], index: 3, kind: output, shape index: {}]
  %s4 = sld [smem:[#allocation0]]
  $region22: #{_lambda_.100} parent=0
    _
  %s6 = ssub.s32 1, %s4
  %s7 = scalar_select 0, %s6, %s4
  // Predicated region
  $region2: #{_lambda_.100} parent=0 // pred_check
    _
  $region3: #{_lambda_.100} parent=0 // pred_check_branch
    %9 = sbr.rel (0) target = $region5
  $region4: #{_lambda_.100} parent=0 // pred_region
    _
  $region5: #{_lambda_.100} parent=0 // pred_fallthru
    _
  // Predicated region
  $region6: #{_lambda_.100} parent=0 // pred_check
    _
  $region7: #{_lambda_.100} parent=0 // pred_check_branch
    %11 = sbr.rel (0) target = $region9
  $region8: #{_lambda_.100} parent=0 // pred_region
    _
  $region9: #{_lambda_.100} parent=0 // pred_fallthru
    _
  // Predicated region
  $region10: #{_lambda_.100} parent=0 // pred_check
    _
  $region11: #{_lambda_.100} parent=0 // pred_check_branch
    %13 = sbr.rel (0) target = $region13
  $region12: #{_lambda_.100} parent=0 // pred_region
    _
  $region13: #{_lambda_.100} parent=0 // pred_fallthru
    _
  %v15 = vld [vmem:[%s0] sm:$0xff]
  %v16 = vld [vmem:[%s0 + $0x8] sm:$0xff]
  %v17 = vld [vmem:[%s0 + $0x10] sm:$0xff]
  %v18 = vld [vmem:[%s0 + $0x18] sm:$0xff]
  %v19 = vld [vmem:[%s1] sm:$0xf]
  %v20 = vld [vmem:[%s1 + $0x4] sm:$0xf]
  %v21 = vld [vmem:[%s1 + $0x8] sm:$0xf]
  %v22 = vld [vmem:[%s1 + $0xc] sm:$0xf]
  %v23 = vld [vmem:[%s1 + $0x10] sm:$0xf]
  %v24 = vld [vmem:[%s1 + $0x14] sm:$0xf]
  %v25 = vld [vmem:[%s1 + $0x18] sm:$0xf]
  %v26 = vld [vmem:[%s1 + $0x1c] sm:$0xf]
  %v27 = vld [vmem:[%s1 + $0x20] sm:$0xf]
  %v28 = vld [vmem:[%s1 + $0x24] sm:$0xf]
  %v29 = vld [vmem:[%s1 + $0x28] sm:$0xf]
  %v30 = vld [vmem:[%s1 + $0x2c] sm:$0xf]
  %v31 = vld [vmem:[%s1 + $0x30] sm:$0xf]
  %v32 = vld [vmem:[%s1 + $0x34] sm:$0xf]
  %v33 = vld [vmem:[%s1 + $0x38] sm:$0xf]
  %v34 = vld [vmem:[%s1 + $0x3c] sm:$0xf]
  %v35 = vld [vmem:[%s1 + $0x40] sm:$0xf]
  %v36 = vld [vmem:[%s1 + $0x44] sm:$0xf]
  %v37 = vld [vmem:[%s2] sm:$0x1]
  %v39 = vlaneseq
  %v40 = vshrl.u32 %v39, 7
  %v41 = vsub.s32 0, %v40
  %v42 = vrot.slane %v37, %v41
  %v48 = vunpack.c.l.b16 %v15
  %v49 = vunpack.c.h.b16 %v15
  %v50 = vunpack.c.l.b16 %v16
  %v51 = vunpack.c.h.b16 %v16
  %v52 = vunpack.c.l.b16 %v17
  %v53 = vunpack.c.h.b16 %v17
  %v54 = vunpack.c.l.b16 %v18
  %v55 = vunpack.c.h.b16 %v18
  %v56 = vpack.c.b16 %v50, %v48
  %v57 = vpack.c.b16 %v51, %v49
  %v58 = vpack.c.b16 %v54, %v52
  %v59 = vpack.c.b16 %v55, %v53
  %v80 = vunpack.c.l.b16 %v19
  %v81 = vunpack.c.l.b16 %v20
  %v82 = vunpack.c.l.b16 %v21
  %v83 = vunpack.c.l.b16 %v22
  %v84 = vunpack.c.l.b16 %v23
  %v85 = vunpack.c.l.b16 %v24
  %v86 = vunpack.c.l.b16 %v25
  %v87 = vunpack.c.l.b16 %v26
  %v88 = vunpack.c.l.b16 %v27
  %v89 = vunpack.c.l.b16 %v28
  %v90 = vunpack.c.l.b16 %v29
  %v91 = vunpack.c.l.b16 %v30
  %v92 = vunpack.c.l.b16 %v31
  %v93 = vunpack.c.l.b16 %v32
  %v94 = vunpack.c.l.b16 %v33
  %v95 = vunpack.c.l.b16 %v34
  %v96 = vunpack.c.l.b16 %v35
  %v97 = vunpack.c.l.b16 %v36
  %v98 = vpack.c.b16 %v81, %v80
  %v99 = vpack.c.b16 %v83, %v82
  %v100 = vpack.c.b16 %v85, %v84
  %v101 = vpack.c.b16 %v87, %v86
  %v102 = vpack.c.b16 %v89, %v88
  %v103 = vpack.c.b16 %v91, %v90
  %v104 = vpack.c.b16 %v93, %v92
  %v105 = vpack.c.b16 %v95, %v94
  %v106 = vpack.c.b16 %v97, %v96
  %vm116 = vcmask 130048
  %v118 = vsel %vm116, %v57, 0
  %v121 = vsel %vm116, %v59, 0
  %123 = vmatprep.subr.bf16.mxu0 0
  %124 = vmatpush1.bf16.msra.mxu0 %v98
  %125 = vmatprep.subr.bf16.mxu0 0
  %126 = vmatpush1.bf16.msra.mxu0 %v99
  %127 = vmatprep.subr.bf16.mxu0 0
  %128 = vmatpush1.bf16.msra.mxu0 %v100
  %129 = vmatprep.subr.bf16.mxu0 0
  %130 = vmatpush1.bf16.msra.mxu0 %v101
  %131 = vmatprep.subr.bf16.mxu0 0
  %132 = vmatpush1.bf16.msra.mxu0 %v102
  %133 = vmatprep.subr.bf16.mxu0 0
  %134 = vmatpush1.bf16.msra.mxu0 %v103
  %135 = vmatprep.subr.bf16.mxu0 0
  %136 = vmatpush1.bf16.msra.mxu0 %v104
  %137 = vmatprep.subr.bf16.mxu0 0
  %138 = vmatpush1.bf16.msra.mxu0 %v105
  %139 = vmatprep.subr.bf16.mxu0 0
  %140 = vmatpush1.bf16.msra.mxu0 %v106
  %141 = vmatprep.subr.bf16.mxu0 0
  %142 = vmatpush1.bf16.msra.mxu0 0
  %143 = vmatprep.subr.bf16.mxu0 0
  %144 = vmatpush1.bf16.msra.mxu0 0
  %145 = vmatprep.subr.bf16.mxu0 0
  %146 = vmatpush1.bf16.msra.mxu0 0
  %147 = vmatprep.subr.bf16.mxu0 0
  %148 = vmatpush1.bf16.msra.mxu0 0
  %149 = vmatprep.subr.bf16.mxu0 0
  %150 = vmatpush1.bf16.msra.mxu0 0
  %151 = vmatprep.subr.bf16.mxu0 0
  %152 = vmatpush1.bf16.msra.mxu0 0
  %153 = vmatprep.subr.bf16.mxu0 0
  %154 = vmatpush1.bf16.msra.mxu0 0
  %155 = vmatprep.mubr.bf16.mxu0 %v118
  %156 = vmatmul.mubr.bf16.gmra.mrb[0].mxu0 %v56
  %v157 = vpop.f32.mrb[0].mxu0
  %v158 = vadd.f32 %v42, %v157
  %v159 = vpop.f32.mrb[0].mxu0
  %v160 = vpop.f32.mrb[0].mxu0
  %v161 = vadd.f32 %v42, %v160
  %v162 = vpop.f32.mrb[0].mxu0
  %163 = vmatprep.mubr.bf16.mxu0 %v121
  %164 = vmatmul.mubr.bf16.gmra.mrb[0].mxu0 %v58
  %v165 = vpop.f32.mrb[0].mxu0
  %v166 = vadd.f32 %v42, %v165
  %v167 = vpop.f32.mrb[0].mxu0
  %v168 = vpop.f32.mrb[0].mxu0
  %v169 = vadd.f32 %v42, %v168
  %v170 = vpop.f32.mrb[0].mxu0
  %171 = vdwg.mxu0
  %v172 = vmax.f32 %v158, 0.0
  %v173 = vmax.f32 %v161, 0.0
  %v174 = vmax.f32 %v166, 0.0
  %v175 = vmax.f32 %v169, 0.0
  %vm176 = vcmask 31744
  %177 = vst.msk [vmem:[%s3] sm:$0xff] %vm176, %v172
  %178 = vst.msk [vmem:[%s3 + $0x8] sm:$0xff] %vm176, %v173
  %179 = vst.msk [vmem:[%s3 + $0x10] sm:$0xff] %vm176, %v174
  %180 = vst.msk [vmem:[%s3 + $0x18] sm:$0xff] %vm176, %v175
  // Predicated region
  $region14: #{_lambda_.100} parent=0 // pred_check
    _
  $region15: #{_lambda_.100} parent=0 // pred_check_branch
    %182 = sbr.rel (0) target = $region17
  $region16: #{_lambda_.100} parent=0 // pred_region
    _
  $region17: #{_lambda_.100} parent=0 // pred_fallthru
    _
  // Predicated region
  $region18: #{_lambda_.100} parent=0 // pred_check
    _
  $region19: #{_lambda_.100} parent=0 // pred_check_branch
    %184 = sbr.rel (0) target = $region21
  $region20: #{_lambda_.100} parent=0 // pred_region
    _
  $region21: #{_lambda_.100} parent=0 // pred_fallthru
    _

// kernel: _lambda_.101
$region0: #{_lambda_.101}
  #allocation0 [shape = 'u32[]', space=smem, size = 0x4, offset = 0x4, fixed_abs, tag = 'smem constant byte address 0x4 - core index']
  #allocation1 [shape = 'u32[144,128]{1,0:T(1,128)}', space=vmem, size = 0x12000, scoped, tag = 'internal scratch']
  #allocation2 [shape = 'f32[1,1]{1,0:T(1,128)S(1)}', space=vmem, size = 0x200, scoped, tag = 'scoped memory for _lambda_.101']
  %s0 = inlined_call_operand.vmem [shape: bf16[32,4], index: 0, kind: input, shape index: {}]
  %s1 = inlined_call_operand.vmem [shape: bf16[4,1], index: 1, kind: input, shape index: {}]
  %s2 = inlined_call_operand.<no memory space> [shape: f32[1,1], index: 2, kind: input, shape index: {}]
  %s3 = inlined_call_operand.vmem [shape: f32[32,1], index: 3, kind: output, shape index: {}]
  %s4 = sld [smem:[#allocation0]]
  $region22: #{_lambda_.101} parent=0
    _
  %s6 = ssub.s32 1, %s4
  %s7 = scalar_select 0, %s6, %s4
  %v8 = vstv %s2
  %9 = vst [vmem:[#allocation2] sm:$0x1] %v8
  // Predicated region
  $region2: #{_lambda_.101} parent=0 // pred_check
    _
  $region3: #{_lambda_.101} parent=0 // pred_check_branch
    %11 = sbr.rel (0) target = $region5
  $region4: #{_lambda_.101} parent=0 // pred_region
    _
  $region5: #{_lambda_.101} parent=0 // pred_fallthru
    _
  // Predicated region
  $region6: #{_lambda_.101} parent=0 // pred_check
    _
  $region7: #{_lambda_.101} parent=0 // pred_check_branch
    %13 = sbr.rel (0) target = $region9
  $region8: #{_lambda_.101} parent=0 // pred_region
    _
  $region9: #{_lambda_.101} parent=0 // pred_fallthru
    _
  // Predicated region
  $region10: #{_lambda_.101} parent=0 // pred_check
    _
  $region11: #{_lambda_.101} parent=0 // pred_check_branch
    %15 = sbr.rel (0) target = $region13
  $region12: #{_lambda_.101} parent=0 // pred_region
    _
  $region13: #{_lambda_.101} parent=0 // pred_fallthru
    _
  %v17 = vld [vmem:[%s0] sm:$0xf]
  %v18 = vld [vmem:[%s0 + $0x4] sm:$0xf]
  %v19 = vld [vmem:[%s0 + $0x8] sm:$0xf]
  %v20 = vld [vmem:[%s0 + $0xc] sm:$0xf]
  %v21 = vld [vmem:[%s1] sm:$0x3]
  %v22 = vld [vmem:[#allocation2] sm:$0x1]
  %v24 = vlaneseq
  %v25 = vshrl.u32 %v24, 7
  %v26 = vsub.s32 0, %v25
  %v27 = vrot.slane %v22, %v26
  %v33 = vunpack.c.l.b16 %v17
  %v34 = vunpack.c.l.b16 %v18
  %v35 = vunpack.c.l.b16 %v19
  %v36 = vunpack.c.l.b16 %v20
  %v37 = vpack.c.b16 %v34, %v33
  %v38 = vpack.c.b16 %v36, %v35
  %vm39 = vcmask 31744
  %v41 = vsel %vm39, %v37, 0
  %v44 = vsel %vm39, %v38, 0
  %vm46 = vcmask 1041408
  %v48 = vsel %vm46, %v21, 0
  %50 = vmatprep.subr.bf16.mxu0 0
  %51 = vmatpush1.bf16.msra.mxu0 %v48
  %52 = vmatprep.subr.bf16.mxu0 0
  %53 = vmatpush1.bf16.msra.mxu0 0
  %54 = vmatprep.subr.bf16.mxu0 0
  %55 = vmatpush1.bf16.msra.mxu0 0
  %56 = vmatprep.subr.bf16.mxu0 0
  %57 = vmatpush1.bf16.msra.mxu0 0
  %58 = vmatprep.subr.bf16.mxu0 0
  %59 = vmatpush1.bf16.msra.mxu0 0
  %60 = vmatprep.subr.bf16.mxu0 0
  %61 = vmatpush1.bf16.msra.mxu0 0
  %62 = vmatprep.subr.bf16.mxu0 0
  %63 = vmatpush1.bf16.msra.mxu0 0
  %64 = vmatprep.subr.bf16.mxu0 0
  %65 = vmatpush1.bf16.msra.mxu0 0
  %66 = vmatprep.subr.bf16.mxu0 0
  %67 = vmatpush1.bf16.msra.mxu0 0
  %68 = vmatprep.subr.bf16.mxu0 0
  %69 = vmatpush1.bf16.msra.mxu0 0
  %70 = vmatprep.subr.bf16.mxu0 0
  %71 = vmatpush1.bf16.msra.mxu0 0
  %72 = vmatprep.subr.bf16.mxu0 0
  %73 = vmatpush1.bf16.msra.mxu0 0
  %74 = vmatprep.subr.bf16.mxu0 0
  %75 = vmatpush1.bf16.msra.mxu0 0
  %76 = vmatprep.subr.bf16.mxu0 0
  %77 = vmatpush1.bf16.msra.mxu0 0
  %78 = vmatprep.subr.bf16.mxu0 0
  %79 = vmatpush1.bf16.msra.mxu0 0
  %80 = vmatprep.subr.bf16.mxu0 0
  %81 = vmatpush1.bf16.msra.mxu0 0
  %82 = vmatprep.mubr.bf16.mxu0 0
  %83 = vmatmul.mubr.bf16.gmra.mrb[0].mxu0 %v41
  %v84 = vpop.f32.mrb[0].mxu0
  %v85 = vadd.f32 %v27, %v84
  %v86 = vpop.f32.mrb[0].mxu0
  %v87 = vpop.f32.mrb[0].mxu0
  %v88 = vadd.f32 %v27, %v87
  %v89 = vpop.f32.mrb[0].mxu0
  %90 = vmatprep.mubr.bf16.mxu0 0
  %91 = vmatmul.mubr.bf16.gmra.mrb[0].mxu0 %v44
  %v92 = vpop.f32.mrb[0].mxu0
  %v93 = vadd.f32 %v27, %v92
  %v94 = vpop.f32.mrb[0].mxu0
  %v95 = vpop.f32.mrb[0].mxu0
  %v96 = vadd.f32 %v27, %v95
  %v97 = vpop.f32.mrb[0].mxu0
  %98 = vdwg.mxu0
  %vm99 = vcmask 7168
  %100 = vst.msk [vmem:[%s3] sm:$0xff] %vm99, %v85
  %101 = vst.msk [vmem:[%s3 + $0x8] sm:$0xff] %vm99, %v88
  %102 = vst.msk [vmem:[%s3 + $0x10] sm:$0xff] %vm99, %v93
  %103 = vst.msk [vmem:[%s3 + $0x18] sm:$0xff] %vm99, %v96
  // Predicated region
  $region14: #{_lambda_.101} parent=0 // pred_check
    _
  $region15: #{_lambda_.101} parent=0 // pred_check_branch
    %105 = sbr.rel (0) target = $region17
  $region16: #{_lambda_.101} parent=0 // pred_region
    _
  $region17: #{_lambda_.101} parent=0 // pred_fallthru
    _
  // Predicated region
  $region18: #{_lambda_.101} parent=0 // pred_check
    _
  $region19: #{_lambda_.101} parent=0 // pred_check_branch
    %107 = sbr.rel (0) target = $region21
  $region20: #{_lambda_.101} parent=0 // pred_region
    _
  $region21: #{_lambda_.101} parent=0 // pred_fallthru
    _

</llo_original>
